<compile_context>
chip_gen: v7x
topology: tpu7x:2x2x1
jax: 0.10.0
libtpu: 0.0.40
codegen_flags: <defaults>
</compile_context>

<pallas_src>
import jax
import jax.numpy as jnp
from jax.experimental import pallas as pl
from jax.experimental.pallas import tpu as pltpu

IN_DIM = 20 * 16 * 8      # 2560
HIDDEN = 1000             # logical hidden size (PyTorch)
HIDDEN_PAD = 1024         # padded to a multiple of 128 for clean lane tiling
OUT_DIM = 20 * 16 * 8     # 2560
NEG_SLOPE = 0.2

TK = 512                  # hidden-dim tile -> 2 grid steps (one per TC on v7x)


def _leaky_relu(x):
    return jnp.where(x > 0, x, NEG_SLOPE * x)


def mlp_kernel(x_ref, w1_ref, b1_ref, w2_ref, p_ref):
    # One hidden slice: h_k = LeakyReLU(x @ W1[:, kslice] + b1[kslice]).
    # Exact per-slice because the activation is elementwise per hidden unit.
    xb = x_ref[...].astype(jnp.bfloat16)
    h = jnp.dot(xb, w1_ref[...], preferred_element_type=jnp.float32)
    h = _leaky_relu(h + b1_ref[...])
    # Partial fc2 product for this hidden slice; fc2 bias + activation are
    # applied in the (tiny) epilogue after the cross-slice reduction.
    p_ref[...] = jnp.dot(h.astype(jnp.bfloat16), w2_ref[...],
                         preferred_element_type=jnp.float32)


def mlp_forward(x, w1, b1, w2, b2):
    B = x.shape[0]
    n_k = HIDDEN_PAD // TK   # 2

    flops = 2 * B * (IN_DIM * HIDDEN_PAD + HIDDEN_PAD * OUT_DIM)
    bytes_accessed = (
        B * IN_DIM * 4                       # x (f32)
        + IN_DIM * HIDDEN_PAD * 2            # W1 (bf16)
        + HIDDEN_PAD * 4                     # b1 (f32)
        + HIDDEN_PAD * OUT_DIM * 2           # W2 (bf16)
        + n_k * B * OUT_DIM * 4              # partial outputs (f32)
    )

    partials = pl.pallas_call(
        mlp_kernel,
        out_shape=jax.ShapeDtypeStruct((n_k, B, OUT_DIM), jnp.float32),
        grid_spec=pltpu.PrefetchScalarGridSpec(
            num_scalar_prefetch=0,
            grid=(n_k,),
            in_specs=[
                pl.BlockSpec((B, IN_DIM), lambda k: (0, 0)),     # x (invariant)
                pl.BlockSpec((IN_DIM, TK), lambda k: (0, k)),    # W1[:, kslice]
                pl.BlockSpec((1, TK), lambda k: (0, k)),         # b1[kslice]
                pl.BlockSpec((TK, OUT_DIM), lambda k: (k, 0)),   # W2[kslice, :]
            ],
            out_specs=pl.BlockSpec((None, B, OUT_DIM), lambda k: (k, 0, 0)),
        ),
        compiler_params=pltpu.CompilerParams(
            # No cross-step carry -> safe to shard the weight stream across
            # v7x's two TensorCores; harmless (sequential) on v5e/v6e.
            dimension_semantics=("parallel",),
            # ~10.6 MB actual residency; 32 MiB fits every generation.
            vmem_limit_bytes=32 * 1024 * 1024,
        ),
        cost_estimate=pl.CostEstimate(
            flops=flops, transcendentals=0, bytes_accessed=bytes_accessed),
    )(x, w1, b1, w2)

    # Tiny epilogue on 40 KB of f32 partials: K-reduce + fc2 bias + LeakyReLU.
    y = partials.sum(axis=0) + b2
    return _leaky_relu(y)


def init_params(key):
    # Deterministic init mimicking PyTorch nn.Linear default:
    # U(-1/sqrt(fan_in), 1/sqrt(fan_in)) for weight and bias.
    k1, k2, k3, k4 = jax.random.split(key, 4)
    bound1 = 1.0 / (IN_DIM ** 0.5)
    bound2 = 1.0 / (HIDDEN ** 0.5)
    w1 = jax.random.uniform(k1, (IN_DIM, HIDDEN), jnp.float32, -bound1, bound1)
    b1 = jax.random.uniform(k2, (1, HIDDEN), jnp.float32, -bound1, bound1)
    w2 = jax.random.uniform(k3, (HIDDEN, OUT_DIM), jnp.float32, -bound2, bound2)
    b2 = jax.random.uniform(k4, (1, OUT_DIM), jnp.float32, -bound2, bound2)

    # Zero-pad hidden dim to 1024 (padded cols/rows contribute exactly 0) and
    # store weights as bf16 (halves HBM weight traffic).  Biases stay f32.
    w1p = jnp.zeros((IN_DIM, HIDDEN_PAD), jnp.bfloat16)
    w1p = w1p.at[:, :HIDDEN].set(w1.astype(jnp.bfloat16))
    b1p = jnp.zeros((1, HIDDEN_PAD), jnp.float32).at[:, :HIDDEN].set(b1)
    w2p = jnp.zeros((HIDDEN_PAD, OUT_DIM), jnp.bfloat16)
    w2p = w2p.at[:HIDDEN, :].set(w2.astype(jnp.bfloat16))
    return w1p, b1p, w2p, b2


def reference_forward(x, w1, b1, w2, b2):
    # Same math as the kernel: bf16 operands, f32 accumulation, f32 bias/act.
    # (Deviates from the f32 PyTorch module only by bf16 weight/activation
    # rounding — see review correctness note.)
    h = jnp.dot(x.astype(jnp.bfloat16), w1,
                preferred_element_type=jnp.float32) + b1
    h = jnp.where(h > 0, h, NEG_SLOPE * h)
    y = jnp.dot(h.astype(jnp.bfloat16), w2,
                preferred_element_type=jnp.float32) + b2
    return jnp.where(y > 0, y, NEG_SLOPE * y)


if __name__ == "__main__":
    key = jax.random.PRNGKey(0)
    kx, kp = jax.random.split(key)
    B = 2
    x = jax.random.normal(kx, (B, IN_DIM), jnp.float32)
    w1, b1, w2, b2 = init_params(kp)

    out = jax.block_until_ready(mlp_forward(x, w1, b1, w2, b2))

    ref = reference_forward(x, w1, b1, w2, b2)
    assert out.shape == (B, OUT_DIM), out.shape
    assert jnp.allclose(out, ref, atol=1e-2, rtol=1e-2), "mismatch vs reference"

    print("KERNEL_OK")
</pallas_src>

<mosaic_0001>
module attributes {stable_mosaic.version = 11 : i64} {
  func.func @mlp_kernel(%arg0: i32, %arg1: memref<2x2560xf32, #tpu.memory_space<vmem>>, %arg2: memref<2560x512xbf16, #tpu.memory_space<vmem>>, %arg3: memref<1x512xf32, #tpu.memory_space<vmem>>, %arg4: memref<512x2560xbf16, #tpu.memory_space<vmem>>, %arg5: memref<1x2x2560xf32, #tpu.memory_space<vmem>>) attributes {dimension_semantics = [#tpu.dimension_semantics<parallel>], iteration_bounds = array<i64: 2>, scalar_prefetch = 0 : i64, scratch_operands = 0 : i64, tpu.core_type = #tpu.core_type<tc>, window_params = [{pipeline_mode = #tpu.pipeline_mode<synchronous>, transform_indices = @transform_0, window_bounds = array<i64: 2, 2560>}, {transform_indices = @transform_1, window_bounds = array<i64: 2560, 512>}, {transform_indices = @transform_2, window_bounds = array<i64: 1, 512>}, {transform_indices = @transform_3, window_bounds = array<i64: 512, 2560>}, {transform_indices = @transform_4, window_bounds = array<i64: 1, 2, 2560>}]} {
    %c0 = arith.constant 0 : index
    %c0_0 = arith.constant 0 : index
    %0 = vector.load %arg1[%c0, %c0_0] : memref<2x2560xf32, #tpu.memory_space<vmem>>, vector<2x2560xf32>
    %1 = arith.truncf %0 : vector<2x2560xf32> to vector<2x2560xbf16>
    %c0_1 = arith.constant 0 : index
    %c0_2 = arith.constant 0 : index
    %2 = vector.load %arg2[%c0_1, %c0_2] : memref<2560x512xbf16, #tpu.memory_space<vmem>>, vector<2560x512xbf16>
    %cst = arith.constant dense<0.000000e+00> : vector<2x512xf32>
    %3 = tpu.matmul %1, %2, %cst {dimension_numbers = #tpu.dot_dimension_numbers<[1], [0], [0], [1], [0, 0, 1, 1], [], []>} : vector<2x2560xbf16>, vector<2560x512xbf16>, vector<2x512xf32> -> vector<2x512xf32>
    %c0_3 = arith.constant 0 : index
    %c0_4 = arith.constant 0 : index
    %4 = vector.load %arg3[%c0_3, %c0_4] : memref<1x512xf32, #tpu.memory_space<vmem>>, vector<1x512xf32>
    %5 = vector.broadcast %4 : vector<1x512xf32> to vector<2x512xf32>
    %6 = arith.addf %3, %5 : vector<2x512xf32>
    %cst_5 = arith.constant 0.000000e+00 : f32
    %7 = vector.broadcast %cst_5 : f32 to vector<2x512xf32>
    %8 = arith.cmpf ogt, %6, %7 : vector<2x512xf32>
    %cst_6 = arith.constant 2.000000e-01 : f32
    %9 = vector.broadcast %cst_6 : f32 to vector<2x512xf32>
    %10 = arith.mulf %9, %6 : vector<2x512xf32>
    %11 = arith.select %8, %6, %10 : vector<2x512xi1>, vector<2x512xf32>
    %12 = arith.truncf %11 : vector<2x512xf32> to vector<2x512xbf16>
    %c0_7 = arith.constant 0 : index
    %c0_8 = arith.constant 0 : index
    %13 = vector.load %arg4[%c0_7, %c0_8] : memref<512x2560xbf16, #tpu.memory_space<vmem>>, vector<512x2560xbf16>
    %cst_9 = arith.constant dense<0.000000e+00> : vector<2x2560xf32>
    %14 = tpu.matmul %12, %13, %cst_9 {dimension_numbers = #tpu.dot_dimension_numbers<[1], [0], [0], [1], [0, 0, 1, 1], [], []>} : vector<2x512xbf16>, vector<512x2560xbf16>, vector<2x2560xf32> -> vector<2x2560xf32>
    %c0_10 = arith.constant 0 : index
    %c0_11 = arith.constant 0 : index
    %c0_12 = arith.constant 0 : index
    %15 = vector.load %arg5[%c0_10, %c0_11, %c0_12] : memref<1x2x2560xf32, #tpu.memory_space<vmem>>, vector<1x2x2560xf32>
    %16 = vector.shape_cast %15 : vector<1x2x2560xf32> to vector<2x2560xf32>
    %17 = vector.shape_cast %14 : vector<2x2560xf32> to vector<1x2x2560xf32>
    tpu.vector_store %arg5[%c0_10, %c0_11, %c0_12], %17 {strides = array<i32>} : memref<1x2x2560xf32, #tpu.memory_space<vmem>>, vector<1x2x2560xf32>,
    return
  }
  func.func @transform_0(%arg0: i32) -> (i32, i32) {
    %c0_i32 = arith.constant 0 : i32
    %c0_i32_0 = arith.constant 0 : i32
    %c0_i32_1 = arith.constant 0 : i32
    return %c0_i32, %c0_i32_0 : i32, i32
  }
  func.func @transform_1(%arg0: i32) -> (i32, i32) {
    %c0_i32 = arith.constant 0 : i32
    %c0_i32_0 = arith.constant 0 : i32
    return %c0_i32, %arg0 : i32, i32
  }
  func.func @transform_2(%arg0: i32) -> (i32, i32) {
    %c0_i32 = arith.constant 0 : i32
    %c0_i32_0 = arith.constant 0 : i32
    return %c0_i32, %arg0 : i32, i32
  }
  func.func @transform_3(%arg0: i32) -> (i32, i32) {
    %c0_i32 = arith.constant 0 : i32
    %c0_i32_0 = arith.constant 0 : i32
    return %arg0, %c0_i32 : i32, i32
  }
  func.func @transform_4(%arg0: i32) -> (i32, i32, i32) {
    %c0_i32 = arith.constant 0 : i32
    %c0_i32_0 = arith.constant 0 : i32
    %c0_i32_1 = arith.constant 0 : i32
    return %arg0, %c0_i32, %c0_i32_0 : i32, i32, i32
  }
}

</mosaic_0001>

<llo_original>
// kernel: tpu_custom_call.1
$region0: #{tpu_custom_call.1}
  #allocation0 [shape = 'u32[]', space=smem, size = 0x4, offset = 0x4, fixed_abs, tag = 'smem constant byte address 0x4 - core index']
  #allocation1 [shape = 'u32[144,128]{1,0:T(1,128)}', space=vmem, size = 0x12000, scoped, tag = 'internal scratch']
  %s0 = inlined_call_operand.hbm [shape: f32[2,2560], index: 0, kind: input, shape index: {}]
  %s1 = inlined_call_operand.hbm [shape: bf16[2560,1024], index: 1, kind: input, shape index: {}]
  %s2 = inlined_call_operand.hbm [shape: f32[1,1024], index: 2, kind: input, shape index: {}]
  %s3 = inlined_call_operand.hbm [shape: bf16[1024,2560], index: 3, kind: input, shape index: {}]
  %s4 = inlined_call_operand.hbm [shape: f32[2,2,2560], index: 4, kind: output, shape index: {}]
  %s5 = sld [smem:[#allocation0]]
  $region65: #{tpu_custom_call.1} parent=0
    _
  %s7 = ssub.s32 1, %s5
  %s8 = scalar_select 0, %s7, %s5
  $region1: #{tpu_custom_call.1} parent=0
    #allocation2 [shape = 'u8[20480]{0}', space=vmem, size = 0x5000, scoped, tag = 'input window, operand 0, single buffered']
    #allocation3 [shape = 's32[2]{0}', space=sflag, size = 0x8, scoped, tag = 'scoped memory for tpu_custom_call.1']
    #allocation4 [shape = 's32[2]{0}', space=sflag, size = 0x8, scoped, tag = 'scoped memory for tpu_custom_call.1']
    #allocation5 [shape = 'u8[5242880]{0}', space=vmem, size = 0x500000, scoped, tag = 'input window, operand 1']
    #allocation6 [shape = 's32[2]{0}', space=sflag, size = 0x8, scoped, tag = 'scoped memory for tpu_custom_call.1']
    #allocation7 [shape = 'u8[4096]{0}', space=vmem, size = 0x1000, scoped, tag = 'input window, operand 2']
    #allocation8 [shape = 'u8[5242880]{0}', space=vmem, size = 0x500000, scoped, tag = 'input window, operand 3']
    #allocation9 [shape = 's32[2]{0}', space=sflag, size = 0x8, scoped, tag = 'scoped memory for tpu_custom_call.1']
    #allocation10 [shape = 'u8[40960]{0}', space=vmem, size = 0xa000, scoped, tag = 'output window, operand 0']
    %9 = vsyncpa [#allocation3], 0
    %10 = vsyncpa [#allocation6], 0
    %s11 = scalar_lea.sflag [#allocation6], 1
    %12 = vsyncpa %s11, 0
    %13 = vsyncpa [#allocation9], 0
    %s14 = scalar_lea.sflag [#allocation9], 1
    %15 = vsyncpa %s14, 0
    %16 = vsyncpa [#allocation4], 0
    %s17 = scalar_lea.sflag [#allocation4], 1
    %18 = vsyncpa %s17, 0
    loop: start=0, step=1, limit=4
    $region2: #{tpu_custom_call.1} parent=1 // loop_pre_header
      _
    $region3: #{tpu_custom_call.1} parent=1 // loop_header
      %s20 = sphi 0, %s24
      %p21 = scmp.ge.s32.totalorder %s20, 4
      %s28 = sphi 0, %s28
      %s30 = sphi 0, %s28
      %s31 = sphi 0, %s30
      %s45 = sphi 0, %s31
      %s51 = sphi 0, %s53
      %s54 = sphi 0, %s51
      %s55 = sphi 0, %s54
      %s71 = sphi 0, %s55
      %s77 = sphi 0, %s79
      %s80 = sphi 0, %s77
      %s81 = sphi 0, %s80
      %s97 = sphi 0, %s81
      %s103 = sphi 0, %s105
      %s106 = sphi 0, %s103
      %s107 = sphi 0, %s106
      %s123 = sphi 0, %s107
      %s129 = sphi 0, %s131
      %s132 = sphi 0, %s129
      %s133 = sphi 0, %s132
      %s149 = sphi 0, %s133
    $region4: #{tpu_custom_call.1} parent=1 // loop_header_branch
      %23 = sbr.rel (%p21) target = $region8
    $region5: #{tpu_custom_call.1} parent=1 // loop_body
      %s25 = ssub.s32 %s20, 1
      %s26 = ssub.s32 %s20, 2
      %s27 = sadd.s32 %s20, 1
      %s29 = sadd.s32 %s28, 1
      %p32 = scmp.eq.s32.totalorder %s20, 1
      %p33 = scmp.ne.s32.totalorder %s28, %s30
      %p34 = scmp.eq.s32.totalorder %s20, 0
      %p35 = por %p33, %p34
      %p36 = scmp.ne.s32.totalorder %s28, %s30
      %p37 = scmp.eq.s32.totalorder %s25, 1
      %p38 = por %p36, %p37
      %p39 = scmp.ne.s32.totalorder %s30, %s31
      %p40 = scmp.eq.s32.totalorder %s25, 0
      %p41 = por %p39, %p40
      %p42 = scmp.ne.s32.totalorder %s30, %s31
      %p43 = scmp.eq.s32.totalorder %s26, 1
      %p44 = por %p42, %p43
      %p46 = scmp.ne.s32.totalorder %s31, %s45
      %p47 = scmp.eq.s32.totalorder %s26, 0
      %p48 = por %p46, %p47
      %s49 = ssub.s32 %s20, %s27
      %p50 = scmp.eq.s32.totalorder %s49, 0
      %s52 = sadd.s32 %s51, 1
      %s53 = scalar_select %p50, %s51, %s52
      %p56 = pneg %p50
      %p57 = scmp.eq.s32.totalorder %s20, 1
      %p58 = por %p56, %p57
      %p59 = scmp.ne.s32.totalorder %s51, %s54
      %p60 = scmp.eq.s32.totalorder %s20, 0
      %p61 = por %p59, %p60
      %p62 = scmp.ne.s32.totalorder %s51, %s54
      %p63 = scmp.eq.s32.totalorder %s25, 1
      %p64 = por %p62, %p63
      %p65 = scmp.ne.s32.totalorder %s54, %s55
      %p66 = scmp.eq.s32.totalorder %s25, 0
      %p67 = por %p65, %p66
      %p68 = scmp.ne.s32.totalorder %s54, %s55
      %p69 = scmp.eq.s32.totalorder %s26, 1
      %p70 = por %p68, %p69
      %p72 = scmp.ne.s32.totalorder %s55, %s71
      %p73 = scmp.eq.s32.totalorder %s26, 0
      %p74 = por %p72, %p73
      %s75 = ssub.s32 %s20, %s27
      %p76 = scmp.eq.s32.totalorder %s75, 0
      %s78 = sadd.s32 %s77, 1
      %s79 = scalar_select %p76, %s77, %s78
      %p82 = pneg %p76
      %p83 = scmp.eq.s32.totalorder %s20, 1
      %p84 = por %p82, %p83
      %p85 = scmp.ne.s32.totalorder %s77, %s80
      %p86 = scmp.eq.s32.totalorder %s20, 0
      %p87 = por %p85, %p86
      %p88 = scmp.ne.s32.totalorder %s77, %s80
      %p89 = scmp.eq.s32.totalorder %s25, 1
      %p90 = por %p88, %p89
      %p91 = scmp.ne.s32.totalorder %s80, %s81
      %p92 = scmp.eq.s32.totalorder %s25, 0
      %p93 = por %p91, %p92
      %p94 = scmp.ne.s32.totalorder %s80, %s81
      %p95 = scmp.eq.s32.totalorder %s26, 1
      %p96 = por %p94, %p95
      %p98 = scmp.ne.s32.totalorder %s81, %s97
      %p99 = scmp.eq.s32.totalorder %s26, 0
      %p100 = por %p98, %p99
      %s101 = ssub.s32 %s20, %s27
      %p102 = scmp.eq.s32.totalorder %s101, 0
      %s104 = sadd.s32 %s103, 1
      %s105 = scalar_select %p102, %s103, %s104
      %p108 = pneg %p102
      %p109 = scmp.eq.s32.totalorder %s20, 1
      %p110 = por %p108, %p109
      %p111 = scmp.ne.s32.totalorder %s103, %s106
      %p112 = scmp.eq.s32.totalorder %s20, 0
      %p113 = por %p111, %p112
      %p114 = scmp.ne.s32.totalorder %s103, %s106
      %p115 = scmp.eq.s32.totalorder %s25, 1
      %p116 = por %p114, %p115
      %p117 = scmp.ne.s32.totalorder %s106, %s107
      %p118 = scmp.eq.s32.totalorder %s25, 0
      %p119 = por %p117, %p118
      %p120 = scmp.ne.s32.totalorder %s106, %s107
      %p121 = scmp.eq.s32.totalorder %s26, 1
      %p122 = por %p120, %p121
      %p124 = scmp.ne.s32.totalorder %s107, %s123
      %p125 = scmp.eq.s32.totalorder %s26, 0
      %p126 = por %p124, %p125
      %s127 = ssub.s32 %s20, %s27
      %p128 = scmp.eq.s32.totalorder %s127, 0
      %s130 = sadd.s32 %s129, 1
      %s131 = scalar_select %p128, %s129, %s130
      %p134 = pneg %p128
      %p135 = scmp.eq.s32.totalorder %s20, 1
      %p136 = por %p134, %p135
      %p137 = scmp.ne.s32.totalorder %s129, %s132
      %p138 = scmp.eq.s32.totalorder %s20, 0
      %p139 = por %p137, %p138
      %p140 = scmp.ne.s32.totalorder %s129, %s132
      %p141 = scmp.eq.s32.totalorder %s25, 1
      %p142 = por %p140, %p141
      %p143 = scmp.ne.s32.totalorder %s132, %s133
      %p144 = scmp.eq.s32.totalorder %s25, 0
      %p145 = por %p143, %p144
      %p146 = scmp.ne.s32.totalorder %s132, %s133
      %p147 = scmp.eq.s32.totalorder %s26, 1
      %p148 = por %p146, %p147
      %p150 = scmp.ne.s32.totalorder %s133, %s149
      %p151 = scmp.eq.s32.totalorder %s26, 0
      %p152 = por %p150, %p151
      %p153 = scmp.le.s32.totalorder 1, %s20
      %p154 = scmp.lt.s32.totalorder %s20, 3
      %p155 = pnand %p153, %p154
      %p156 = pneg %p155
      // Predicated region
      $region9: #{tpu_custom_call.1} parent=5 // pred_check
        _
      $region10: #{tpu_custom_call.1} parent=5 // pred_check_branch
        %158 = sbr.rel (%p155) target = $region12
      $region11: #{tpu_custom_call.1} parent=5 // pred_region
        %s159 = ssub.s32 %s20, 1
        // Predicated region
        $region13: #{tpu_custom_call.1} parent=11 // pred_check
          %p160 = pneg %p41
        $region14: #{tpu_custom_call.1} parent=11 // pred_check_branch
          %162 = sbr.rel (%p160) target = $region16
        $region15: #{tpu_custom_call.1} parent=11 // pred_region
          %s164 = ssub.s32 640, 640
          %165 = vsyncadd [#allocation3], %s164
          %s167 = sshll.u32 [#allocation2], 4
          %s168 = int_to_ptr.vmem [resolvable:$true] %s167
          %170 = dma.hbm_to_vmem [thread:$0]  %s0, 640, %s168, [#allocation3]
        $region16: #{tpu_custom_call.1} parent=11 // pred_fallthru
          _
      $region12: #{tpu_custom_call.1} parent=5 // pred_fallthru
        _
      %p171 = scmp.lt.s32.totalorder %s20, 2
      // Predicated region
      $region17: #{tpu_custom_call.1} parent=5 // pred_check
        %p172 = pneg %p171
      $region18: #{tpu_custom_call.1} parent=5 // pred_check_branch
        %174 = sbr.rel (%p172) target = $region20
      $region19: #{tpu_custom_call.1} parent=5 // pred_region
        // Predicated region
        $region21: #{tpu_custom_call.1} parent=19 // pred_check
          %p175 = pneg %p61
        $region22: #{tpu_custom_call.1} parent=19 // pred_check_branch
          %177 = sbr.rel (%p175) target = $region24
        $region23: #{tpu_custom_call.1} parent=19 // pred_region
          %s178 = sand.u32 %s20, 1
          %s179 = scalar_lea.sflag [#allocation6], %s178
          %s180 = sand.u32 %s51, 1
          %s181 = smul.addr %s180, 5120
          %s182 = scalar_lea.vmem [#allocation5], %s181
          %s183 = smul.u32 4, %s20
          %s185 = ssub.s32 81920, 81920
          %186 = vsyncadd %s179, %s185
          %s187 = smul.addr %s183, 64
          %s188 = scalar_lea.hbm %s1, %s187
          %s189 = sshll.u32 %s182, 4
          %s190 = int_to_ptr.vmem [resolvable:$true] %s189
          %195 = dma.hbm_to_vmem [thread:$0]  %s188, 81920, %s190, %s179, 512, 256, 16
        $region24: #{tpu_custom_call.1} parent=19 // pred_fallthru
          _
        // Predicated region
        $region25: #{tpu_custom_call.1} parent=19 // pred_check
          %p196 = pneg %p87
        $region26: #{tpu_custom_call.1} parent=19 // pred_check_branch
          %198 = sbr.rel (%p196) target = $region28
        $region27: #{tpu_custom_call.1} parent=19 // pred_region
          %s199 = sand.u32 %s20, 1
          %s200 = scalar_lea.sflag [#allocation6], %s199
          %s201 = sand.u32 %s77, 1
          %s202 = smul.addr %s201, 4
          %s203 = scalar_lea.vmem [#allocation7], %s202
          %s204 = smul.u32 4, %s20
          %s206 = ssub.s32 64, 64
          %207 = vsyncadd %s200, %s206
          %s208 = smul.addr %s204, 16
          %s209 = scalar_lea.hbm %s2, %s208
          %s211 = sshll.u32 %s203, 4
          %s212 = int_to_ptr.vmem [resolvable:$true] %s211
          %214 = dma.hbm_to_vmem [thread:$0]  %s209, 64, %s212, %s200
        $region28: #{tpu_custom_call.1} parent=19 // pred_fallthru
          _
        // Predicated region
        $region29: #{tpu_custom_call.1} parent=19 // pred_check
          %p215 = pneg %p113
        $region30: #{tpu_custom_call.1} parent=19 // pred_check_branch
          %217 = sbr.rel (%p215) target = $region32
        $region31: #{tpu_custom_call.1} parent=19 // pred_region
          %s218 = sand.u32 %s103, 1
          %s219 = scalar_lea.sflag [#allocation9], %s218
          %s220 = sand.u32 %s103, 1
          %s221 = smul.addr %s220, 5120
          %s222 = scalar_lea.vmem [#allocation8], %s221
          %s223 = smul.u32 64, %s20
          %s225 = ssub.s32 81920, 81920
          %226 = vsyncadd %s219, %s225
          %s227 = smul.addr %s223, 20
          %s228 = smul.addr %s227, 64
          %s229 = scalar_lea.hbm %s3, %s228
          %s230 = sshll.u32 %s222, 4
          %s231 = int_to_ptr.vmem [resolvable:$true] %s230
          %236 = dma.hbm_to_vmem [thread:$0]  %s229, 81920, %s231, %s219, 1280, 1280, 80
        $region32: #{tpu_custom_call.1} parent=19 // pred_fallthru
          _
      $region20: #{tpu_custom_call.1} parent=5 // pred_fallthru
        _
      %p237 = scmp.le.s32.totalorder 1, %s20
      %p238 = scmp.lt.s32.totalorder %s20, 3
      %p239 = pnand %p237, %p238
      %p240 = pneg %p239
      // Predicated region
      $region33: #{tpu_custom_call.1} parent=5 // pred_check
        _
      $region34: #{tpu_custom_call.1} parent=5 // pred_check_branch
        %242 = sbr.rel (%p239) target = $region36
      $region35: #{tpu_custom_call.1} parent=5 // pred_region
        %s243 = ssub.s32 %s20, 1
        // Predicated region
        $region37: #{tpu_custom_call.1} parent=35 // pred_check
          %p244 = pneg %p41
        $region38: #{tpu_custom_call.1} parent=35 // pred_check_branch
          %246 = sbr.rel (%p244) target = $region40
        $region39: #{tpu_custom_call.1} parent=35 // pred_region
          %247 = dma.done [#allocation3], 640
        $region40: #{tpu_custom_call.1} parent=35 // pred_fallthru
          _
        %s248 = sand.u32 %s25, 1
        %s249 = scalar_lea.sflag [#allocation6], %s248
        %s250 = sand.u32 %s54, 1
        %s251 = smul.addr %s250, 5120
        %s252 = scalar_lea.vmem [#allocation5], %s251
        // Predicated region
        $region41: #{tpu_custom_call.1} parent=35 // pred_check
          %p253 = pneg %p67
        $region42: #{tpu_custom_call.1} parent=35 // pred_check_branch
          %255 = sbr.rel (%p253) target = $region44
        $region43: #{tpu_custom_call.1} parent=35 // pred_region
          %256 = dma.done %s249, 81920
        $region44: #{tpu_custom_call.1} parent=35 // pred_fallthru
          _
        %s257 = sand.u32 %s25, 1
        %s258 = scalar_lea.sflag [#allocation6], %s257
        %s259 = sand.u32 %s80, 1
        %s260 = smul.addr %s259, 4
        %s261 = scalar_lea.vmem [#allocation7], %s260
        // Predicated region
        $region45: #{tpu_custom_call.1} parent=35 // pred_check
          %p262 = pneg %p93
        $region46: #{tpu_custom_call.1} parent=35 // pred_check_branch
          %264 = sbr.rel (%p262) target = $region48
        $region47: #{tpu_custom_call.1} parent=35 // pred_region
          %265 = dma.done %s258, 64
        $region48: #{tpu_custom_call.1} parent=35 // pred_fallthru
          _
        %s266 = sand.u32 %s106, 1
        %s267 = scalar_lea.sflag [#allocation9], %s266
        %s268 = sand.u32 %s106, 1
        %s269 = smul.addr %s268, 5120
        %s270 = scalar_lea.vmem [#allocation8], %s269
        // Predicated region
        $region49: #{tpu_custom_call.1} parent=35 // pred_check
          %p271 = pneg %p119
        $region50: #{tpu_custom_call.1} parent=35 // pred_check_branch
          %273 = sbr.rel (%p271) target = $region52
        $region51: #{tpu_custom_call.1} parent=35 // pred_region
          %274 = dma.done %s267, 81920
        $region52: #{tpu_custom_call.1} parent=35 // pred_fallthru
          _
        %p275 = pneg %p41
        %p276 = pneg %p38
        %s277 = sand.u32 %s25, 1
        %s278 = scalar_lea.sflag [#allocation6], %s277
        %s279 = sand.u32 %s54, 1
        %s280 = smul.addr %s279, 5120
        %s281 = scalar_lea.vmem [#allocation5], %s280
        %p282 = pneg %p67
        %p283 = pneg %p64
        %s284 = sand.u32 %s25, 1
        %s285 = scalar_lea.sflag [#allocation6], %s284
        %s286 = sand.u32 %s80, 1
        %s287 = smul.addr %s286, 4
        %s288 = scalar_lea.vmem [#allocation7], %s287
        %p289 = pneg %p93
        %p290 = pneg %p90
        %s291 = sand.u32 %s106, 1
        %s292 = scalar_lea.sflag [#allocation9], %s291
        %s293 = sand.u32 %s106, 1
        %s294 = smul.addr %s293, 5120
        %s295 = scalar_lea.vmem [#allocation8], %s294
        %p296 = pneg %p119
        %p297 = pneg %p116
        %p298 = pneg %p145
        %p299 = pneg %p142
        %s300 = sand.u32 %s132, 1
        %s301 = scalar_lea.sflag [#allocation4], %s300
        %s302 = sand.u32 %s132, 1
        %s303 = smul.addr %s302, 40
        %s304 = scalar_lea.vmem [#allocation10], %s303
        %s305 = smul.u32 4, %s25
        %s306 = smul.u32 4, %s25
        %s307 = smul.u32 64, %s25
        %v308 = vld [vmem:[#allocation2] sm:$0xff]
        %v309 = vld [vmem:[#allocation2 + $0x8] sm:$0xff]
        %v310 = vld [vmem:[#allocation2 + $0x10] sm:$0xff]
        %v311 = vld [vmem:[#allocation2 + $0x18] sm:$0xff]
        %v312 = vld [vmem:[#allocation2 + $0x20] sm:$0xff]
        %v318 = vcombine.high %v308, %v308
        %v320 = vunpack.c.l.s4 1983009808
        %v321 = vunpack.c.0.s8 %v320
        %v322 = vlaneseq
        %v323 = vshrl.u32 %v322, 7
        %v324 = vsub.s32 %v321, %v323
        %v325 = vrot.slane %v308, %v324
        %v327 = vunpack.c.l.s4 1983009808
        %v328 = vunpack.c.0.s8 %v327
        %v329 = vlaneseq
        %v330 = vshrl.u32 %v329, 7
        %v331 = vsub.s32 %v328, %v330
        %v332 = vrot.slane %v318, %v331
        %v333 = vcombine.high %v325, %v325
        %v334 = vcombine.high %v332, %v332
        %v335 = vcombine.high %v309, %v309
        %v337 = vunpack.c.l.s4 1983009808
        %v338 = vunpack.c.0.s8 %v337
        %v339 = vlaneseq
        %v340 = vshrl.u32 %v339, 7
        %v341 = vsub.s32 %v338, %v340
        %v342 = vrot.slane %v309, %v341
        %v344 = vunpack.c.l.s4 1983009808
        %v345 = vunpack.c.0.s8 %v344
        %v346 = vlaneseq
        %v347 = vshrl.u32 %v346, 7
        %v348 = vsub.s32 %v345, %v347
        %v349 = vrot.slane %v335, %v348
        %v350 = vcombine.high %v342, %v342
        %v351 = vcombine.high %v349, %v349
        %v352 = vcombine.high %v310, %v310
        %v354 = vunpack.c.l.s4 1983009808
        %v355 = vunpack.c.0.s8 %v354
        %v356 = vlaneseq
        %v357 = vshrl.u32 %v356, 7
        %v358 = vsub.s32 %v355, %v357
        %v359 = vrot.slane %v310, %v358
        %v361 = vunpack.c.l.s4 1983009808
        %v362 = vunpack.c.0.s8 %v361
        %v363 = vlaneseq
        %v364 = vshrl.u32 %v363, 7
        %v365 = vsub.s32 %v362, %v364
        %v366 = vrot.slane %v352, %v365
        %v367 = vcombine.high %v359, %v359
        %v368 = vcombine.high %v366, %v366
        %v369 = vcombine.high %v311, %v311
        %v371 = vunpack.c.l.s4 1983009808
        %v372 = vunpack.c.0.s8 %v371
        %v373 = vlaneseq
        %v374 = vshrl.u32 %v373, 7
        %v375 = vsub.s32 %v372, %v374
        %v376 = vrot.slane %v311, %v375
        %v378 = vunpack.c.l.s4 1983009808
        %v379 = vunpack.c.0.s8 %v378
        %v380 = vlaneseq
        %v381 = vshrl.u32 %v380, 7
        %v382 = vsub.s32 %v379, %v381
        %v383 = vrot.slane %v369, %v382
        %v384 = vcombine.high %v376, %v376
        %v385 = vcombine.high %v383, %v383
        %v386 = vcombine.high %v312, %v312
        %v388 = vunpack.c.l.s4 1983009808
        %v389 = vunpack.c.0.s8 %v388
        %v390 = vlaneseq
        %v391 = vshrl.u32 %v390, 7
        %v392 = vsub.s32 %v389, %v391
        %v393 = vrot.slane %v312, %v392
        %v395 = vunpack.c.l.s4 1983009808
        %v396 = vunpack.c.0.s8 %v395
        %v397 = vlaneseq
        %v398 = vshrl.u32 %v397, 7
        %v399 = vsub.s32 %v396, %v398
        %v400 = vrot.slane %v386, %v399
        %v401 = vcombine.high %v393, %v393
        %v402 = vcombine.high %v400, %v400
        %v423 = vpack.c.bf16 %v325, %v325
        %v424 = vpack.c.bf16 %v333, %v333
        %v425 = vpack.c.bf16 %v332, %v332
        %v426 = vpack.c.bf16 %v334, %v334
        %v427 = vpack.c.bf16 %v342, %v342
        %v428 = vpack.c.bf16 %v350, %v350
        %v429 = vpack.c.bf16 %v349, %v349
        %v430 = vpack.c.bf16 %v351, %v351
        %v431 = vpack.c.bf16 %v359, %v359
        %v432 = vpack.c.bf16 %v367, %v367
        %v433 = vpack.c.bf16 %v366, %v366
        %v434 = vpack.c.bf16 %v368, %v368
        %v435 = vpack.c.bf16 %v376, %v376
        %v436 = vpack.c.bf16 %v384, %v384
        %v437 = vpack.c.bf16 %v383, %v383
        %v438 = vpack.c.bf16 %v385, %v385
        %v439 = vpack.c.bf16 %v393, %v393
        %v440 = vpack.c.bf16 %v401, %v401
        %v441 = vpack.c.bf16 %v400, %v400
        %v442 = vpack.c.bf16 %v402, %v402
        %v443 = vld [vmem:[%s252] sm:$0xff]
        %v444 = vld [vmem:[%s252 + $0x8] sm:$0xff]
        %v445 = vld [vmem:[%s252 + $0x10] sm:$0xff]
        %v446 = vld [vmem:[%s252 + $0x18] sm:$0xff]
        %v447 = vld [vmem:[%s252 + $0x20] sm:$0xff]
        %v448 = vld [vmem:[%s252 + $0x28] sm:$0xff]
        %v449 = vld [vmem:[%s252 + $0x30] sm:$0xff]
        %v450 = vld [vmem:[%s252 + $0x38] sm:$0xff]
        %v451 = vld [vmem:[%s252 + $0x40] sm:$0xff]
        %v452 = vld [vmem:[%s252 + $0x48] sm:$0xff]
        %v453 = vld [vmem:[%s252 + $0x50] sm:$0xff]
        %v454 = vld [vmem:[%s252 + $0x58] sm:$0xff]
        %v455 = vld [vmem:[%s252 + $0x60] sm:$0xff]
        %v456 = vld [vmem:[%s252 + $0x68] sm:$0xff]
        %v457 = vld [vmem:[%s252 + $0x70] sm:$0xff]
        %v458 = vld [vmem:[%s252 + $0x78] sm:$0xff]
        %v459 = vld [vmem:[%s252 + $0x80] sm:$0xff]
        %v460 = vld [vmem:[%s252 + $0x88] sm:$0xff]
        %v461 = vld [vmem:[%s252 + $0x90] sm:$0xff]
        %v462 = vld [vmem:[%s252 + $0x98] sm:$0xff]
        %v463 = vld [vmem:[%s252 + $0xa0] sm:$0xff]
        %v464 = vld [vmem:[%s252 + $0xa8] sm:$0xff]
        %v465 = vld [vmem:[%s252 + $0xb0] sm:$0xff]
        %v466 = vld [vmem:[%s252 + $0xb8] sm:$0xff]
        %v467 = vld [vmem:[%s252 + $0xc0] sm:$0xff]
        %v468 = vld [vmem:[%s252 + $0xc8] sm:$0xff]
        %v469 = vld [vmem:[%s252 + $0xd0] sm:$0xff]
        %v470 = vld [vmem:[%s252 + $0xd8] sm:$0xff]
        %v471 = vld [vmem:[%s252 + $0xe0] sm:$0xff]
        %v472 = vld [vmem:[%s252 + $0xe8] sm:$0xff]
        %v473 = vld [vmem:[%s252 + $0xf0] sm:$0xff]
        %v474 = vld [vmem:[%s252 + $0xf8] sm:$0xff]
        %v475 = vld [vmem:[%s252 + $0x100] sm:$0xff]
        %v476 = vld [vmem:[%s252 + $0x108] sm:$0xff]
        %v477 = vld [vmem:[%s252 + $0x110] sm:$0xff]
        %v478 = vld [vmem:[%s252 + $0x118] sm:$0xff]
        %v479 = vld [vmem:[%s252 + $0x120] sm:$0xff]
        %v480 = vld [vmem:[%s252 + $0x128] sm:$0xff]
        %v481 = vld [vmem:[%s252 + $0x130] sm:$0xff]
        %v482 = vld [vmem:[%s252 + $0x138] sm:$0xff]
        %v483 = vld [vmem:[%s252 + $0x140] sm:$0xff]
        %v484 = vld [vmem:[%s252 + $0x148] sm:$0xff]
        %v485 = vld [vmem:[%s252 + $0x150] sm:$0xff]
        %v486 = vld [vmem:[%s252 + $0x158] sm:$0xff]
        %v487 = vld [vmem:[%s252 + $0x160] sm:$0xff]
        %v488 = vld [vmem:[%s252 + $0x168] sm:$0xff]
        %v489 = vld [vmem:[%s252 + $0x170] sm:$0xff]
        %v490 = vld [vmem:[%s252 + $0x178] sm:$0xff]
        %v491 = vld [vmem:[%s252 + $0x180] sm:$0xff]
        %v492 = vld [vmem:[%s252 + $0x188] sm:$0xff]
        %v493 = vld [vmem:[%s252 + $0x190] sm:$0xff]
        %v494 = vld [vmem:[%s252 + $0x198] sm:$0xff]
        %v495 = vld [vmem:[%s252 + $0x1a0] sm:$0xff]
        %v496 = vld [vmem:[%s252 + $0x1a8] sm:$0xff]
        %v497 = vld [vmem:[%s252 + $0x1b0] sm:$0xff]
        %v498 = vld [vmem:[%s252 + $0x1b8] sm:$0xff]
        %v499 = vld [vmem:[%s252 + $0x1c0] sm:$0xff]
        %v500 = vld [vmem:[%s252 + $0x1c8] sm:$0xff]
        %v501 = vld [vmem:[%s252 + $0x1d0] sm:$0xff]
        %v502 = vld [vmem:[%s252 + $0x1d8] sm:$0xff]
        %v503 = vld [vmem:[%s252 + $0x1e0] sm:$0xff]
        %v504 = vld [vmem:[%s252 + $0x1e8] sm:$0xff]
        %v505 = vld [vmem:[%s252 + $0x1f0] sm:$0xff]
        %v506 = vld [vmem:[%s252 + $0x1f8] sm:$0xff]
        %v507 = vld [vmem:[%s252 + $0x200] sm:$0xff]
        %v508 = vld [vmem:[%s252 + $0x208] sm:$0xff]
        %v509 = vld [vmem:[%s252 + $0x210] sm:$0xff]
        %v510 = vld [vmem:[%s252 + $0x218] sm:$0xff]
        %v511 = vld [vmem:[%s252 + $0x220] sm:$0xff]
        %v512 = vld [vmem:[%s252 + $0x228] sm:$0xff]
        %v513 = vld [vmem:[%s252 + $0x230] sm:$0xff]
        %v514 = vld [vmem:[%s252 + $0x238] sm:$0xff]
        %v515 = vld [vmem:[%s252 + $0x240] sm:$0xff]
        %v516 = vld [vmem:[%s252 + $0x248] sm:$0xff]
        %v517 = vld [vmem:[%s252 + $0x250] sm:$0xff]
        %v518 = vld [vmem:[%s252 + $0x258] sm:$0xff]
        %v519 = vld [vmem:[%s252 + $0x260] sm:$0xff]
        %v520 = vld [vmem:[%s252 + $0x268] sm:$0xff]
        %v521 = vld [vmem:[%s252 + $0x270] sm:$0xff]
        %v522 = vld [vmem:[%s252 + $0x278] sm:$0xff]
        %v523 = vld [vmem:[%s252 + $0x280] sm:$0xff]
        %v524 = vld [vmem:[%s252 + $0x288] sm:$0xff]
        %v525 = vld [vmem:[%s252 + $0x290] sm:$0xff]
        %v526 = vld [vmem:[%s252 + $0x298] sm:$0xff]
        %v527 = vld [vmem:[%s252 + $0x2a0] sm:$0xff]
        %v528 = vld [vmem:[%s252 + $0x2a8] sm:$0xff]
        %v529 = vld [vmem:[%s252 + $0x2b0] sm:$0xff]
        %v530 = vld [vmem:[%s252 + $0x2b8] sm:$0xff]
        %v531 = vld [vmem:[%s252 + $0x2c0] sm:$0xff]
        %v532 = vld [vmem:[%s252 + $0x2c8] sm:$0xff]
        %v533 = vld [vmem:[%s252 + $0x2d0] sm:$0xff]
        %v534 = vld [vmem:[%s252 + $0x2d8] sm:$0xff]
        %v535 = vld [vmem:[%s252 + $0x2e0] sm:$0xff]
        %v536 = vld [vmem:[%s252 + $0x2e8] sm:$0xff]
        %v537 = vld [vmem:[%s252 + $0x2f0] sm:$0xff]
        %v538 = vld [vmem:[%s252 + $0x2f8] sm:$0xff]
        %v539 = vld [vmem:[%s252 + $0x300] sm:$0xff]
        %v540 = vld [vmem:[%s252 + $0x308] sm:$0xff]
        %v541 = vld [vmem:[%s252 + $0x310] sm:$0xff]
        %v542 = vld [vmem:[%s252 + $0x318] sm:$0xff]
        %v543 = vld [vmem:[%s252 + $0x320] sm:$0xff]
        %v544 = vld [vmem:[%s252 + $0x328] sm:$0xff]
        %v545 = vld [vmem:[%s252 + $0x330] sm:$0xff]
        %v546 = vld [vmem:[%s252 + $0x338] sm:$0xff]
        %v547 = vld [vmem:[%s252 + $0x340] sm:$0xff]
        %v548 = vld [vmem:[%s252 + $0x348] sm:$0xff]
        %v549 = vld [vmem:[%s252 + $0x350] sm:$0xff]
        %v550 = vld [vmem:[%s252 + $0x358] sm:$0xff]
        %v551 = vld [vmem:[%s252 + $0x360] sm:$0xff]
        %v552 = vld [vmem:[%s252 + $0x368] sm:$0xff]
        %v553 = vld [vmem:[%s252 + $0x370] sm:$0xff]
        %v554 = vld [vmem:[%s252 + $0x378] sm:$0xff]
        %v555 = vld [vmem:[%s252 + $0x380] sm:$0xff]
        %v556 = vld [vmem:[%s252 + $0x388] sm:$0xff]
        %v557 = vld [vmem:[%s252 + $0x390] sm:$0xff]
        %v558 = vld [vmem:[%s252 + $0x398] sm:$0xff]
        %v559 = vld [vmem:[%s252 + $0x3a0] sm:$0xff]
        %v560 = vld [vmem:[%s252 + $0x3a8] sm:$0xff]
        %v561 = vld [vmem:[%s252 + $0x3b0] sm:$0xff]
        %v562 = vld [vmem:[%s252 + $0x3b8] sm:$0xff]
        %v563 = vld [vmem:[%s252 + $0x3c0] sm:$0xff]
        %v564 = vld [vmem:[%s252 + $0x3c8] sm:$0xff]
        %v565 = vld [vmem:[%s252 + $0x3d0] sm:$0xff]
        %v566 = vld [vmem:[%s252 + $0x3d8] sm:$0xff]
        %v567 = vld [vmem:[%s252 + $0x3e0] sm:$0xff]
        %v568 = vld [vmem:[%s252 + $0x3e8] sm:$0xff]
        %v569 = vld [vmem:[%s252 + $0x3f0] sm:$0xff]
        %v570 = vld [vmem:[%s252 + $0x3f8] sm:$0xff]
        %v571 = vld [vmem:[%s252 + $0x400] sm:$0xff]
        %v572 = vld [vmem:[%s252 + $0x408] sm:$0xff]
        %v573 = vld [vmem:[%s252 + $0x410] sm:$0xff]
        %v574 = vld [vmem:[%s252 + $0x418] sm:$0xff]
        %v575 = vld [vmem:[%s252 + $0x420] sm:$0xff]
        %v576 = vld [vmem:[%s252 + $0x428] sm:$0xff]
        %v577 = vld [vmem:[%s252 + $0x430] sm:$0xff]
        %v578 = vld [vmem:[%s252 + $0x438] sm:$0xff]
        %v579 = vld [vmem:[%s252 + $0x440] sm:$0xff]
        %v580 = vld [vmem:[%s252 + $0x448] sm:$0xff]
        %v581 = vld [vmem:[%s252 + $0x450] sm:$0xff]
        %v582 = vld [vmem:[%s252 + $0x458] sm:$0xff]
        %v583 = vld [vmem:[%s252 + $0x460] sm:$0xff]
        %v584 = vld [vmem:[%s252 + $0x468] sm:$0xff]
        %v585 = vld [vmem:[%s252 + $0x470] sm:$0xff]
        %v586 = vld [vmem:[%s252 + $0x478] sm:$0xff]
        %v587 = vld [vmem:[%s252 + $0x480] sm:$0xff]
        %v588 = vld [vmem:[%s252 + $0x488] sm:$0xff]
        %v589 = vld [vmem:[%s252 + $0x490] sm:$0xff]
        %v590 = vld [vmem:[%s252 + $0x498] sm:$0xff]
        %v591 = vld [vmem:[%s252 + $0x4a0] sm:$0xff]
        %v592 = vld [vmem:[%s252 + $0x4a8] sm:$0xff]
        %v593 = vld [vmem:[%s252 + $0x4b0] sm:$0xff]
        %v594 = vld [vmem:[%s252 + $0x4b8] sm:$0xff]
        %v595 = vld [vmem:[%s252 + $0x4c0] sm:$0xff]
        %v596 = vld [vmem:[%s252 + $0x4c8] sm:$0xff]
        %v597 = vld [vmem:[%s252 + $0x4d0] sm:$0xff]
        %v598 = vld [vmem:[%s252 + $0x4d8] sm:$0xff]
        %v599 = vld [vmem:[%s252 + $0x4e0] sm:$0xff]
        %v600 = vld [vmem:[%s252 + $0x4e8] sm:$0xff]
        %v601 = vld [vmem:[%s252 + $0x4f0] sm:$0xff]
        %v602 = vld [vmem:[%s252 + $0x4f8] sm:$0xff]
        %v603 = vld [vmem:[%s252 + $0x500] sm:$0xff]
        %v604 = vld [vmem:[%s252 + $0x508] sm:$0xff]
        %v605 = vld [vmem:[%s252 + $0x510] sm:$0xff]
        %v606 = vld [vmem:[%s252 + $0x518] sm:$0xff]
        %v607 = vld [vmem:[%s252 + $0x520] sm:$0xff]
        %v608 = vld [vmem:[%s252 + $0x528] sm:$0xff]
        %v609 = vld [vmem:[%s252 + $0x530] sm:$0xff]
        %v610 = vld [vmem:[%s252 + $0x538] sm:$0xff]
        %v611 = vld [vmem:[%s252 + $0x540] sm:$0xff]
        %v612 = vld [vmem:[%s252 + $0x548] sm:$0xff]
        %v613 = vld [vmem:[%s252 + $0x550] sm:$0xff]
        %v614 = vld [vmem:[%s252 + $0x558] sm:$0xff]
        %v615 = vld [vmem:[%s252 + $0x560] sm:$0xff]
        %v616 = vld [vmem:[%s252 + $0x568] sm:$0xff]
        %v617 = vld [vmem:[%s252 + $0x570] sm:$0xff]
        %v618 = vld [vmem:[%s252 + $0x578] sm:$0xff]
        %v619 = vld [vmem:[%s252 + $0x580] sm:$0xff]
        %v620 = vld [vmem:[%s252 + $0x588] sm:$0xff]
        %v621 = vld [vmem:[%s252 + $0x590] sm:$0xff]
        %v622 = vld [vmem:[%s252 + $0x598] sm:$0xff]
        %v623 = vld [vmem:[%s252 + $0x5a0] sm:$0xff]
        %v624 = vld [vmem:[%s252 + $0x5a8] sm:$0xff]
        %v625 = vld [vmem:[%s252 + $0x5b0] sm:$0xff]
        %v626 = vld [vmem:[%s252 + $0x5b8] sm:$0xff]
        %v627 = vld [vmem:[%s252 + $0x5c0] sm:$0xff]
        %v628 = vld [vmem:[%s252 + $0x5c8] sm:$0xff]
        %v629 = vld [vmem:[%s252 + $0x5d0] sm:$0xff]
        %v630 = vld [vmem:[%s252 + $0x5d8] sm:$0xff]
        %v631 = vld [vmem:[%s252 + $0x5e0] sm:$0xff]
        %v632 = vld [vmem:[%s252 + $0x5e8] sm:$0xff]
        %v633 = vld [vmem:[%s252 + $0x5f0] sm:$0xff]
        %v634 = vld [vmem:[%s252 + $0x5f8] sm:$0xff]
        %v635 = vld [vmem:[%s252 + $0x600] sm:$0xff]
        %v636 = vld [vmem:[%s252 + $0x608] sm:$0xff]
        %v637 = vld [vmem:[%s252 + $0x610] sm:$0xff]
        %v638 = vld [vmem:[%s252 + $0x618] sm:$0xff]
        %v639 = vld [vmem:[%s252 + $0x620] sm:$0xff]
        %v640 = vld [vmem:[%s252 + $0x628] sm:$0xff]
        %v641 = vld [vmem:[%s252 + $0x630] sm:$0xff]
        %v642 = vld [vmem:[%s252 + $0x638] sm:$0xff]
        %v643 = vld [vmem:[%s252 + $0x640] sm:$0xff]
        %v644 = vld [vmem:[%s252 + $0x648] sm:$0xff]
        %v645 = vld [vmem:[%s252 + $0x650] sm:$0xff]
        %v646 = vld [vmem:[%s252 + $0x658] sm:$0xff]
        %v647 = vld [vmem:[%s252 + $0x660] sm:$0xff]
        %v648 = vld [vmem:[%s252 + $0x668] sm:$0xff]
        %v649 = vld [vmem:[%s252 + $0x670] sm:$0xff]
        %v650 = vld [vmem:[%s252 + $0x678] sm:$0xff]
        %v651 = vld [vmem:[%s252 + $0x680] sm:$0xff]
        %v652 = vld [vmem:[%s252 + $0x688] sm:$0xff]
        %v653 = vld [vmem:[%s252 + $0x690] sm:$0xff]
        %v654 = vld [vmem:[%s252 + $0x698] sm:$0xff]
        %v655 = vld [vmem:[%s252 + $0x6a0] sm:$0xff]
        %v656 = vld [vmem:[%s252 + $0x6a8] sm:$0xff]
        %v657 = vld [vmem:[%s252 + $0x6b0] sm:$0xff]
        %v658 = vld [vmem:[%s252 + $0x6b8] sm:$0xff]
        %v659 = vld [vmem:[%s252 + $0x6c0] sm:$0xff]
        %v660 = vld [vmem:[%s252 + $0x6c8] sm:$0xff]
        %v661 = vld [vmem:[%s252 + $0x6d0] sm:$0xff]
        %v662 = vld [vmem:[%s252 + $0x6d8] sm:$0xff]
        %v663 = vld [vmem:[%s252 + $0x6e0] sm:$0xff]
        %v664 = vld [vmem:[%s252 + $0x6e8] sm:$0xff]
        %v665 = vld [vmem:[%s252 + $0x6f0] sm:$0xff]
        %v666 = vld [vmem:[%s252 + $0x6f8] sm:$0xff]
        %v667 = vld [vmem:[%s252 + $0x700] sm:$0xff]
        %v668 = vld [vmem:[%s252 + $0x708] sm:$0xff]
        %v669 = vld [vmem:[%s252 + $0x710] sm:$0xff]
        %v670 = vld [vmem:[%s252 + $0x718] sm:$0xff]
        %v671 = vld [vmem:[%s252 + $0x720] sm:$0xff]
        %v672 = vld [vmem:[%s252 + $0x728] sm:$0xff]
        %v673 = vld [vmem:[%s252 + $0x730] sm:$0xff]
        %v674 = vld [vmem:[%s252 + $0x738] sm:$0xff]
        %v675 = vld [vmem:[%s252 + $0x740] sm:$0xff]
        %v676 = vld [vmem:[%s252 + $0x748] sm:$0xff]
        %v677 = vld [vmem:[%s252 + $0x750] sm:$0xff]
        %v678 = vld [vmem:[%s252 + $0x758] sm:$0xff]
        %v679 = vld [vmem:[%s252 + $0x760] sm:$0xff]
        %v680 = vld [vmem:[%s252 + $0x768] sm:$0xff]
        %v681 = vld [vmem:[%s252 + $0x770] sm:$0xff]
        %v682 = vld [vmem:[%s252 + $0x778] sm:$0xff]
        %v683 = vld [vmem:[%s252 + $0x780] sm:$0xff]
        %v684 = vld [vmem:[%s252 + $0x788] sm:$0xff]
        %v685 = vld [vmem:[%s252 + $0x790] sm:$0xff]
        %v686 = vld [vmem:[%s252 + $0x798] sm:$0xff]
        %v687 = vld [vmem:[%s252 + $0x7a0] sm:$0xff]
        %v688 = vld [vmem:[%s252 + $0x7a8] sm:$0xff]
        %v689 = vld [vmem:[%s252 + $0x7b0] sm:$0xff]
        %v690 = vld [vmem:[%s252 + $0x7b8] sm:$0xff]
        %v691 = vld [vmem:[%s252 + $0x7c0] sm:$0xff]
        %v692 = vld [vmem:[%s252 + $0x7c8] sm:$0xff]
        %v693 = vld [vmem:[%s252 + $0x7d0] sm:$0xff]
        %v694 = vld [vmem:[%s252 + $0x7d8] sm:$0xff]
        %v695 = vld [vmem:[%s252 + $0x7e0] sm:$0xff]
        %v696 = vld [vmem:[%s252 + $0x7e8] sm:$0xff]
        %v697 = vld [vmem:[%s252 + $0x7f0] sm:$0xff]
        %v698 = vld [vmem:[%s252 + $0x7f8] sm:$0xff]
        %v699 = vld [vmem:[%s252 + $0x800] sm:$0xff]
        %v700 = vld [vmem:[%s252 + $0x808] sm:$0xff]
        %v701 = vld [vmem:[%s252 + $0x810] sm:$0xff]
        %v702 = vld [vmem:[%s252 + $0x818] sm:$0xff]
        %v703 = vld [vmem:[%s252 + $0x820] sm:$0xff]
        %v704 = vld [vmem:[%s252 + $0x828] sm:$0xff]
        %v705 = vld [vmem:[%s252 + $0x830] sm:$0xff]
        %v706 = vld [vmem:[%s252 + $0x838] sm:$0xff]
        %v707 = vld [vmem:[%s252 + $0x840] sm:$0xff]
        %v708 = vld [vmem:[%s252 + $0x848] sm:$0xff]
        %v709 = vld [vmem:[%s252 + $0x850] sm:$0xff]
        %v710 = vld [vmem:[%s252 + $0x858] sm:$0xff]
        %v711 = vld [vmem:[%s252 + $0x860] sm:$0xff]
        %v712 = vld [vmem:[%s252 + $0x868] sm:$0xff]
        %v713 = vld [vmem:[%s252 + $0x870] sm:$0xff]
        %v714 = vld [vmem:[%s252 + $0x878] sm:$0xff]
        %v715 = vld [vmem:[%s252 + $0x880] sm:$0xff]
        %v716 = vld [vmem:[%s252 + $0x888] sm:$0xff]
        %v717 = vld [vmem:[%s252 + $0x890] sm:$0xff]
        %v718 = vld [vmem:[%s252 + $0x898] sm:$0xff]
        %v719 = vld [vmem:[%s252 + $0x8a0] sm:$0xff]
        %v720 = vld [vmem:[%s252 + $0x8a8] sm:$0xff]
        %v721 = vld [vmem:[%s252 + $0x8b0] sm:$0xff]
        %v722 = vld [vmem:[%s252 + $0x8b8] sm:$0xff]
        %v723 = vld [vmem:[%s252 + $0x8c0] sm:$0xff]
        %v724 = vld [vmem:[%s252 + $0x8c8] sm:$0xff]
        %v725 = vld [vmem:[%s252 + $0x8d0] sm:$0xff]
        %v726 = vld [vmem:[%s252 + $0x8d8] sm:$0xff]
        %v727 = vld [vmem:[%s252 + $0x8e0] sm:$0xff]
        %v728 = vld [vmem:[%s252 + $0x8e8] sm:$0xff]
        %v729 = vld [vmem:[%s252 + $0x8f0] sm:$0xff]
        %v730 = vld [vmem:[%s252 + $0x8f8] sm:$0xff]
        %v731 = vld [vmem:[%s252 + $0x900] sm:$0xff]
        %v732 = vld [vmem:[%s252 + $0x908] sm:$0xff]
        %v733 = vld [vmem:[%s252 + $0x910] sm:$0xff]
        %v734 = vld [vmem:[%s252 + $0x918] sm:$0xff]
        %v735 = vld [vmem:[%s252 + $0x920] sm:$0xff]
        %v736 = vld [vmem:[%s252 + $0x928] sm:$0xff]
        %v737 = vld [vmem:[%s252 + $0x930] sm:$0xff]
        %v738 = vld [vmem:[%s252 + $0x938] sm:$0xff]
        %v739 = vld [vmem:[%s252 + $0x940] sm:$0xff]
        %v740 = vld [vmem:[%s252 + $0x948] sm:$0xff]
        %v741 = vld [vmem:[%s252 + $0x950] sm:$0xff]
        %v742 = vld [vmem:[%s252 + $0x958] sm:$0xff]
        %v743 = vld [vmem:[%s252 + $0x960] sm:$0xff]
        %v744 = vld [vmem:[%s252 + $0x968] sm:$0xff]
        %v745 = vld [vmem:[%s252 + $0x970] sm:$0xff]
        %v746 = vld [vmem:[%s252 + $0x978] sm:$0xff]
        %v747 = vld [vmem:[%s252 + $0x980] sm:$0xff]
        %v748 = vld [vmem:[%s252 + $0x988] sm:$0xff]
        %v749 = vld [vmem:[%s252 + $0x990] sm:$0xff]
        %v750 = vld [vmem:[%s252 + $0x998] sm:$0xff]
        %v751 = vld [vmem:[%s252 + $0x9a0] sm:$0xff]
        %v752 = vld [vmem:[%s252 + $0x9a8] sm:$0xff]
        %v753 = vld [vmem:[%s252 + $0x9b0] sm:$0xff]
        %v754 = vld [vmem:[%s252 + $0x9b8] sm:$0xff]
        %v755 = vld [vmem:[%s252 + $0x9c0] sm:$0xff]
        %v756 = vld [vmem:[%s252 + $0x9c8] sm:$0xff]
        %v757 = vld [vmem:[%s252 + $0x9d0] sm:$0xff]
        %v758 = vld [vmem:[%s252 + $0x9d8] sm:$0xff]
        %v759 = vld [vmem:[%s252 + $0x9e0] sm:$0xff]
        %v760 = vld [vmem:[%s252 + $0x9e8] sm:$0xff]
        %v761 = vld [vmem:[%s252 + $0x9f0] sm:$0xff]
        %v762 = vld [vmem:[%s252 + $0x9f8] sm:$0xff]
        %v763 = vld [vmem:[%s252 + $0xa00] sm:$0xff]
        %v764 = vld [vmem:[%s252 + $0xa08] sm:$0xff]
        %v765 = vld [vmem:[%s252 + $0xa10] sm:$0xff]
        %v766 = vld [vmem:[%s252 + $0xa18] sm:$0xff]
        %v767 = vld [vmem:[%s252 + $0xa20] sm:$0xff]
        %v768 = vld [vmem:[%s252 + $0xa28] sm:$0xff]
        %v769 = vld [vmem:[%s252 + $0xa30] sm:$0xff]
        %v770 = vld [vmem:[%s252 + $0xa38] sm:$0xff]
        %v771 = vld [vmem:[%s252 + $0xa40] sm:$0xff]
        %v772 = vld [vmem:[%s252 + $0xa48] sm:$0xff]
        %v773 = vld [vmem:[%s252 + $0xa50] sm:$0xff]
        %v774 = vld [vmem:[%s252 + $0xa58] sm:$0xff]
        %v775 = vld [vmem:[%s252 + $0xa60] sm:$0xff]
        %v776 = vld [vmem:[%s252 + $0xa68] sm:$0xff]
        %v777 = vld [vmem:[%s252 + $0xa70] sm:$0xff]
        %v778 = vld [vmem:[%s252 + $0xa78] sm:$0xff]
        %v779 = vld [vmem:[%s252 + $0xa80] sm:$0xff]
        %v780 = vld [vmem:[%s252 + $0xa88] sm:$0xff]
        %v781 = vld [vmem:[%s252 + $0xa90] sm:$0xff]
        %v782 = vld [vmem:[%s252 + $0xa98] sm:$0xff]
        %v783 = vld [vmem:[%s252 + $0xaa0] sm:$0xff]
        %v784 = vld [vmem:[%s252 + $0xaa8] sm:$0xff]
        %v785 = vld [vmem:[%s252 + $0xab0] sm:$0xff]
        %v786 = vld [vmem:[%s252 + $0xab8] sm:$0xff]
        %v787 = vld [vmem:[%s252 + $0xac0] sm:$0xff]
        %v788 = vld [vmem:[%s252 + $0xac8] sm:$0xff]
        %v789 = vld [vmem:[%s252 + $0xad0] sm:$0xff]
        %v790 = vld [vmem:[%s252 + $0xad8] sm:$0xff]
        %v791 = vld [vmem:[%s252 + $0xae0] sm:$0xff]
        %v792 = vld [vmem:[%s252 + $0xae8] sm:$0xff]
        %v793 = vld [vmem:[%s252 + $0xaf0] sm:$0xff]
        %v794 = vld [vmem:[%s252 + $0xaf8] sm:$0xff]
        %v795 = vld [vmem:[%s252 + $0xb00] sm:$0xff]
        %v796 = vld [vmem:[%s252 + $0xb08] sm:$0xff]
        %v797 = vld [vmem:[%s252 + $0xb10] sm:$0xff]
        %v798 = vld [vmem:[%s252 + $0xb18] sm:$0xff]
        %v799 = vld [vmem:[%s252 + $0xb20] sm:$0xff]
        %v800 = vld [vmem:[%s252 + $0xb28] sm:$0xff]
        %v801 = vld [vmem:[%s252 + $0xb30] sm:$0xff]
        %v802 = vld [vmem:[%s252 + $0xb38] sm:$0xff]
        %v803 = vld [vmem:[%s252 + $0xb40] sm:$0xff]
        %v804 = vld [vmem:[%s252 + $0xb48] sm:$0xff]
        %v805 = vld [vmem:[%s252 + $0xb50] sm:$0xff]
        %v806 = vld [vmem:[%s252 + $0xb58] sm:$0xff]
        %v807 = vld [vmem:[%s252 + $0xb60] sm:$0xff]
        %v808 = vld [vmem:[%s252 + $0xb68] sm:$0xff]
        %v809 = vld [vmem:[%s252 + $0xb70] sm:$0xff]
        %v810 = vld [vmem:[%s252 + $0xb78] sm:$0xff]
        %v811 = vld [vmem:[%s252 + $0xb80] sm:$0xff]
        %v812 = vld [vmem:[%s252 + $0xb88] sm:$0xff]
        %v813 = vld [vmem:[%s252 + $0xb90] sm:$0xff]
        %v814 = vld [vmem:[%s252 + $0xb98] sm:$0xff]
        %v815 = vld [vmem:[%s252 + $0xba0] sm:$0xff]
        %v816 = vld [vmem:[%s252 + $0xba8] sm:$0xff]
        %v817 = vld [vmem:[%s252 + $0xbb0] sm:$0xff]
        %v818 = vld [vmem:[%s252 + $0xbb8] sm:$0xff]
        %v819 = vld [vmem:[%s252 + $0xbc0] sm:$0xff]
        %v820 = vld [vmem:[%s252 + $0xbc8] sm:$0xff]
        %v821 = vld [vmem:[%s252 + $0xbd0] sm:$0xff]
        %v822 = vld [vmem:[%s252 + $0xbd8] sm:$0xff]
        %v823 = vld [vmem:[%s252 + $0xbe0] sm:$0xff]
        %v824 = vld [vmem:[%s252 + $0xbe8] sm:$0xff]
        %v825 = vld [vmem:[%s252 + $0xbf0] sm:$0xff]
        %v826 = vld [vmem:[%s252 + $0xbf8] sm:$0xff]
        %v827 = vld [vmem:[%s252 + $0xc00] sm:$0xff]
        %v828 = vld [vmem:[%s252 + $0xc08] sm:$0xff]
        %v829 = vld [vmem:[%s252 + $0xc10] sm:$0xff]
        %v830 = vld [vmem:[%s252 + $0xc18] sm:$0xff]
        %v831 = vld [vmem:[%s252 + $0xc20] sm:$0xff]
        %v832 = vld [vmem:[%s252 + $0xc28] sm:$0xff]
        %v833 = vld [vmem:[%s252 + $0xc30] sm:$0xff]
        %v834 = vld [vmem:[%s252 + $0xc38] sm:$0xff]
        %v835 = vld [vmem:[%s252 + $0xc40] sm:$0xff]
        %v836 = vld [vmem:[%s252 + $0xc48] sm:$0xff]
        %v837 = vld [vmem:[%s252 + $0xc50] sm:$0xff]
        %v838 = vld [vmem:[%s252 + $0xc58] sm:$0xff]
        %v839 = vld [vmem:[%s252 + $0xc60] sm:$0xff]
        %v840 = vld [vmem:[%s252 + $0xc68] sm:$0xff]
        %v841 = vld [vmem:[%s252 + $0xc70] sm:$0xff]
        %v842 = vld [vmem:[%s252 + $0xc78] sm:$0xff]
        %v843 = vld [vmem:[%s252 + $0xc80] sm:$0xff]
        %v844 = vld [vmem:[%s252 + $0xc88] sm:$0xff]
        %v845 = vld [vmem:[%s252 + $0xc90] sm:$0xff]
        %v846 = vld [vmem:[%s252 + $0xc98] sm:$0xff]
        %v847 = vld [vmem:[%s252 + $0xca0] sm:$0xff]
        %v848 = vld [vmem:[%s252 + $0xca8] sm:$0xff]
        %v849 = vld [vmem:[%s252 + $0xcb0] sm:$0xff]
        %v850 = vld [vmem:[%s252 + $0xcb8] sm:$0xff]
        %v851 = vld [vmem:[%s252 + $0xcc0] sm:$0xff]
        %v852 = vld [vmem:[%s252 + $0xcc8] sm:$0xff]
        %v853 = vld [vmem:[%s252 + $0xcd0] sm:$0xff]
        %v854 = vld [vmem:[%s252 + $0xcd8] sm:$0xff]
        %v855 = vld [vmem:[%s252 + $0xce0] sm:$0xff]
        %v856 = vld [vmem:[%s252 + $0xce8] sm:$0xff]
        %v857 = vld [vmem:[%s252 + $0xcf0] sm:$0xff]
        %v858 = vld [vmem:[%s252 + $0xcf8] sm:$0xff]
        %v859 = vld [vmem:[%s252 + $0xd00] sm:$0xff]
        %v860 = vld [vmem:[%s252 + $0xd08] sm:$0xff]
        %v861 = vld [vmem:[%s252 + $0xd10] sm:$0xff]
        %v862 = vld [vmem:[%s252 + $0xd18] sm:$0xff]
        %v863 = vld [vmem:[%s252 + $0xd20] sm:$0xff]
        %v864 = vld [vmem:[%s252 + $0xd28] sm:$0xff]
        %v865 = vld [vmem:[%s252 + $0xd30] sm:$0xff]
        %v866 = vld [vmem:[%s252 + $0xd38] sm:$0xff]
        %v867 = vld [vmem:[%s252 + $0xd40] sm:$0xff]
        %v868 = vld [vmem:[%s252 + $0xd48] sm:$0xff]
        %v869 = vld [vmem:[%s252 + $0xd50] sm:$0xff]
        %v870 = vld [vmem:[%s252 + $0xd58] sm:$0xff]
        %v871 = vld [vmem:[%s252 + $0xd60] sm:$0xff]
        %v872 = vld [vmem:[%s252 + $0xd68] sm:$0xff]
        %v873 = vld [vmem:[%s252 + $0xd70] sm:$0xff]
        %v874 = vld [vmem:[%s252 + $0xd78] sm:$0xff]
        %v875 = vld [vmem:[%s252 + $0xd80] sm:$0xff]
        %v876 = vld [vmem:[%s252 + $0xd88] sm:$0xff]
        %v877 = vld [vmem:[%s252 + $0xd90] sm:$0xff]
        %v878 = vld [vmem:[%s252 + $0xd98] sm:$0xff]
        %v879 = vld [vmem:[%s252 + $0xda0] sm:$0xff]
        %v880 = vld [vmem:[%s252 + $0xda8] sm:$0xff]
        %v881 = vld [vmem:[%s252 + $0xdb0] sm:$0xff]
        %v882 = vld [vmem:[%s252 + $0xdb8] sm:$0xff]
        %v883 = vld [vmem:[%s252 + $0xdc0] sm:$0xff]
        %v884 = vld [vmem:[%s252 + $0xdc8] sm:$0xff]
        %v885 = vld [vmem:[%s252 + $0xdd0] sm:$0xff]
        %v886 = vld [vmem:[%s252 + $0xdd8] sm:$0xff]
        %v887 = vld [vmem:[%s252 + $0xde0] sm:$0xff]
        %v888 = vld [vmem:[%s252 + $0xde8] sm:$0xff]
        %v889 = vld [vmem:[%s252 + $0xdf0] sm:$0xff]
        %v890 = vld [vmem:[%s252 + $0xdf8] sm:$0xff]
        %v891 = vld [vmem:[%s252 + $0xe00] sm:$0xff]
        %v892 = vld [vmem:[%s252 + $0xe08] sm:$0xff]
        %v893 = vld [vmem:[%s252 + $0xe10] sm:$0xff]
        %v894 = vld [vmem:[%s252 + $0xe18] sm:$0xff]
        %v895 = vld [vmem:[%s252 + $0xe20] sm:$0xff]
        %v896 = vld [vmem:[%s252 + $0xe28] sm:$0xff]
        %v897 = vld [vmem:[%s252 + $0xe30] sm:$0xff]
        %v898 = vld [vmem:[%s252 + $0xe38] sm:$0xff]
        %v899 = vld [vmem:[%s252 + $0xe40] sm:$0xff]
        %v900 = vld [vmem:[%s252 + $0xe48] sm:$0xff]
        %v901 = vld [vmem:[%s252 + $0xe50] sm:$0xff]
        %v902 = vld [vmem:[%s252 + $0xe58] sm:$0xff]
        %v903 = vld [vmem:[%s252 + $0xe60] sm:$0xff]
        %v904 = vld [vmem:[%s252 + $0xe68] sm:$0xff]
        %v905 = vld [vmem:[%s252 + $0xe70] sm:$0xff]
        %v906 = vld [vmem:[%s252 + $0xe78] sm:$0xff]
        %v907 = vld [vmem:[%s252 + $0xe80] sm:$0xff]
        %v908 = vld [vmem:[%s252 + $0xe88] sm:$0xff]
        %v909 = vld [vmem:[%s252 + $0xe90] sm:$0xff]
        %v910 = vld [vmem:[%s252 + $0xe98] sm:$0xff]
        %v911 = vld [vmem:[%s252 + $0xea0] sm:$0xff]
        %v912 = vld [vmem:[%s252 + $0xea8] sm:$0xff]
        %v913 = vld [vmem:[%s252 + $0xeb0] sm:$0xff]
        %v914 = vld [vmem:[%s252 + $0xeb8] sm:$0xff]
        %v915 = vld [vmem:[%s252 + $0xec0] sm:$0xff]
        %v916 = vld [vmem:[%s252 + $0xec8] sm:$0xff]
        %v917 = vld [vmem:[%s252 + $0xed0] sm:$0xff]
        %v918 = vld [vmem:[%s252 + $0xed8] sm:$0xff]
        %v919 = vld [vmem:[%s252 + $0xee0] sm:$0xff]
        %v920 = vld [vmem:[%s252 + $0xee8] sm:$0xff]
        %v921 = vld [vmem:[%s252 + $0xef0] sm:$0xff]
        %v922 = vld [vmem:[%s252 + $0xef8] sm:$0xff]
        %v923 = vld [vmem:[%s252 + $0xf00] sm:$0xff]
        %v924 = vld [vmem:[%s252 + $0xf08] sm:$0xff]
        %v925 = vld [vmem:[%s252 + $0xf10] sm:$0xff]
        %v926 = vld [vmem:[%s252 + $0xf18] sm:$0xff]
        %v927 = vld [vmem:[%s252 + $0xf20] sm:$0xff]
        %v928 = vld [vmem:[%s252 + $0xf28] sm:$0xff]
        %v929 = vld [vmem:[%s252 + $0xf30] sm:$0xff]
        %v930 = vld [vmem:[%s252 + $0xf38] sm:$0xff]
        %v931 = vld [vmem:[%s252 + $0xf40] sm:$0xff]
        %v932 = vld [vmem:[%s252 + $0xf48] sm:$0xff]
        %v933 = vld [vmem:[%s252 + $0xf50] sm:$0xff]
        %v934 = vld [vmem:[%s252 + $0xf58] sm:$0xff]
        %v935 = vld [vmem:[%s252 + $0xf60] sm:$0xff]
        %v936 = vld [vmem:[%s252 + $0xf68] sm:$0xff]
        %v937 = vld [vmem:[%s252 + $0xf70] sm:$0xff]
        %v938 = vld [vmem:[%s252 + $0xf78] sm:$0xff]
        %v939 = vld [vmem:[%s252 + $0xf80] sm:$0xff]
        %v940 = vld [vmem:[%s252 + $0xf88] sm:$0xff]
        %v941 = vld [vmem:[%s252 + $0xf90] sm:$0xff]
        %v942 = vld [vmem:[%s252 + $0xf98] sm:$0xff]
        %v943 = vld [vmem:[%s252 + $0xfa0] sm:$0xff]
        %v944 = vld [vmem:[%s252 + $0xfa8] sm:$0xff]
        %v945 = vld [vmem:[%s252 + $0xfb0] sm:$0xff]
        %v946 = vld [vmem:[%s252 + $0xfb8] sm:$0xff]
        %v947 = vld [vmem:[%s252 + $0xfc0] sm:$0xff]
        %v948 = vld [vmem:[%s252 + $0xfc8] sm:$0xff]
        %v949 = vld [vmem:[%s252 + $0xfd0] sm:$0xff]
        %v950 = vld [vmem:[%s252 + $0xfd8] sm:$0xff]
        %v951 = vld [vmem:[%s252 + $0xfe0] sm:$0xff]
        %v952 = vld [vmem:[%s252 + $0xfe8] sm:$0xff]
        %v953 = vld [vmem:[%s252 + $0xff0] sm:$0xff]
        %v954 = vld [vmem:[%s252 + $0xff8] sm:$0xff]
        %v955 = vld [vmem:[%s252 + $0x1000] sm:$0xff]
        %v956 = vld [vmem:[%s252 + $0x1008] sm:$0xff]
        %v957 = vld [vmem:[%s252 + $0x1010] sm:$0xff]
        %v958 = vld [vmem:[%s252 + $0x1018] sm:$0xff]
        %v959 = vld [vmem:[%s252 + $0x1020] sm:$0xff]
        %v960 = vld [vmem:[%s252 + $0x1028] sm:$0xff]
        %v961 = vld [vmem:[%s252 + $0x1030] sm:$0xff]
        %v962 = vld [vmem:[%s252 + $0x1038] sm:$0xff]
        %v963 = vld [vmem:[%s252 + $0x1040] sm:$0xff]
        %v964 = vld [vmem:[%s252 + $0x1048] sm:$0xff]
        %v965 = vld [vmem:[%s252 + $0x1050] sm:$0xff]
        %v966 = vld [vmem:[%s252 + $0x1058] sm:$0xff]
        %v967 = vld [vmem:[%s252 + $0x1060] sm:$0xff]
        %v968 = vld [vmem:[%s252 + $0x1068] sm:$0xff]
        %v969 = vld [vmem:[%s252 + $0x1070] sm:$0xff]
        %v970 = vld [vmem:[%s252 + $0x1078] sm:$0xff]
        %v971 = vld [vmem:[%s252 + $0x1080] sm:$0xff]
        %v972 = vld [vmem:[%s252 + $0x1088] sm:$0xff]
        %v973 = vld [vmem:[%s252 + $0x1090] sm:$0xff]
        %v974 = vld [vmem:[%s252 + $0x1098] sm:$0xff]
        %v975 = vld [vmem:[%s252 + $0x10a0] sm:$0xff]
        %v976 = vld [vmem:[%s252 + $0x10a8] sm:$0xff]
        %v977 = vld [vmem:[%s252 + $0x10b0] sm:$0xff]
        %v978 = vld [vmem:[%s252 + $0x10b8] sm:$0xff]
        %v979 = vld [vmem:[%s252 + $0x10c0] sm:$0xff]
        %v980 = vld [vmem:[%s252 + $0x10c8] sm:$0xff]
        %v981 = vld [vmem:[%s252 + $0x10d0] sm:$0xff]
        %v982 = vld [vmem:[%s252 + $0x10d8] sm:$0xff]
        %v983 = vld [vmem:[%s252 + $0x10e0] sm:$0xff]
        %v984 = vld [vmem:[%s252 + $0x10e8] sm:$0xff]
        %v985 = vld [vmem:[%s252 + $0x10f0] sm:$0xff]
        %v986 = vld [vmem:[%s252 + $0x10f8] sm:$0xff]
        %v987 = vld [vmem:[%s252 + $0x1100] sm:$0xff]
        %v988 = vld [vmem:[%s252 + $0x1108] sm:$0xff]
        %v989 = vld [vmem:[%s252 + $0x1110] sm:$0xff]
        %v990 = vld [vmem:[%s252 + $0x1118] sm:$0xff]
        %v991 = vld [vmem:[%s252 + $0x1120] sm:$0xff]
        %v992 = vld [vmem:[%s252 + $0x1128] sm:$0xff]
        %v993 = vld [vmem:[%s252 + $0x1130] sm:$0xff]
        %v994 = vld [vmem:[%s252 + $0x1138] sm:$0xff]
        %v995 = vld [vmem:[%s252 + $0x1140] sm:$0xff]
        %v996 = vld [vmem:[%s252 + $0x1148] sm:$0xff]
        %v997 = vld [vmem:[%s252 + $0x1150] sm:$0xff]
        %v998 = vld [vmem:[%s252 + $0x1158] sm:$0xff]
        %v999 = vld [vmem:[%s252 + $0x1160] sm:$0xff]
        %v1000 = vld [vmem:[%s252 + $0x1168] sm:$0xff]
        %v1001 = vld [vmem:[%s252 + $0x1170] sm:$0xff]
        %v1002 = vld [vmem:[%s252 + $0x1178] sm:$0xff]
        %v1003 = vld [vmem:[%s252 + $0x1180] sm:$0xff]
        %v1004 = vld [vmem:[%s252 + $0x1188] sm:$0xff]
        %v1005 = vld [vmem:[%s252 + $0x1190] sm:$0xff]
        %v1006 = vld [vmem:[%s252 + $0x1198] sm:$0xff]
        %v1007 = vld [vmem:[%s252 + $0x11a0] sm:$0xff]
        %v1008 = vld [vmem:[%s252 + $0x11a8] sm:$0xff]
        %v1009 = vld [vmem:[%s252 + $0x11b0] sm:$0xff]
        %v1010 = vld [vmem:[%s252 + $0x11b8] sm:$0xff]
        %v1011 = vld [vmem:[%s252 + $0x11c0] sm:$0xff]
        %v1012 = vld [vmem:[%s252 + $0x11c8] sm:$0xff]
        %v1013 = vld [vmem:[%s252 + $0x11d0] sm:$0xff]
        %v1014 = vld [vmem:[%s252 + $0x11d8] sm:$0xff]
        %v1015 = vld [vmem:[%s252 + $0x11e0] sm:$0xff]
        %v1016 = vld [vmem:[%s252 + $0x11e8] sm:$0xff]
        %v1017 = vld [vmem:[%s252 + $0x11f0] sm:$0xff]
        %v1018 = vld [vmem:[%s252 + $0x11f8] sm:$0xff]
        %v1019 = vld [vmem:[%s252 + $0x1200] sm:$0xff]
        %v1020 = vld [vmem:[%s252 + $0x1208] sm:$0xff]
        %v1021 = vld [vmem:[%s252 + $0x1210] sm:$0xff]
        %v1022 = vld [vmem:[%s252 + $0x1218] sm:$0xff]
        %v1023 = vld [vmem:[%s252 + $0x1220] sm:$0xff]
        %v1024 = vld [vmem:[%s252 + $0x1228] sm:$0xff]
        %v1025 = vld [vmem:[%s252 + $0x1230] sm:$0xff]
        %v1026 = vld [vmem:[%s252 + $0x1238] sm:$0xff]
        %v1027 = vld [vmem:[%s252 + $0x1240] sm:$0xff]
        %v1028 = vld [vmem:[%s252 + $0x1248] sm:$0xff]
        %v1029 = vld [vmem:[%s252 + $0x1250] sm:$0xff]
        %v1030 = vld [vmem:[%s252 + $0x1258] sm:$0xff]
        %v1031 = vld [vmem:[%s252 + $0x1260] sm:$0xff]
        %v1032 = vld [vmem:[%s252 + $0x1268] sm:$0xff]
        %v1033 = vld [vmem:[%s252 + $0x1270] sm:$0xff]
        %v1034 = vld [vmem:[%s252 + $0x1278] sm:$0xff]
        %v1035 = vld [vmem:[%s252 + $0x1280] sm:$0xff]
        %v1036 = vld [vmem:[%s252 + $0x1288] sm:$0xff]
        %v1037 = vld [vmem:[%s252 + $0x1290] sm:$0xff]
        %v1038 = vld [vmem:[%s252 + $0x1298] sm:$0xff]
        %v1039 = vld [vmem:[%s252 + $0x12a0] sm:$0xff]
        %v1040 = vld [vmem:[%s252 + $0x12a8] sm:$0xff]
        %v1041 = vld [vmem:[%s252 + $0x12b0] sm:$0xff]
        %v1042 = vld [vmem:[%s252 + $0x12b8] sm:$0xff]
        %v1043 = vld [vmem:[%s252 + $0x12c0] sm:$0xff]
        %v1044 = vld [vmem:[%s252 + $0x12c8] sm:$0xff]
        %v1045 = vld [vmem:[%s252 + $0x12d0] sm:$0xff]
        %v1046 = vld [vmem:[%s252 + $0x12d8] sm:$0xff]
        %v1047 = vld [vmem:[%s252 + $0x12e0] sm:$0xff]
        %v1048 = vld [vmem:[%s252 + $0x12e8] sm:$0xff]
        %v1049 = vld [vmem:[%s252 + $0x12f0] sm:$0xff]
        %v1050 = vld [vmem:[%s252 + $0x12f8] sm:$0xff]
        %v1051 = vld [vmem:[%s252 + $0x1300] sm:$0xff]
        %v1052 = vld [vmem:[%s252 + $0x1308] sm:$0xff]
        %v1053 = vld [vmem:[%s252 + $0x1310] sm:$0xff]
        %v1054 = vld [vmem:[%s252 + $0x1318] sm:$0xff]
        %v1055 = vld [vmem:[%s252 + $0x1320] sm:$0xff]
        %v1056 = vld [vmem:[%s252 + $0x1328] sm:$0xff]
        %v1057 = vld [vmem:[%s252 + $0x1330] sm:$0xff]
        %v1058 = vld [vmem:[%s252 + $0x1338] sm:$0xff]
        %v1059 = vld [vmem:[%s252 + $0x1340] sm:$0xff]
        %v1060 = vld [vmem:[%s252 + $0x1348] sm:$0xff]
        %v1061 = vld [vmem:[%s252 + $0x1350] sm:$0xff]
        %v1062 = vld [vmem:[%s252 + $0x1358] sm:$0xff]
        %v1063 = vld [vmem:[%s252 + $0x1360] sm:$0xff]
        %v1064 = vld [vmem:[%s252 + $0x1368] sm:$0xff]
        %v1065 = vld [vmem:[%s252 + $0x1370] sm:$0xff]
        %v1066 = vld [vmem:[%s252 + $0x1378] sm:$0xff]
        %v1067 = vld [vmem:[%s252 + $0x1380] sm:$0xff]
        %v1068 = vld [vmem:[%s252 + $0x1388] sm:$0xff]
        %v1069 = vld [vmem:[%s252 + $0x1390] sm:$0xff]
        %v1070 = vld [vmem:[%s252 + $0x1398] sm:$0xff]
        %v1071 = vld [vmem:[%s252 + $0x13a0] sm:$0xff]
        %v1072 = vld [vmem:[%s252 + $0x13a8] sm:$0xff]
        %v1073 = vld [vmem:[%s252 + $0x13b0] sm:$0xff]
        %v1074 = vld [vmem:[%s252 + $0x13b8] sm:$0xff]
        %v1075 = vld [vmem:[%s252 + $0x13c0] sm:$0xff]
        %v1076 = vld [vmem:[%s252 + $0x13c8] sm:$0xff]
        %v1077 = vld [vmem:[%s252 + $0x13d0] sm:$0xff]
        %v1078 = vld [vmem:[%s252 + $0x13d8] sm:$0xff]
        %v1079 = vld [vmem:[%s252 + $0x13e0] sm:$0xff]
        %v1080 = vld [vmem:[%s252 + $0x13e8] sm:$0xff]
        %v1081 = vld [vmem:[%s252 + $0x13f0] sm:$0xff]
        %v1082 = vld [vmem:[%s252 + $0x13f8] sm:$0xff]
        %v1083 = vld [vmem:[%s261] sm:$0xf]
        %v1085 = vlaneseq
        %v1086 = vshrl.u32 %v1085, 7
        %v1087 = vsub.s32 0, %v1086
        %v1088 = vrot.slane %v1083, %v1087
        %v1089 = vlaneseq
        %v1090 = vshrl.u32 %v1089, 7
        %v1091 = vsub.s32 1, %v1090
        %v1092 = vrot.slane %v1083, %v1091
        %v1093 = vlaneseq
        %v1094 = vshrl.u32 %v1093, 7
        %v1095 = vsub.s32 2, %v1094
        %v1096 = vrot.slane %v1083, %v1095
        %v1097 = vlaneseq
        %v1098 = vshrl.u32 %v1097, 7
        %v1099 = vsub.s32 3, %v1098
        %v1100 = vrot.slane %v1083, %v1099
        %v1745 = vunpack.c.l.b16 %v443
        %v1746 = vunpack.c.h.b16 %v443
        %v1747 = vunpack.c.l.b16 %v444
        %v1748 = vunpack.c.h.b16 %v444
        %v1749 = vunpack.c.l.b16 %v445
        %v1750 = vunpack.c.h.b16 %v445
        %v1751 = vunpack.c.l.b16 %v446
        %v1752 = vunpack.c.h.b16 %v446
        %v1753 = vunpack.c.l.b16 %v447
        %v1754 = vunpack.c.h.b16 %v447
        %v1755 = vunpack.c.l.b16 %v448
        %v1756 = vunpack.c.h.b16 %v448
        %v1757 = vunpack.c.l.b16 %v449
        %v1758 = vunpack.c.h.b16 %v449
        %v1759 = vunpack.c.l.b16 %v450
        %v1760 = vunpack.c.h.b16 %v450
        %v1761 = vunpack.c.l.b16 %v451
        %v1762 = vunpack.c.h.b16 %v451
        %v1763 = vunpack.c.l.b16 %v452
        %v1764 = vunpack.c.h.b16 %v452
        %v1765 = vunpack.c.l.b16 %v453
        %v1766 = vunpack.c.h.b16 %v453
        %v1767 = vunpack.c.l.b16 %v454
        %v1768 = vunpack.c.h.b16 %v454
        %v1769 = vunpack.c.l.b16 %v455
        %v1770 = vunpack.c.h.b16 %v455
        %v1771 = vunpack.c.l.b16 %v456
        %v1772 = vunpack.c.h.b16 %v456
        %v1773 = vunpack.c.l.b16 %v457
        %v1774 = vunpack.c.h.b16 %v457
        %v1775 = vunpack.c.l.b16 %v458
        %v1776 = vunpack.c.h.b16 %v458
        %v1777 = vunpack.c.l.b16 %v459
        %v1778 = vunpack.c.h.b16 %v459
        %v1779 = vunpack.c.l.b16 %v460
        %v1780 = vunpack.c.h.b16 %v460
        %v1781 = vunpack.c.l.b16 %v461
        %v1782 = vunpack.c.h.b16 %v461
        %v1783 = vunpack.c.l.b16 %v462
        %v1784 = vunpack.c.h.b16 %v462
        %v1785 = vunpack.c.l.b16 %v463
        %v1786 = vunpack.c.h.b16 %v463
        %v1787 = vunpack.c.l.b16 %v464
        %v1788 = vunpack.c.h.b16 %v464
        %v1789 = vunpack.c.l.b16 %v465
        %v1790 = vunpack.c.h.b16 %v465
        %v1791 = vunpack.c.l.b16 %v466
        %v1792 = vunpack.c.h.b16 %v466
        %v1793 = vunpack.c.l.b16 %v467
        %v1794 = vunpack.c.h.b16 %v467
        %v1795 = vunpack.c.l.b16 %v468
        %v1796 = vunpack.c.h.b16 %v468
        %v1797 = vunpack.c.l.b16 %v469
        %v1798 = vunpack.c.h.b16 %v469
        %v1799 = vunpack.c.l.b16 %v470
        %v1800 = vunpack.c.h.b16 %v470
        %v1801 = vunpack.c.l.b16 %v471
        %v1802 = vunpack.c.h.b16 %v471
        %v1803 = vunpack.c.l.b16 %v472
        %v1804 = vunpack.c.h.b16 %v472
        %v1805 = vunpack.c.l.b16 %v473
        %v1806 = vunpack.c.h.b16 %v473
        %v1807 = vunpack.c.l.b16 %v474
        %v1808 = vunpack.c.h.b16 %v474
        %v1809 = vunpack.c.l.b16 %v475
        %v1810 = vunpack.c.h.b16 %v475
        %v1811 = vunpack.c.l.b16 %v476
        %v1812 = vunpack.c.h.b16 %v476
        %v1813 = vunpack.c.l.b16 %v477
        %v1814 = vunpack.c.h.b16 %v477
        %v1815 = vunpack.c.l.b16 %v478
        %v1816 = vunpack.c.h.b16 %v478
        %v1817 = vunpack.c.l.b16 %v479
        %v1818 = vunpack.c.h.b16 %v479
        %v1819 = vunpack.c.l.b16 %v480
        %v1820 = vunpack.c.h.b16 %v480
        %v1821 = vunpack.c.l.b16 %v481
        %v1822 = vunpack.c.h.b16 %v481
        %v1823 = vunpack.c.l.b16 %v482
        %v1824 = vunpack.c.h.b16 %v482
        %v1825 = vunpack.c.l.b16 %v483
        %v1826 = vunpack.c.h.b16 %v483
        %v1827 = vunpack.c.l.b16 %v484
        %v1828 = vunpack.c.h.b16 %v484
        %v1829 = vunpack.c.l.b16 %v485
        %v1830 = vunpack.c.h.b16 %v485
        %v1831 = vunpack.c.l.b16 %v486
        %v1832 = vunpack.c.h.b16 %v486
        %v1833 = vunpack.c.l.b16 %v487
        %v1834 = vunpack.c.h.b16 %v487
        %v1835 = vunpack.c.l.b16 %v488
        %v1836 = vunpack.c.h.b16 %v488
        %v1837 = vunpack.c.l.b16 %v489
        %v1838 = vunpack.c.h.b16 %v489
        %v1839 = vunpack.c.l.b16 %v490
        %v1840 = vunpack.c.h.b16 %v490
        %v1841 = vunpack.c.l.b16 %v491
        %v1842 = vunpack.c.h.b16 %v491
        %v1843 = vunpack.c.l.b16 %v492
        %v1844 = vunpack.c.h.b16 %v492
        %v1845 = vunpack.c.l.b16 %v493
        %v1846 = vunpack.c.h.b16 %v493
        %v1847 = vunpack.c.l.b16 %v494
        %v1848 = vunpack.c.h.b16 %v494
        %v1849 = vunpack.c.l.b16 %v495
        %v1850 = vunpack.c.h.b16 %v495
        %v1851 = vunpack.c.l.b16 %v496
        %v1852 = vunpack.c.h.b16 %v496
        %v1853 = vunpack.c.l.b16 %v497
        %v1854 = vunpack.c.h.b16 %v497
        %v1855 = vunpack.c.l.b16 %v498
        %v1856 = vunpack.c.h.b16 %v498
        %v1857 = vunpack.c.l.b16 %v499
        %v1858 = vunpack.c.h.b16 %v499
        %v1859 = vunpack.c.l.b16 %v500
        %v1860 = vunpack.c.h.b16 %v500
        %v1861 = vunpack.c.l.b16 %v501
        %v1862 = vunpack.c.h.b16 %v501
        %v1863 = vunpack.c.l.b16 %v502
        %v1864 = vunpack.c.h.b16 %v502
        %v1865 = vunpack.c.l.b16 %v503
        %v1866 = vunpack.c.h.b16 %v503
        %v1867 = vunpack.c.l.b16 %v504
        %v1868 = vunpack.c.h.b16 %v504
        %v1869 = vunpack.c.l.b16 %v505
        %v1870 = vunpack.c.h.b16 %v505
        %v1871 = vunpack.c.l.b16 %v506
        %v1872 = vunpack.c.h.b16 %v506
        %v1873 = vunpack.c.l.b16 %v507
        %v1874 = vunpack.c.h.b16 %v507
        %v1875 = vunpack.c.l.b16 %v508
        %v1876 = vunpack.c.h.b16 %v508
        %v1877 = vunpack.c.l.b16 %v509
        %v1878 = vunpack.c.h.b16 %v509
        %v1879 = vunpack.c.l.b16 %v510
        %v1880 = vunpack.c.h.b16 %v510
        %v1881 = vunpack.c.l.b16 %v511
        %v1882 = vunpack.c.h.b16 %v511
        %v1883 = vunpack.c.l.b16 %v512
        %v1884 = vunpack.c.h.b16 %v512
        %v1885 = vunpack.c.l.b16 %v513
        %v1886 = vunpack.c.h.b16 %v513
        %v1887 = vunpack.c.l.b16 %v514
        %v1888 = vunpack.c.h.b16 %v514
        %v1889 = vunpack.c.l.b16 %v515
        %v1890 = vunpack.c.h.b16 %v515
        %v1891 = vunpack.c.l.b16 %v516
        %v1892 = vunpack.c.h.b16 %v516
        %v1893 = vunpack.c.l.b16 %v517
        %v1894 = vunpack.c.h.b16 %v517
        %v1895 = vunpack.c.l.b16 %v518
        %v1896 = vunpack.c.h.b16 %v518
        %v1897 = vunpack.c.l.b16 %v519
        %v1898 = vunpack.c.h.b16 %v519
        %v1899 = vunpack.c.l.b16 %v520
        %v1900 = vunpack.c.h.b16 %v520
        %v1901 = vunpack.c.l.b16 %v521
        %v1902 = vunpack.c.h.b16 %v521
        %v1903 = vunpack.c.l.b16 %v522
        %v1904 = vunpack.c.h.b16 %v522
        %v1905 = vunpack.c.l.b16 %v523
        %v1906 = vunpack.c.h.b16 %v523
        %v1907 = vunpack.c.l.b16 %v524
        %v1908 = vunpack.c.h.b16 %v524
        %v1909 = vunpack.c.l.b16 %v525
        %v1910 = vunpack.c.h.b16 %v525
        %v1911 = vunpack.c.l.b16 %v526
        %v1912 = vunpack.c.h.b16 %v526
        %v1913 = vunpack.c.l.b16 %v527
        %v1914 = vunpack.c.h.b16 %v527
        %v1915 = vunpack.c.l.b16 %v528
        %v1916 = vunpack.c.h.b16 %v528
        %v1917 = vunpack.c.l.b16 %v529
        %v1918 = vunpack.c.h.b16 %v529
        %v1919 = vunpack.c.l.b16 %v530
        %v1920 = vunpack.c.h.b16 %v530
        %v1921 = vunpack.c.l.b16 %v531
        %v1922 = vunpack.c.h.b16 %v531
        %v1923 = vunpack.c.l.b16 %v532
        %v1924 = vunpack.c.h.b16 %v532
        %v1925 = vunpack.c.l.b16 %v533
        %v1926 = vunpack.c.h.b16 %v533
        %v1927 = vunpack.c.l.b16 %v534
        %v1928 = vunpack.c.h.b16 %v534
        %v1929 = vunpack.c.l.b16 %v535
        %v1930 = vunpack.c.h.b16 %v535
        %v1931 = vunpack.c.l.b16 %v536
        %v1932 = vunpack.c.h.b16 %v536
        %v1933 = vunpack.c.l.b16 %v537
        %v1934 = vunpack.c.h.b16 %v537
        %v1935 = vunpack.c.l.b16 %v538
        %v1936 = vunpack.c.h.b16 %v538
        %v1937 = vunpack.c.l.b16 %v539
        %v1938 = vunpack.c.h.b16 %v539
        %v1939 = vunpack.c.l.b16 %v540
        %v1940 = vunpack.c.h.b16 %v540
        %v1941 = vunpack.c.l.b16 %v541
        %v1942 = vunpack.c.h.b16 %v541
        %v1943 = vunpack.c.l.b16 %v542
        %v1944 = vunpack.c.h.b16 %v542
        %v1945 = vunpack.c.l.b16 %v543
        %v1946 = vunpack.c.h.b16 %v543
        %v1947 = vunpack.c.l.b16 %v544
        %v1948 = vunpack.c.h.b16 %v544
        %v1949 = vunpack.c.l.b16 %v545
        %v1950 = vunpack.c.h.b16 %v545
        %v1951 = vunpack.c.l.b16 %v546
        %v1952 = vunpack.c.h.b16 %v546
        %v1953 = vunpack.c.l.b16 %v547
        %v1954 = vunpack.c.h.b16 %v547
        %v1955 = vunpack.c.l.b16 %v548
        %v1956 = vunpack.c.h.b16 %v548
        %v1957 = vunpack.c.l.b16 %v549
        %v1958 = vunpack.c.h.b16 %v549
        %v1959 = vunpack.c.l.b16 %v550
        %v1960 = vunpack.c.h.b16 %v550
        %v1961 = vunpack.c.l.b16 %v551
        %v1962 = vunpack.c.h.b16 %v551
        %v1963 = vunpack.c.l.b16 %v552
        %v1964 = vunpack.c.h.b16 %v552
        %v1965 = vunpack.c.l.b16 %v553
        %v1966 = vunpack.c.h.b16 %v553
        %v1967 = vunpack.c.l.b16 %v554
        %v1968 = vunpack.c.h.b16 %v554
        %v1969 = vunpack.c.l.b16 %v555
        %v1970 = vunpack.c.h.b16 %v555
        %v1971 = vunpack.c.l.b16 %v556
        %v1972 = vunpack.c.h.b16 %v556
        %v1973 = vunpack.c.l.b16 %v557
        %v1974 = vunpack.c.h.b16 %v557
        %v1975 = vunpack.c.l.b16 %v558
        %v1976 = vunpack.c.h.b16 %v558
        %v1977 = vunpack.c.l.b16 %v559
        %v1978 = vunpack.c.h.b16 %v559
        %v1979 = vunpack.c.l.b16 %v560
        %v1980 = vunpack.c.h.b16 %v560
        %v1981 = vunpack.c.l.b16 %v561
        %v1982 = vunpack.c.h.b16 %v561
        %v1983 = vunpack.c.l.b16 %v562
        %v1984 = vunpack.c.h.b16 %v562
        %v1985 = vunpack.c.l.b16 %v563
        %v1986 = vunpack.c.h.b16 %v563
        %v1987 = vunpack.c.l.b16 %v564
        %v1988 = vunpack.c.h.b16 %v564
        %v1989 = vunpack.c.l.b16 %v565
        %v1990 = vunpack.c.h.b16 %v565
        %v1991 = vunpack.c.l.b16 %v566
        %v1992 = vunpack.c.h.b16 %v566
        %v1993 = vunpack.c.l.b16 %v567
        %v1994 = vunpack.c.h.b16 %v567
        %v1995 = vunpack.c.l.b16 %v568
        %v1996 = vunpack.c.h.b16 %v568
        %v1997 = vunpack.c.l.b16 %v569
        %v1998 = vunpack.c.h.b16 %v569
        %v1999 = vunpack.c.l.b16 %v570
        %v2000 = vunpack.c.h.b16 %v570
        %v2001 = vunpack.c.l.b16 %v571
        %v2002 = vunpack.c.h.b16 %v571
        %v2003 = vunpack.c.l.b16 %v572
        %v2004 = vunpack.c.h.b16 %v572
        %v2005 = vunpack.c.l.b16 %v573
        %v2006 = vunpack.c.h.b16 %v573
        %v2007 = vunpack.c.l.b16 %v574
        %v2008 = vunpack.c.h.b16 %v574
        %v2009 = vunpack.c.l.b16 %v575
        %v2010 = vunpack.c.h.b16 %v575
        %v2011 = vunpack.c.l.b16 %v576
        %v2012 = vunpack.c.h.b16 %v576
        %v2013 = vunpack.c.l.b16 %v577
        %v2014 = vunpack.c.h.b16 %v577
        %v2015 = vunpack.c.l.b16 %v578
        %v2016 = vunpack.c.h.b16 %v578
        %v2017 = vunpack.c.l.b16 %v579
        %v2018 = vunpack.c.h.b16 %v579
        %v2019 = vunpack.c.l.b16 %v580
        %v2020 = vunpack.c.h.b16 %v580
        %v2021 = vunpack.c.l.b16 %v581
        %v2022 = vunpack.c.h.b16 %v581
        %v2023 = vunpack.c.l.b16 %v582
        %v2024 = vunpack.c.h.b16 %v582
        %v2025 = vunpack.c.l.b16 %v583
        %v2026 = vunpack.c.h.b16 %v583
        %v2027 = vunpack.c.l.b16 %v584
        %v2028 = vunpack.c.h.b16 %v584
        %v2029 = vunpack.c.l.b16 %v585
        %v2030 = vunpack.c.h.b16 %v585
        %v2031 = vunpack.c.l.b16 %v586
        %v2032 = vunpack.c.h.b16 %v586
        %v2033 = vunpack.c.l.b16 %v587
        %v2034 = vunpack.c.h.b16 %v587
        %v2035 = vunpack.c.l.b16 %v588
        %v2036 = vunpack.c.h.b16 %v588
        %v2037 = vunpack.c.l.b16 %v589
        %v2038 = vunpack.c.h.b16 %v589
        %v2039 = vunpack.c.l.b16 %v590
        %v2040 = vunpack.c.h.b16 %v590
        %v2041 = vunpack.c.l.b16 %v591
        %v2042 = vunpack.c.h.b16 %v591
        %v2043 = vunpack.c.l.b16 %v592
        %v2044 = vunpack.c.h.b16 %v592
        %v2045 = vunpack.c.l.b16 %v593
        %v2046 = vunpack.c.h.b16 %v593
        %v2047 = vunpack.c.l.b16 %v594
        %v2048 = vunpack.c.h.b16 %v594
        %v2049 = vunpack.c.l.b16 %v595
        %v2050 = vunpack.c.h.b16 %v595
        %v2051 = vunpack.c.l.b16 %v596
        %v2052 = vunpack.c.h.b16 %v596
        %v2053 = vunpack.c.l.b16 %v597
        %v2054 = vunpack.c.h.b16 %v597
        %v2055 = vunpack.c.l.b16 %v598
        %v2056 = vunpack.c.h.b16 %v598
        %v2057 = vunpack.c.l.b16 %v599
        %v2058 = vunpack.c.h.b16 %v599
        %v2059 = vunpack.c.l.b16 %v600
        %v2060 = vunpack.c.h.b16 %v600
        %v2061 = vunpack.c.l.b16 %v601
        %v2062 = vunpack.c.h.b16 %v601
        %v2063 = vunpack.c.l.b16 %v602
        %v2064 = vunpack.c.h.b16 %v602
        %v2065 = vunpack.c.l.b16 %v603
        %v2066 = vunpack.c.h.b16 %v603
        %v2067 = vunpack.c.l.b16 %v604
        %v2068 = vunpack.c.h.b16 %v604
        %v2069 = vunpack.c.l.b16 %v605
        %v2070 = vunpack.c.h.b16 %v605
        %v2071 = vunpack.c.l.b16 %v606
        %v2072 = vunpack.c.h.b16 %v606
        %v2073 = vunpack.c.l.b16 %v607
        %v2074 = vunpack.c.h.b16 %v607
        %v2075 = vunpack.c.l.b16 %v608
        %v2076 = vunpack.c.h.b16 %v608
        %v2077 = vunpack.c.l.b16 %v609
        %v2078 = vunpack.c.h.b16 %v609
        %v2079 = vunpack.c.l.b16 %v610
        %v2080 = vunpack.c.h.b16 %v610
        %v2081 = vunpack.c.l.b16 %v611
        %v2082 = vunpack.c.h.b16 %v611
        %v2083 = vunpack.c.l.b16 %v612
        %v2084 = vunpack.c.h.b16 %v612
        %v2085 = vunpack.c.l.b16 %v613
        %v2086 = vunpack.c.h.b16 %v613
        %v2087 = vunpack.c.l.b16 %v614
        %v2088 = vunpack.c.h.b16 %v614
        %v2089 = vunpack.c.l.b16 %v615
        %v2090 = vunpack.c.h.b16 %v615
        %v2091 = vunpack.c.l.b16 %v616
        %v2092 = vunpack.c.h.b16 %v616
        %v2093 = vunpack.c.l.b16 %v617
        %v2094 = vunpack.c.h.b16 %v617
        %v2095 = vunpack.c.l.b16 %v618
        %v2096 = vunpack.c.h.b16 %v618
        %v2097 = vunpack.c.l.b16 %v619
        %v2098 = vunpack.c.h.b16 %v619
        %v2099 = vunpack.c.l.b16 %v620
        %v2100 = vunpack.c.h.b16 %v620
        %v2101 = vunpack.c.l.b16 %v621
        %v2102 = vunpack.c.h.b16 %v621
        %v2103 = vunpack.c.l.b16 %v622
        %v2104 = vunpack.c.h.b16 %v622
        %v2105 = vunpack.c.l.b16 %v623
        %v2106 = vunpack.c.h.b16 %v623
        %v2107 = vunpack.c.l.b16 %v624
        %v2108 = vunpack.c.h.b16 %v624
        %v2109 = vunpack.c.l.b16 %v625
        %v2110 = vunpack.c.h.b16 %v625
        %v2111 = vunpack.c.l.b16 %v626
        %v2112 = vunpack.c.h.b16 %v626
        %v2113 = vunpack.c.l.b16 %v627
        %v2114 = vunpack.c.h.b16 %v627
        %v2115 = vunpack.c.l.b16 %v628
        %v2116 = vunpack.c.h.b16 %v628
        %v2117 = vunpack.c.l.b16 %v629
        %v2118 = vunpack.c.h.b16 %v629
        %v2119 = vunpack.c.l.b16 %v630
        %v2120 = vunpack.c.h.b16 %v630
        %v2121 = vunpack.c.l.b16 %v631
        %v2122 = vunpack.c.h.b16 %v631
        %v2123 = vunpack.c.l.b16 %v632
        %v2124 = vunpack.c.h.b16 %v632
        %v2125 = vunpack.c.l.b16 %v633
        %v2126 = vunpack.c.h.b16 %v633
        %v2127 = vunpack.c.l.b16 %v634
        %v2128 = vunpack.c.h.b16 %v634
        %v2129 = vunpack.c.l.b16 %v635
        %v2130 = vunpack.c.h.b16 %v635
        %v2131 = vunpack.c.l.b16 %v636
        %v2132 = vunpack.c.h.b16 %v636
        %v2133 = vunpack.c.l.b16 %v637
        %v2134 = vunpack.c.h.b16 %v637
        %v2135 = vunpack.c.l.b16 %v638
        %v2136 = vunpack.c.h.b16 %v638
        %v2137 = vunpack.c.l.b16 %v639
        %v2138 = vunpack.c.h.b16 %v639
        %v2139 = vunpack.c.l.b16 %v640
        %v2140 = vunpack.c.h.b16 %v640
        %v2141 = vunpack.c.l.b16 %v641
        %v2142 = vunpack.c.h.b16 %v641
        %v2143 = vunpack.c.l.b16 %v642
        %v2144 = vunpack.c.h.b16 %v642
        %v2145 = vunpack.c.l.b16 %v643
        %v2146 = vunpack.c.h.b16 %v643
        %v2147 = vunpack.c.l.b16 %v644
        %v2148 = vunpack.c.h.b16 %v644
        %v2149 = vunpack.c.l.b16 %v645
        %v2150 = vunpack.c.h.b16 %v645
        %v2151 = vunpack.c.l.b16 %v646
        %v2152 = vunpack.c.h.b16 %v646
        %v2153 = vunpack.c.l.b16 %v647
        %v2154 = vunpack.c.h.b16 %v647
        %v2155 = vunpack.c.l.b16 %v648
        %v2156 = vunpack.c.h.b16 %v648
        %v2157 = vunpack.c.l.b16 %v649
        %v2158 = vunpack.c.h.b16 %v649
        %v2159 = vunpack.c.l.b16 %v650
        %v2160 = vunpack.c.h.b16 %v650
        %v2161 = vunpack.c.l.b16 %v651
        %v2162 = vunpack.c.h.b16 %v651
        %v2163 = vunpack.c.l.b16 %v652
        %v2164 = vunpack.c.h.b16 %v652
        %v2165 = vunpack.c.l.b16 %v653
        %v2166 = vunpack.c.h.b16 %v653
        %v2167 = vunpack.c.l.b16 %v654
        %v2168 = vunpack.c.h.b16 %v654
        %v2169 = vunpack.c.l.b16 %v655
        %v2170 = vunpack.c.h.b16 %v655
        %v2171 = vunpack.c.l.b16 %v656
        %v2172 = vunpack.c.h.b16 %v656
        %v2173 = vunpack.c.l.b16 %v657
        %v2174 = vunpack.c.h.b16 %v657
        %v2175 = vunpack.c.l.b16 %v658
        %v2176 = vunpack.c.h.b16 %v658
        %v2177 = vunpack.c.l.b16 %v659
        %v2178 = vunpack.c.h.b16 %v659
        %v2179 = vunpack.c.l.b16 %v660
        %v2180 = vunpack.c.h.b16 %v660
        %v2181 = vunpack.c.l.b16 %v661
        %v2182 = vunpack.c.h.b16 %v661
        %v2183 = vunpack.c.l.b16 %v662
        %v2184 = vunpack.c.h.b16 %v662
        %v2185 = vunpack.c.l.b16 %v663
        %v2186 = vunpack.c.h.b16 %v663
        %v2187 = vunpack.c.l.b16 %v664
        %v2188 = vunpack.c.h.b16 %v664
        %v2189 = vunpack.c.l.b16 %v665
        %v2190 = vunpack.c.h.b16 %v665
        %v2191 = vunpack.c.l.b16 %v666
        %v2192 = vunpack.c.h.b16 %v666
        %v2193 = vunpack.c.l.b16 %v667
        %v2194 = vunpack.c.h.b16 %v667
        %v2195 = vunpack.c.l.b16 %v668
        %v2196 = vunpack.c.h.b16 %v668
        %v2197 = vunpack.c.l.b16 %v669
        %v2198 = vunpack.c.h.b16 %v669
        %v2199 = vunpack.c.l.b16 %v670
        %v2200 = vunpack.c.h.b16 %v670
        %v2201 = vunpack.c.l.b16 %v671
        %v2202 = vunpack.c.h.b16 %v671
        %v2203 = vunpack.c.l.b16 %v672
        %v2204 = vunpack.c.h.b16 %v672
        %v2205 = vunpack.c.l.b16 %v673
        %v2206 = vunpack.c.h.b16 %v673
        %v2207 = vunpack.c.l.b16 %v674
        %v2208 = vunpack.c.h.b16 %v674
        %v2209 = vunpack.c.l.b16 %v675
        %v2210 = vunpack.c.h.b16 %v675
        %v2211 = vunpack.c.l.b16 %v676
        %v2212 = vunpack.c.h.b16 %v676
        %v2213 = vunpack.c.l.b16 %v677
        %v2214 = vunpack.c.h.b16 %v677
        %v2215 = vunpack.c.l.b16 %v678
        %v2216 = vunpack.c.h.b16 %v678
        %v2217 = vunpack.c.l.b16 %v679
        %v2218 = vunpack.c.h.b16 %v679
        %v2219 = vunpack.c.l.b16 %v680
        %v2220 = vunpack.c.h.b16 %v680
        %v2221 = vunpack.c.l.b16 %v681
        %v2222 = vunpack.c.h.b16 %v681
        %v2223 = vunpack.c.l.b16 %v682
        %v2224 = vunpack.c.h.b16 %v682
        %v2225 = vunpack.c.l.b16 %v683
        %v2226 = vunpack.c.h.b16 %v683
        %v2227 = vunpack.c.l.b16 %v684
        %v2228 = vunpack.c.h.b16 %v684
        %v2229 = vunpack.c.l.b16 %v685
        %v2230 = vunpack.c.h.b16 %v685
        %v2231 = vunpack.c.l.b16 %v686
        %v2232 = vunpack.c.h.b16 %v686
        %v2233 = vunpack.c.l.b16 %v687
        %v2234 = vunpack.c.h.b16 %v687
        %v2235 = vunpack.c.l.b16 %v688
        %v2236 = vunpack.c.h.b16 %v688
        %v2237 = vunpack.c.l.b16 %v689
        %v2238 = vunpack.c.h.b16 %v689
        %v2239 = vunpack.c.l.b16 %v690
        %v2240 = vunpack.c.h.b16 %v690
        %v2241 = vunpack.c.l.b16 %v691
        %v2242 = vunpack.c.h.b16 %v691
        %v2243 = vunpack.c.l.b16 %v692
        %v2244 = vunpack.c.h.b16 %v692
        %v2245 = vunpack.c.l.b16 %v693
        %v2246 = vunpack.c.h.b16 %v693
        %v2247 = vunpack.c.l.b16 %v694
        %v2248 = vunpack.c.h.b16 %v694
        %v2249 = vunpack.c.l.b16 %v695
        %v2250 = vunpack.c.h.b16 %v695
        %v2251 = vunpack.c.l.b16 %v696
        %v2252 = vunpack.c.h.b16 %v696
        %v2253 = vunpack.c.l.b16 %v697
        %v2254 = vunpack.c.h.b16 %v697
        %v2255 = vunpack.c.l.b16 %v698
        %v2256 = vunpack.c.h.b16 %v698
        %v2257 = vunpack.c.l.b16 %v699
        %v2258 = vunpack.c.h.b16 %v699
        %v2259 = vunpack.c.l.b16 %v700
        %v2260 = vunpack.c.h.b16 %v700
        %v2261 = vunpack.c.l.b16 %v701
        %v2262 = vunpack.c.h.b16 %v701
        %v2263 = vunpack.c.l.b16 %v702
        %v2264 = vunpack.c.h.b16 %v702
        %v2265 = vunpack.c.l.b16 %v703
        %v2266 = vunpack.c.h.b16 %v703
        %v2267 = vunpack.c.l.b16 %v704
        %v2268 = vunpack.c.h.b16 %v704
        %v2269 = vunpack.c.l.b16 %v705
        %v2270 = vunpack.c.h.b16 %v705
        %v2271 = vunpack.c.l.b16 %v706
        %v2272 = vunpack.c.h.b16 %v706
        %v2273 = vunpack.c.l.b16 %v707
        %v2274 = vunpack.c.h.b16 %v707
        %v2275 = vunpack.c.l.b16 %v708
        %v2276 = vunpack.c.h.b16 %v708
        %v2277 = vunpack.c.l.b16 %v709
        %v2278 = vunpack.c.h.b16 %v709
        %v2279 = vunpack.c.l.b16 %v710
        %v2280 = vunpack.c.h.b16 %v710
        %v2281 = vunpack.c.l.b16 %v711
        %v2282 = vunpack.c.h.b16 %v711
        %v2283 = vunpack.c.l.b16 %v712
        %v2284 = vunpack.c.h.b16 %v712
        %v2285 = vunpack.c.l.b16 %v713
        %v2286 = vunpack.c.h.b16 %v713
        %v2287 = vunpack.c.l.b16 %v714
        %v2288 = vunpack.c.h.b16 %v714
        %v2289 = vunpack.c.l.b16 %v715
        %v2290 = vunpack.c.h.b16 %v715
        %v2291 = vunpack.c.l.b16 %v716
        %v2292 = vunpack.c.h.b16 %v716
        %v2293 = vunpack.c.l.b16 %v717
        %v2294 = vunpack.c.h.b16 %v717
        %v2295 = vunpack.c.l.b16 %v718
        %v2296 = vunpack.c.h.b16 %v718
        %v2297 = vunpack.c.l.b16 %v719
        %v2298 = vunpack.c.h.b16 %v719
        %v2299 = vunpack.c.l.b16 %v720
        %v2300 = vunpack.c.h.b16 %v720
        %v2301 = vunpack.c.l.b16 %v721
        %v2302 = vunpack.c.h.b16 %v721
        %v2303 = vunpack.c.l.b16 %v722
        %v2304 = vunpack.c.h.b16 %v722
        %v2305 = vunpack.c.l.b16 %v723
        %v2306 = vunpack.c.h.b16 %v723
        %v2307 = vunpack.c.l.b16 %v724
        %v2308 = vunpack.c.h.b16 %v724
        %v2309 = vunpack.c.l.b16 %v725
        %v2310 = vunpack.c.h.b16 %v725
        %v2311 = vunpack.c.l.b16 %v726
        %v2312 = vunpack.c.h.b16 %v726
        %v2313 = vunpack.c.l.b16 %v727
        %v2314 = vunpack.c.h.b16 %v727
        %v2315 = vunpack.c.l.b16 %v728
        %v2316 = vunpack.c.h.b16 %v728
        %v2317 = vunpack.c.l.b16 %v729
        %v2318 = vunpack.c.h.b16 %v729
        %v2319 = vunpack.c.l.b16 %v730
        %v2320 = vunpack.c.h.b16 %v730
        %v2321 = vunpack.c.l.b16 %v731
        %v2322 = vunpack.c.h.b16 %v731
        %v2323 = vunpack.c.l.b16 %v732
        %v2324 = vunpack.c.h.b16 %v732
        %v2325 = vunpack.c.l.b16 %v733
        %v2326 = vunpack.c.h.b16 %v733
        %v2327 = vunpack.c.l.b16 %v734
        %v2328 = vunpack.c.h.b16 %v734
        %v2329 = vunpack.c.l.b16 %v735
        %v2330 = vunpack.c.h.b16 %v735
        %v2331 = vunpack.c.l.b16 %v736
        %v2332 = vunpack.c.h.b16 %v736
        %v2333 = vunpack.c.l.b16 %v737
        %v2334 = vunpack.c.h.b16 %v737
        %v2335 = vunpack.c.l.b16 %v738
        %v2336 = vunpack.c.h.b16 %v738
        %v2337 = vunpack.c.l.b16 %v739
        %v2338 = vunpack.c.h.b16 %v739
        %v2339 = vunpack.c.l.b16 %v740
        %v2340 = vunpack.c.h.b16 %v740
        %v2341 = vunpack.c.l.b16 %v741
        %v2342 = vunpack.c.h.b16 %v741
        %v2343 = vunpack.c.l.b16 %v742
        %v2344 = vunpack.c.h.b16 %v742
        %v2345 = vunpack.c.l.b16 %v743
        %v2346 = vunpack.c.h.b16 %v743
        %v2347 = vunpack.c.l.b16 %v744
        %v2348 = vunpack.c.h.b16 %v744
        %v2349 = vunpack.c.l.b16 %v745
        %v2350 = vunpack.c.h.b16 %v745
        %v2351 = vunpack.c.l.b16 %v746
        %v2352 = vunpack.c.h.b16 %v746
        %v2353 = vunpack.c.l.b16 %v747
        %v2354 = vunpack.c.h.b16 %v747
        %v2355 = vunpack.c.l.b16 %v748
        %v2356 = vunpack.c.h.b16 %v748
        %v2357 = vunpack.c.l.b16 %v749
        %v2358 = vunpack.c.h.b16 %v749
        %v2359 = vunpack.c.l.b16 %v750
        %v2360 = vunpack.c.h.b16 %v750
        %v2361 = vunpack.c.l.b16 %v751
        %v2362 = vunpack.c.h.b16 %v751
        %v2363 = vunpack.c.l.b16 %v752
        %v2364 = vunpack.c.h.b16 %v752
        %v2365 = vunpack.c.l.b16 %v753
        %v2366 = vunpack.c.h.b16 %v753
        %v2367 = vunpack.c.l.b16 %v754
        %v2368 = vunpack.c.h.b16 %v754
        %v2369 = vunpack.c.l.b16 %v755
        %v2370 = vunpack.c.h.b16 %v755
        %v2371 = vunpack.c.l.b16 %v756
        %v2372 = vunpack.c.h.b16 %v756
        %v2373 = vunpack.c.l.b16 %v757
        %v2374 = vunpack.c.h.b16 %v757
        %v2375 = vunpack.c.l.b16 %v758
        %v2376 = vunpack.c.h.b16 %v758
        %v2377 = vunpack.c.l.b16 %v759
        %v2378 = vunpack.c.h.b16 %v759
        %v2379 = vunpack.c.l.b16 %v760
        %v2380 = vunpack.c.h.b16 %v760
        %v2381 = vunpack.c.l.b16 %v761
        %v2382 = vunpack.c.h.b16 %v761
        %v2383 = vunpack.c.l.b16 %v762
        %v2384 = vunpack.c.h.b16 %v762
        %v2385 = vunpack.c.l.b16 %v763
        %v2386 = vunpack.c.h.b16 %v763
        %v2387 = vunpack.c.l.b16 %v764
        %v2388 = vunpack.c.h.b16 %v764
        %v2389 = vunpack.c.l.b16 %v765
        %v2390 = vunpack.c.h.b16 %v765
        %v2391 = vunpack.c.l.b16 %v766
        %v2392 = vunpack.c.h.b16 %v766
        %v2393 = vunpack.c.l.b16 %v767
        %v2394 = vunpack.c.h.b16 %v767
        %v2395 = vunpack.c.l.b16 %v768
        %v2396 = vunpack.c.h.b16 %v768
        %v2397 = vunpack.c.l.b16 %v769
        %v2398 = vunpack.c.h.b16 %v769
        %v2399 = vunpack.c.l.b16 %v770
        %v2400 = vunpack.c.h.b16 %v770
        %v2401 = vunpack.c.l.b16 %v771
        %v2402 = vunpack.c.h.b16 %v771
        %v2403 = vunpack.c.l.b16 %v772
        %v2404 = vunpack.c.h.b16 %v772
        %v2405 = vunpack.c.l.b16 %v773
        %v2406 = vunpack.c.h.b16 %v773
        %v2407 = vunpack.c.l.b16 %v774
        %v2408 = vunpack.c.h.b16 %v774
        %v2409 = vunpack.c.l.b16 %v775
        %v2410 = vunpack.c.h.b16 %v775
        %v2411 = vunpack.c.l.b16 %v776
        %v2412 = vunpack.c.h.b16 %v776
        %v2413 = vunpack.c.l.b16 %v777
        %v2414 = vunpack.c.h.b16 %v777
        %v2415 = vunpack.c.l.b16 %v778
        %v2416 = vunpack.c.h.b16 %v778
        %v2417 = vunpack.c.l.b16 %v779
        %v2418 = vunpack.c.h.b16 %v779
        %v2419 = vunpack.c.l.b16 %v780
        %v2420 = vunpack.c.h.b16 %v780
        %v2421 = vunpack.c.l.b16 %v781
        %v2422 = vunpack.c.h.b16 %v781
        %v2423 = vunpack.c.l.b16 %v782
        %v2424 = vunpack.c.h.b16 %v782
        %v2425 = vunpack.c.l.b16 %v783
        %v2426 = vunpack.c.h.b16 %v783
        %v2427 = vunpack.c.l.b16 %v784
        %v2428 = vunpack.c.h.b16 %v784
        %v2429 = vunpack.c.l.b16 %v785
        %v2430 = vunpack.c.h.b16 %v785
        %v2431 = vunpack.c.l.b16 %v786
        %v2432 = vunpack.c.h.b16 %v786
        %v2433 = vunpack.c.l.b16 %v787
        %v2434 = vunpack.c.h.b16 %v787
        %v2435 = vunpack.c.l.b16 %v788
        %v2436 = vunpack.c.h.b16 %v788
        %v2437 = vunpack.c.l.b16 %v789
        %v2438 = vunpack.c.h.b16 %v789
        %v2439 = vunpack.c.l.b16 %v790
        %v2440 = vunpack.c.h.b16 %v790
        %v2441 = vunpack.c.l.b16 %v791
        %v2442 = vunpack.c.h.b16 %v791
        %v2443 = vunpack.c.l.b16 %v792
        %v2444 = vunpack.c.h.b16 %v792
        %v2445 = vunpack.c.l.b16 %v793
        %v2446 = vunpack.c.h.b16 %v793
        %v2447 = vunpack.c.l.b16 %v794
        %v2448 = vunpack.c.h.b16 %v794
        %v2449 = vunpack.c.l.b16 %v795
        %v2450 = vunpack.c.h.b16 %v795
        %v2451 = vunpack.c.l.b16 %v796
        %v2452 = vunpack.c.h.b16 %v796
        %v2453 = vunpack.c.l.b16 %v797
        %v2454 = vunpack.c.h.b16 %v797
        %v2455 = vunpack.c.l.b16 %v798
        %v2456 = vunpack.c.h.b16 %v798
        %v2457 = vunpack.c.l.b16 %v799
        %v2458 = vunpack.c.h.b16 %v799
        %v2459 = vunpack.c.l.b16 %v800
        %v2460 = vunpack.c.h.b16 %v800
        %v2461 = vunpack.c.l.b16 %v801
        %v2462 = vunpack.c.h.b16 %v801
        %v2463 = vunpack.c.l.b16 %v802
        %v2464 = vunpack.c.h.b16 %v802
        %v2465 = vunpack.c.l.b16 %v803
        %v2466 = vunpack.c.h.b16 %v803
        %v2467 = vunpack.c.l.b16 %v804
        %v2468 = vunpack.c.h.b16 %v804
        %v2469 = vunpack.c.l.b16 %v805
        %v2470 = vunpack.c.h.b16 %v805
        %v2471 = vunpack.c.l.b16 %v806
        %v2472 = vunpack.c.h.b16 %v806
        %v2473 = vunpack.c.l.b16 %v807
        %v2474 = vunpack.c.h.b16 %v807
        %v2475 = vunpack.c.l.b16 %v808
        %v2476 = vunpack.c.h.b16 %v808
        %v2477 = vunpack.c.l.b16 %v809
        %v2478 = vunpack.c.h.b16 %v809
        %v2479 = vunpack.c.l.b16 %v810
        %v2480 = vunpack.c.h.b16 %v810
        %v2481 = vunpack.c.l.b16 %v811
        %v2482 = vunpack.c.h.b16 %v811
        %v2483 = vunpack.c.l.b16 %v812
        %v2484 = vunpack.c.h.b16 %v812
        %v2485 = vunpack.c.l.b16 %v813
        %v2486 = vunpack.c.h.b16 %v813
        %v2487 = vunpack.c.l.b16 %v814
        %v2488 = vunpack.c.h.b16 %v814
        %v2489 = vunpack.c.l.b16 %v815
        %v2490 = vunpack.c.h.b16 %v815
        %v2491 = vunpack.c.l.b16 %v816
        %v2492 = vunpack.c.h.b16 %v816
        %v2493 = vunpack.c.l.b16 %v817
        %v2494 = vunpack.c.h.b16 %v817
        %v2495 = vunpack.c.l.b16 %v818
        %v2496 = vunpack.c.h.b16 %v818
        %v2497 = vunpack.c.l.b16 %v819
        %v2498 = vunpack.c.h.b16 %v819
        %v2499 = vunpack.c.l.b16 %v820
        %v2500 = vunpack.c.h.b16 %v820
        %v2501 = vunpack.c.l.b16 %v821
        %v2502 = vunpack.c.h.b16 %v821
        %v2503 = vunpack.c.l.b16 %v822
        %v2504 = vunpack.c.h.b16 %v822
        %v2505 = vunpack.c.l.b16 %v823
        %v2506 = vunpack.c.h.b16 %v823
        %v2507 = vunpack.c.l.b16 %v824
        %v2508 = vunpack.c.h.b16 %v824
        %v2509 = vunpack.c.l.b16 %v825
        %v2510 = vunpack.c.h.b16 %v825
        %v2511 = vunpack.c.l.b16 %v826
        %v2512 = vunpack.c.h.b16 %v826
        %v2513 = vunpack.c.l.b16 %v827
        %v2514 = vunpack.c.h.b16 %v827
        %v2515 = vunpack.c.l.b16 %v828
        %v2516 = vunpack.c.h.b16 %v828
        %v2517 = vunpack.c.l.b16 %v829
        %v2518 = vunpack.c.h.b16 %v829
        %v2519 = vunpack.c.l.b16 %v830
        %v2520 = vunpack.c.h.b16 %v830
        %v2521 = vunpack.c.l.b16 %v831
        %v2522 = vunpack.c.h.b16 %v831
        %v2523 = vunpack.c.l.b16 %v832
        %v2524 = vunpack.c.h.b16 %v832
        %v2525 = vunpack.c.l.b16 %v833
        %v2526 = vunpack.c.h.b16 %v833
        %v2527 = vunpack.c.l.b16 %v834
        %v2528 = vunpack.c.h.b16 %v834
        %v2529 = vunpack.c.l.b16 %v835
        %v2530 = vunpack.c.h.b16 %v835
        %v2531 = vunpack.c.l.b16 %v836
        %v2532 = vunpack.c.h.b16 %v836
        %v2533 = vunpack.c.l.b16 %v837
        %v2534 = vunpack.c.h.b16 %v837
        %v2535 = vunpack.c.l.b16 %v838
        %v2536 = vunpack.c.h.b16 %v838
        %v2537 = vunpack.c.l.b16 %v839
        %v2538 = vunpack.c.h.b16 %v839
        %v2539 = vunpack.c.l.b16 %v840
        %v2540 = vunpack.c.h.b16 %v840
        %v2541 = vunpack.c.l.b16 %v841
        %v2542 = vunpack.c.h.b16 %v841
        %v2543 = vunpack.c.l.b16 %v842
        %v2544 = vunpack.c.h.b16 %v842
        %v2545 = vunpack.c.l.b16 %v843
        %v2546 = vunpack.c.h.b16 %v843
        %v2547 = vunpack.c.l.b16 %v844
        %v2548 = vunpack.c.h.b16 %v844
        %v2549 = vunpack.c.l.b16 %v845
        %v2550 = vunpack.c.h.b16 %v845
        %v2551 = vunpack.c.l.b16 %v846
        %v2552 = vunpack.c.h.b16 %v846
        %v2553 = vunpack.c.l.b16 %v847
        %v2554 = vunpack.c.h.b16 %v847
        %v2555 = vunpack.c.l.b16 %v848
        %v2556 = vunpack.c.h.b16 %v848
        %v2557 = vunpack.c.l.b16 %v849
        %v2558 = vunpack.c.h.b16 %v849
        %v2559 = vunpack.c.l.b16 %v850
        %v2560 = vunpack.c.h.b16 %v850
        %v2561 = vunpack.c.l.b16 %v851
        %v2562 = vunpack.c.h.b16 %v851
        %v2563 = vunpack.c.l.b16 %v852
        %v2564 = vunpack.c.h.b16 %v852
        %v2565 = vunpack.c.l.b16 %v853
        %v2566 = vunpack.c.h.b16 %v853
        %v2567 = vunpack.c.l.b16 %v854
        %v2568 = vunpack.c.h.b16 %v854
        %v2569 = vunpack.c.l.b16 %v855
        %v2570 = vunpack.c.h.b16 %v855
        %v2571 = vunpack.c.l.b16 %v856
        %v2572 = vunpack.c.h.b16 %v856
        %v2573 = vunpack.c.l.b16 %v857
        %v2574 = vunpack.c.h.b16 %v857
        %v2575 = vunpack.c.l.b16 %v858
        %v2576 = vunpack.c.h.b16 %v858
        %v2577 = vunpack.c.l.b16 %v859
        %v2578 = vunpack.c.h.b16 %v859
        %v2579 = vunpack.c.l.b16 %v860
        %v2580 = vunpack.c.h.b16 %v860
        %v2581 = vunpack.c.l.b16 %v861
        %v2582 = vunpack.c.h.b16 %v861
        %v2583 = vunpack.c.l.b16 %v862
        %v2584 = vunpack.c.h.b16 %v862
        %v2585 = vunpack.c.l.b16 %v863
        %v2586 = vunpack.c.h.b16 %v863
        %v2587 = vunpack.c.l.b16 %v864
        %v2588 = vunpack.c.h.b16 %v864
        %v2589 = vunpack.c.l.b16 %v865
        %v2590 = vunpack.c.h.b16 %v865
        %v2591 = vunpack.c.l.b16 %v866
        %v2592 = vunpack.c.h.b16 %v866
        %v2593 = vunpack.c.l.b16 %v867
        %v2594 = vunpack.c.h.b16 %v867
        %v2595 = vunpack.c.l.b16 %v868
        %v2596 = vunpack.c.h.b16 %v868
        %v2597 = vunpack.c.l.b16 %v869
        %v2598 = vunpack.c.h.b16 %v869
        %v2599 = vunpack.c.l.b16 %v870
        %v2600 = vunpack.c.h.b16 %v870
        %v2601 = vunpack.c.l.b16 %v871
        %v2602 = vunpack.c.h.b16 %v871
        %v2603 = vunpack.c.l.b16 %v872
        %v2604 = vunpack.c.h.b16 %v872
        %v2605 = vunpack.c.l.b16 %v873
        %v2606 = vunpack.c.h.b16 %v873
        %v2607 = vunpack.c.l.b16 %v874
        %v2608 = vunpack.c.h.b16 %v874
        %v2609 = vunpack.c.l.b16 %v875
        %v2610 = vunpack.c.h.b16 %v875
        %v2611 = vunpack.c.l.b16 %v876
        %v2612 = vunpack.c.h.b16 %v876
        %v2613 = vunpack.c.l.b16 %v877
        %v2614 = vunpack.c.h.b16 %v877
        %v2615 = vunpack.c.l.b16 %v878
        %v2616 = vunpack.c.h.b16 %v878
        %v2617 = vunpack.c.l.b16 %v879
        %v2618 = vunpack.c.h.b16 %v879
        %v2619 = vunpack.c.l.b16 %v880
        %v2620 = vunpack.c.h.b16 %v880
        %v2621 = vunpack.c.l.b16 %v881
        %v2622 = vunpack.c.h.b16 %v881
        %v2623 = vunpack.c.l.b16 %v882
        %v2624 = vunpack.c.h.b16 %v882
        %v2625 = vunpack.c.l.b16 %v883
        %v2626 = vunpack.c.h.b16 %v883
        %v2627 = vunpack.c.l.b16 %v884
        %v2628 = vunpack.c.h.b16 %v884
        %v2629 = vunpack.c.l.b16 %v885
        %v2630 = vunpack.c.h.b16 %v885
        %v2631 = vunpack.c.l.b16 %v886
        %v2632 = vunpack.c.h.b16 %v886
        %v2633 = vunpack.c.l.b16 %v887
        %v2634 = vunpack.c.h.b16 %v887
        %v2635 = vunpack.c.l.b16 %v888
        %v2636 = vunpack.c.h.b16 %v888
        %v2637 = vunpack.c.l.b16 %v889
        %v2638 = vunpack.c.h.b16 %v889
        %v2639 = vunpack.c.l.b16 %v890
        %v2640 = vunpack.c.h.b16 %v890
        %v2641 = vunpack.c.l.b16 %v891
        %v2642 = vunpack.c.h.b16 %v891
        %v2643 = vunpack.c.l.b16 %v892
        %v2644 = vunpack.c.h.b16 %v892
        %v2645 = vunpack.c.l.b16 %v893
        %v2646 = vunpack.c.h.b16 %v893
        %v2647 = vunpack.c.l.b16 %v894
        %v2648 = vunpack.c.h.b16 %v894
        %v2649 = vunpack.c.l.b16 %v895
        %v2650 = vunpack.c.h.b16 %v895
        %v2651 = vunpack.c.l.b16 %v896
        %v2652 = vunpack.c.h.b16 %v896
        %v2653 = vunpack.c.l.b16 %v897
        %v2654 = vunpack.c.h.b16 %v897
        %v2655 = vunpack.c.l.b16 %v898
        %v2656 = vunpack.c.h.b16 %v898
        %v2657 = vunpack.c.l.b16 %v899
        %v2658 = vunpack.c.h.b16 %v899
        %v2659 = vunpack.c.l.b16 %v900
        %v2660 = vunpack.c.h.b16 %v900
        %v2661 = vunpack.c.l.b16 %v901
        %v2662 = vunpack.c.h.b16 %v901
        %v2663 = vunpack.c.l.b16 %v902
        %v2664 = vunpack.c.h.b16 %v902
        %v2665 = vunpack.c.l.b16 %v903
        %v2666 = vunpack.c.h.b16 %v903
        %v2667 = vunpack.c.l.b16 %v904
        %v2668 = vunpack.c.h.b16 %v904
        %v2669 = vunpack.c.l.b16 %v905
        %v2670 = vunpack.c.h.b16 %v905
        %v2671 = vunpack.c.l.b16 %v906
        %v2672 = vunpack.c.h.b16 %v906
        %v2673 = vunpack.c.l.b16 %v907
        %v2674 = vunpack.c.h.b16 %v907
        %v2675 = vunpack.c.l.b16 %v908
        %v2676 = vunpack.c.h.b16 %v908
        %v2677 = vunpack.c.l.b16 %v909
        %v2678 = vunpack.c.h.b16 %v909
        %v2679 = vunpack.c.l.b16 %v910
        %v2680 = vunpack.c.h.b16 %v910
        %v2681 = vunpack.c.l.b16 %v911
        %v2682 = vunpack.c.h.b16 %v911
        %v2683 = vunpack.c.l.b16 %v912
        %v2684 = vunpack.c.h.b16 %v912
        %v2685 = vunpack.c.l.b16 %v913
        %v2686 = vunpack.c.h.b16 %v913
        %v2687 = vunpack.c.l.b16 %v914
        %v2688 = vunpack.c.h.b16 %v914
        %v2689 = vunpack.c.l.b16 %v915
        %v2690 = vunpack.c.h.b16 %v915
        %v2691 = vunpack.c.l.b16 %v916
        %v2692 = vunpack.c.h.b16 %v916
        %v2693 = vunpack.c.l.b16 %v917
        %v2694 = vunpack.c.h.b16 %v917
        %v2695 = vunpack.c.l.b16 %v918
        %v2696 = vunpack.c.h.b16 %v918
        %v2697 = vunpack.c.l.b16 %v919
        %v2698 = vunpack.c.h.b16 %v919
        %v2699 = vunpack.c.l.b16 %v920
        %v2700 = vunpack.c.h.b16 %v920
        %v2701 = vunpack.c.l.b16 %v921
        %v2702 = vunpack.c.h.b16 %v921
        %v2703 = vunpack.c.l.b16 %v922
        %v2704 = vunpack.c.h.b16 %v922
        %v2705 = vunpack.c.l.b16 %v923
        %v2706 = vunpack.c.h.b16 %v923
        %v2707 = vunpack.c.l.b16 %v924
        %v2708 = vunpack.c.h.b16 %v924
        %v2709 = vunpack.c.l.b16 %v925
        %v2710 = vunpack.c.h.b16 %v925
        %v2711 = vunpack.c.l.b16 %v926
        %v2712 = vunpack.c.h.b16 %v926
        %v2713 = vunpack.c.l.b16 %v927
        %v2714 = vunpack.c.h.b16 %v927
        %v2715 = vunpack.c.l.b16 %v928
        %v2716 = vunpack.c.h.b16 %v928
        %v2717 = vunpack.c.l.b16 %v929
        %v2718 = vunpack.c.h.b16 %v929
        %v2719 = vunpack.c.l.b16 %v930
        %v2720 = vunpack.c.h.b16 %v930
        %v2721 = vunpack.c.l.b16 %v931
        %v2722 = vunpack.c.h.b16 %v931
        %v2723 = vunpack.c.l.b16 %v932
        %v2724 = vunpack.c.h.b16 %v932
        %v2725 = vunpack.c.l.b16 %v933
        %v2726 = vunpack.c.h.b16 %v933
        %v2727 = vunpack.c.l.b16 %v934
        %v2728 = vunpack.c.h.b16 %v934
        %v2729 = vunpack.c.l.b16 %v935
        %v2730 = vunpack.c.h.b16 %v935
        %v2731 = vunpack.c.l.b16 %v936
        %v2732 = vunpack.c.h.b16 %v936
        %v2733 = vunpack.c.l.b16 %v937
        %v2734 = vunpack.c.h.b16 %v937
        %v2735 = vunpack.c.l.b16 %v938
        %v2736 = vunpack.c.h.b16 %v938
        %v2737 = vunpack.c.l.b16 %v939
        %v2738 = vunpack.c.h.b16 %v939
        %v2739 = vunpack.c.l.b16 %v940
        %v2740 = vunpack.c.h.b16 %v940
        %v2741 = vunpack.c.l.b16 %v941
        %v2742 = vunpack.c.h.b16 %v941
        %v2743 = vunpack.c.l.b16 %v942
        %v2744 = vunpack.c.h.b16 %v942
        %v2745 = vunpack.c.l.b16 %v943
        %v2746 = vunpack.c.h.b16 %v943
        %v2747 = vunpack.c.l.b16 %v944
        %v2748 = vunpack.c.h.b16 %v944
        %v2749 = vunpack.c.l.b16 %v945
        %v2750 = vunpack.c.h.b16 %v945
        %v2751 = vunpack.c.l.b16 %v946
        %v2752 = vunpack.c.h.b16 %v946
        %v2753 = vunpack.c.l.b16 %v947
        %v2754 = vunpack.c.h.b16 %v947
        %v2755 = vunpack.c.l.b16 %v948
        %v2756 = vunpack.c.h.b16 %v948
        %v2757 = vunpack.c.l.b16 %v949
        %v2758 = vunpack.c.h.b16 %v949
        %v2759 = vunpack.c.l.b16 %v950
        %v2760 = vunpack.c.h.b16 %v950
        %v2761 = vunpack.c.l.b16 %v951
        %v2762 = vunpack.c.h.b16 %v951
        %v2763 = vunpack.c.l.b16 %v952
        %v2764 = vunpack.c.h.b16 %v952
        %v2765 = vunpack.c.l.b16 %v953
        %v2766 = vunpack.c.h.b16 %v953
        %v2767 = vunpack.c.l.b16 %v954
        %v2768 = vunpack.c.h.b16 %v954
        %v2769 = vunpack.c.l.b16 %v955
        %v2770 = vunpack.c.h.b16 %v955
        %v2771 = vunpack.c.l.b16 %v956
        %v2772 = vunpack.c.h.b16 %v956
        %v2773 = vunpack.c.l.b16 %v957
        %v2774 = vunpack.c.h.b16 %v957
        %v2775 = vunpack.c.l.b16 %v958
        %v2776 = vunpack.c.h.b16 %v958
        %v2777 = vunpack.c.l.b16 %v959
        %v2778 = vunpack.c.h.b16 %v959
        %v2779 = vunpack.c.l.b16 %v960
        %v2780 = vunpack.c.h.b16 %v960
        %v2781 = vunpack.c.l.b16 %v961
        %v2782 = vunpack.c.h.b16 %v961
        %v2783 = vunpack.c.l.b16 %v962
        %v2784 = vunpack.c.h.b16 %v962
        %v2785 = vunpack.c.l.b16 %v963
        %v2786 = vunpack.c.h.b16 %v963
        %v2787 = vunpack.c.l.b16 %v964
        %v2788 = vunpack.c.h.b16 %v964
        %v2789 = vunpack.c.l.b16 %v965
        %v2790 = vunpack.c.h.b16 %v965
        %v2791 = vunpack.c.l.b16 %v966
        %v2792 = vunpack.c.h.b16 %v966
        %v2793 = vunpack.c.l.b16 %v967
        %v2794 = vunpack.c.h.b16 %v967
        %v2795 = vunpack.c.l.b16 %v968
        %v2796 = vunpack.c.h.b16 %v968
        %v2797 = vunpack.c.l.b16 %v969
        %v2798 = vunpack.c.h.b16 %v969
        %v2799 = vunpack.c.l.b16 %v970
        %v2800 = vunpack.c.h.b16 %v970
        %v2801 = vunpack.c.l.b16 %v971
        %v2802 = vunpack.c.h.b16 %v971
        %v2803 = vunpack.c.l.b16 %v972
        %v2804 = vunpack.c.h.b16 %v972
        %v2805 = vunpack.c.l.b16 %v973
        %v2806 = vunpack.c.h.b16 %v973
        %v2807 = vunpack.c.l.b16 %v974
        %v2808 = vunpack.c.h.b16 %v974
        %v2809 = vunpack.c.l.b16 %v975
        %v2810 = vunpack.c.h.b16 %v975
        %v2811 = vunpack.c.l.b16 %v976
        %v2812 = vunpack.c.h.b16 %v976
        %v2813 = vunpack.c.l.b16 %v977
        %v2814 = vunpack.c.h.b16 %v977
        %v2815 = vunpack.c.l.b16 %v978
        %v2816 = vunpack.c.h.b16 %v978
        %v2817 = vunpack.c.l.b16 %v979
        %v2818 = vunpack.c.h.b16 %v979
        %v2819 = vunpack.c.l.b16 %v980
        %v2820 = vunpack.c.h.b16 %v980
        %v2821 = vunpack.c.l.b16 %v981
        %v2822 = vunpack.c.h.b16 %v981
        %v2823 = vunpack.c.l.b16 %v982
        %v2824 = vunpack.c.h.b16 %v982
        %v2825 = vunpack.c.l.b16 %v983
        %v2826 = vunpack.c.h.b16 %v983
        %v2827 = vunpack.c.l.b16 %v984
        %v2828 = vunpack.c.h.b16 %v984
        %v2829 = vunpack.c.l.b16 %v985
        %v2830 = vunpack.c.h.b16 %v985
        %v2831 = vunpack.c.l.b16 %v986
        %v2832 = vunpack.c.h.b16 %v986
        %v2833 = vunpack.c.l.b16 %v987
        %v2834 = vunpack.c.h.b16 %v987
        %v2835 = vunpack.c.l.b16 %v988
        %v2836 = vunpack.c.h.b16 %v988
        %v2837 = vunpack.c.l.b16 %v989
        %v2838 = vunpack.c.h.b16 %v989
        %v2839 = vunpack.c.l.b16 %v990
        %v2840 = vunpack.c.h.b16 %v990
        %v2841 = vunpack.c.l.b16 %v991
        %v2842 = vunpack.c.h.b16 %v991
        %v2843 = vunpack.c.l.b16 %v992
        %v2844 = vunpack.c.h.b16 %v992
        %v2845 = vunpack.c.l.b16 %v993
        %v2846 = vunpack.c.h.b16 %v993
        %v2847 = vunpack.c.l.b16 %v994
        %v2848 = vunpack.c.h.b16 %v994
        %v2849 = vunpack.c.l.b16 %v995
        %v2850 = vunpack.c.h.b16 %v995
        %v2851 = vunpack.c.l.b16 %v996
        %v2852 = vunpack.c.h.b16 %v996
        %v2853 = vunpack.c.l.b16 %v997
        %v2854 = vunpack.c.h.b16 %v997
        %v2855 = vunpack.c.l.b16 %v998
        %v2856 = vunpack.c.h.b16 %v998
        %v2857 = vunpack.c.l.b16 %v999
        %v2858 = vunpack.c.h.b16 %v999
        %v2859 = vunpack.c.l.b16 %v1000
        %v2860 = vunpack.c.h.b16 %v1000
        %v2861 = vunpack.c.l.b16 %v1001
        %v2862 = vunpack.c.h.b16 %v1001
        %v2863 = vunpack.c.l.b16 %v1002
        %v2864 = vunpack.c.h.b16 %v1002
        %v2865 = vunpack.c.l.b16 %v1003
        %v2866 = vunpack.c.h.b16 %v1003
        %v2867 = vunpack.c.l.b16 %v1004
        %v2868 = vunpack.c.h.b16 %v1004
        %v2869 = vunpack.c.l.b16 %v1005
        %v2870 = vunpack.c.h.b16 %v1005
        %v2871 = vunpack.c.l.b16 %v1006
        %v2872 = vunpack.c.h.b16 %v1006
        %v2873 = vunpack.c.l.b16 %v1007
        %v2874 = vunpack.c.h.b16 %v1007
        %v2875 = vunpack.c.l.b16 %v1008
        %v2876 = vunpack.c.h.b16 %v1008
        %v2877 = vunpack.c.l.b16 %v1009
        %v2878 = vunpack.c.h.b16 %v1009
        %v2879 = vunpack.c.l.b16 %v1010
        %v2880 = vunpack.c.h.b16 %v1010
        %v2881 = vunpack.c.l.b16 %v1011
        %v2882 = vunpack.c.h.b16 %v1011
        %v2883 = vunpack.c.l.b16 %v1012
        %v2884 = vunpack.c.h.b16 %v1012
        %v2885 = vunpack.c.l.b16 %v1013
        %v2886 = vunpack.c.h.b16 %v1013
        %v2887 = vunpack.c.l.b16 %v1014
        %v2888 = vunpack.c.h.b16 %v1014
        %v2889 = vunpack.c.l.b16 %v1015
        %v2890 = vunpack.c.h.b16 %v1015
        %v2891 = vunpack.c.l.b16 %v1016
        %v2892 = vunpack.c.h.b16 %v1016
        %v2893 = vunpack.c.l.b16 %v1017
        %v2894 = vunpack.c.h.b16 %v1017
        %v2895 = vunpack.c.l.b16 %v1018
        %v2896 = vunpack.c.h.b16 %v1018
        %v2897 = vunpack.c.l.b16 %v1019
        %v2898 = vunpack.c.h.b16 %v1019
        %v2899 = vunpack.c.l.b16 %v1020
        %v2900 = vunpack.c.h.b16 %v1020
        %v2901 = vunpack.c.l.b16 %v1021
        %v2902 = vunpack.c.h.b16 %v1021
        %v2903 = vunpack.c.l.b16 %v1022
        %v2904 = vunpack.c.h.b16 %v1022
        %v2905 = vunpack.c.l.b16 %v1023
        %v2906 = vunpack.c.h.b16 %v1023
        %v2907 = vunpack.c.l.b16 %v1024
        %v2908 = vunpack.c.h.b16 %v1024
        %v2909 = vunpack.c.l.b16 %v1025
        %v2910 = vunpack.c.h.b16 %v1025
        %v2911 = vunpack.c.l.b16 %v1026
        %v2912 = vunpack.c.h.b16 %v1026
        %v2913 = vunpack.c.l.b16 %v1027
        %v2914 = vunpack.c.h.b16 %v1027
        %v2915 = vunpack.c.l.b16 %v1028
        %v2916 = vunpack.c.h.b16 %v1028
        %v2917 = vunpack.c.l.b16 %v1029
        %v2918 = vunpack.c.h.b16 %v1029
        %v2919 = vunpack.c.l.b16 %v1030
        %v2920 = vunpack.c.h.b16 %v1030
        %v2921 = vunpack.c.l.b16 %v1031
        %v2922 = vunpack.c.h.b16 %v1031
        %v2923 = vunpack.c.l.b16 %v1032
        %v2924 = vunpack.c.h.b16 %v1032
        %v2925 = vunpack.c.l.b16 %v1033
        %v2926 = vunpack.c.h.b16 %v1033
        %v2927 = vunpack.c.l.b16 %v1034
        %v2928 = vunpack.c.h.b16 %v1034
        %v2929 = vunpack.c.l.b16 %v1035
        %v2930 = vunpack.c.h.b16 %v1035
        %v2931 = vunpack.c.l.b16 %v1036
        %v2932 = vunpack.c.h.b16 %v1036
        %v2933 = vunpack.c.l.b16 %v1037
        %v2934 = vunpack.c.h.b16 %v1037
        %v2935 = vunpack.c.l.b16 %v1038
        %v2936 = vunpack.c.h.b16 %v1038
        %v2937 = vunpack.c.l.b16 %v1039
        %v2938 = vunpack.c.h.b16 %v1039
        %v2939 = vunpack.c.l.b16 %v1040
        %v2940 = vunpack.c.h.b16 %v1040
        %v2941 = vunpack.c.l.b16 %v1041
        %v2942 = vunpack.c.h.b16 %v1041
        %v2943 = vunpack.c.l.b16 %v1042
        %v2944 = vunpack.c.h.b16 %v1042
        %v2945 = vunpack.c.l.b16 %v1043
        %v2946 = vunpack.c.h.b16 %v1043
        %v2947 = vunpack.c.l.b16 %v1044
        %v2948 = vunpack.c.h.b16 %v1044
        %v2949 = vunpack.c.l.b16 %v1045
        %v2950 = vunpack.c.h.b16 %v1045
        %v2951 = vunpack.c.l.b16 %v1046
        %v2952 = vunpack.c.h.b16 %v1046
        %v2953 = vunpack.c.l.b16 %v1047
        %v2954 = vunpack.c.h.b16 %v1047
        %v2955 = vunpack.c.l.b16 %v1048
        %v2956 = vunpack.c.h.b16 %v1048
        %v2957 = vunpack.c.l.b16 %v1049
        %v2958 = vunpack.c.h.b16 %v1049
        %v2959 = vunpack.c.l.b16 %v1050
        %v2960 = vunpack.c.h.b16 %v1050
        %v2961 = vunpack.c.l.b16 %v1051
        %v2962 = vunpack.c.h.b16 %v1051
        %v2963 = vunpack.c.l.b16 %v1052
        %v2964 = vunpack.c.h.b16 %v1052
        %v2965 = vunpack.c.l.b16 %v1053
        %v2966 = vunpack.c.h.b16 %v1053
        %v2967 = vunpack.c.l.b16 %v1054
        %v2968 = vunpack.c.h.b16 %v1054
        %v2969 = vunpack.c.l.b16 %v1055
        %v2970 = vunpack.c.h.b16 %v1055
        %v2971 = vunpack.c.l.b16 %v1056
        %v2972 = vunpack.c.h.b16 %v1056
        %v2973 = vunpack.c.l.b16 %v1057
        %v2974 = vunpack.c.h.b16 %v1057
        %v2975 = vunpack.c.l.b16 %v1058
        %v2976 = vunpack.c.h.b16 %v1058
        %v2977 = vunpack.c.l.b16 %v1059
        %v2978 = vunpack.c.h.b16 %v1059
        %v2979 = vunpack.c.l.b16 %v1060
        %v2980 = vunpack.c.h.b16 %v1060
        %v2981 = vunpack.c.l.b16 %v1061
        %v2982 = vunpack.c.h.b16 %v1061
        %v2983 = vunpack.c.l.b16 %v1062
        %v2984 = vunpack.c.h.b16 %v1062
        %v2985 = vunpack.c.l.b16 %v1063
        %v2986 = vunpack.c.h.b16 %v1063
        %v2987 = vunpack.c.l.b16 %v1064
        %v2988 = vunpack.c.h.b16 %v1064
        %v2989 = vunpack.c.l.b16 %v1065
        %v2990 = vunpack.c.h.b16 %v1065
        %v2991 = vunpack.c.l.b16 %v1066
        %v2992 = vunpack.c.h.b16 %v1066
        %v2993 = vunpack.c.l.b16 %v1067
        %v2994 = vunpack.c.h.b16 %v1067
        %v2995 = vunpack.c.l.b16 %v1068
        %v2996 = vunpack.c.h.b16 %v1068
        %v2997 = vunpack.c.l.b16 %v1069
        %v2998 = vunpack.c.h.b16 %v1069
        %v2999 = vunpack.c.l.b16 %v1070
        %v3000 = vunpack.c.h.b16 %v1070
        %v3001 = vunpack.c.l.b16 %v1071
        %v3002 = vunpack.c.h.b16 %v1071
        %v3003 = vunpack.c.l.b16 %v1072
        %v3004 = vunpack.c.h.b16 %v1072
        %v3005 = vunpack.c.l.b16 %v1073
        %v3006 = vunpack.c.h.b16 %v1073
        %v3007 = vunpack.c.l.b16 %v1074
        %v3008 = vunpack.c.h.b16 %v1074
        %v3009 = vunpack.c.l.b16 %v1075
        %v3010 = vunpack.c.h.b16 %v1075
        %v3011 = vunpack.c.l.b16 %v1076
        %v3012 = vunpack.c.h.b16 %v1076
        %v3013 = vunpack.c.l.b16 %v1077
        %v3014 = vunpack.c.h.b16 %v1077
        %v3015 = vunpack.c.l.b16 %v1078
        %v3016 = vunpack.c.h.b16 %v1078
        %v3017 = vunpack.c.l.b16 %v1079
        %v3018 = vunpack.c.h.b16 %v1079
        %v3019 = vunpack.c.l.b16 %v1080
        %v3020 = vunpack.c.h.b16 %v1080
        %v3021 = vunpack.c.l.b16 %v1081
        %v3022 = vunpack.c.h.b16 %v1081
        %v3023 = vunpack.c.l.b16 %v1082
        %v3024 = vunpack.c.h.b16 %v1082
        %v3025 = vpack.c.b16 %v1749, %v1745
        %v3026 = vpack.c.b16 %v1750, %v1746
        %v3027 = vpack.c.b16 %v1751, %v1747
        %v3028 = vpack.c.b16 %v1752, %v1748
        %v3029 = vpack.c.b16 %v1757, %v1753
        %v3030 = vpack.c.b16 %v1758, %v1754
        %v3031 = vpack.c.b16 %v1759, %v1755
        %v3032 = vpack.c.b16 %v1760, %v1756
        %v3033 = vpack.c.b16 %v1765, %v1761
        %v3034 = vpack.c.b16 %v1766, %v1762
        %v3035 = vpack.c.b16 %v1767, %v1763
        %v3036 = vpack.c.b16 %v1768, %v1764
        %v3037 = vpack.c.b16 %v1773, %v1769
        %v3038 = vpack.c.b16 %v1774, %v1770
        %v3039 = vpack.c.b16 %v1775, %v1771
        %v3040 = vpack.c.b16 %v1776, %v1772
        %v3041 = vpack.c.b16 %v1781, %v1777
        %v3042 = vpack.c.b16 %v1782, %v1778
        %v3043 = vpack.c.b16 %v1783, %v1779
        %v3044 = vpack.c.b16 %v1784, %v1780
        %v3045 = vpack.c.b16 %v1789, %v1785
        %v3046 = vpack.c.b16 %v1790, %v1786
        %v3047 = vpack.c.b16 %v1791, %v1787
        %v3048 = vpack.c.b16 %v1792, %v1788
        %v3049 = vpack.c.b16 %v1797, %v1793
        %v3050 = vpack.c.b16 %v1798, %v1794
        %v3051 = vpack.c.b16 %v1799, %v1795
        %v3052 = vpack.c.b16 %v1800, %v1796
        %v3053 = vpack.c.b16 %v1805, %v1801
        %v3054 = vpack.c.b16 %v1806, %v1802
        %v3055 = vpack.c.b16 %v1807, %v1803
        %v3056 = vpack.c.b16 %v1808, %v1804
        %v3057 = vpack.c.b16 %v1813, %v1809
        %v3058 = vpack.c.b16 %v1814, %v1810
        %v3059 = vpack.c.b16 %v1815, %v1811
        %v3060 = vpack.c.b16 %v1816, %v1812
        %v3061 = vpack.c.b16 %v1821, %v1817
        %v3062 = vpack.c.b16 %v1822, %v1818
        %v3063 = vpack.c.b16 %v1823, %v1819
        %v3064 = vpack.c.b16 %v1824, %v1820
        %v3065 = vpack.c.b16 %v1829, %v1825
        %v3066 = vpack.c.b16 %v1830, %v1826
        %v3067 = vpack.c.b16 %v1831, %v1827
        %v3068 = vpack.c.b16 %v1832, %v1828
        %v3069 = vpack.c.b16 %v1837, %v1833
        %v3070 = vpack.c.b16 %v1838, %v1834
        %v3071 = vpack.c.b16 %v1839, %v1835
        %v3072 = vpack.c.b16 %v1840, %v1836
        %v3073 = vpack.c.b16 %v1845, %v1841
        %v3074 = vpack.c.b16 %v1846, %v1842
        %v3075 = vpack.c.b16 %v1847, %v1843
        %v3076 = vpack.c.b16 %v1848, %v1844
        %v3077 = vpack.c.b16 %v1853, %v1849
        %v3078 = vpack.c.b16 %v1854, %v1850
        %v3079 = vpack.c.b16 %v1855, %v1851
        %v3080 = vpack.c.b16 %v1856, %v1852
        %v3081 = vpack.c.b16 %v1861, %v1857
        %v3082 = vpack.c.b16 %v1862, %v1858
        %v3083 = vpack.c.b16 %v1863, %v1859
        %v3084 = vpack.c.b16 %v1864, %v1860
        %v3085 = vpack.c.b16 %v1869, %v1865
        %v3086 = vpack.c.b16 %v1870, %v1866
        %v3087 = vpack.c.b16 %v1871, %v1867
        %v3088 = vpack.c.b16 %v1872, %v1868
        %v3089 = vpack.c.b16 %v1877, %v1873
        %v3090 = vpack.c.b16 %v1878, %v1874
        %v3091 = vpack.c.b16 %v1879, %v1875
        %v3092 = vpack.c.b16 %v1880, %v1876
        %v3093 = vpack.c.b16 %v1885, %v1881
        %v3094 = vpack.c.b16 %v1886, %v1882
        %v3095 = vpack.c.b16 %v1887, %v1883
        %v3096 = vpack.c.b16 %v1888, %v1884
        %v3097 = vpack.c.b16 %v1893, %v1889
        %v3098 = vpack.c.b16 %v1894, %v1890
        %v3099 = vpack.c.b16 %v1895, %v1891
        %v3100 = vpack.c.b16 %v1896, %v1892
        %v3101 = vpack.c.b16 %v1901, %v1897
        %v3102 = vpack.c.b16 %v1902, %v1898
        %v3103 = vpack.c.b16 %v1903, %v1899
        %v3104 = vpack.c.b16 %v1904, %v1900
        %v3105 = vpack.c.b16 %v1909, %v1905
        %v3106 = vpack.c.b16 %v1910, %v1906
        %v3107 = vpack.c.b16 %v1911, %v1907
        %v3108 = vpack.c.b16 %v1912, %v1908
        %v3109 = vpack.c.b16 %v1917, %v1913
        %v3110 = vpack.c.b16 %v1918, %v1914
        %v3111 = vpack.c.b16 %v1919, %v1915
        %v3112 = vpack.c.b16 %v1920, %v1916
        %v3113 = vpack.c.b16 %v1925, %v1921
        %v3114 = vpack.c.b16 %v1926, %v1922
        %v3115 = vpack.c.b16 %v1927, %v1923
        %v3116 = vpack.c.b16 %v1928, %v1924
        %v3117 = vpack.c.b16 %v1933, %v1929
        %v3118 = vpack.c.b16 %v1934, %v1930
        %v3119 = vpack.c.b16 %v1935, %v1931
        %v3120 = vpack.c.b16 %v1936, %v1932
        %v3121 = vpack.c.b16 %v1941, %v1937
        %v3122 = vpack.c.b16 %v1942, %v1938
        %v3123 = vpack.c.b16 %v1943, %v1939
        %v3124 = vpack.c.b16 %v1944, %v1940
        %v3125 = vpack.c.b16 %v1949, %v1945
        %v3126 = vpack.c.b16 %v1950, %v1946
        %v3127 = vpack.c.b16 %v1951, %v1947
        %v3128 = vpack.c.b16 %v1952, %v1948
        %v3129 = vpack.c.b16 %v1957, %v1953
        %v3130 = vpack.c.b16 %v1958, %v1954
        %v3131 = vpack.c.b16 %v1959, %v1955
        %v3132 = vpack.c.b16 %v1960, %v1956
        %v3133 = vpack.c.b16 %v1965, %v1961
        %v3134 = vpack.c.b16 %v1966, %v1962
        %v3135 = vpack.c.b16 %v1967, %v1963
        %v3136 = vpack.c.b16 %v1968, %v1964
        %v3137 = vpack.c.b16 %v1973, %v1969
        %v3138 = vpack.c.b16 %v1974, %v1970
        %v3139 = vpack.c.b16 %v1975, %v1971
        %v3140 = vpack.c.b16 %v1976, %v1972
        %v3141 = vpack.c.b16 %v1981, %v1977
        %v3142 = vpack.c.b16 %v1982, %v1978
        %v3143 = vpack.c.b16 %v1983, %v1979
        %v3144 = vpack.c.b16 %v1984, %v1980
        %v3145 = vpack.c.b16 %v1989, %v1985
        %v3146 = vpack.c.b16 %v1990, %v1986
        %v3147 = vpack.c.b16 %v1991, %v1987
        %v3148 = vpack.c.b16 %v1992, %v1988
        %v3149 = vpack.c.b16 %v1997, %v1993
        %v3150 = vpack.c.b16 %v1998, %v1994
        %v3151 = vpack.c.b16 %v1999, %v1995
        %v3152 = vpack.c.b16 %v2000, %v1996
        %v3153 = vpack.c.b16 %v2005, %v2001
        %v3154 = vpack.c.b16 %v2006, %v2002
        %v3155 = vpack.c.b16 %v2007, %v2003
        %v3156 = vpack.c.b16 %v2008, %v2004
        %v3157 = vpack.c.b16 %v2013, %v2009
        %v3158 = vpack.c.b16 %v2014, %v2010
        %v3159 = vpack.c.b16 %v2015, %v2011
        %v3160 = vpack.c.b16 %v2016, %v2012
        %v3161 = vpack.c.b16 %v2021, %v2017
        %v3162 = vpack.c.b16 %v2022, %v2018
        %v3163 = vpack.c.b16 %v2023, %v2019
        %v3164 = vpack.c.b16 %v2024, %v2020
        %v3165 = vpack.c.b16 %v2029, %v2025
        %v3166 = vpack.c.b16 %v2030, %v2026
        %v3167 = vpack.c.b16 %v2031, %v2027
        %v3168 = vpack.c.b16 %v2032, %v2028
        %v3169 = vpack.c.b16 %v2037, %v2033
        %v3170 = vpack.c.b16 %v2038, %v2034
        %v3171 = vpack.c.b16 %v2039, %v2035
        %v3172 = vpack.c.b16 %v2040, %v2036
        %v3173 = vpack.c.b16 %v2045, %v2041
        %v3174 = vpack.c.b16 %v2046, %v2042
        %v3175 = vpack.c.b16 %v2047, %v2043
        %v3176 = vpack.c.b16 %v2048, %v2044
        %v3177 = vpack.c.b16 %v2053, %v2049
        %v3178 = vpack.c.b16 %v2054, %v2050
        %v3179 = vpack.c.b16 %v2055, %v2051
        %v3180 = vpack.c.b16 %v2056, %v2052
        %v3181 = vpack.c.b16 %v2061, %v2057
        %v3182 = vpack.c.b16 %v2062, %v2058
        %v3183 = vpack.c.b16 %v2063, %v2059
        %v3184 = vpack.c.b16 %v2064, %v2060
        %v3185 = vpack.c.b16 %v2069, %v2065
        %v3186 = vpack.c.b16 %v2070, %v2066
        %v3187 = vpack.c.b16 %v2071, %v2067
        %v3188 = vpack.c.b16 %v2072, %v2068
        %v3189 = vpack.c.b16 %v2077, %v2073
        %v3190 = vpack.c.b16 %v2078, %v2074
        %v3191 = vpack.c.b16 %v2079, %v2075
        %v3192 = vpack.c.b16 %v2080, %v2076
        %v3193 = vpack.c.b16 %v2085, %v2081
        %v3194 = vpack.c.b16 %v2086, %v2082
        %v3195 = vpack.c.b16 %v2087, %v2083
        %v3196 = vpack.c.b16 %v2088, %v2084
        %v3197 = vpack.c.b16 %v2093, %v2089
        %v3198 = vpack.c.b16 %v2094, %v2090
        %v3199 = vpack.c.b16 %v2095, %v2091
        %v3200 = vpack.c.b16 %v2096, %v2092
        %v3201 = vpack.c.b16 %v2101, %v2097
        %v3202 = vpack.c.b16 %v2102, %v2098
        %v3203 = vpack.c.b16 %v2103, %v2099
        %v3204 = vpack.c.b16 %v2104, %v2100
        %v3205 = vpack.c.b16 %v2109, %v2105
        %v3206 = vpack.c.b16 %v2110, %v2106
        %v3207 = vpack.c.b16 %v2111, %v2107
        %v3208 = vpack.c.b16 %v2112, %v2108
        %v3209 = vpack.c.b16 %v2117, %v2113
        %v3210 = vpack.c.b16 %v2118, %v2114
        %v3211 = vpack.c.b16 %v2119, %v2115
        %v3212 = vpack.c.b16 %v2120, %v2116
        %v3213 = vpack.c.b16 %v2125, %v2121
        %v3214 = vpack.c.b16 %v2126, %v2122
        %v3215 = vpack.c.b16 %v2127, %v2123
        %v3216 = vpack.c.b16 %v2128, %v2124
        %v3217 = vpack.c.b16 %v2133, %v2129
        %v3218 = vpack.c.b16 %v2134, %v2130
        %v3219 = vpack.c.b16 %v2135, %v2131
        %v3220 = vpack.c.b16 %v2136, %v2132
        %v3221 = vpack.c.b16 %v2141, %v2137
        %v3222 = vpack.c.b16 %v2142, %v2138
        %v3223 = vpack.c.b16 %v2143, %v2139
        %v3224 = vpack.c.b16 %v2144, %v2140
        %v3225 = vpack.c.b16 %v2149, %v2145
        %v3226 = vpack.c.b16 %v2150, %v2146
        %v3227 = vpack.c.b16 %v2151, %v2147
        %v3228 = vpack.c.b16 %v2152, %v2148
        %v3229 = vpack.c.b16 %v2157, %v2153
        %v3230 = vpack.c.b16 %v2158, %v2154
        %v3231 = vpack.c.b16 %v2159, %v2155
        %v3232 = vpack.c.b16 %v2160, %v2156
        %v3233 = vpack.c.b16 %v2165, %v2161
        %v3234 = vpack.c.b16 %v2166, %v2162
        %v3235 = vpack.c.b16 %v2167, %v2163
        %v3236 = vpack.c.b16 %v2168, %v2164
        %v3237 = vpack.c.b16 %v2173, %v2169
        %v3238 = vpack.c.b16 %v2174, %v2170
        %v3239 = vpack.c.b16 %v2175, %v2171
        %v3240 = vpack.c.b16 %v2176, %v2172
        %v3241 = vpack.c.b16 %v2181, %v2177
        %v3242 = vpack.c.b16 %v2182, %v2178
        %v3243 = vpack.c.b16 %v2183, %v2179
        %v3244 = vpack.c.b16 %v2184, %v2180
        %v3245 = vpack.c.b16 %v2189, %v2185
        %v3246 = vpack.c.b16 %v2190, %v2186
        %v3247 = vpack.c.b16 %v2191, %v2187
        %v3248 = vpack.c.b16 %v2192, %v2188
        %v3249 = vpack.c.b16 %v2197, %v2193
        %v3250 = vpack.c.b16 %v2198, %v2194
        %v3251 = vpack.c.b16 %v2199, %v2195
        %v3252 = vpack.c.b16 %v2200, %v2196
        %v3253 = vpack.c.b16 %v2205, %v2201
        %v3254 = vpack.c.b16 %v2206, %v2202
        %v3255 = vpack.c.b16 %v2207, %v2203
        %v3256 = vpack.c.b16 %v2208, %v2204
        %v3257 = vpack.c.b16 %v2213, %v2209
        %v3258 = vpack.c.b16 %v2214, %v2210
        %v3259 = vpack.c.b16 %v2215, %v2211
        %v3260 = vpack.c.b16 %v2216, %v2212
        %v3261 = vpack.c.b16 %v2221, %v2217
        %v3262 = vpack.c.b16 %v2222, %v2218
        %v3263 = vpack.c.b16 %v2223, %v2219
        %v3264 = vpack.c.b16 %v2224, %v2220
        %v3265 = vpack.c.b16 %v2229, %v2225
        %v3266 = vpack.c.b16 %v2230, %v2226
        %v3267 = vpack.c.b16 %v2231, %v2227
        %v3268 = vpack.c.b16 %v2232, %v2228
        %v3269 = vpack.c.b16 %v2237, %v2233
        %v3270 = vpack.c.b16 %v2238, %v2234
        %v3271 = vpack.c.b16 %v2239, %v2235
        %v3272 = vpack.c.b16 %v2240, %v2236
        %v3273 = vpack.c.b16 %v2245, %v2241
        %v3274 = vpack.c.b16 %v2246, %v2242
        %v3275 = vpack.c.b16 %v2247, %v2243
        %v3276 = vpack.c.b16 %v2248, %v2244
        %v3277 = vpack.c.b16 %v2253, %v2249
        %v3278 = vpack.c.b16 %v2254, %v2250
        %v3279 = vpack.c.b16 %v2255, %v2251
        %v3280 = vpack.c.b16 %v2256, %v2252
        %v3281 = vpack.c.b16 %v2261, %v2257
        %v3282 = vpack.c.b16 %v2262, %v2258
        %v3283 = vpack.c.b16 %v2263, %v2259
        %v3284 = vpack.c.b16 %v2264, %v2260
        %v3285 = vpack.c.b16 %v2269, %v2265
        %v3286 = vpack.c.b16 %v2270, %v2266
        %v3287 = vpack.c.b16 %v2271, %v2267
        %v3288 = vpack.c.b16 %v2272, %v2268
        %v3289 = vpack.c.b16 %v2277, %v2273
        %v3290 = vpack.c.b16 %v2278, %v2274
        %v3291 = vpack.c.b16 %v2279, %v2275
        %v3292 = vpack.c.b16 %v2280, %v2276
        %v3293 = vpack.c.b16 %v2285, %v2281
        %v3294 = vpack.c.b16 %v2286, %v2282
        %v3295 = vpack.c.b16 %v2287, %v2283
        %v3296 = vpack.c.b16 %v2288, %v2284
        %v3297 = vpack.c.b16 %v2293, %v2289
        %v3298 = vpack.c.b16 %v2294, %v2290
        %v3299 = vpack.c.b16 %v2295, %v2291
        %v3300 = vpack.c.b16 %v2296, %v2292
        %v3301 = vpack.c.b16 %v2301, %v2297
        %v3302 = vpack.c.b16 %v2302, %v2298
        %v3303 = vpack.c.b16 %v2303, %v2299
        %v3304 = vpack.c.b16 %v2304, %v2300
        %v3305 = vpack.c.b16 %v2309, %v2305
        %v3306 = vpack.c.b16 %v2310, %v2306
        %v3307 = vpack.c.b16 %v2311, %v2307
        %v3308 = vpack.c.b16 %v2312, %v2308
        %v3309 = vpack.c.b16 %v2317, %v2313
        %v3310 = vpack.c.b16 %v2318, %v2314
        %v3311 = vpack.c.b16 %v2319, %v2315
        %v3312 = vpack.c.b16 %v2320, %v2316
        %v3313 = vpack.c.b16 %v2325, %v2321
        %v3314 = vpack.c.b16 %v2326, %v2322
        %v3315 = vpack.c.b16 %v2327, %v2323
        %v3316 = vpack.c.b16 %v2328, %v2324
        %v3317 = vpack.c.b16 %v2333, %v2329
        %v3318 = vpack.c.b16 %v2334, %v2330
        %v3319 = vpack.c.b16 %v2335, %v2331
        %v3320 = vpack.c.b16 %v2336, %v2332
        %v3321 = vpack.c.b16 %v2341, %v2337
        %v3322 = vpack.c.b16 %v2342, %v2338
        %v3323 = vpack.c.b16 %v2343, %v2339
        %v3324 = vpack.c.b16 %v2344, %v2340
        %v3325 = vpack.c.b16 %v2349, %v2345
        %v3326 = vpack.c.b16 %v2350, %v2346
        %v3327 = vpack.c.b16 %v2351, %v2347
        %v3328 = vpack.c.b16 %v2352, %v2348
        %v3329 = vpack.c.b16 %v2357, %v2353
        %v3330 = vpack.c.b16 %v2358, %v2354
        %v3331 = vpack.c.b16 %v2359, %v2355
        %v3332 = vpack.c.b16 %v2360, %v2356
        %v3333 = vpack.c.b16 %v2365, %v2361
        %v3334 = vpack.c.b16 %v2366, %v2362
        %v3335 = vpack.c.b16 %v2367, %v2363
        %v3336 = vpack.c.b16 %v2368, %v2364
        %v3337 = vpack.c.b16 %v2373, %v2369
        %v3338 = vpack.c.b16 %v2374, %v2370
        %v3339 = vpack.c.b16 %v2375, %v2371
        %v3340 = vpack.c.b16 %v2376, %v2372
        %v3341 = vpack.c.b16 %v2381, %v2377
        %v3342 = vpack.c.b16 %v2382, %v2378
        %v3343 = vpack.c.b16 %v2383, %v2379
        %v3344 = vpack.c.b16 %v2384, %v2380
        %v3345 = vpack.c.b16 %v2389, %v2385
        %v3346 = vpack.c.b16 %v2390, %v2386
        %v3347 = vpack.c.b16 %v2391, %v2387
        %v3348 = vpack.c.b16 %v2392, %v2388
        %v3349 = vpack.c.b16 %v2397, %v2393
        %v3350 = vpack.c.b16 %v2398, %v2394
        %v3351 = vpack.c.b16 %v2399, %v2395
        %v3352 = vpack.c.b16 %v2400, %v2396
        %v3353 = vpack.c.b16 %v2405, %v2401
        %v3354 = vpack.c.b16 %v2406, %v2402
        %v3355 = vpack.c.b16 %v2407, %v2403
        %v3356 = vpack.c.b16 %v2408, %v2404
        %v3357 = vpack.c.b16 %v2413, %v2409
        %v3358 = vpack.c.b16 %v2414, %v2410
        %v3359 = vpack.c.b16 %v2415, %v2411
        %v3360 = vpack.c.b16 %v2416, %v2412
        %v3361 = vpack.c.b16 %v2421, %v2417
        %v3362 = vpack.c.b16 %v2422, %v2418
        %v3363 = vpack.c.b16 %v2423, %v2419
        %v3364 = vpack.c.b16 %v2424, %v2420
        %v3365 = vpack.c.b16 %v2429, %v2425
        %v3366 = vpack.c.b16 %v2430, %v2426
        %v3367 = vpack.c.b16 %v2431, %v2427
        %v3368 = vpack.c.b16 %v2432, %v2428
        %v3369 = vpack.c.b16 %v2437, %v2433
        %v3370 = vpack.c.b16 %v2438, %v2434
        %v3371 = vpack.c.b16 %v2439, %v2435
        %v3372 = vpack.c.b16 %v2440, %v2436
        %v3373 = vpack.c.b16 %v2445, %v2441
        %v3374 = vpack.c.b16 %v2446, %v2442
        %v3375 = vpack.c.b16 %v2447, %v2443
        %v3376 = vpack.c.b16 %v2448, %v2444
        %v3377 = vpack.c.b16 %v2453, %v2449
        %v3378 = vpack.c.b16 %v2454, %v2450
        %v3379 = vpack.c.b16 %v2455, %v2451
        %v3380 = vpack.c.b16 %v2456, %v2452
        %v3381 = vpack.c.b16 %v2461, %v2457
        %v3382 = vpack.c.b16 %v2462, %v2458
        %v3383 = vpack.c.b16 %v2463, %v2459
        %v3384 = vpack.c.b16 %v2464, %v2460
        %v3385 = vpack.c.b16 %v2469, %v2465
        %v3386 = vpack.c.b16 %v2470, %v2466
        %v3387 = vpack.c.b16 %v2471, %v2467
        %v3388 = vpack.c.b16 %v2472, %v2468
        %v3389 = vpack.c.b16 %v2477, %v2473
        %v3390 = vpack.c.b16 %v2478, %v2474
        %v3391 = vpack.c.b16 %v2479, %v2475
        %v3392 = vpack.c.b16 %v2480, %v2476
        %v3393 = vpack.c.b16 %v2485, %v2481
        %v3394 = vpack.c.b16 %v2486, %v2482
        %v3395 = vpack.c.b16 %v2487, %v2483
        %v3396 = vpack.c.b16 %v2488, %v2484
        %v3397 = vpack.c.b16 %v2493, %v2489
        %v3398 = vpack.c.b16 %v2494, %v2490
        %v3399 = vpack.c.b16 %v2495, %v2491
        %v3400 = vpack.c.b16 %v2496, %v2492
        %v3401 = vpack.c.b16 %v2501, %v2497
        %v3402 = vpack.c.b16 %v2502, %v2498
        %v3403 = vpack.c.b16 %v2503, %v2499
        %v3404 = vpack.c.b16 %v2504, %v2500
        %v3405 = vpack.c.b16 %v2509, %v2505
        %v3406 = vpack.c.b16 %v2510, %v2506
        %v3407 = vpack.c.b16 %v2511, %v2507
        %v3408 = vpack.c.b16 %v2512, %v2508
        %v3409 = vpack.c.b16 %v2517, %v2513
        %v3410 = vpack.c.b16 %v2518, %v2514
        %v3411 = vpack.c.b16 %v2519, %v2515
        %v3412 = vpack.c.b16 %v2520, %v2516
        %v3413 = vpack.c.b16 %v2525, %v2521
        %v3414 = vpack.c.b16 %v2526, %v2522
        %v3415 = vpack.c.b16 %v2527, %v2523
        %v3416 = vpack.c.b16 %v2528, %v2524
        %v3417 = vpack.c.b16 %v2533, %v2529
        %v3418 = vpack.c.b16 %v2534, %v2530
        %v3419 = vpack.c.b16 %v2535, %v2531
        %v3420 = vpack.c.b16 %v2536, %v2532
        %v3421 = vpack.c.b16 %v2541, %v2537
        %v3422 = vpack.c.b16 %v2542, %v2538
        %v3423 = vpack.c.b16 %v2543, %v2539
        %v3424 = vpack.c.b16 %v2544, %v2540
        %v3425 = vpack.c.b16 %v2549, %v2545
        %v3426 = vpack.c.b16 %v2550, %v2546
        %v3427 = vpack.c.b16 %v2551, %v2547
        %v3428 = vpack.c.b16 %v2552, %v2548
        %v3429 = vpack.c.b16 %v2557, %v2553
        %v3430 = vpack.c.b16 %v2558, %v2554
        %v3431 = vpack.c.b16 %v2559, %v2555
        %v3432 = vpack.c.b16 %v2560, %v2556
        %v3433 = vpack.c.b16 %v2565, %v2561
        %v3434 = vpack.c.b16 %v2566, %v2562
        %v3435 = vpack.c.b16 %v2567, %v2563
        %v3436 = vpack.c.b16 %v2568, %v2564
        %v3437 = vpack.c.b16 %v2573, %v2569
        %v3438 = vpack.c.b16 %v2574, %v2570
        %v3439 = vpack.c.b16 %v2575, %v2571
        %v3440 = vpack.c.b16 %v2576, %v2572
        %v3441 = vpack.c.b16 %v2581, %v2577
        %v3442 = vpack.c.b16 %v2582, %v2578
        %v3443 = vpack.c.b16 %v2583, %v2579
        %v3444 = vpack.c.b16 %v2584, %v2580
        %v3445 = vpack.c.b16 %v2589, %v2585
        %v3446 = vpack.c.b16 %v2590, %v2586
        %v3447 = vpack.c.b16 %v2591, %v2587
        %v3448 = vpack.c.b16 %v2592, %v2588
        %v3449 = vpack.c.b16 %v2597, %v2593
        %v3450 = vpack.c.b16 %v2598, %v2594
        %v3451 = vpack.c.b16 %v2599, %v2595
        %v3452 = vpack.c.b16 %v2600, %v2596
        %v3453 = vpack.c.b16 %v2605, %v2601
        %v3454 = vpack.c.b16 %v2606, %v2602
        %v3455 = vpack.c.b16 %v2607, %v2603
        %v3456 = vpack.c.b16 %v2608, %v2604
        %v3457 = vpack.c.b16 %v2613, %v2609
        %v3458 = vpack.c.b16 %v2614, %v2610
        %v3459 = vpack.c.b16 %v2615, %v2611
        %v3460 = vpack.c.b16 %v2616, %v2612
        %v3461 = vpack.c.b16 %v2621, %v2617
        %v3462 = vpack.c.b16 %v2622, %v2618
        %v3463 = vpack.c.b16 %v2623, %v2619
        %v3464 = vpack.c.b16 %v2624, %v2620
        %v3465 = vpack.c.b16 %v2629, %v2625
        %v3466 = vpack.c.b16 %v2630, %v2626
        %v3467 = vpack.c.b16 %v2631, %v2627
        %v3468 = vpack.c.b16 %v2632, %v2628
        %v3469 = vpack.c.b16 %v2637, %v2633
        %v3470 = vpack.c.b16 %v2638, %v2634
        %v3471 = vpack.c.b16 %v2639, %v2635
        %v3472 = vpack.c.b16 %v2640, %v2636
        %v3473 = vpack.c.b16 %v2645, %v2641
        %v3474 = vpack.c.b16 %v2646, %v2642
        %v3475 = vpack.c.b16 %v2647, %v2643
        %v3476 = vpack.c.b16 %v2648, %v2644
        %v3477 = vpack.c.b16 %v2653, %v2649
        %v3478 = vpack.c.b16 %v2654, %v2650
        %v3479 = vpack.c.b16 %v2655, %v2651
        %v3480 = vpack.c.b16 %v2656, %v2652
        %v3481 = vpack.c.b16 %v2661, %v2657
        %v3482 = vpack.c.b16 %v2662, %v2658
        %v3483 = vpack.c.b16 %v2663, %v2659
        %v3484 = vpack.c.b16 %v2664, %v2660
        %v3485 = vpack.c.b16 %v2669, %v2665
        %v3486 = vpack.c.b16 %v2670, %v2666
        %v3487 = vpack.c.b16 %v2671, %v2667
        %v3488 = vpack.c.b16 %v2672, %v2668
        %v3489 = vpack.c.b16 %v2677, %v2673
        %v3490 = vpack.c.b16 %v2678, %v2674
        %v3491 = vpack.c.b16 %v2679, %v2675
        %v3492 = vpack.c.b16 %v2680, %v2676
        %v3493 = vpack.c.b16 %v2685, %v2681
        %v3494 = vpack.c.b16 %v2686, %v2682
        %v3495 = vpack.c.b16 %v2687, %v2683
        %v3496 = vpack.c.b16 %v2688, %v2684
        %v3497 = vpack.c.b16 %v2693, %v2689
        %v3498 = vpack.c.b16 %v2694, %v2690
        %v3499 = vpack.c.b16 %v2695, %v2691
        %v3500 = vpack.c.b16 %v2696, %v2692
        %v3501 = vpack.c.b16 %v2701, %v2697
        %v3502 = vpack.c.b16 %v2702, %v2698
        %v3503 = vpack.c.b16 %v2703, %v2699
        %v3504 = vpack.c.b16 %v2704, %v2700
        %v3505 = vpack.c.b16 %v2709, %v2705
        %v3506 = vpack.c.b16 %v2710, %v2706
        %v3507 = vpack.c.b16 %v2711, %v2707
        %v3508 = vpack.c.b16 %v2712, %v2708
        %v3509 = vpack.c.b16 %v2717, %v2713
        %v3510 = vpack.c.b16 %v2718, %v2714
        %v3511 = vpack.c.b16 %v2719, %v2715
        %v3512 = vpack.c.b16 %v2720, %v2716
        %v3513 = vpack.c.b16 %v2725, %v2721
        %v3514 = vpack.c.b16 %v2726, %v2722
        %v3515 = vpack.c.b16 %v2727, %v2723
        %v3516 = vpack.c.b16 %v2728, %v2724
        %v3517 = vpack.c.b16 %v2733, %v2729
        %v3518 = vpack.c.b16 %v2734, %v2730
        %v3519 = vpack.c.b16 %v2735, %v2731
        %v3520 = vpack.c.b16 %v2736, %v2732
        %v3521 = vpack.c.b16 %v2741, %v2737
        %v3522 = vpack.c.b16 %v2742, %v2738
        %v3523 = vpack.c.b16 %v2743, %v2739
        %v3524 = vpack.c.b16 %v2744, %v2740
        %v3525 = vpack.c.b16 %v2749, %v2745
        %v3526 = vpack.c.b16 %v2750, %v2746
        %v3527 = vpack.c.b16 %v2751, %v2747
        %v3528 = vpack.c.b16 %v2752, %v2748
        %v3529 = vpack.c.b16 %v2757, %v2753
        %v3530 = vpack.c.b16 %v2758, %v2754
        %v3531 = vpack.c.b16 %v2759, %v2755
        %v3532 = vpack.c.b16 %v2760, %v2756
        %v3533 = vpack.c.b16 %v2765, %v2761
        %v3534 = vpack.c.b16 %v2766, %v2762
        %v3535 = vpack.c.b16 %v2767, %v2763
        %v3536 = vpack.c.b16 %v2768, %v2764
        %v3537 = vpack.c.b16 %v2773, %v2769
        %v3538 = vpack.c.b16 %v2774, %v2770
        %v3539 = vpack.c.b16 %v2775, %v2771
        %v3540 = vpack.c.b16 %v2776, %v2772
        %v3541 = vpack.c.b16 %v2781, %v2777
        %v3542 = vpack.c.b16 %v2782, %v2778
        %v3543 = vpack.c.b16 %v2783, %v2779
        %v3544 = vpack.c.b16 %v2784, %v2780
        %v3545 = vpack.c.b16 %v2789, %v2785
        %v3546 = vpack.c.b16 %v2790, %v2786
        %v3547 = vpack.c.b16 %v2791, %v2787
        %v3548 = vpack.c.b16 %v2792, %v2788
        %v3549 = vpack.c.b16 %v2797, %v2793
        %v3550 = vpack.c.b16 %v2798, %v2794
        %v3551 = vpack.c.b16 %v2799, %v2795
        %v3552 = vpack.c.b16 %v2800, %v2796
        %v3553 = vpack.c.b16 %v2805, %v2801
        %v3554 = vpack.c.b16 %v2806, %v2802
        %v3555 = vpack.c.b16 %v2807, %v2803
        %v3556 = vpack.c.b16 %v2808, %v2804
        %v3557 = vpack.c.b16 %v2813, %v2809
        %v3558 = vpack.c.b16 %v2814, %v2810
        %v3559 = vpack.c.b16 %v2815, %v2811
        %v3560 = vpack.c.b16 %v2816, %v2812
        %v3561 = vpack.c.b16 %v2821, %v2817
        %v3562 = vpack.c.b16 %v2822, %v2818
        %v3563 = vpack.c.b16 %v2823, %v2819
        %v3564 = vpack.c.b16 %v2824, %v2820
        %v3565 = vpack.c.b16 %v2829, %v2825
        %v3566 = vpack.c.b16 %v2830, %v2826
        %v3567 = vpack.c.b16 %v2831, %v2827
        %v3568 = vpack.c.b16 %v2832, %v2828
        %v3569 = vpack.c.b16 %v2837, %v2833
        %v3570 = vpack.c.b16 %v2838, %v2834
        %v3571 = vpack.c.b16 %v2839, %v2835
        %v3572 = vpack.c.b16 %v2840, %v2836
        %v3573 = vpack.c.b16 %v2845, %v2841
        %v3574 = vpack.c.b16 %v2846, %v2842
        %v3575 = vpack.c.b16 %v2847, %v2843
        %v3576 = vpack.c.b16 %v2848, %v2844
        %v3577 = vpack.c.b16 %v2853, %v2849
        %v3578 = vpack.c.b16 %v2854, %v2850
        %v3579 = vpack.c.b16 %v2855, %v2851
        %v3580 = vpack.c.b16 %v2856, %v2852
        %v3581 = vpack.c.b16 %v2861, %v2857
        %v3582 = vpack.c.b16 %v2862, %v2858
        %v3583 = vpack.c.b16 %v2863, %v2859
        %v3584 = vpack.c.b16 %v2864, %v2860
        %v3585 = vpack.c.b16 %v2869, %v2865
        %v3586 = vpack.c.b16 %v2870, %v2866
        %v3587 = vpack.c.b16 %v2871, %v2867
        %v3588 = vpack.c.b16 %v2872, %v2868
        %v3589 = vpack.c.b16 %v2877, %v2873
        %v3590 = vpack.c.b16 %v2878, %v2874
        %v3591 = vpack.c.b16 %v2879, %v2875
        %v3592 = vpack.c.b16 %v2880, %v2876
        %v3593 = vpack.c.b16 %v2885, %v2881
        %v3594 = vpack.c.b16 %v2886, %v2882
        %v3595 = vpack.c.b16 %v2887, %v2883
        %v3596 = vpack.c.b16 %v2888, %v2884
        %v3597 = vpack.c.b16 %v2893, %v2889
        %v3598 = vpack.c.b16 %v2894, %v2890
        %v3599 = vpack.c.b16 %v2895, %v2891
        %v3600 = vpack.c.b16 %v2896, %v2892
        %v3601 = vpack.c.b16 %v2901, %v2897
        %v3602 = vpack.c.b16 %v2902, %v2898
        %v3603 = vpack.c.b16 %v2903, %v2899
        %v3604 = vpack.c.b16 %v2904, %v2900
        %v3605 = vpack.c.b16 %v2909, %v2905
        %v3606 = vpack.c.b16 %v2910, %v2906
        %v3607 = vpack.c.b16 %v2911, %v2907
        %v3608 = vpack.c.b16 %v2912, %v2908
        %v3609 = vpack.c.b16 %v2917, %v2913
        %v3610 = vpack.c.b16 %v2918, %v2914
        %v3611 = vpack.c.b16 %v2919, %v2915
        %v3612 = vpack.c.b16 %v2920, %v2916
        %v3613 = vpack.c.b16 %v2925, %v2921
        %v3614 = vpack.c.b16 %v2926, %v2922
        %v3615 = vpack.c.b16 %v2927, %v2923
        %v3616 = vpack.c.b16 %v2928, %v2924
        %v3617 = vpack.c.b16 %v2933, %v2929
        %v3618 = vpack.c.b16 %v2934, %v2930
        %v3619 = vpack.c.b16 %v2935, %v2931
        %v3620 = vpack.c.b16 %v2936, %v2932
        %v3621 = vpack.c.b16 %v2941, %v2937
        %v3622 = vpack.c.b16 %v2942, %v2938
        %v3623 = vpack.c.b16 %v2943, %v2939
        %v3624 = vpack.c.b16 %v2944, %v2940
        %v3625 = vpack.c.b16 %v2949, %v2945
        %v3626 = vpack.c.b16 %v2950, %v2946
        %v3627 = vpack.c.b16 %v2951, %v2947
        %v3628 = vpack.c.b16 %v2952, %v2948
        %v3629 = vpack.c.b16 %v2957, %v2953
        %v3630 = vpack.c.b16 %v2958, %v2954
        %v3631 = vpack.c.b16 %v2959, %v2955
        %v3632 = vpack.c.b16 %v2960, %v2956
        %v3633 = vpack.c.b16 %v2965, %v2961
        %v3634 = vpack.c.b16 %v2966, %v2962
        %v3635 = vpack.c.b16 %v2967, %v2963
        %v3636 = vpack.c.b16 %v2968, %v2964
        %v3637 = vpack.c.b16 %v2973, %v2969
        %v3638 = vpack.c.b16 %v2974, %v2970
        %v3639 = vpack.c.b16 %v2975, %v2971
        %v3640 = vpack.c.b16 %v2976, %v2972
        %v3641 = vpack.c.b16 %v2981, %v2977
        %v3642 = vpack.c.b16 %v2982, %v2978
        %v3643 = vpack.c.b16 %v2983, %v2979
        %v3644 = vpack.c.b16 %v2984, %v2980
        %v3645 = vpack.c.b16 %v2989, %v2985
        %v3646 = vpack.c.b16 %v2990, %v2986
        %v3647 = vpack.c.b16 %v2991, %v2987
        %v3648 = vpack.c.b16 %v2992, %v2988
        %v3649 = vpack.c.b16 %v2997, %v2993
        %v3650 = vpack.c.b16 %v2998, %v2994
        %v3651 = vpack.c.b16 %v2999, %v2995
        %v3652 = vpack.c.b16 %v3000, %v2996
        %v3653 = vpack.c.b16 %v3005, %v3001
        %v3654 = vpack.c.b16 %v3006, %v3002
        %v3655 = vpack.c.b16 %v3007, %v3003
        %v3656 = vpack.c.b16 %v3008, %v3004
        %v3657 = vpack.c.b16 %v3013, %v3009
        %v3658 = vpack.c.b16 %v3014, %v3010
        %v3659 = vpack.c.b16 %v3015, %v3011
        %v3660 = vpack.c.b16 %v3016, %v3012
        %v3661 = vpack.c.b16 %v3021, %v3017
        %v3662 = vpack.c.b16 %v3022, %v3018
        %v3663 = vpack.c.b16 %v3023, %v3019
        %v3664 = vpack.c.b16 %v3024, %v3020
        %4305 = vmatprep.subr.bf16.mxu0 %v3026
        %4306 = vmatpush1.bf16.msra.mxu0 %v3025
        %4307 = vmatprep.subr.bf16.mxu0 %v3030
        %4308 = vmatpush1.bf16.msra.mxu0 %v3029
        %4309 = vmatprep.subr.bf16.mxu0 %v3034
        %4310 = vmatpush1.bf16.msra.mxu0 %v3033
        %4311 = vmatprep.subr.bf16.mxu0 %v3038
        %4312 = vmatpush1.bf16.msra.mxu0 %v3037
        %4313 = vmatprep.subr.bf16.mxu0 %v3042
        %4314 = vmatpush1.bf16.msra.mxu0 %v3041
        %4315 = vmatprep.subr.bf16.mxu0 %v3046
        %4316 = vmatpush1.bf16.msra.mxu0 %v3045
        %4317 = vmatprep.subr.bf16.mxu0 %v3050
        %4318 = vmatpush1.bf16.msra.mxu0 %v3049
        %4319 = vmatprep.subr.bf16.mxu0 %v3054
        %4320 = vmatpush1.bf16.msra.mxu0 %v3053
        %4321 = vmatprep.subr.bf16.mxu0 %v3058
        %4322 = vmatpush1.bf16.msra.mxu0 %v3057
        %4323 = vmatprep.subr.bf16.mxu0 %v3062
        %4324 = vmatpush1.bf16.msra.mxu0 %v3061
        %4325 = vmatprep.subr.bf16.mxu0 %v3066
        %4326 = vmatpush1.bf16.msra.mxu0 %v3065
        %4327 = vmatprep.subr.bf16.mxu0 %v3070
        %4328 = vmatpush1.bf16.msra.mxu0 %v3069
        %4329 = vmatprep.subr.bf16.mxu0 %v3074
        %4330 = vmatpush1.bf16.msra.mxu0 %v3073
        %4331 = vmatprep.subr.bf16.mxu0 %v3078
        %4332 = vmatpush1.bf16.msra.mxu0 %v3077
        %4333 = vmatprep.subr.bf16.mxu0 %v3082
        %4334 = vmatpush1.bf16.msra.mxu0 %v3081
        %4335 = vmatprep.subr.bf16.mxu0 %v3086
        %4336 = vmatpush1.bf16.msra.mxu0 %v3085
        %4337 = vmatprep.mubr.bf16.mxu0 %v424
        %4338 = vmatmul.mubr.bf16.gmra.mrb[0].mxu0 %v423
        %v4339 = vpop.f32.mrb[0].mxu0
        %v4340 = vadd.f32 %v1088, %v4339
        %v4341 = vpop.f32.mrb[0].mxu0
        %v4342 = vadd.f32 %v1092, %v4341
        %v4343 = vpop.f32.mrb[0].mxu0
        %v4344 = vpop.f32.mrb[0].mxu0
        %4345 = vdwg.mxu0
        %4346 = vmatprep.subr.bf16.mxu0 %v3090
        %4347 = vmatpush1.bf16.msra.mxu0 %v3089
        %4348 = vmatprep.subr.bf16.mxu0 %v3094
        %4349 = vmatpush1.bf16.msra.mxu0 %v3093
        %4350 = vmatprep.subr.bf16.mxu0 %v3098
        %4351 = vmatpush1.bf16.msra.mxu0 %v3097
        %4352 = vmatprep.subr.bf16.mxu0 %v3102
        %4353 = vmatpush1.bf16.msra.mxu0 %v3101
        %4354 = vmatprep.subr.bf16.mxu0 %v3106
        %4355 = vmatpush1.bf16.msra.mxu0 %v3105
        %4356 = vmatprep.subr.bf16.mxu0 %v3110
        %4357 = vmatpush1.bf16.msra.mxu0 %v3109
        %4358 = vmatprep.subr.bf16.mxu0 %v3114
        %4359 = vmatpush1.bf16.msra.mxu0 %v3113
        %4360 = vmatprep.subr.bf16.mxu0 %v3118
        %4361 = vmatpush1.bf16.msra.mxu0 %v3117
        %4362 = vmatprep.subr.bf16.mxu0 %v3122
        %4363 = vmatpush1.bf16.msra.mxu0 %v3121
        %4364 = vmatprep.subr.bf16.mxu0 %v3126
        %4365 = vmatpush1.bf16.msra.mxu0 %v3125
        %4366 = vmatprep.subr.bf16.mxu0 %v3130
        %4367 = vmatpush1.bf16.msra.mxu0 %v3129
        %4368 = vmatprep.subr.bf16.mxu0 %v3134
        %4369 = vmatpush1.bf16.msra.mxu0 %v3133
        %4370 = vmatprep.subr.bf16.mxu0 %v3138
        %4371 = vmatpush1.bf16.msra.mxu0 %v3137
        %4372 = vmatprep.subr.bf16.mxu0 %v3142
        %4373 = vmatpush1.bf16.msra.mxu0 %v3141
        %4374 = vmatprep.subr.bf16.mxu0 %v3146
        %4375 = vmatpush1.bf16.msra.mxu0 %v3145
        %4376 = vmatprep.subr.bf16.mxu0 %v3150
        %4377 = vmatpush1.bf16.msra.mxu0 %v3149
        %4378 = vmatprep.mubr.bf16.mxu0 %v426
        %4379 = vmatmul.mubr.bf16.gmra.mrb[0].mxu0 %v425
        %v4380 = vpop.f32.mrb[0].mxu0
        %v4381 = vadd.f32 %v4340, %v4380
        %v4382 = vpop.f32.mrb[0].mxu0
        %v4383 = vadd.f32 %v4342, %v4382
        %v4384 = vpop.f32.mrb[0].mxu0
        %v4385 = vpop.f32.mrb[0].mxu0
        %4386 = vdwg.mxu0
        %4387 = vmatprep.subr.bf16.mxu0 %v3154
        %4388 = vmatpush1.bf16.msra.mxu0 %v3153
        %4389 = vmatprep.subr.bf16.mxu0 %v3158
        %4390 = vmatpush1.bf16.msra.mxu0 %v3157
        %4391 = vmatprep.subr.bf16.mxu0 %v3162
        %4392 = vmatpush1.bf16.msra.mxu0 %v3161
        %4393 = vmatprep.subr.bf16.mxu0 %v3166
        %4394 = vmatpush1.bf16.msra.mxu0 %v3165
        %4395 = vmatprep.subr.bf16.mxu0 %v3170
        %4396 = vmatpush1.bf16.msra.mxu0 %v3169
        %4397 = vmatprep.subr.bf16.mxu0 %v3174
        %4398 = vmatpush1.bf16.msra.mxu0 %v3173
        %4399 = vmatprep.subr.bf16.mxu0 %v3178
        %4400 = vmatpush1.bf16.msra.mxu0 %v3177
        %4401 = vmatprep.subr.bf16.mxu0 %v3182
        %4402 = vmatpush1.bf16.msra.mxu0 %v3181
        %4403 = vmatprep.subr.bf16.mxu0 %v3186
        %4404 = vmatpush1.bf16.msra.mxu0 %v3185
        %4405 = vmatprep.subr.bf16.mxu0 %v3190
        %4406 = vmatpush1.bf16.msra.mxu0 %v3189
        %4407 = vmatprep.subr.bf16.mxu0 %v3194
        %4408 = vmatpush1.bf16.msra.mxu0 %v3193
        %4409 = vmatprep.subr.bf16.mxu0 %v3198
        %4410 = vmatpush1.bf16.msra.mxu0 %v3197
        %4411 = vmatprep.subr.bf16.mxu0 %v3202
        %4412 = vmatpush1.bf16.msra.mxu0 %v3201
        %4413 = vmatprep.subr.bf16.mxu0 %v3206
        %4414 = vmatpush1.bf16.msra.mxu0 %v3205
        %4415 = vmatprep.subr.bf16.mxu0 %v3210
        %4416 = vmatpush1.bf16.msra.mxu0 %v3209
        %4417 = vmatprep.subr.bf16.mxu0 %v3214
        %4418 = vmatpush1.bf16.msra.mxu0 %v3213
        %4419 = vmatprep.mubr.bf16.mxu0 %v428
        %4420 = vmatmul.mubr.bf16.gmra.mrb[0].mxu0 %v427
        %v4421 = vpop.f32.mrb[0].mxu0
        %v4422 = vadd.f32 %v4381, %v4421
        %v4423 = vpop.f32.mrb[0].mxu0
        %v4424 = vadd.f32 %v4383, %v4423
        %v4425 = vpop.f32.mrb[0].mxu0
        %v4426 = vpop.f32.mrb[0].mxu0
        %4427 = vdwg.mxu0
        %4428 = vmatprep.subr.bf16.mxu0 %v3218
        %4429 = vmatpush1.bf16.msra.mxu0 %v3217
        %4430 = vmatprep.subr.bf16.mxu0 %v3222
        %4431 = vmatpush1.bf16.msra.mxu0 %v3221
        %4432 = vmatprep.subr.bf16.mxu0 %v3226
        %4433 = vmatpush1.bf16.msra.mxu0 %v3225
        %4434 = vmatprep.subr.bf16.mxu0 %v3230
        %4435 = vmatpush1.bf16.msra.mxu0 %v3229
        %4436 = vmatprep.subr.bf16.mxu0 %v3234
        %4437 = vmatpush1.bf16.msra.mxu0 %v3233
        %4438 = vmatprep.subr.bf16.mxu0 %v3238
        %4439 = vmatpush1.bf16.msra.mxu0 %v3237
        %4440 = vmatprep.subr.bf16.mxu0 %v3242
        %4441 = vmatpush1.bf16.msra.mxu0 %v3241
        %4442 = vmatprep.subr.bf16.mxu0 %v3246
        %4443 = vmatpush1.bf16.msra.mxu0 %v3245
        %4444 = vmatprep.subr.bf16.mxu0 %v3250
        %4445 = vmatpush1.bf16.msra.mxu0 %v3249
        %4446 = vmatprep.subr.bf16.mxu0 %v3254
        %4447 = vmatpush1.bf16.msra.mxu0 %v3253
        %4448 = vmatprep.subr.bf16.mxu0 %v3258
        %4449 = vmatpush1.bf16.msra.mxu0 %v3257
        %4450 = vmatprep.subr.bf16.mxu0 %v3262
        %4451 = vmatpush1.bf16.msra.mxu0 %v3261
        %4452 = vmatprep.subr.bf16.mxu0 %v3266
        %4453 = vmatpush1.bf16.msra.mxu0 %v3265
        %4454 = vmatprep.subr.bf16.mxu0 %v3270
        %4455 = vmatpush1.bf16.msra.mxu0 %v3269
        %4456 = vmatprep.subr.bf16.mxu0 %v3274
        %4457 = vmatpush1.bf16.msra.mxu0 %v3273
        %4458 = vmatprep.subr.bf16.mxu0 %v3278
        %4459 = vmatpush1.bf16.msra.mxu0 %v3277
        %4460 = vmatprep.mubr.bf16.mxu0 %v430
        %4461 = vmatmul.mubr.bf16.gmra.mrb[0].mxu0 %v429
        %v4462 = vpop.f32.mrb[0].mxu0
        %v4463 = vadd.f32 %v4422, %v4462
        %v4464 = vpop.f32.mrb[0].mxu0
        %v4465 = vadd.f32 %v4424, %v4464
        %v4466 = vpop.f32.mrb[0].mxu0
        %v4467 = vpop.f32.mrb[0].mxu0
        %4468 = vdwg.mxu0
        %4469 = vmatprep.subr.bf16.mxu0 %v3282
        %4470 = vmatpush1.bf16.msra.mxu0 %v3281
        %4471 = vmatprep.subr.bf16.mxu0 %v3286
        %4472 = vmatpush1.bf16.msra.mxu0 %v3285
        %4473 = vmatprep.subr.bf16.mxu0 %v3290
        %4474 = vmatpush1.bf16.msra.mxu0 %v3289
        %4475 = vmatprep.subr.bf16.mxu0 %v3294
        %4476 = vmatpush1.bf16.msra.mxu0 %v3293
        %4477 = vmatprep.subr.bf16.mxu0 %v3298
        %4478 = vmatpush1.bf16.msra.mxu0 %v3297
        %4479 = vmatprep.subr.bf16.mxu0 %v3302
        %4480 = vmatpush1.bf16.msra.mxu0 %v3301
        %4481 = vmatprep.subr.bf16.mxu0 %v3306
        %4482 = vmatpush1.bf16.msra.mxu0 %v3305
        %4483 = vmatprep.subr.bf16.mxu0 %v3310
        %4484 = vmatpush1.bf16.msra.mxu0 %v3309
        %4485 = vmatprep.subr.bf16.mxu0 %v3314
        %4486 = vmatpush1.bf16.msra.mxu0 %v3313
        %4487 = vmatprep.subr.bf16.mxu0 %v3318
        %4488 = vmatpush1.bf16.msra.mxu0 %v3317
        %4489 = vmatprep.subr.bf16.mxu0 %v3322
        %4490 = vmatpush1.bf16.msra.mxu0 %v3321
        %4491 = vmatprep.subr.bf16.mxu0 %v3326
        %4492 = vmatpush1.bf16.msra.mxu0 %v3325
        %4493 = vmatprep.subr.bf16.mxu0 %v3330
        %4494 = vmatpush1.bf16.msra.mxu0 %v3329
        %4495 = vmatprep.subr.bf16.mxu0 %v3334
        %4496 = vmatpush1.bf16.msra.mxu0 %v3333
        %4497 = vmatprep.subr.bf16.mxu0 %v3338
        %4498 = vmatpush1.bf16.msra.mxu0 %v3337
        %4499 = vmatprep.subr.bf16.mxu0 %v3342
        %4500 = vmatpush1.bf16.msra.mxu0 %v3341
        %4501 = vmatprep.mubr.bf16.mxu0 %v432
        %4502 = vmatmul.mubr.bf16.gmra.mrb[0].mxu0 %v431
        %v4503 = vpop.f32.mrb[0].mxu0
        %v4504 = vadd.f32 %v4463, %v4503
        %v4505 = vpop.f32.mrb[0].mxu0
        %v4506 = vadd.f32 %v4465, %v4505
        %v4507 = vpop.f32.mrb[0].mxu0
        %v4508 = vpop.f32.mrb[0].mxu0
        %4509 = vdwg.mxu0
        %4510 = vmatprep.subr.bf16.mxu0 %v3346
        %4511 = vmatpush1.bf16.msra.mxu0 %v3345
        %4512 = vmatprep.subr.bf16.mxu0 %v3350
        %4513 = vmatpush1.bf16.msra.mxu0 %v3349
        %4514 = vmatprep.subr.bf16.mxu0 %v3354
        %4515 = vmatpush1.bf16.msra.mxu0 %v3353
        %4516 = vmatprep.subr.bf16.mxu0 %v3358
        %4517 = vmatpush1.bf16.msra.mxu0 %v3357
        %4518 = vmatprep.subr.bf16.mxu0 %v3362
        %4519 = vmatpush1.bf16.msra.mxu0 %v3361
        %4520 = vmatprep.subr.bf16.mxu0 %v3366
        %4521 = vmatpush1.bf16.msra.mxu0 %v3365
        %4522 = vmatprep.subr.bf16.mxu0 %v3370
        %4523 = vmatpush1.bf16.msra.mxu0 %v3369
        %4524 = vmatprep.subr.bf16.mxu0 %v3374
        %4525 = vmatpush1.bf16.msra.mxu0 %v3373
        %4526 = vmatprep.subr.bf16.mxu0 %v3378
        %4527 = vmatpush1.bf16.msra.mxu0 %v3377
        %4528 = vmatprep.subr.bf16.mxu0 %v3382
        %4529 = vmatpush1.bf16.msra.mxu0 %v3381
        %4530 = vmatprep.subr.bf16.mxu0 %v3386
        %4531 = vmatpush1.bf16.msra.mxu0 %v3385
        %4532 = vmatprep.subr.bf16.mxu0 %v3390
        %4533 = vmatpush1.bf16.msra.mxu0 %v3389
        %4534 = vmatprep.subr.bf16.mxu0 %v3394
        %4535 = vmatpush1.bf16.msra.mxu0 %v3393
        %4536 = vmatprep.subr.bf16.mxu0 %v3398
        %4537 = vmatpush1.bf16.msra.mxu0 %v3397
        %4538 = vmatprep.subr.bf16.mxu0 %v3402
        %4539 = vmatpush1.bf16.msra.mxu0 %v3401
        %4540 = vmatprep.subr.bf16.mxu0 %v3406
        %4541 = vmatpush1.bf16.msra.mxu0 %v3405
        %4542 = vmatprep.mubr.bf16.mxu0 %v434
        %4543 = vmatmul.mubr.bf16.gmra.mrb[0].mxu0 %v433
        %v4544 = vpop.f32.mrb[0].mxu0
        %v4545 = vadd.f32 %v4504, %v4544
        %v4546 = vpop.f32.mrb[0].mxu0
        %v4547 = vadd.f32 %v4506, %v4546
        %v4548 = vpop.f32.mrb[0].mxu0
        %v4549 = vpop.f32.mrb[0].mxu0
        %4550 = vdwg.mxu0
        %4551 = vmatprep.subr.bf16.mxu0 %v3410
        %4552 = vmatpush1.bf16.msra.mxu0 %v3409
        %4553 = vmatprep.subr.bf16.mxu0 %v3414
        %4554 = vmatpush1.bf16.msra.mxu0 %v3413
        %4555 = vmatprep.subr.bf16.mxu0 %v3418
        %4556 = vmatpush1.bf16.msra.mxu0 %v3417
        %4557 = vmatprep.subr.bf16.mxu0 %v3422
        %4558 = vmatpush1.bf16.msra.mxu0 %v3421
        %4559 = vmatprep.subr.bf16.mxu0 %v3426
        %4560 = vmatpush1.bf16.msra.mxu0 %v3425
        %4561 = vmatprep.subr.bf16.mxu0 %v3430
        %4562 = vmatpush1.bf16.msra.mxu0 %v3429
        %4563 = vmatprep.subr.bf16.mxu0 %v3434
        %4564 = vmatpush1.bf16.msra.mxu0 %v3433
        %4565 = vmatprep.subr.bf16.mxu0 %v3438
        %4566 = vmatpush1.bf16.msra.mxu0 %v3437
        %4567 = vmatprep.subr.bf16.mxu0 %v3442
        %4568 = vmatpush1.bf16.msra.mxu0 %v3441
        %4569 = vmatprep.subr.bf16.mxu0 %v3446
        %4570 = vmatpush1.bf16.msra.mxu0 %v3445
        %4571 = vmatprep.subr.bf16.mxu0 %v3450
        %4572 = vmatpush1.bf16.msra.mxu0 %v3449
        %4573 = vmatprep.subr.bf16.mxu0 %v3454
        %4574 = vmatpush1.bf16.msra.mxu0 %v3453
        %4575 = vmatprep.subr.bf16.mxu0 %v3458
        %4576 = vmatpush1.bf16.msra.mxu0 %v3457
        %4577 = vmatprep.subr.bf16.mxu0 %v3462
        %4578 = vmatpush1.bf16.msra.mxu0 %v3461
        %4579 = vmatprep.subr.bf16.mxu0 %v3466
        %4580 = vmatpush1.bf16.msra.mxu0 %v3465
        %4581 = vmatprep.subr.bf16.mxu0 %v3470
        %4582 = vmatpush1.bf16.msra.mxu0 %v3469
        %4583 = vmatprep.mubr.bf16.mxu0 %v436
        %4584 = vmatmul.mubr.bf16.gmra.mrb[0].mxu0 %v435
        %v4585 = vpop.f32.mrb[0].mxu0
        %v4586 = vadd.f32 %v4545, %v4585
        %v4587 = vpop.f32.mrb[0].mxu0
        %v4588 = vadd.f32 %v4547, %v4587
        %v4589 = vpop.f32.mrb[0].mxu0
        %v4590 = vpop.f32.mrb[0].mxu0
        %4591 = vdwg.mxu0
        %4592 = vmatprep.subr.bf16.mxu0 %v3474
        %4593 = vmatpush1.bf16.msra.mxu0 %v3473
        %4594 = vmatprep.subr.bf16.mxu0 %v3478
        %4595 = vmatpush1.bf16.msra.mxu0 %v3477
        %4596 = vmatprep.subr.bf16.mxu0 %v3482
        %4597 = vmatpush1.bf16.msra.mxu0 %v3481
        %4598 = vmatprep.subr.bf16.mxu0 %v3486
        %4599 = vmatpush1.bf16.msra.mxu0 %v3485
        %4600 = vmatprep.subr.bf16.mxu0 %v3490
        %4601 = vmatpush1.bf16.msra.mxu0 %v3489
        %4602 = vmatprep.subr.bf16.mxu0 %v3494
        %4603 = vmatpush1.bf16.msra.mxu0 %v3493
        %4604 = vmatprep.subr.bf16.mxu0 %v3498
        %4605 = vmatpush1.bf16.msra.mxu0 %v3497
        %4606 = vmatprep.subr.bf16.mxu0 %v3502
        %4607 = vmatpush1.bf16.msra.mxu0 %v3501
        %4608 = vmatprep.subr.bf16.mxu0 %v3506
        %4609 = vmatpush1.bf16.msra.mxu0 %v3505
        %4610 = vmatprep.subr.bf16.mxu0 %v3510
        %4611 = vmatpush1.bf16.msra.mxu0 %v3509
        %4612 = vmatprep.subr.bf16.mxu0 %v3514
        %4613 = vmatpush1.bf16.msra.mxu0 %v3513
        %4614 = vmatprep.subr.bf16.mxu0 %v3518
        %4615 = vmatpush1.bf16.msra.mxu0 %v3517
        %4616 = vmatprep.subr.bf16.mxu0 %v3522
        %4617 = vmatpush1.bf16.msra.mxu0 %v3521
        %4618 = vmatprep.subr.bf16.mxu0 %v3526
        %4619 = vmatpush1.bf16.msra.mxu0 %v3525
        %4620 = vmatprep.subr.bf16.mxu0 %v3530
        %4621 = vmatpush1.bf16.msra.mxu0 %v3529
        %4622 = vmatprep.subr.bf16.mxu0 %v3534
        %4623 = vmatpush1.bf16.msra.mxu0 %v3533
        %4624 = vmatprep.mubr.bf16.mxu0 %v438
        %4625 = vmatmul.mubr.bf16.gmra.mrb[0].mxu0 %v437
        %v4626 = vpop.f32.mrb[0].mxu0
        %v4627 = vadd.f32 %v4586, %v4626
        %v4628 = vpop.f32.mrb[0].mxu0
        %v4629 = vadd.f32 %v4588, %v4628
        %v4630 = vpop.f32.mrb[0].mxu0
        %v4631 = vpop.f32.mrb[0].mxu0
        %4632 = vdwg.mxu0
        %4633 = vmatprep.subr.bf16.mxu0 %v3538
        %4634 = vmatpush1.bf16.msra.mxu0 %v3537
        %4635 = vmatprep.subr.bf16.mxu0 %v3542
        %4636 = vmatpush1.bf16.msra.mxu0 %v3541
        %4637 = vmatprep.subr.bf16.mxu0 %v3546
        %4638 = vmatpush1.bf16.msra.mxu0 %v3545
        %4639 = vmatprep.subr.bf16.mxu0 %v3550
        %4640 = vmatpush1.bf16.msra.mxu0 %v3549
        %4641 = vmatprep.subr.bf16.mxu0 %v3554
        %4642 = vmatpush1.bf16.msra.mxu0 %v3553
        %4643 = vmatprep.subr.bf16.mxu0 %v3558
        %4644 = vmatpush1.bf16.msra.mxu0 %v3557
        %4645 = vmatprep.subr.bf16.mxu0 %v3562
        %4646 = vmatpush1.bf16.msra.mxu0 %v3561
        %4647 = vmatprep.subr.bf16.mxu0 %v3566
        %4648 = vmatpush1.bf16.msra.mxu0 %v3565
        %4649 = vmatprep.subr.bf16.mxu0 %v3570
        %4650 = vmatpush1.bf16.msra.mxu0 %v3569
        %4651 = vmatprep.subr.bf16.mxu0 %v3574
        %4652 = vmatpush1.bf16.msra.mxu0 %v3573
        %4653 = vmatprep.subr.bf16.mxu0 %v3578
        %4654 = vmatpush1.bf16.msra.mxu0 %v3577
        %4655 = vmatprep.subr.bf16.mxu0 %v3582
        %4656 = vmatpush1.bf16.msra.mxu0 %v3581
        %4657 = vmatprep.subr.bf16.mxu0 %v3586
        %4658 = vmatpush1.bf16.msra.mxu0 %v3585
        %4659 = vmatprep.subr.bf16.mxu0 %v3590
        %4660 = vmatpush1.bf16.msra.mxu0 %v3589
        %4661 = vmatprep.subr.bf16.mxu0 %v3594
        %4662 = vmatpush1.bf16.msra.mxu0 %v3593
        %4663 = vmatprep.subr.bf16.mxu0 %v3598
        %4664 = vmatpush1.bf16.msra.mxu0 %v3597
        %4665 = vmatprep.mubr.bf16.mxu0 %v440
        %4666 = vmatmul.mubr.bf16.gmra.mrb[0].mxu0 %v439
        %v4667 = vpop.f32.mrb[0].mxu0
        %v4668 = vadd.f32 %v4627, %v4667
        %v4669 = vpop.f32.mrb[0].mxu0
        %v4670 = vadd.f32 %v4629, %v4669
        %v4671 = vpop.f32.mrb[0].mxu0
        %v4672 = vpop.f32.mrb[0].mxu0
        %4673 = vdwg.mxu0
        %4674 = vmatprep.subr.bf16.mxu0 %v3602
        %4675 = vmatpush1.bf16.msra.mxu0 %v3601
        %4676 = vmatprep.subr.bf16.mxu0 %v3606
        %4677 = vmatpush1.bf16.msra.mxu0 %v3605
        %4678 = vmatprep.subr.bf16.mxu0 %v3610
        %4679 = vmatpush1.bf16.msra.mxu0 %v3609
        %4680 = vmatprep.subr.bf16.mxu0 %v3614
        %4681 = vmatpush1.bf16.msra.mxu0 %v3613
        %4682 = vmatprep.subr.bf16.mxu0 %v3618
        %4683 = vmatpush1.bf16.msra.mxu0 %v3617
        %4684 = vmatprep.subr.bf16.mxu0 %v3622
        %4685 = vmatpush1.bf16.msra.mxu0 %v3621
        %4686 = vmatprep.subr.bf16.mxu0 %v3626
        %4687 = vmatpush1.bf16.msra.mxu0 %v3625
        %4688 = vmatprep.subr.bf16.mxu0 %v3630
        %4689 = vmatpush1.bf16.msra.mxu0 %v3629
        %4690 = vmatprep.subr.bf16.mxu0 %v3634
        %4691 = vmatpush1.bf16.msra.mxu0 %v3633
        %4692 = vmatprep.subr.bf16.mxu0 %v3638
        %4693 = vmatpush1.bf16.msra.mxu0 %v3637
        %4694 = vmatprep.subr.bf16.mxu0 %v3642
        %4695 = vmatpush1.bf16.msra.mxu0 %v3641
        %4696 = vmatprep.subr.bf16.mxu0 %v3646
        %4697 = vmatpush1.bf16.msra.mxu0 %v3645
        %4698 = vmatprep.subr.bf16.mxu0 %v3650
        %4699 = vmatpush1.bf16.msra.mxu0 %v3649
        %4700 = vmatprep.subr.bf16.mxu0 %v3654
        %4701 = vmatpush1.bf16.msra.mxu0 %v3653
        %4702 = vmatprep.subr.bf16.mxu0 %v3658
        %4703 = vmatpush1.bf16.msra.mxu0 %v3657
        %4704 = vmatprep.subr.bf16.mxu0 %v3662
        %4705 = vmatpush1.bf16.msra.mxu0 %v3661
        %4706 = vmatprep.mubr.bf16.mxu0 %v442
        %4707 = vmatmul.mubr.bf16.gmra.mrb[0].mxu0 %v441
        %v4708 = vpop.f32.mrb[0].mxu0
        %v4709 = vadd.f32 %v4668, %v4708
        %v4710 = vpop.f32.mrb[0].mxu0
        %v4711 = vadd.f32 %v4670, %v4710
        %v4712 = vpop.f32.mrb[0].mxu0
        %v4713 = vpop.f32.mrb[0].mxu0
        %4714 = vdwg.mxu0
        %4715 = vmatprep.subr.bf16.mxu0 %v3028
        %4716 = vmatpush1.bf16.msra.mxu0 %v3027
        %4717 = vmatprep.subr.bf16.mxu0 %v3032
        %4718 = vmatpush1.bf16.msra.mxu0 %v3031
        %4719 = vmatprep.subr.bf16.mxu0 %v3036
        %4720 = vmatpush1.bf16.msra.mxu0 %v3035
        %4721 = vmatprep.subr.bf16.mxu0 %v3040
        %4722 = vmatpush1.bf16.msra.mxu0 %v3039
        %4723 = vmatprep.subr.bf16.mxu0 %v3044
        %4724 = vmatpush1.bf16.msra.mxu0 %v3043
        %4725 = vmatprep.subr.bf16.mxu0 %v3048
        %4726 = vmatpush1.bf16.msra.mxu0 %v3047
        %4727 = vmatprep.subr.bf16.mxu0 %v3052
        %4728 = vmatpush1.bf16.msra.mxu0 %v3051
        %4729 = vmatprep.subr.bf16.mxu0 %v3056
        %4730 = vmatpush1.bf16.msra.mxu0 %v3055
        %4731 = vmatprep.subr.bf16.mxu0 %v3060
        %4732 = vmatpush1.bf16.msra.mxu0 %v3059
        %4733 = vmatprep.subr.bf16.mxu0 %v3064
        %4734 = vmatpush1.bf16.msra.mxu0 %v3063
        %4735 = vmatprep.subr.bf16.mxu0 %v3068
        %4736 = vmatpush1.bf16.msra.mxu0 %v3067
        %4737 = vmatprep.subr.bf16.mxu0 %v3072
        %4738 = vmatpush1.bf16.msra.mxu0 %v3071
        %4739 = vmatprep.subr.bf16.mxu0 %v3076
        %4740 = vmatpush1.bf16.msra.mxu0 %v3075
        %4741 = vmatprep.subr.bf16.mxu0 %v3080
        %4742 = vmatpush1.bf16.msra.mxu0 %v3079
        %4743 = vmatprep.subr.bf16.mxu0 %v3084
        %4744 = vmatpush1.bf16.msra.mxu0 %v3083
        %4745 = vmatprep.subr.bf16.mxu0 %v3088
        %4746 = vmatpush1.bf16.msra.mxu0 %v3087
        %4747 = vmatprep.mubr.bf16.mxu0 %v424
        %4748 = vmatmul.mubr.bf16.gmra.mrb[0].mxu0 %v423
        %v4749 = vpop.f32.mrb[0].mxu0
        %v4750 = vadd.f32 %v1096, %v4749
        %v4751 = vpop.f32.mrb[0].mxu0
        %v4752 = vadd.f32 %v1100, %v4751
        %v4753 = vpop.f32.mrb[0].mxu0
        %v4754 = vpop.f32.mrb[0].mxu0
        %4755 = vdwg.mxu0
        %4756 = vmatprep.subr.bf16.mxu0 %v3092
        %4757 = vmatpush1.bf16.msra.mxu0 %v3091
        %4758 = vmatprep.subr.bf16.mxu0 %v3096
        %4759 = vmatpush1.bf16.msra.mxu0 %v3095
        %4760 = vmatprep.subr.bf16.mxu0 %v3100
        %4761 = vmatpush1.bf16.msra.mxu0 %v3099
        %4762 = vmatprep.subr.bf16.mxu0 %v3104
        %4763 = vmatpush1.bf16.msra.mxu0 %v3103
        %4764 = vmatprep.subr.bf16.mxu0 %v3108
        %4765 = vmatpush1.bf16.msra.mxu0 %v3107
        %4766 = vmatprep.subr.bf16.mxu0 %v3112
        %4767 = vmatpush1.bf16.msra.mxu0 %v3111
        %4768 = vmatprep.subr.bf16.mxu0 %v3116
        %4769 = vmatpush1.bf16.msra.mxu0 %v3115
        %4770 = vmatprep.subr.bf16.mxu0 %v3120
        %4771 = vmatpush1.bf16.msra.mxu0 %v3119
        %4772 = vmatprep.subr.bf16.mxu0 %v3124
        %4773 = vmatpush1.bf16.msra.mxu0 %v3123
        %4774 = vmatprep.subr.bf16.mxu0 %v3128
        %4775 = vmatpush1.bf16.msra.mxu0 %v3127
        %4776 = vmatprep.subr.bf16.mxu0 %v3132
        %4777 = vmatpush1.bf16.msra.mxu0 %v3131
        %4778 = vmatprep.subr.bf16.mxu0 %v3136
        %4779 = vmatpush1.bf16.msra.mxu0 %v3135
        %4780 = vmatprep.subr.bf16.mxu0 %v3140
        %4781 = vmatpush1.bf16.msra.mxu0 %v3139
        %4782 = vmatprep.subr.bf16.mxu0 %v3144
        %4783 = vmatpush1.bf16.msra.mxu0 %v3143
        %4784 = vmatprep.subr.bf16.mxu0 %v3148
        %4785 = vmatpush1.bf16.msra.mxu0 %v3147
        %4786 = vmatprep.subr.bf16.mxu0 %v3152
        %4787 = vmatpush1.bf16.msra.mxu0 %v3151
        %4788 = vmatprep.mubr.bf16.mxu0 %v426
        %4789 = vmatmul.mubr.bf16.gmra.mrb[0].mxu0 %v425
        %v4790 = vpop.f32.mrb[0].mxu0
        %v4791 = vadd.f32 %v4750, %v4790
        %v4792 = vpop.f32.mrb[0].mxu0
        %v4793 = vadd.f32 %v4752, %v4792
        %v4794 = vpop.f32.mrb[0].mxu0
        %v4795 = vpop.f32.mrb[0].mxu0
        %4796 = vdwg.mxu0
        %4797 = vmatprep.subr.bf16.mxu0 %v3156
        %4798 = vmatpush1.bf16.msra.mxu0 %v3155
        %4799 = vmatprep.subr.bf16.mxu0 %v3160
        %4800 = vmatpush1.bf16.msra.mxu0 %v3159
        %4801 = vmatprep.subr.bf16.mxu0 %v3164
        %4802 = vmatpush1.bf16.msra.mxu0 %v3163
        %4803 = vmatprep.subr.bf16.mxu0 %v3168
        %4804 = vmatpush1.bf16.msra.mxu0 %v3167
        %4805 = vmatprep.subr.bf16.mxu0 %v3172
        %4806 = vmatpush1.bf16.msra.mxu0 %v3171
        %4807 = vmatprep.subr.bf16.mxu0 %v3176
        %4808 = vmatpush1.bf16.msra.mxu0 %v3175
        %4809 = vmatprep.subr.bf16.mxu0 %v3180
        %4810 = vmatpush1.bf16.msra.mxu0 %v3179
        %4811 = vmatprep.subr.bf16.mxu0 %v3184
        %4812 = vmatpush1.bf16.msra.mxu0 %v3183
        %4813 = vmatprep.subr.bf16.mxu0 %v3188
        %4814 = vmatpush1.bf16.msra.mxu0 %v3187
        %4815 = vmatprep.subr.bf16.mxu0 %v3192
        %4816 = vmatpush1.bf16.msra.mxu0 %v3191
        %4817 = vmatprep.subr.bf16.mxu0 %v3196
        %4818 = vmatpush1.bf16.msra.mxu0 %v3195
        %4819 = vmatprep.subr.bf16.mxu0 %v3200
        %4820 = vmatpush1.bf16.msra.mxu0 %v3199
        %4821 = vmatprep.subr.bf16.mxu0 %v3204
        %4822 = vmatpush1.bf16.msra.mxu0 %v3203
        %4823 = vmatprep.subr.bf16.mxu0 %v3208
        %4824 = vmatpush1.bf16.msra.mxu0 %v3207
        %4825 = vmatprep.subr.bf16.mxu0 %v3212
        %4826 = vmatpush1.bf16.msra.mxu0 %v3211
        %4827 = vmatprep.subr.bf16.mxu0 %v3216
        %4828 = vmatpush1.bf16.msra.mxu0 %v3215
        %4829 = vmatprep.mubr.bf16.mxu0 %v428
        %4830 = vmatmul.mubr.bf16.gmra.mrb[0].mxu0 %v427
        %v4831 = vpop.f32.mrb[0].mxu0
        %v4832 = vadd.f32 %v4791, %v4831
        %v4833 = vpop.f32.mrb[0].mxu0
        %v4834 = vadd.f32 %v4793, %v4833
        %v4835 = vpop.f32.mrb[0].mxu0
        %v4836 = vpop.f32.mrb[0].mxu0
        %4837 = vdwg.mxu0
        %4838 = vmatprep.subr.bf16.mxu0 %v3220
        %4839 = vmatpush1.bf16.msra.mxu0 %v3219
        %4840 = vmatprep.subr.bf16.mxu0 %v3224
        %4841 = vmatpush1.bf16.msra.mxu0 %v3223
        %4842 = vmatprep.subr.bf16.mxu0 %v3228
        %4843 = vmatpush1.bf16.msra.mxu0 %v3227
        %4844 = vmatprep.subr.bf16.mxu0 %v3232
        %4845 = vmatpush1.bf16.msra.mxu0 %v3231
        %4846 = vmatprep.subr.bf16.mxu0 %v3236
        %4847 = vmatpush1.bf16.msra.mxu0 %v3235
        %4848 = vmatprep.subr.bf16.mxu0 %v3240
        %4849 = vmatpush1.bf16.msra.mxu0 %v3239
        %4850 = vmatprep.subr.bf16.mxu0 %v3244
        %4851 = vmatpush1.bf16.msra.mxu0 %v3243
        %4852 = vmatprep.subr.bf16.mxu0 %v3248
        %4853 = vmatpush1.bf16.msra.mxu0 %v3247
        %4854 = vmatprep.subr.bf16.mxu0 %v3252
        %4855 = vmatpush1.bf16.msra.mxu0 %v3251
        %4856 = vmatprep.subr.bf16.mxu0 %v3256
        %4857 = vmatpush1.bf16.msra.mxu0 %v3255
        %4858 = vmatprep.subr.bf16.mxu0 %v3260
        %4859 = vmatpush1.bf16.msra.mxu0 %v3259
        %4860 = vmatprep.subr.bf16.mxu0 %v3264
        %4861 = vmatpush1.bf16.msra.mxu0 %v3263
        %4862 = vmatprep.subr.bf16.mxu0 %v3268
        %4863 = vmatpush1.bf16.msra.mxu0 %v3267
        %4864 = vmatprep.subr.bf16.mxu0 %v3272
        %4865 = vmatpush1.bf16.msra.mxu0 %v3271
        %4866 = vmatprep.subr.bf16.mxu0 %v3276
        %4867 = vmatpush1.bf16.msra.mxu0 %v3275
        %4868 = vmatprep.subr.bf16.mxu0 %v3280
        %4869 = vmatpush1.bf16.msra.mxu0 %v3279
        %4870 = vmatprep.mubr.bf16.mxu0 %v430
        %4871 = vmatmul.mubr.bf16.gmra.mrb[0].mxu0 %v429
        %v4872 = vpop.f32.mrb[0].mxu0
        %v4873 = vadd.f32 %v4832, %v4872
        %v4874 = vpop.f32.mrb[0].mxu0
        %v4875 = vadd.f32 %v4834, %v4874
        %v4876 = vpop.f32.mrb[0].mxu0
        %v4877 = vpop.f32.mrb[0].mxu0
        %4878 = vdwg.mxu0
        %4879 = vmatprep.subr.bf16.mxu0 %v3284
        %4880 = vmatpush1.bf16.msra.mxu0 %v3283
        %4881 = vmatprep.subr.bf16.mxu0 %v3288
        %4882 = vmatpush1.bf16.msra.mxu0 %v3287
        %4883 = vmatprep.subr.bf16.mxu0 %v3292
        %4884 = vmatpush1.bf16.msra.mxu0 %v3291
        %4885 = vmatprep.subr.bf16.mxu0 %v3296
        %4886 = vmatpush1.bf16.msra.mxu0 %v3295
        %4887 = vmatprep.subr.bf16.mxu0 %v3300
        %4888 = vmatpush1.bf16.msra.mxu0 %v3299
        %4889 = vmatprep.subr.bf16.mxu0 %v3304
        %4890 = vmatpush1.bf16.msra.mxu0 %v3303
        %4891 = vmatprep.subr.bf16.mxu0 %v3308
        %4892 = vmatpush1.bf16.msra.mxu0 %v3307
        %4893 = vmatprep.subr.bf16.mxu0 %v3312
        %4894 = vmatpush1.bf16.msra.mxu0 %v3311
        %4895 = vmatprep.subr.bf16.mxu0 %v3316
        %4896 = vmatpush1.bf16.msra.mxu0 %v3315
        %4897 = vmatprep.subr.bf16.mxu0 %v3320
        %4898 = vmatpush1.bf16.msra.mxu0 %v3319
        %4899 = vmatprep.subr.bf16.mxu0 %v3324
        %4900 = vmatpush1.bf16.msra.mxu0 %v3323
        %4901 = vmatprep.subr.bf16.mxu0 %v3328
        %4902 = vmatpush1.bf16.msra.mxu0 %v3327
        %4903 = vmatprep.subr.bf16.mxu0 %v3332
        %4904 = vmatpush1.bf16.msra.mxu0 %v3331
        %4905 = vmatprep.subr.bf16.mxu0 %v3336
        %4906 = vmatpush1.bf16.msra.mxu0 %v3335
        %4907 = vmatprep.subr.bf16.mxu0 %v3340
        %4908 = vmatpush1.bf16.msra.mxu0 %v3339
        %4909 = vmatprep.subr.bf16.mxu0 %v3344
        %4910 = vmatpush1.bf16.msra.mxu0 %v3343
        %4911 = vmatprep.mubr.bf16.mxu0 %v432
        %4912 = vmatmul.mubr.bf16.gmra.mrb[0].mxu0 %v431
        %v4913 = vpop.f32.mrb[0].mxu0
        %v4914 = vadd.f32 %v4873, %v4913
        %v4915 = vpop.f32.mrb[0].mxu0
        %v4916 = vadd.f32 %v4875, %v4915
        %v4917 = vpop.f32.mrb[0].mxu0
        %v4918 = vpop.f32.mrb[0].mxu0
        %4919 = vdwg.mxu0
        %4920 = vmatprep.subr.bf16.mxu0 %v3348
        %4921 = vmatpush1.bf16.msra.mxu0 %v3347
        %4922 = vmatprep.subr.bf16.mxu0 %v3352
        %4923 = vmatpush1.bf16.msra.mxu0 %v3351
        %4924 = vmatprep.subr.bf16.mxu0 %v3356
        %4925 = vmatpush1.bf16.msra.mxu0 %v3355
        %4926 = vmatprep.subr.bf16.mxu0 %v3360
        %4927 = vmatpush1.bf16.msra.mxu0 %v3359
        %4928 = vmatprep.subr.bf16.mxu0 %v3364
        %4929 = vmatpush1.bf16.msra.mxu0 %v3363
        %4930 = vmatprep.subr.bf16.mxu0 %v3368
        %4931 = vmatpush1.bf16.msra.mxu0 %v3367
        %4932 = vmatprep.subr.bf16.mxu0 %v3372
        %4933 = vmatpush1.bf16.msra.mxu0 %v3371
        %4934 = vmatprep.subr.bf16.mxu0 %v3376
        %4935 = vmatpush1.bf16.msra.mxu0 %v3375
        %4936 = vmatprep.subr.bf16.mxu0 %v3380
        %4937 = vmatpush1.bf16.msra.mxu0 %v3379
        %4938 = vmatprep.subr.bf16.mxu0 %v3384
        %4939 = vmatpush1.bf16.msra.mxu0 %v3383
        %4940 = vmatprep.subr.bf16.mxu0 %v3388
        %4941 = vmatpush1.bf16.msra.mxu0 %v3387
        %4942 = vmatprep.subr.bf16.mxu0 %v3392
        %4943 = vmatpush1.bf16.msra.mxu0 %v3391
        %4944 = vmatprep.subr.bf16.mxu0 %v3396
        %4945 = vmatpush1.bf16.msra.mxu0 %v3395
        %4946 = vmatprep.subr.bf16.mxu0 %v3400
        %4947 = vmatpush1.bf16.msra.mxu0 %v3399
        %4948 = vmatprep.subr.bf16.mxu0 %v3404
        %4949 = vmatpush1.bf16.msra.mxu0 %v3403
        %4950 = vmatprep.subr.bf16.mxu0 %v3408
        %4951 = vmatpush1.bf16.msra.mxu0 %v3407
        %4952 = vmatprep.mubr.bf16.mxu0 %v434
        %4953 = vmatmul.mubr.bf16.gmra.mrb[0].mxu0 %v433
        %v4954 = vpop.f32.mrb[0].mxu0
        %v4955 = vadd.f32 %v4914, %v4954
        %v4956 = vpop.f32.mrb[0].mxu0
        %v4957 = vadd.f32 %v4916, %v4956
        %v4958 = vpop.f32.mrb[0].mxu0
        %v4959 = vpop.f32.mrb[0].mxu0
        %4960 = vdwg.mxu0
        %4961 = vmatprep.subr.bf16.mxu0 %v3412
        %4962 = vmatpush1.bf16.msra.mxu0 %v3411
        %4963 = vmatprep.subr.bf16.mxu0 %v3416
        %4964 = vmatpush1.bf16.msra.mxu0 %v3415
        %4965 = vmatprep.subr.bf16.mxu0 %v3420
        %4966 = vmatpush1.bf16.msra.mxu0 %v3419
        %4967 = vmatprep.subr.bf16.mxu0 %v3424
        %4968 = vmatpush1.bf16.msra.mxu0 %v3423
        %4969 = vmatprep.subr.bf16.mxu0 %v3428
        %4970 = vmatpush1.bf16.msra.mxu0 %v3427
        %4971 = vmatprep.subr.bf16.mxu0 %v3432
        %4972 = vmatpush1.bf16.msra.mxu0 %v3431
        %4973 = vmatprep.subr.bf16.mxu0 %v3436
        %4974 = vmatpush1.bf16.msra.mxu0 %v3435
        %4975 = vmatprep.subr.bf16.mxu0 %v3440
        %4976 = vmatpush1.bf16.msra.mxu0 %v3439
        %4977 = vmatprep.subr.bf16.mxu0 %v3444
        %4978 = vmatpush1.bf16.msra.mxu0 %v3443
        %4979 = vmatprep.subr.bf16.mxu0 %v3448
        %4980 = vmatpush1.bf16.msra.mxu0 %v3447
        %4981 = vmatprep.subr.bf16.mxu0 %v3452
        %4982 = vmatpush1.bf16.msra.mxu0 %v3451
        %4983 = vmatprep.subr.bf16.mxu0 %v3456
        %4984 = vmatpush1.bf16.msra.mxu0 %v3455
        %4985 = vmatprep.subr.bf16.mxu0 %v3460
        %4986 = vmatpush1.bf16.msra.mxu0 %v3459
        %4987 = vmatprep.subr.bf16.mxu0 %v3464
        %4988 = vmatpush1.bf16.msra.mxu0 %v3463
        %4989 = vmatprep.subr.bf16.mxu0 %v3468
        %4990 = vmatpush1.bf16.msra.mxu0 %v3467
        %4991 = vmatprep.subr.bf16.mxu0 %v3472
        %4992 = vmatpush1.bf16.msra.mxu0 %v3471
        %4993 = vmatprep.mubr.bf16.mxu0 %v436
        %4994 = vmatmul.mubr.bf16.gmra.mrb[0].mxu0 %v435
        %v4995 = vpop.f32.mrb[0].mxu0
        %v4996 = vadd.f32 %v4955, %v4995
        %v4997 = vpop.f32.mrb[0].mxu0
        %v4998 = vadd.f32 %v4957, %v4997
        %v4999 = vpop.f32.mrb[0].mxu0
        %v5000 = vpop.f32.mrb[0].mxu0
        %5001 = vdwg.mxu0
        %5002 = vmatprep.subr.bf16.mxu0 %v3476
        %5003 = vmatpush1.bf16.msra.mxu0 %v3475
        %5004 = vmatprep.subr.bf16.mxu0 %v3480
        %5005 = vmatpush1.bf16.msra.mxu0 %v3479
        %5006 = vmatprep.subr.bf16.mxu0 %v3484
        %5007 = vmatpush1.bf16.msra.mxu0 %v3483
        %5008 = vmatprep.subr.bf16.mxu0 %v3488
        %5009 = vmatpush1.bf16.msra.mxu0 %v3487
        %5010 = vmatprep.subr.bf16.mxu0 %v3492
        %5011 = vmatpush1.bf16.msra.mxu0 %v3491
        %5012 = vmatprep.subr.bf16.mxu0 %v3496
        %5013 = vmatpush1.bf16.msra.mxu0 %v3495
        %5014 = vmatprep.subr.bf16.mxu0 %v3500
        %5015 = vmatpush1.bf16.msra.mxu0 %v3499
        %5016 = vmatprep.subr.bf16.mxu0 %v3504
        %5017 = vmatpush1.bf16.msra.mxu0 %v3503
        %5018 = vmatprep.subr.bf16.mxu0 %v3508
        %5019 = vmatpush1.bf16.msra.mxu0 %v3507
        %5020 = vmatprep.subr.bf16.mxu0 %v3512
        %5021 = vmatpush1.bf16.msra.mxu0 %v3511
        %5022 = vmatprep.subr.bf16.mxu0 %v3516
        %5023 = vmatpush1.bf16.msra.mxu0 %v3515
        %5024 = vmatprep.subr.bf16.mxu0 %v3520
        %5025 = vmatpush1.bf16.msra.mxu0 %v3519
        %5026 = vmatprep.subr.bf16.mxu0 %v3524
        %5027 = vmatpush1.bf16.msra.mxu0 %v3523
        %5028 = vmatprep.subr.bf16.mxu0 %v3528
        %5029 = vmatpush1.bf16.msra.mxu0 %v3527
        %5030 = vmatprep.subr.bf16.mxu0 %v3532
        %5031 = vmatpush1.bf16.msra.mxu0 %v3531
        %5032 = vmatprep.subr.bf16.mxu0 %v3536
        %5033 = vmatpush1.bf16.msra.mxu0 %v3535
        %5034 = vmatprep.mubr.bf16.mxu0 %v438
        %5035 = vmatmul.mubr.bf16.gmra.mrb[0].mxu0 %v437
        %v5036 = vpop.f32.mrb[0].mxu0
        %v5037 = vadd.f32 %v4996, %v5036
        %v5038 = vpop.f32.mrb[0].mxu0
        %v5039 = vadd.f32 %v4998, %v5038
        %v5040 = vpop.f32.mrb[0].mxu0
        %v5041 = vpop.f32.mrb[0].mxu0
        %5042 = vdwg.mxu0
        %5043 = vmatprep.subr.bf16.mxu0 %v3540
        %5044 = vmatpush1.bf16.msra.mxu0 %v3539
        %5045 = vmatprep.subr.bf16.mxu0 %v3544
        %5046 = vmatpush1.bf16.msra.mxu0 %v3543
        %5047 = vmatprep.subr.bf16.mxu0 %v3548
        %5048 = vmatpush1.bf16.msra.mxu0 %v3547
        %5049 = vmatprep.subr.bf16.mxu0 %v3552
        %5050 = vmatpush1.bf16.msra.mxu0 %v3551
        %5051 = vmatprep.subr.bf16.mxu0 %v3556
        %5052 = vmatpush1.bf16.msra.mxu0 %v3555
        %5053 = vmatprep.subr.bf16.mxu0 %v3560
        %5054 = vmatpush1.bf16.msra.mxu0 %v3559
        %5055 = vmatprep.subr.bf16.mxu0 %v3564
        %5056 = vmatpush1.bf16.msra.mxu0 %v3563
        %5057 = vmatprep.subr.bf16.mxu0 %v3568
        %5058 = vmatpush1.bf16.msra.mxu0 %v3567
        %5059 = vmatprep.subr.bf16.mxu0 %v3572
        %5060 = vmatpush1.bf16.msra.mxu0 %v3571
        %5061 = vmatprep.subr.bf16.mxu0 %v3576
        %5062 = vmatpush1.bf16.msra.mxu0 %v3575
        %5063 = vmatprep.subr.bf16.mxu0 %v3580
        %5064 = vmatpush1.bf16.msra.mxu0 %v3579
        %5065 = vmatprep.subr.bf16.mxu0 %v3584
        %5066 = vmatpush1.bf16.msra.mxu0 %v3583
        %5067 = vmatprep.subr.bf16.mxu0 %v3588
        %5068 = vmatpush1.bf16.msra.mxu0 %v3587
        %5069 = vmatprep.subr.bf16.mxu0 %v3592
        %5070 = vmatpush1.bf16.msra.mxu0 %v3591
        %5071 = vmatprep.subr.bf16.mxu0 %v3596
        %5072 = vmatpush1.bf16.msra.mxu0 %v3595
        %5073 = vmatprep.subr.bf16.mxu0 %v3600
        %5074 = vmatpush1.bf16.msra.mxu0 %v3599
        %5075 = vmatprep.mubr.bf16.mxu0 %v440
        %5076 = vmatmul.mubr.bf16.gmra.mrb[0].mxu0 %v439
        %v5077 = vpop.f32.mrb[0].mxu0
        %v5078 = vadd.f32 %v5037, %v5077
        %v5079 = vpop.f32.mrb[0].mxu0
        %v5080 = vadd.f32 %v5039, %v5079
        %v5081 = vpop.f32.mrb[0].mxu0
        %v5082 = vpop.f32.mrb[0].mxu0
        %5083 = vdwg.mxu0
        %5084 = vmatprep.subr.bf16.mxu0 %v3604
        %5085 = vmatpush1.bf16.msra.mxu0 %v3603
        %5086 = vmatprep.subr.bf16.mxu0 %v3608
        %5087 = vmatpush1.bf16.msra.mxu0 %v3607
        %5088 = vmatprep.subr.bf16.mxu0 %v3612
        %5089 = vmatpush1.bf16.msra.mxu0 %v3611
        %5090 = vmatprep.subr.bf16.mxu0 %v3616
        %5091 = vmatpush1.bf16.msra.mxu0 %v3615
        %5092 = vmatprep.subr.bf16.mxu0 %v3620
        %5093 = vmatpush1.bf16.msra.mxu0 %v3619
        %5094 = vmatprep.subr.bf16.mxu0 %v3624
        %5095 = vmatpush1.bf16.msra.mxu0 %v3623
        %5096 = vmatprep.subr.bf16.mxu0 %v3628
        %5097 = vmatpush1.bf16.msra.mxu0 %v3627
        %5098 = vmatprep.subr.bf16.mxu0 %v3632
        %5099 = vmatpush1.bf16.msra.mxu0 %v3631
        %5100 = vmatprep.subr.bf16.mxu0 %v3636
        %5101 = vmatpush1.bf16.msra.mxu0 %v3635
        %5102 = vmatprep.subr.bf16.mxu0 %v3640
        %5103 = vmatpush1.bf16.msra.mxu0 %v3639
        %5104 = vmatprep.subr.bf16.mxu0 %v3644
        %5105 = vmatpush1.bf16.msra.mxu0 %v3643
        %5106 = vmatprep.subr.bf16.mxu0 %v3648
        %5107 = vmatpush1.bf16.msra.mxu0 %v3647
        %5108 = vmatprep.subr.bf16.mxu0 %v3652
        %5109 = vmatpush1.bf16.msra.mxu0 %v3651
        %5110 = vmatprep.subr.bf16.mxu0 %v3656
        %5111 = vmatpush1.bf16.msra.mxu0 %v3655
        %5112 = vmatprep.subr.bf16.mxu0 %v3660
        %5113 = vmatpush1.bf16.msra.mxu0 %v3659
        %5114 = vmatprep.subr.bf16.mxu0 %v3664
        %5115 = vmatpush1.bf16.msra.mxu0 %v3663
        %5116 = vmatprep.mubr.bf16.mxu0 %v442
        %5117 = vmatmul.mubr.bf16.gmra.mrb[0].mxu0 %v441
        %v5118 = vpop.f32.mrb[0].mxu0
        %v5119 = vadd.f32 %v5078, %v5118
        %v5120 = vpop.f32.mrb[0].mxu0
        %v5121 = vadd.f32 %v5080, %v5120
        %v5122 = vpop.f32.mrb[0].mxu0
        %v5123 = vpop.f32.mrb[0].mxu0
        %5124 = vdwg.mxu0
        %vm5125 = vcmp.gt.f32.partialorder %v4709, 0.0
        %vm5126 = vcmp.gt.f32.partialorder %v4711, 0.0
        %vm5127 = vcmp.gt.f32.partialorder %v5119, 0.0
        %vm5128 = vcmp.gt.f32.partialorder %v5121, 0.0
        %v5129 = vmul.f32 %v4709, 0.2
        %v5130 = vmul.f32 %v4711, 0.2
        %v5131 = vmul.f32 %v5119, 0.2
        %v5132 = vmul.f32 %v5121, 0.2
        %v5133 = vsel %vm5125, %v4709, %v5129
        %v5134 = vsel %vm5126, %v4711, %v5130
        %v5135 = vsel %vm5127, %v5119, %v5131
        %v5136 = vsel %vm5128, %v5121, %v5132
        %v5137 = vpack.c.bf16 %v5133, %v5133
        %v5138 = vpack.c.bf16 %v5134, %v5134
        %v5139 = vpack.c.bf16 %v5135, %v5135
        %v5140 = vpack.c.bf16 %v5136, %v5136
        %v5141 = vld [vmem:[%s270] sm:$0xff]
        %v5142 = vld [vmem:[%s270 + $0x8] sm:$0xff]
        %v5143 = vld [vmem:[%s270 + $0x10] sm:$0xff]
        %v5144 = vld [vmem:[%s270 + $0x18] sm:$0xff]
        %v5145 = vld [vmem:[%s270 + $0x20] sm:$0xff]
        %v5146 = vld [vmem:[%s270 + $0x28] sm:$0xff]
        %v5147 = vld [vmem:[%s270 + $0x30] sm:$0xff]
        %v5148 = vld [vmem:[%s270 + $0x38] sm:$0xff]
        %v5149 = vld [vmem:[%s270 + $0x40] sm:$0xff]
        %v5150 = vld [vmem:[%s270 + $0x48] sm:$0xff]
        %v5151 = vld [vmem:[%s270 + $0x50] sm:$0xff]
        %v5152 = vld [vmem:[%s270 + $0x58] sm:$0xff]
        %v5153 = vld [vmem:[%s270 + $0x60] sm:$0xff]
        %v5154 = vld [vmem:[%s270 + $0x68] sm:$0xff]
        %v5155 = vld [vmem:[%s270 + $0x70] sm:$0xff]
        %v5156 = vld [vmem:[%s270 + $0x78] sm:$0xff]
        %v5157 = vld [vmem:[%s270 + $0x80] sm:$0xff]
        %v5158 = vld [vmem:[%s270 + $0x88] sm:$0xff]
        %v5159 = vld [vmem:[%s270 + $0x90] sm:$0xff]
        %v5160 = vld [vmem:[%s270 + $0x98] sm:$0xff]
        %v5161 = vld [vmem:[%s270 + $0xa0] sm:$0xff]
        %v5162 = vld [vmem:[%s270 + $0xa8] sm:$0xff]
        %v5163 = vld [vmem:[%s270 + $0xb0] sm:$0xff]
        %v5164 = vld [vmem:[%s270 + $0xb8] sm:$0xff]
        %v5165 = vld [vmem:[%s270 + $0xc0] sm:$0xff]
        %v5166 = vld [vmem:[%s270 + $0xc8] sm:$0xff]
        %v5167 = vld [vmem:[%s270 + $0xd0] sm:$0xff]
        %v5168 = vld [vmem:[%s270 + $0xd8] sm:$0xff]
        %v5169 = vld [vmem:[%s270 + $0xe0] sm:$0xff]
        %v5170 = vld [vmem:[%s270 + $0xe8] sm:$0xff]
        %v5171 = vld [vmem:[%s270 + $0xf0] sm:$0xff]
        %v5172 = vld [vmem:[%s270 + $0xf8] sm:$0xff]
        %v5173 = vld [vmem:[%s270 + $0x100] sm:$0xff]
        %v5174 = vld [vmem:[%s270 + $0x108] sm:$0xff]
        %v5175 = vld [vmem:[%s270 + $0x110] sm:$0xff]
        %v5176 = vld [vmem:[%s270 + $0x118] sm:$0xff]
        %v5177 = vld [vmem:[%s270 + $0x120] sm:$0xff]
        %v5178 = vld [vmem:[%s270 + $0x128] sm:$0xff]
        %v5179 = vld [vmem:[%s270 + $0x130] sm:$0xff]
        %v5180 = vld [vmem:[%s270 + $0x138] sm:$0xff]
        %v5181 = vld [vmem:[%s270 + $0x140] sm:$0xff]
        %v5182 = vld [vmem:[%s270 + $0x148] sm:$0xff]
        %v5183 = vld [vmem:[%s270 + $0x150] sm:$0xff]
        %v5184 = vld [vmem:[%s270 + $0x158] sm:$0xff]
        %v5185 = vld [vmem:[%s270 + $0x160] sm:$0xff]
        %v5186 = vld [vmem:[%s270 + $0x168] sm:$0xff]
        %v5187 = vld [vmem:[%s270 + $0x170] sm:$0xff]
        %v5188 = vld [vmem:[%s270 + $0x178] sm:$0xff]
        %v5189 = vld [vmem:[%s270 + $0x180] sm:$0xff]
        %v5190 = vld [vmem:[%s270 + $0x188] sm:$0xff]
        %v5191 = vld [vmem:[%s270 + $0x190] sm:$0xff]
        %v5192 = vld [vmem:[%s270 + $0x198] sm:$0xff]
        %v5193 = vld [vmem:[%s270 + $0x1a0] sm:$0xff]
        %v5194 = vld [vmem:[%s270 + $0x1a8] sm:$0xff]
        %v5195 = vld [vmem:[%s270 + $0x1b0] sm:$0xff]
        %v5196 = vld [vmem:[%s270 + $0x1b8] sm:$0xff]
        %v5197 = vld [vmem:[%s270 + $0x1c0] sm:$0xff]
        %v5198 = vld [vmem:[%s270 + $0x1c8] sm:$0xff]
        %v5199 = vld [vmem:[%s270 + $0x1d0] sm:$0xff]
        %v5200 = vld [vmem:[%s270 + $0x1d8] sm:$0xff]
        %v5201 = vld [vmem:[%s270 + $0x1e0] sm:$0xff]
        %v5202 = vld [vmem:[%s270 + $0x1e8] sm:$0xff]
        %v5203 = vld [vmem:[%s270 + $0x1f0] sm:$0xff]
        %v5204 = vld [vmem:[%s270 + $0x1f8] sm:$0xff]
        %v5205 = vld [vmem:[%s270 + $0x200] sm:$0xff]
        %v5206 = vld [vmem:[%s270 + $0x208] sm:$0xff]
        %v5207 = vld [vmem:[%s270 + $0x210] sm:$0xff]
        %v5208 = vld [vmem:[%s270 + $0x218] sm:$0xff]
        %v5209 = vld [vmem:[%s270 + $0x220] sm:$0xff]
        %v5210 = vld [vmem:[%s270 + $0x228] sm:$0xff]
        %v5211 = vld [vmem:[%s270 + $0x230] sm:$0xff]
        %v5212 = vld [vmem:[%s270 + $0x238] sm:$0xff]
        %v5213 = vld [vmem:[%s270 + $0x240] sm:$0xff]
        %v5214 = vld [vmem:[%s270 + $0x248] sm:$0xff]
        %v5215 = vld [vmem:[%s270 + $0x250] sm:$0xff]
        %v5216 = vld [vmem:[%s270 + $0x258] sm:$0xff]
        %v5217 = vld [vmem:[%s270 + $0x260] sm:$0xff]
        %v5218 = vld [vmem:[%s270 + $0x268] sm:$0xff]
        %v5219 = vld [vmem:[%s270 + $0x270] sm:$0xff]
        %v5220 = vld [vmem:[%s270 + $0x278] sm:$0xff]
        %v5221 = vld [vmem:[%s270 + $0x280] sm:$0xff]
        %v5222 = vld [vmem:[%s270 + $0x288] sm:$0xff]
        %v5223 = vld [vmem:[%s270 + $0x290] sm:$0xff]
        %v5224 = vld [vmem:[%s270 + $0x298] sm:$0xff]
        %v5225 = vld [vmem:[%s270 + $0x2a0] sm:$0xff]
        %v5226 = vld [vmem:[%s270 + $0x2a8] sm:$0xff]
        %v5227 = vld [vmem:[%s270 + $0x2b0] sm:$0xff]
        %v5228 = vld [vmem:[%s270 + $0x2b8] sm:$0xff]
        %v5229 = vld [vmem:[%s270 + $0x2c0] sm:$0xff]
        %v5230 = vld [vmem:[%s270 + $0x2c8] sm:$0xff]
        %v5231 = vld [vmem:[%s270 + $0x2d0] sm:$0xff]
        %v5232 = vld [vmem:[%s270 + $0x2d8] sm:$0xff]
        %v5233 = vld [vmem:[%s270 + $0x2e0] sm:$0xff]
        %v5234 = vld [vmem:[%s270 + $0x2e8] sm:$0xff]
        %v5235 = vld [vmem:[%s270 + $0x2f0] sm:$0xff]
        %v5236 = vld [vmem:[%s270 + $0x2f8] sm:$0xff]
        %v5237 = vld [vmem:[%s270 + $0x300] sm:$0xff]
        %v5238 = vld [vmem:[%s270 + $0x308] sm:$0xff]
        %v5239 = vld [vmem:[%s270 + $0x310] sm:$0xff]
        %v5240 = vld [vmem:[%s270 + $0x318] sm:$0xff]
        %v5241 = vld [vmem:[%s270 + $0x320] sm:$0xff]
        %v5242 = vld [vmem:[%s270 + $0x328] sm:$0xff]
        %v5243 = vld [vmem:[%s270 + $0x330] sm:$0xff]
        %v5244 = vld [vmem:[%s270 + $0x338] sm:$0xff]
        %v5245 = vld [vmem:[%s270 + $0x340] sm:$0xff]
        %v5246 = vld [vmem:[%s270 + $0x348] sm:$0xff]
        %v5247 = vld [vmem:[%s270 + $0x350] sm:$0xff]
        %v5248 = vld [vmem:[%s270 + $0x358] sm:$0xff]
        %v5249 = vld [vmem:[%s270 + $0x360] sm:$0xff]
        %v5250 = vld [vmem:[%s270 + $0x368] sm:$0xff]
        %v5251 = vld [vmem:[%s270 + $0x370] sm:$0xff]
        %v5252 = vld [vmem:[%s270 + $0x378] sm:$0xff]
        %v5253 = vld [vmem:[%s270 + $0x380] sm:$0xff]
        %v5254 = vld [vmem:[%s270 + $0x388] sm:$0xff]
        %v5255 = vld [vmem:[%s270 + $0x390] sm:$0xff]
        %v5256 = vld [vmem:[%s270 + $0x398] sm:$0xff]
        %v5257 = vld [vmem:[%s270 + $0x3a0] sm:$0xff]
        %v5258 = vld [vmem:[%s270 + $0x3a8] sm:$0xff]
        %v5259 = vld [vmem:[%s270 + $0x3b0] sm:$0xff]
        %v5260 = vld [vmem:[%s270 + $0x3b8] sm:$0xff]
        %v5261 = vld [vmem:[%s270 + $0x3c0] sm:$0xff]
        %v5262 = vld [vmem:[%s270 + $0x3c8] sm:$0xff]
        %v5263 = vld [vmem:[%s270 + $0x3d0] sm:$0xff]
        %v5264 = vld [vmem:[%s270 + $0x3d8] sm:$0xff]
        %v5265 = vld [vmem:[%s270 + $0x3e0] sm:$0xff]
        %v5266 = vld [vmem:[%s270 + $0x3e8] sm:$0xff]
        %v5267 = vld [vmem:[%s270 + $0x3f0] sm:$0xff]
        %v5268 = vld [vmem:[%s270 + $0x3f8] sm:$0xff]
        %v5269 = vld [vmem:[%s270 + $0x400] sm:$0xff]
        %v5270 = vld [vmem:[%s270 + $0x408] sm:$0xff]
        %v5271 = vld [vmem:[%s270 + $0x410] sm:$0xff]
        %v5272 = vld [vmem:[%s270 + $0x418] sm:$0xff]
        %v5273 = vld [vmem:[%s270 + $0x420] sm:$0xff]
        %v5274 = vld [vmem:[%s270 + $0x428] sm:$0xff]
        %v5275 = vld [vmem:[%s270 + $0x430] sm:$0xff]
        %v5276 = vld [vmem:[%s270 + $0x438] sm:$0xff]
        %v5277 = vld [vmem:[%s270 + $0x440] sm:$0xff]
        %v5278 = vld [vmem:[%s270 + $0x448] sm:$0xff]
        %v5279 = vld [vmem:[%s270 + $0x450] sm:$0xff]
        %v5280 = vld [vmem:[%s270 + $0x458] sm:$0xff]
        %v5281 = vld [vmem:[%s270 + $0x460] sm:$0xff]
        %v5282 = vld [vmem:[%s270 + $0x468] sm:$0xff]
        %v5283 = vld [vmem:[%s270 + $0x470] sm:$0xff]
        %v5284 = vld [vmem:[%s270 + $0x478] sm:$0xff]
        %v5285 = vld [vmem:[%s270 + $0x480] sm:$0xff]
        %v5286 = vld [vmem:[%s270 + $0x488] sm:$0xff]
        %v5287 = vld [vmem:[%s270 + $0x490] sm:$0xff]
        %v5288 = vld [vmem:[%s270 + $0x498] sm:$0xff]
        %v5289 = vld [vmem:[%s270 + $0x4a0] sm:$0xff]
        %v5290 = vld [vmem:[%s270 + $0x4a8] sm:$0xff]
        %v5291 = vld [vmem:[%s270 + $0x4b0] sm:$0xff]
        %v5292 = vld [vmem:[%s270 + $0x4b8] sm:$0xff]
        %v5293 = vld [vmem:[%s270 + $0x4c0] sm:$0xff]
        %v5294 = vld [vmem:[%s270 + $0x4c8] sm:$0xff]
        %v5295 = vld [vmem:[%s270 + $0x4d0] sm:$0xff]
        %v5296 = vld [vmem:[%s270 + $0x4d8] sm:$0xff]
        %v5297 = vld [vmem:[%s270 + $0x4e0] sm:$0xff]
        %v5298 = vld [vmem:[%s270 + $0x4e8] sm:$0xff]
        %v5299 = vld [vmem:[%s270 + $0x4f0] sm:$0xff]
        %v5300 = vld [vmem:[%s270 + $0x4f8] sm:$0xff]
        %v5301 = vld [vmem:[%s270 + $0x500] sm:$0xff]
        %v5302 = vld [vmem:[%s270 + $0x508] sm:$0xff]
        %v5303 = vld [vmem:[%s270 + $0x510] sm:$0xff]
        %v5304 = vld [vmem:[%s270 + $0x518] sm:$0xff]
        %v5305 = vld [vmem:[%s270 + $0x520] sm:$0xff]
        %v5306 = vld [vmem:[%s270 + $0x528] sm:$0xff]
        %v5307 = vld [vmem:[%s270 + $0x530] sm:$0xff]
        %v5308 = vld [vmem:[%s270 + $0x538] sm:$0xff]
        %v5309 = vld [vmem:[%s270 + $0x540] sm:$0xff]
        %v5310 = vld [vmem:[%s270 + $0x548] sm:$0xff]
        %v5311 = vld [vmem:[%s270 + $0x550] sm:$0xff]
        %v5312 = vld [vmem:[%s270 + $0x558] sm:$0xff]
        %v5313 = vld [vmem:[%s270 + $0x560] sm:$0xff]
        %v5314 = vld [vmem:[%s270 + $0x568] sm:$0xff]
        %v5315 = vld [vmem:[%s270 + $0x570] sm:$0xff]
        %v5316 = vld [vmem:[%s270 + $0x578] sm:$0xff]
        %v5317 = vld [vmem:[%s270 + $0x580] sm:$0xff]
        %v5318 = vld [vmem:[%s270 + $0x588] sm:$0xff]
        %v5319 = vld [vmem:[%s270 + $0x590] sm:$0xff]
        %v5320 = vld [vmem:[%s270 + $0x598] sm:$0xff]
        %v5321 = vld [vmem:[%s270 + $0x5a0] sm:$0xff]
        %v5322 = vld [vmem:[%s270 + $0x5a8] sm:$0xff]
        %v5323 = vld [vmem:[%s270 + $0x5b0] sm:$0xff]
        %v5324 = vld [vmem:[%s270 + $0x5b8] sm:$0xff]
        %v5325 = vld [vmem:[%s270 + $0x5c0] sm:$0xff]
        %v5326 = vld [vmem:[%s270 + $0x5c8] sm:$0xff]
        %v5327 = vld [vmem:[%s270 + $0x5d0] sm:$0xff]
        %v5328 = vld [vmem:[%s270 + $0x5d8] sm:$0xff]
        %v5329 = vld [vmem:[%s270 + $0x5e0] sm:$0xff]
        %v5330 = vld [vmem:[%s270 + $0x5e8] sm:$0xff]
        %v5331 = vld [vmem:[%s270 + $0x5f0] sm:$0xff]
        %v5332 = vld [vmem:[%s270 + $0x5f8] sm:$0xff]
        %v5333 = vld [vmem:[%s270 + $0x600] sm:$0xff]
        %v5334 = vld [vmem:[%s270 + $0x608] sm:$0xff]
        %v5335 = vld [vmem:[%s270 + $0x610] sm:$0xff]
        %v5336 = vld [vmem:[%s270 + $0x618] sm:$0xff]
        %v5337 = vld [vmem:[%s270 + $0x620] sm:$0xff]
        %v5338 = vld [vmem:[%s270 + $0x628] sm:$0xff]
        %v5339 = vld [vmem:[%s270 + $0x630] sm:$0xff]
        %v5340 = vld [vmem:[%s270 + $0x638] sm:$0xff]
        %v5341 = vld [vmem:[%s270 + $0x640] sm:$0xff]
        %v5342 = vld [vmem:[%s270 + $0x648] sm:$0xff]
        %v5343 = vld [vmem:[%s270 + $0x650] sm:$0xff]
        %v5344 = vld [vmem:[%s270 + $0x658] sm:$0xff]
        %v5345 = vld [vmem:[%s270 + $0x660] sm:$0xff]
        %v5346 = vld [vmem:[%s270 + $0x668] sm:$0xff]
        %v5347 = vld [vmem:[%s270 + $0x670] sm:$0xff]
        %v5348 = vld [vmem:[%s270 + $0x678] sm:$0xff]
        %v5349 = vld [vmem:[%s270 + $0x680] sm:$0xff]
        %v5350 = vld [vmem:[%s270 + $0x688] sm:$0xff]
        %v5351 = vld [vmem:[%s270 + $0x690] sm:$0xff]
        %v5352 = vld [vmem:[%s270 + $0x698] sm:$0xff]
        %v5353 = vld [vmem:[%s270 + $0x6a0] sm:$0xff]
        %v5354 = vld [vmem:[%s270 + $0x6a8] sm:$0xff]
        %v5355 = vld [vmem:[%s270 + $0x6b0] sm:$0xff]
        %v5356 = vld [vmem:[%s270 + $0x6b8] sm:$0xff]
        %v5357 = vld [vmem:[%s270 + $0x6c0] sm:$0xff]
        %v5358 = vld [vmem:[%s270 + $0x6c8] sm:$0xff]
        %v5359 = vld [vmem:[%s270 + $0x6d0] sm:$0xff]
        %v5360 = vld [vmem:[%s270 + $0x6d8] sm:$0xff]
        %v5361 = vld [vmem:[%s270 + $0x6e0] sm:$0xff]
        %v5362 = vld [vmem:[%s270 + $0x6e8] sm:$0xff]
        %v5363 = vld [vmem:[%s270 + $0x6f0] sm:$0xff]
        %v5364 = vld [vmem:[%s270 + $0x6f8] sm:$0xff]
        %v5365 = vld [vmem:[%s270 + $0x700] sm:$0xff]
        %v5366 = vld [vmem:[%s270 + $0x708] sm:$0xff]
        %v5367 = vld [vmem:[%s270 + $0x710] sm:$0xff]
        %v5368 = vld [vmem:[%s270 + $0x718] sm:$0xff]
        %v5369 = vld [vmem:[%s270 + $0x720] sm:$0xff]
        %v5370 = vld [vmem:[%s270 + $0x728] sm:$0xff]
        %v5371 = vld [vmem:[%s270 + $0x730] sm:$0xff]
        %v5372 = vld [vmem:[%s270 + $0x738] sm:$0xff]
        %v5373 = vld [vmem:[%s270 + $0x740] sm:$0xff]
        %v5374 = vld [vmem:[%s270 + $0x748] sm:$0xff]
        %v5375 = vld [vmem:[%s270 + $0x750] sm:$0xff]
        %v5376 = vld [vmem:[%s270 + $0x758] sm:$0xff]
        %v5377 = vld [vmem:[%s270 + $0x760] sm:$0xff]
        %v5378 = vld [vmem:[%s270 + $0x768] sm:$0xff]
        %v5379 = vld [vmem:[%s270 + $0x770] sm:$0xff]
        %v5380 = vld [vmem:[%s270 + $0x778] sm:$0xff]
        %v5381 = vld [vmem:[%s270 + $0x780] sm:$0xff]
        %v5382 = vld [vmem:[%s270 + $0x788] sm:$0xff]
        %v5383 = vld [vmem:[%s270 + $0x790] sm:$0xff]
        %v5384 = vld [vmem:[%s270 + $0x798] sm:$0xff]
        %v5385 = vld [vmem:[%s270 + $0x7a0] sm:$0xff]
        %v5386 = vld [vmem:[%s270 + $0x7a8] sm:$0xff]
        %v5387 = vld [vmem:[%s270 + $0x7b0] sm:$0xff]
        %v5388 = vld [vmem:[%s270 + $0x7b8] sm:$0xff]
        %v5389 = vld [vmem:[%s270 + $0x7c0] sm:$0xff]
        %v5390 = vld [vmem:[%s270 + $0x7c8] sm:$0xff]
        %v5391 = vld [vmem:[%s270 + $0x7d0] sm:$0xff]
        %v5392 = vld [vmem:[%s270 + $0x7d8] sm:$0xff]
        %v5393 = vld [vmem:[%s270 + $0x7e0] sm:$0xff]
        %v5394 = vld [vmem:[%s270 + $0x7e8] sm:$0xff]
        %v5395 = vld [vmem:[%s270 + $0x7f0] sm:$0xff]
        %v5396 = vld [vmem:[%s270 + $0x7f8] sm:$0xff]
        %v5397 = vld [vmem:[%s270 + $0x800] sm:$0xff]
        %v5398 = vld [vmem:[%s270 + $0x808] sm:$0xff]
        %v5399 = vld [vmem:[%s270 + $0x810] sm:$0xff]
        %v5400 = vld [vmem:[%s270 + $0x818] sm:$0xff]
        %v5401 = vld [vmem:[%s270 + $0x820] sm:$0xff]
        %v5402 = vld [vmem:[%s270 + $0x828] sm:$0xff]
        %v5403 = vld [vmem:[%s270 + $0x830] sm:$0xff]
        %v5404 = vld [vmem:[%s270 + $0x838] sm:$0xff]
        %v5405 = vld [vmem:[%s270 + $0x840] sm:$0xff]
        %v5406 = vld [vmem:[%s270 + $0x848] sm:$0xff]
        %v5407 = vld [vmem:[%s270 + $0x850] sm:$0xff]
        %v5408 = vld [vmem:[%s270 + $0x858] sm:$0xff]
        %v5409 = vld [vmem:[%s270 + $0x860] sm:$0xff]
        %v5410 = vld [vmem:[%s270 + $0x868] sm:$0xff]
        %v5411 = vld [vmem:[%s270 + $0x870] sm:$0xff]
        %v5412 = vld [vmem:[%s270 + $0x878] sm:$0xff]
        %v5413 = vld [vmem:[%s270 + $0x880] sm:$0xff]
        %v5414 = vld [vmem:[%s270 + $0x888] sm:$0xff]
        %v5415 = vld [vmem:[%s270 + $0x890] sm:$0xff]
        %v5416 = vld [vmem:[%s270 + $0x898] sm:$0xff]
        %v5417 = vld [vmem:[%s270 + $0x8a0] sm:$0xff]
        %v5418 = vld [vmem:[%s270 + $0x8a8] sm:$0xff]
        %v5419 = vld [vmem:[%s270 + $0x8b0] sm:$0xff]
        %v5420 = vld [vmem:[%s270 + $0x8b8] sm:$0xff]
        %v5421 = vld [vmem:[%s270 + $0x8c0] sm:$0xff]
        %v5422 = vld [vmem:[%s270 + $0x8c8] sm:$0xff]
        %v5423 = vld [vmem:[%s270 + $0x8d0] sm:$0xff]
        %v5424 = vld [vmem:[%s270 + $0x8d8] sm:$0xff]
        %v5425 = vld [vmem:[%s270 + $0x8e0] sm:$0xff]
        %v5426 = vld [vmem:[%s270 + $0x8e8] sm:$0xff]
        %v5427 = vld [vmem:[%s270 + $0x8f0] sm:$0xff]
        %v5428 = vld [vmem:[%s270 + $0x8f8] sm:$0xff]
        %v5429 = vld [vmem:[%s270 + $0x900] sm:$0xff]
        %v5430 = vld [vmem:[%s270 + $0x908] sm:$0xff]
        %v5431 = vld [vmem:[%s270 + $0x910] sm:$0xff]
        %v5432 = vld [vmem:[%s270 + $0x918] sm:$0xff]
        %v5433 = vld [vmem:[%s270 + $0x920] sm:$0xff]
        %v5434 = vld [vmem:[%s270 + $0x928] sm:$0xff]
        %v5435 = vld [vmem:[%s270 + $0x930] sm:$0xff]
        %v5436 = vld [vmem:[%s270 + $0x938] sm:$0xff]
        %v5437 = vld [vmem:[%s270 + $0x940] sm:$0xff]
        %v5438 = vld [vmem:[%s270 + $0x948] sm:$0xff]
        %v5439 = vld [vmem:[%s270 + $0x950] sm:$0xff]
        %v5440 = vld [vmem:[%s270 + $0x958] sm:$0xff]
        %v5441 = vld [vmem:[%s270 + $0x960] sm:$0xff]
        %v5442 = vld [vmem:[%s270 + $0x968] sm:$0xff]
        %v5443 = vld [vmem:[%s270 + $0x970] sm:$0xff]
        %v5444 = vld [vmem:[%s270 + $0x978] sm:$0xff]
        %v5445 = vld [vmem:[%s270 + $0x980] sm:$0xff]
        %v5446 = vld [vmem:[%s270 + $0x988] sm:$0xff]
        %v5447 = vld [vmem:[%s270 + $0x990] sm:$0xff]
        %v5448 = vld [vmem:[%s270 + $0x998] sm:$0xff]
        %v5449 = vld [vmem:[%s270 + $0x9a0] sm:$0xff]
        %v5450 = vld [vmem:[%s270 + $0x9a8] sm:$0xff]
        %v5451 = vld [vmem:[%s270 + $0x9b0] sm:$0xff]
        %v5452 = vld [vmem:[%s270 + $0x9b8] sm:$0xff]
        %v5453 = vld [vmem:[%s270 + $0x9c0] sm:$0xff]
        %v5454 = vld [vmem:[%s270 + $0x9c8] sm:$0xff]
        %v5455 = vld [vmem:[%s270 + $0x9d0] sm:$0xff]
        %v5456 = vld [vmem:[%s270 + $0x9d8] sm:$0xff]
        %v5457 = vld [vmem:[%s270 + $0x9e0] sm:$0xff]
        %v5458 = vld [vmem:[%s270 + $0x9e8] sm:$0xff]
        %v5459 = vld [vmem:[%s270 + $0x9f0] sm:$0xff]
        %v5460 = vld [vmem:[%s270 + $0x9f8] sm:$0xff]
        %v5461 = vld [vmem:[%s270 + $0xa00] sm:$0xff]
        %v5462 = vld [vmem:[%s270 + $0xa08] sm:$0xff]
        %v5463 = vld [vmem:[%s270 + $0xa10] sm:$0xff]
        %v5464 = vld [vmem:[%s270 + $0xa18] sm:$0xff]
        %v5465 = vld [vmem:[%s270 + $0xa20] sm:$0xff]
        %v5466 = vld [vmem:[%s270 + $0xa28] sm:$0xff]
        %v5467 = vld [vmem:[%s270 + $0xa30] sm:$0xff]
        %v5468 = vld [vmem:[%s270 + $0xa38] sm:$0xff]
        %v5469 = vld [vmem:[%s270 + $0xa40] sm:$0xff]
        %v5470 = vld [vmem:[%s270 + $0xa48] sm:$0xff]
        %v5471 = vld [vmem:[%s270 + $0xa50] sm:$0xff]
        %v5472 = vld [vmem:[%s270 + $0xa58] sm:$0xff]
        %v5473 = vld [vmem:[%s270 + $0xa60] sm:$0xff]
        %v5474 = vld [vmem:[%s270 + $0xa68] sm:$0xff]
        %v5475 = vld [vmem:[%s270 + $0xa70] sm:$0xff]
        %v5476 = vld [vmem:[%s270 + $0xa78] sm:$0xff]
        %v5477 = vld [vmem:[%s270 + $0xa80] sm:$0xff]
        %v5478 = vld [vmem:[%s270 + $0xa88] sm:$0xff]
        %v5479 = vld [vmem:[%s270 + $0xa90] sm:$0xff]
        %v5480 = vld [vmem:[%s270 + $0xa98] sm:$0xff]
        %v5481 = vld [vmem:[%s270 + $0xaa0] sm:$0xff]
        %v5482 = vld [vmem:[%s270 + $0xaa8] sm:$0xff]
        %v5483 = vld [vmem:[%s270 + $0xab0] sm:$0xff]
        %v5484 = vld [vmem:[%s270 + $0xab8] sm:$0xff]
        %v5485 = vld [vmem:[%s270 + $0xac0] sm:$0xff]
        %v5486 = vld [vmem:[%s270 + $0xac8] sm:$0xff]
        %v5487 = vld [vmem:[%s270 + $0xad0] sm:$0xff]
        %v5488 = vld [vmem:[%s270 + $0xad8] sm:$0xff]
        %v5489 = vld [vmem:[%s270 + $0xae0] sm:$0xff]
        %v5490 = vld [vmem:[%s270 + $0xae8] sm:$0xff]
        %v5491 = vld [vmem:[%s270 + $0xaf0] sm:$0xff]
        %v5492 = vld [vmem:[%s270 + $0xaf8] sm:$0xff]
        %v5493 = vld [vmem:[%s270 + $0xb00] sm:$0xff]
        %v5494 = vld [vmem:[%s270 + $0xb08] sm:$0xff]
        %v5495 = vld [vmem:[%s270 + $0xb10] sm:$0xff]
        %v5496 = vld [vmem:[%s270 + $0xb18] sm:$0xff]
        %v5497 = vld [vmem:[%s270 + $0xb20] sm:$0xff]
        %v5498 = vld [vmem:[%s270 + $0xb28] sm:$0xff]
        %v5499 = vld [vmem:[%s270 + $0xb30] sm:$0xff]
        %v5500 = vld [vmem:[%s270 + $0xb38] sm:$0xff]
        %v5501 = vld [vmem:[%s270 + $0xb40] sm:$0xff]
        %v5502 = vld [vmem:[%s270 + $0xb48] sm:$0xff]
        %v5503 = vld [vmem:[%s270 + $0xb50] sm:$0xff]
        %v5504 = vld [vmem:[%s270 + $0xb58] sm:$0xff]
        %v5505 = vld [vmem:[%s270 + $0xb60] sm:$0xff]
        %v5506 = vld [vmem:[%s270 + $0xb68] sm:$0xff]
        %v5507 = vld [vmem:[%s270 + $0xb70] sm:$0xff]
        %v5508 = vld [vmem:[%s270 + $0xb78] sm:$0xff]
        %v5509 = vld [vmem:[%s270 + $0xb80] sm:$0xff]
        %v5510 = vld [vmem:[%s270 + $0xb88] sm:$0xff]
        %v5511 = vld [vmem:[%s270 + $0xb90] sm:$0xff]
        %v5512 = vld [vmem:[%s270 + $0xb98] sm:$0xff]
        %v5513 = vld [vmem:[%s270 + $0xba0] sm:$0xff]
        %v5514 = vld [vmem:[%s270 + $0xba8] sm:$0xff]
        %v5515 = vld [vmem:[%s270 + $0xbb0] sm:$0xff]
        %v5516 = vld [vmem:[%s270 + $0xbb8] sm:$0xff]
        %v5517 = vld [vmem:[%s270 + $0xbc0] sm:$0xff]
        %v5518 = vld [vmem:[%s270 + $0xbc8] sm:$0xff]
        %v5519 = vld [vmem:[%s270 + $0xbd0] sm:$0xff]
        %v5520 = vld [vmem:[%s270 + $0xbd8] sm:$0xff]
        %v5521 = vld [vmem:[%s270 + $0xbe0] sm:$0xff]
        %v5522 = vld [vmem:[%s270 + $0xbe8] sm:$0xff]
        %v5523 = vld [vmem:[%s270 + $0xbf0] sm:$0xff]
        %v5524 = vld [vmem:[%s270 + $0xbf8] sm:$0xff]
        %v5525 = vld [vmem:[%s270 + $0xc00] sm:$0xff]
        %v5526 = vld [vmem:[%s270 + $0xc08] sm:$0xff]
        %v5527 = vld [vmem:[%s270 + $0xc10] sm:$0xff]
        %v5528 = vld [vmem:[%s270 + $0xc18] sm:$0xff]
        %v5529 = vld [vmem:[%s270 + $0xc20] sm:$0xff]
        %v5530 = vld [vmem:[%s270 + $0xc28] sm:$0xff]
        %v5531 = vld [vmem:[%s270 + $0xc30] sm:$0xff]
        %v5532 = vld [vmem:[%s270 + $0xc38] sm:$0xff]
        %v5533 = vld [vmem:[%s270 + $0xc40] sm:$0xff]
        %v5534 = vld [vmem:[%s270 + $0xc48] sm:$0xff]
        %v5535 = vld [vmem:[%s270 + $0xc50] sm:$0xff]
        %v5536 = vld [vmem:[%s270 + $0xc58] sm:$0xff]
        %v5537 = vld [vmem:[%s270 + $0xc60] sm:$0xff]
        %v5538 = vld [vmem:[%s270 + $0xc68] sm:$0xff]
        %v5539 = vld [vmem:[%s270 + $0xc70] sm:$0xff]
        %v5540 = vld [vmem:[%s270 + $0xc78] sm:$0xff]
        %v5541 = vld [vmem:[%s270 + $0xc80] sm:$0xff]
        %v5542 = vld [vmem:[%s270 + $0xc88] sm:$0xff]
        %v5543 = vld [vmem:[%s270 + $0xc90] sm:$0xff]
        %v5544 = vld [vmem:[%s270 + $0xc98] sm:$0xff]
        %v5545 = vld [vmem:[%s270 + $0xca0] sm:$0xff]
        %v5546 = vld [vmem:[%s270 + $0xca8] sm:$0xff]
        %v5547 = vld [vmem:[%s270 + $0xcb0] sm:$0xff]
        %v5548 = vld [vmem:[%s270 + $0xcb8] sm:$0xff]
        %v5549 = vld [vmem:[%s270 + $0xcc0] sm:$0xff]
        %v5550 = vld [vmem:[%s270 + $0xcc8] sm:$0xff]
        %v5551 = vld [vmem:[%s270 + $0xcd0] sm:$0xff]
        %v5552 = vld [vmem:[%s270 + $0xcd8] sm:$0xff]
        %v5553 = vld [vmem:[%s270 + $0xce0] sm:$0xff]
        %v5554 = vld [vmem:[%s270 + $0xce8] sm:$0xff]
        %v5555 = vld [vmem:[%s270 + $0xcf0] sm:$0xff]
        %v5556 = vld [vmem:[%s270 + $0xcf8] sm:$0xff]
        %v5557 = vld [vmem:[%s270 + $0xd00] sm:$0xff]
        %v5558 = vld [vmem:[%s270 + $0xd08] sm:$0xff]
        %v5559 = vld [vmem:[%s270 + $0xd10] sm:$0xff]
        %v5560 = vld [vmem:[%s270 + $0xd18] sm:$0xff]
        %v5561 = vld [vmem:[%s270 + $0xd20] sm:$0xff]
        %v5562 = vld [vmem:[%s270 + $0xd28] sm:$0xff]
        %v5563 = vld [vmem:[%s270 + $0xd30] sm:$0xff]
        %v5564 = vld [vmem:[%s270 + $0xd38] sm:$0xff]
        %v5565 = vld [vmem:[%s270 + $0xd40] sm:$0xff]
        %v5566 = vld [vmem:[%s270 + $0xd48] sm:$0xff]
        %v5567 = vld [vmem:[%s270 + $0xd50] sm:$0xff]
        %v5568 = vld [vmem:[%s270 + $0xd58] sm:$0xff]
        %v5569 = vld [vmem:[%s270 + $0xd60] sm:$0xff]
        %v5570 = vld [vmem:[%s270 + $0xd68] sm:$0xff]
        %v5571 = vld [vmem:[%s270 + $0xd70] sm:$0xff]
        %v5572 = vld [vmem:[%s270 + $0xd78] sm:$0xff]
        %v5573 = vld [vmem:[%s270 + $0xd80] sm:$0xff]
        %v5574 = vld [vmem:[%s270 + $0xd88] sm:$0xff]
        %v5575 = vld [vmem:[%s270 + $0xd90] sm:$0xff]
        %v5576 = vld [vmem:[%s270 + $0xd98] sm:$0xff]
        %v5577 = vld [vmem:[%s270 + $0xda0] sm:$0xff]
        %v5578 = vld [vmem:[%s270 + $0xda8] sm:$0xff]
        %v5579 = vld [vmem:[%s270 + $0xdb0] sm:$0xff]
        %v5580 = vld [vmem:[%s270 + $0xdb8] sm:$0xff]
        %v5581 = vld [vmem:[%s270 + $0xdc0] sm:$0xff]
        %v5582 = vld [vmem:[%s270 + $0xdc8] sm:$0xff]
        %v5583 = vld [vmem:[%s270 + $0xdd0] sm:$0xff]
        %v5584 = vld [vmem:[%s270 + $0xdd8] sm:$0xff]
        %v5585 = vld [vmem:[%s270 + $0xde0] sm:$0xff]
        %v5586 = vld [vmem:[%s270 + $0xde8] sm:$0xff]
        %v5587 = vld [vmem:[%s270 + $0xdf0] sm:$0xff]
        %v5588 = vld [vmem:[%s270 + $0xdf8] sm:$0xff]
        %v5589 = vld [vmem:[%s270 + $0xe00] sm:$0xff]
        %v5590 = vld [vmem:[%s270 + $0xe08] sm:$0xff]
        %v5591 = vld [vmem:[%s270 + $0xe10] sm:$0xff]
        %v5592 = vld [vmem:[%s270 + $0xe18] sm:$0xff]
        %v5593 = vld [vmem:[%s270 + $0xe20] sm:$0xff]
        %v5594 = vld [vmem:[%s270 + $0xe28] sm:$0xff]
        %v5595 = vld [vmem:[%s270 + $0xe30] sm:$0xff]
        %v5596 = vld [vmem:[%s270 + $0xe38] sm:$0xff]
        %v5597 = vld [vmem:[%s270 + $0xe40] sm:$0xff]
        %v5598 = vld [vmem:[%s270 + $0xe48] sm:$0xff]
        %v5599 = vld [vmem:[%s270 + $0xe50] sm:$0xff]
        %v5600 = vld [vmem:[%s270 + $0xe58] sm:$0xff]
        %v5601 = vld [vmem:[%s270 + $0xe60] sm:$0xff]
        %v5602 = vld [vmem:[%s270 + $0xe68] sm:$0xff]
        %v5603 = vld [vmem:[%s270 + $0xe70] sm:$0xff]
        %v5604 = vld [vmem:[%s270 + $0xe78] sm:$0xff]
        %v5605 = vld [vmem:[%s270 + $0xe80] sm:$0xff]
        %v5606 = vld [vmem:[%s270 + $0xe88] sm:$0xff]
        %v5607 = vld [vmem:[%s270 + $0xe90] sm:$0xff]
        %v5608 = vld [vmem:[%s270 + $0xe98] sm:$0xff]
        %v5609 = vld [vmem:[%s270 + $0xea0] sm:$0xff]
        %v5610 = vld [vmem:[%s270 + $0xea8] sm:$0xff]
        %v5611 = vld [vmem:[%s270 + $0xeb0] sm:$0xff]
        %v5612 = vld [vmem:[%s270 + $0xeb8] sm:$0xff]
        %v5613 = vld [vmem:[%s270 + $0xec0] sm:$0xff]
        %v5614 = vld [vmem:[%s270 + $0xec8] sm:$0xff]
        %v5615 = vld [vmem:[%s270 + $0xed0] sm:$0xff]
        %v5616 = vld [vmem:[%s270 + $0xed8] sm:$0xff]
        %v5617 = vld [vmem:[%s270 + $0xee0] sm:$0xff]
        %v5618 = vld [vmem:[%s270 + $0xee8] sm:$0xff]
        %v5619 = vld [vmem:[%s270 + $0xef0] sm:$0xff]
        %v5620 = vld [vmem:[%s270 + $0xef8] sm:$0xff]
        %v5621 = vld [vmem:[%s270 + $0xf00] sm:$0xff]
        %v5622 = vld [vmem:[%s270 + $0xf08] sm:$0xff]
        %v5623 = vld [vmem:[%s270 + $0xf10] sm:$0xff]
        %v5624 = vld [vmem:[%s270 + $0xf18] sm:$0xff]
        %v5625 = vld [vmem:[%s270 + $0xf20] sm:$0xff]
        %v5626 = vld [vmem:[%s270 + $0xf28] sm:$0xff]
        %v5627 = vld [vmem:[%s270 + $0xf30] sm:$0xff]
        %v5628 = vld [vmem:[%s270 + $0xf38] sm:$0xff]
        %v5629 = vld [vmem:[%s270 + $0xf40] sm:$0xff]
        %v5630 = vld [vmem:[%s270 + $0xf48] sm:$0xff]
        %v5631 = vld [vmem:[%s270 + $0xf50] sm:$0xff]
        %v5632 = vld [vmem:[%s270 + $0xf58] sm:$0xff]
        %v5633 = vld [vmem:[%s270 + $0xf60] sm:$0xff]
        %v5634 = vld [vmem:[%s270 + $0xf68] sm:$0xff]
        %v5635 = vld [vmem:[%s270 + $0xf70] sm:$0xff]
        %v5636 = vld [vmem:[%s270 + $0xf78] sm:$0xff]
        %v5637 = vld [vmem:[%s270 + $0xf80] sm:$0xff]
        %v5638 = vld [vmem:[%s270 + $0xf88] sm:$0xff]
        %v5639 = vld [vmem:[%s270 + $0xf90] sm:$0xff]
        %v5640 = vld [vmem:[%s270 + $0xf98] sm:$0xff]
        %v5641 = vld [vmem:[%s270 + $0xfa0] sm:$0xff]
        %v5642 = vld [vmem:[%s270 + $0xfa8] sm:$0xff]
        %v5643 = vld [vmem:[%s270 + $0xfb0] sm:$0xff]
        %v5644 = vld [vmem:[%s270 + $0xfb8] sm:$0xff]
        %v5645 = vld [vmem:[%s270 + $0xfc0] sm:$0xff]
        %v5646 = vld [vmem:[%s270 + $0xfc8] sm:$0xff]
        %v5647 = vld [vmem:[%s270 + $0xfd0] sm:$0xff]
        %v5648 = vld [vmem:[%s270 + $0xfd8] sm:$0xff]
        %v5649 = vld [vmem:[%s270 + $0xfe0] sm:$0xff]
        %v5650 = vld [vmem:[%s270 + $0xfe8] sm:$0xff]
        %v5651 = vld [vmem:[%s270 + $0xff0] sm:$0xff]
        %v5652 = vld [vmem:[%s270 + $0xff8] sm:$0xff]
        %v5653 = vld [vmem:[%s270 + $0x1000] sm:$0xff]
        %v5654 = vld [vmem:[%s270 + $0x1008] sm:$0xff]
        %v5655 = vld [vmem:[%s270 + $0x1010] sm:$0xff]
        %v5656 = vld [vmem:[%s270 + $0x1018] sm:$0xff]
        %v5657 = vld [vmem:[%s270 + $0x1020] sm:$0xff]
        %v5658 = vld [vmem:[%s270 + $0x1028] sm:$0xff]
        %v5659 = vld [vmem:[%s270 + $0x1030] sm:$0xff]
        %v5660 = vld [vmem:[%s270 + $0x1038] sm:$0xff]
        %v5661 = vld [vmem:[%s270 + $0x1040] sm:$0xff]
        %v5662 = vld [vmem:[%s270 + $0x1048] sm:$0xff]
        %v5663 = vld [vmem:[%s270 + $0x1050] sm:$0xff]
        %v5664 = vld [vmem:[%s270 + $0x1058] sm:$0xff]
        %v5665 = vld [vmem:[%s270 + $0x1060] sm:$0xff]
        %v5666 = vld [vmem:[%s270 + $0x1068] sm:$0xff]
        %v5667 = vld [vmem:[%s270 + $0x1070] sm:$0xff]
        %v5668 = vld [vmem:[%s270 + $0x1078] sm:$0xff]
        %v5669 = vld [vmem:[%s270 + $0x1080] sm:$0xff]
        %v5670 = vld [vmem:[%s270 + $0x1088] sm:$0xff]
        %v5671 = vld [vmem:[%s270 + $0x1090] sm:$0xff]
        %v5672 = vld [vmem:[%s270 + $0x1098] sm:$0xff]
        %v5673 = vld [vmem:[%s270 + $0x10a0] sm:$0xff]
        %v5674 = vld [vmem:[%s270 + $0x10a8] sm:$0xff]
        %v5675 = vld [vmem:[%s270 + $0x10b0] sm:$0xff]
        %v5676 = vld [vmem:[%s270 + $0x10b8] sm:$0xff]
        %v5677 = vld [vmem:[%s270 + $0x10c0] sm:$0xff]
        %v5678 = vld [vmem:[%s270 + $0x10c8] sm:$0xff]
        %v5679 = vld [vmem:[%s270 + $0x10d0] sm:$0xff]
        %v5680 = vld [vmem:[%s270 + $0x10d8] sm:$0xff]
        %v5681 = vld [vmem:[%s270 + $0x10e0] sm:$0xff]
        %v5682 = vld [vmem:[%s270 + $0x10e8] sm:$0xff]
        %v5683 = vld [vmem:[%s270 + $0x10f0] sm:$0xff]
        %v5684 = vld [vmem:[%s270 + $0x10f8] sm:$0xff]
        %v5685 = vld [vmem:[%s270 + $0x1100] sm:$0xff]
        %v5686 = vld [vmem:[%s270 + $0x1108] sm:$0xff]
        %v5687 = vld [vmem:[%s270 + $0x1110] sm:$0xff]
        %v5688 = vld [vmem:[%s270 + $0x1118] sm:$0xff]
        %v5689 = vld [vmem:[%s270 + $0x1120] sm:$0xff]
        %v5690 = vld [vmem:[%s270 + $0x1128] sm:$0xff]
        %v5691 = vld [vmem:[%s270 + $0x1130] sm:$0xff]
        %v5692 = vld [vmem:[%s270 + $0x1138] sm:$0xff]
        %v5693 = vld [vmem:[%s270 + $0x1140] sm:$0xff]
        %v5694 = vld [vmem:[%s270 + $0x1148] sm:$0xff]
        %v5695 = vld [vmem:[%s270 + $0x1150] sm:$0xff]
        %v5696 = vld [vmem:[%s270 + $0x1158] sm:$0xff]
        %v5697 = vld [vmem:[%s270 + $0x1160] sm:$0xff]
        %v5698 = vld [vmem:[%s270 + $0x1168] sm:$0xff]
        %v5699 = vld [vmem:[%s270 + $0x1170] sm:$0xff]
        %v5700 = vld [vmem:[%s270 + $0x1178] sm:$0xff]
        %v5701 = vld [vmem:[%s270 + $0x1180] sm:$0xff]
        %v5702 = vld [vmem:[%s270 + $0x1188] sm:$0xff]
        %v5703 = vld [vmem:[%s270 + $0x1190] sm:$0xff]
        %v5704 = vld [vmem:[%s270 + $0x1198] sm:$0xff]
        %v5705 = vld [vmem:[%s270 + $0x11a0] sm:$0xff]
        %v5706 = vld [vmem:[%s270 + $0x11a8] sm:$0xff]
        %v5707 = vld [vmem:[%s270 + $0x11b0] sm:$0xff]
        %v5708 = vld [vmem:[%s270 + $0x11b8] sm:$0xff]
        %v5709 = vld [vmem:[%s270 + $0x11c0] sm:$0xff]
        %v5710 = vld [vmem:[%s270 + $0x11c8] sm:$0xff]
        %v5711 = vld [vmem:[%s270 + $0x11d0] sm:$0xff]
        %v5712 = vld [vmem:[%s270 + $0x11d8] sm:$0xff]
        %v5713 = vld [vmem:[%s270 + $0x11e0] sm:$0xff]
        %v5714 = vld [vmem:[%s270 + $0x11e8] sm:$0xff]
        %v5715 = vld [vmem:[%s270 + $0x11f0] sm:$0xff]
        %v5716 = vld [vmem:[%s270 + $0x11f8] sm:$0xff]
        %v5717 = vld [vmem:[%s270 + $0x1200] sm:$0xff]
        %v5718 = vld [vmem:[%s270 + $0x1208] sm:$0xff]
        %v5719 = vld [vmem:[%s270 + $0x1210] sm:$0xff]
        %v5720 = vld [vmem:[%s270 + $0x1218] sm:$0xff]
        %v5721 = vld [vmem:[%s270 + $0x1220] sm:$0xff]
        %v5722 = vld [vmem:[%s270 + $0x1228] sm:$0xff]
        %v5723 = vld [vmem:[%s270 + $0x1230] sm:$0xff]
        %v5724 = vld [vmem:[%s270 + $0x1238] sm:$0xff]
        %v5725 = vld [vmem:[%s270 + $0x1240] sm:$0xff]
        %v5726 = vld [vmem:[%s270 + $0x1248] sm:$0xff]
        %v5727 = vld [vmem:[%s270 + $0x1250] sm:$0xff]
        %v5728 = vld [vmem:[%s270 + $0x1258] sm:$0xff]
        %v5729 = vld [vmem:[%s270 + $0x1260] sm:$0xff]
        %v5730 = vld [vmem:[%s270 + $0x1268] sm:$0xff]
        %v5731 = vld [vmem:[%s270 + $0x1270] sm:$0xff]
        %v5732 = vld [vmem:[%s270 + $0x1278] sm:$0xff]
        %v5733 = vld [vmem:[%s270 + $0x1280] sm:$0xff]
        %v5734 = vld [vmem:[%s270 + $0x1288] sm:$0xff]
        %v5735 = vld [vmem:[%s270 + $0x1290] sm:$0xff]
        %v5736 = vld [vmem:[%s270 + $0x1298] sm:$0xff]
        %v5737 = vld [vmem:[%s270 + $0x12a0] sm:$0xff]
        %v5738 = vld [vmem:[%s270 + $0x12a8] sm:$0xff]
        %v5739 = vld [vmem:[%s270 + $0x12b0] sm:$0xff]
        %v5740 = vld [vmem:[%s270 + $0x12b8] sm:$0xff]
        %v5741 = vld [vmem:[%s270 + $0x12c0] sm:$0xff]
        %v5742 = vld [vmem:[%s270 + $0x12c8] sm:$0xff]
        %v5743 = vld [vmem:[%s270 + $0x12d0] sm:$0xff]
        %v5744 = vld [vmem:[%s270 + $0x12d8] sm:$0xff]
        %v5745 = vld [vmem:[%s270 + $0x12e0] sm:$0xff]
        %v5746 = vld [vmem:[%s270 + $0x12e8] sm:$0xff]
        %v5747 = vld [vmem:[%s270 + $0x12f0] sm:$0xff]
        %v5748 = vld [vmem:[%s270 + $0x12f8] sm:$0xff]
        %v5749 = vld [vmem:[%s270 + $0x1300] sm:$0xff]
        %v5750 = vld [vmem:[%s270 + $0x1308] sm:$0xff]
        %v5751 = vld [vmem:[%s270 + $0x1310] sm:$0xff]
        %v5752 = vld [vmem:[%s270 + $0x1318] sm:$0xff]
        %v5753 = vld [vmem:[%s270 + $0x1320] sm:$0xff]
        %v5754 = vld [vmem:[%s270 + $0x1328] sm:$0xff]
        %v5755 = vld [vmem:[%s270 + $0x1330] sm:$0xff]
        %v5756 = vld [vmem:[%s270 + $0x1338] sm:$0xff]
        %v5757 = vld [vmem:[%s270 + $0x1340] sm:$0xff]
        %v5758 = vld [vmem:[%s270 + $0x1348] sm:$0xff]
        %v5759 = vld [vmem:[%s270 + $0x1350] sm:$0xff]
        %v5760 = vld [vmem:[%s270 + $0x1358] sm:$0xff]
        %v5761 = vld [vmem:[%s270 + $0x1360] sm:$0xff]
        %v5762 = vld [vmem:[%s270 + $0x1368] sm:$0xff]
        %v5763 = vld [vmem:[%s270 + $0x1370] sm:$0xff]
        %v5764 = vld [vmem:[%s270 + $0x1378] sm:$0xff]
        %v5765 = vld [vmem:[%s270 + $0x1380] sm:$0xff]
        %v5766 = vld [vmem:[%s270 + $0x1388] sm:$0xff]
        %v5767 = vld [vmem:[%s270 + $0x1390] sm:$0xff]
        %v5768 = vld [vmem:[%s270 + $0x1398] sm:$0xff]
        %v5769 = vld [vmem:[%s270 + $0x13a0] sm:$0xff]
        %v5770 = vld [vmem:[%s270 + $0x13a8] sm:$0xff]
        %v5771 = vld [vmem:[%s270 + $0x13b0] sm:$0xff]
        %v5772 = vld [vmem:[%s270 + $0x13b8] sm:$0xff]
        %v5773 = vld [vmem:[%s270 + $0x13c0] sm:$0xff]
        %v5774 = vld [vmem:[%s270 + $0x13c8] sm:$0xff]
        %v5775 = vld [vmem:[%s270 + $0x13d0] sm:$0xff]
        %v5776 = vld [vmem:[%s270 + $0x13d8] sm:$0xff]
        %v5777 = vld [vmem:[%s270 + $0x13e0] sm:$0xff]
        %v5778 = vld [vmem:[%s270 + $0x13e8] sm:$0xff]
        %v5779 = vld [vmem:[%s270 + $0x13f0] sm:$0xff]
        %v5780 = vld [vmem:[%s270 + $0x13f8] sm:$0xff]
        %v6421 = vunpack.c.l.b16 %v5141
        %v6422 = vunpack.c.h.b16 %v5141
        %v6423 = vunpack.c.l.b16 %v5142
        %v6424 = vunpack.c.h.b16 %v5142
        %v6425 = vunpack.c.l.b16 %v5143
        %v6426 = vunpack.c.h.b16 %v5143
        %v6427 = vunpack.c.l.b16 %v5144
        %v6428 = vunpack.c.h.b16 %v5144
        %v6429 = vunpack.c.l.b16 %v5145
        %v6430 = vunpack.c.h.b16 %v5145
        %v6431 = vunpack.c.l.b16 %v5146
        %v6432 = vunpack.c.h.b16 %v5146
        %v6433 = vunpack.c.l.b16 %v5147
        %v6434 = vunpack.c.h.b16 %v5147
        %v6435 = vunpack.c.l.b16 %v5148
        %v6436 = vunpack.c.h.b16 %v5148
        %v6437 = vunpack.c.l.b16 %v5149
        %v6438 = vunpack.c.h.b16 %v5149
        %v6439 = vunpack.c.l.b16 %v5150
        %v6440 = vunpack.c.h.b16 %v5150
        %v6441 = vunpack.c.l.b16 %v5151
        %v6442 = vunpack.c.h.b16 %v5151
        %v6443 = vunpack.c.l.b16 %v5152
        %v6444 = vunpack.c.h.b16 %v5152
        %v6445 = vunpack.c.l.b16 %v5153
        %v6446 = vunpack.c.h.b16 %v5153
        %v6447 = vunpack.c.l.b16 %v5154
        %v6448 = vunpack.c.h.b16 %v5154
        %v6449 = vunpack.c.l.b16 %v5155
        %v6450 = vunpack.c.h.b16 %v5155
        %v6451 = vunpack.c.l.b16 %v5156
        %v6452 = vunpack.c.h.b16 %v5156
        %v6453 = vunpack.c.l.b16 %v5157
        %v6454 = vunpack.c.h.b16 %v5157
        %v6455 = vunpack.c.l.b16 %v5158
        %v6456 = vunpack.c.h.b16 %v5158
        %v6457 = vunpack.c.l.b16 %v5159
        %v6458 = vunpack.c.h.b16 %v5159
        %v6459 = vunpack.c.l.b16 %v5160
        %v6460 = vunpack.c.h.b16 %v5160
        %v6461 = vunpack.c.l.b16 %v5161
        %v6462 = vunpack.c.h.b16 %v5161
        %v6463 = vunpack.c.l.b16 %v5162
        %v6464 = vunpack.c.h.b16 %v5162
        %v6465 = vunpack.c.l.b16 %v5163
        %v6466 = vunpack.c.h.b16 %v5163
        %v6467 = vunpack.c.l.b16 %v5164
        %v6468 = vunpack.c.h.b16 %v5164
        %v6469 = vunpack.c.l.b16 %v5165
        %v6470 = vunpack.c.h.b16 %v5165
        %v6471 = vunpack.c.l.b16 %v5166
        %v6472 = vunpack.c.h.b16 %v5166
        %v6473 = vunpack.c.l.b16 %v5167
        %v6474 = vunpack.c.h.b16 %v5167
        %v6475 = vunpack.c.l.b16 %v5168
        %v6476 = vunpack.c.h.b16 %v5168
        %v6477 = vunpack.c.l.b16 %v5169
        %v6478 = vunpack.c.h.b16 %v5169
        %v6479 = vunpack.c.l.b16 %v5170
        %v6480 = vunpack.c.h.b16 %v5170
        %v6481 = vunpack.c.l.b16 %v5171
        %v6482 = vunpack.c.h.b16 %v5171
        %v6483 = vunpack.c.l.b16 %v5172
        %v6484 = vunpack.c.h.b16 %v5172
        %v6485 = vunpack.c.l.b16 %v5173
        %v6486 = vunpack.c.h.b16 %v5173
        %v6487 = vunpack.c.l.b16 %v5174
        %v6488 = vunpack.c.h.b16 %v5174
        %v6489 = vunpack.c.l.b16 %v5175
        %v6490 = vunpack.c.h.b16 %v5175
        %v6491 = vunpack.c.l.b16 %v5176
        %v6492 = vunpack.c.h.b16 %v5176
        %v6493 = vunpack.c.l.b16 %v5177
        %v6494 = vunpack.c.h.b16 %v5177
        %v6495 = vunpack.c.l.b16 %v5178
        %v6496 = vunpack.c.h.b16 %v5178
        %v6497 = vunpack.c.l.b16 %v5179
        %v6498 = vunpack.c.h.b16 %v5179
        %v6499 = vunpack.c.l.b16 %v5180
        %v6500 = vunpack.c.h.b16 %v5180
        %v6501 = vunpack.c.l.b16 %v5181
        %v6502 = vunpack.c.h.b16 %v5181
        %v6503 = vunpack.c.l.b16 %v5182
        %v6504 = vunpack.c.h.b16 %v5182
        %v6505 = vunpack.c.l.b16 %v5183
        %v6506 = vunpack.c.h.b16 %v5183
        %v6507 = vunpack.c.l.b16 %v5184
        %v6508 = vunpack.c.h.b16 %v5184
        %v6509 = vunpack.c.l.b16 %v5185
        %v6510 = vunpack.c.h.b16 %v5185
        %v6511 = vunpack.c.l.b16 %v5186
        %v6512 = vunpack.c.h.b16 %v5186
        %v6513 = vunpack.c.l.b16 %v5187
        %v6514 = vunpack.c.h.b16 %v5187
        %v6515 = vunpack.c.l.b16 %v5188
        %v6516 = vunpack.c.h.b16 %v5188
        %v6517 = vunpack.c.l.b16 %v5189
        %v6518 = vunpack.c.h.b16 %v5189
        %v6519 = vunpack.c.l.b16 %v5190
        %v6520 = vunpack.c.h.b16 %v5190
        %v6521 = vunpack.c.l.b16 %v5191
        %v6522 = vunpack.c.h.b16 %v5191
        %v6523 = vunpack.c.l.b16 %v5192
        %v6524 = vunpack.c.h.b16 %v5192
        %v6525 = vunpack.c.l.b16 %v5193
        %v6526 = vunpack.c.h.b16 %v5193
        %v6527 = vunpack.c.l.b16 %v5194
        %v6528 = vunpack.c.h.b16 %v5194
        %v6529 = vunpack.c.l.b16 %v5195
        %v6530 = vunpack.c.h.b16 %v5195
        %v6531 = vunpack.c.l.b16 %v5196
        %v6532 = vunpack.c.h.b16 %v5196
        %v6533 = vunpack.c.l.b16 %v5197
        %v6534 = vunpack.c.h.b16 %v5197
        %v6535 = vunpack.c.l.b16 %v5198
        %v6536 = vunpack.c.h.b16 %v5198
        %v6537 = vunpack.c.l.b16 %v5199
        %v6538 = vunpack.c.h.b16 %v5199
        %v6539 = vunpack.c.l.b16 %v5200
        %v6540 = vunpack.c.h.b16 %v5200
        %v6541 = vunpack.c.l.b16 %v5201
        %v6542 = vunpack.c.h.b16 %v5201
        %v6543 = vunpack.c.l.b16 %v5202
        %v6544 = vunpack.c.h.b16 %v5202
        %v6545 = vunpack.c.l.b16 %v5203
        %v6546 = vunpack.c.h.b16 %v5203
        %v6547 = vunpack.c.l.b16 %v5204
        %v6548 = vunpack.c.h.b16 %v5204
        %v6549 = vunpack.c.l.b16 %v5205
        %v6550 = vunpack.c.h.b16 %v5205
        %v6551 = vunpack.c.l.b16 %v5206
        %v6552 = vunpack.c.h.b16 %v5206
        %v6553 = vunpack.c.l.b16 %v5207
        %v6554 = vunpack.c.h.b16 %v5207
        %v6555 = vunpack.c.l.b16 %v5208
        %v6556 = vunpack.c.h.b16 %v5208
        %v6557 = vunpack.c.l.b16 %v5209
        %v6558 = vunpack.c.h.b16 %v5209
        %v6559 = vunpack.c.l.b16 %v5210
        %v6560 = vunpack.c.h.b16 %v5210
        %v6561 = vunpack.c.l.b16 %v5211
        %v6562 = vunpack.c.h.b16 %v5211
        %v6563 = vunpack.c.l.b16 %v5212
        %v6564 = vunpack.c.h.b16 %v5212
        %v6565 = vunpack.c.l.b16 %v5213
        %v6566 = vunpack.c.h.b16 %v5213
        %v6567 = vunpack.c.l.b16 %v5214
        %v6568 = vunpack.c.h.b16 %v5214
        %v6569 = vunpack.c.l.b16 %v5215
        %v6570 = vunpack.c.h.b16 %v5215
        %v6571 = vunpack.c.l.b16 %v5216
        %v6572 = vunpack.c.h.b16 %v5216
        %v6573 = vunpack.c.l.b16 %v5217
        %v6574 = vunpack.c.h.b16 %v5217
        %v6575 = vunpack.c.l.b16 %v5218
        %v6576 = vunpack.c.h.b16 %v5218
        %v6577 = vunpack.c.l.b16 %v5219
        %v6578 = vunpack.c.h.b16 %v5219
        %v6579 = vunpack.c.l.b16 %v5220
        %v6580 = vunpack.c.h.b16 %v5220
        %v6581 = vunpack.c.l.b16 %v5221
        %v6582 = vunpack.c.h.b16 %v5221
        %v6583 = vunpack.c.l.b16 %v5222
        %v6584 = vunpack.c.h.b16 %v5222
        %v6585 = vunpack.c.l.b16 %v5223
        %v6586 = vunpack.c.h.b16 %v5223
        %v6587 = vunpack.c.l.b16 %v5224
        %v6588 = vunpack.c.h.b16 %v5224
        %v6589 = vunpack.c.l.b16 %v5225
        %v6590 = vunpack.c.h.b16 %v5225
        %v6591 = vunpack.c.l.b16 %v5226
        %v6592 = vunpack.c.h.b16 %v5226
        %v6593 = vunpack.c.l.b16 %v5227
        %v6594 = vunpack.c.h.b16 %v5227
        %v6595 = vunpack.c.l.b16 %v5228
        %v6596 = vunpack.c.h.b16 %v5228
        %v6597 = vunpack.c.l.b16 %v5229
        %v6598 = vunpack.c.h.b16 %v5229
        %v6599 = vunpack.c.l.b16 %v5230
        %v6600 = vunpack.c.h.b16 %v5230
        %v6601 = vunpack.c.l.b16 %v5231
        %v6602 = vunpack.c.h.b16 %v5231
        %v6603 = vunpack.c.l.b16 %v5232
        %v6604 = vunpack.c.h.b16 %v5232
        %v6605 = vunpack.c.l.b16 %v5233
        %v6606 = vunpack.c.h.b16 %v5233
        %v6607 = vunpack.c.l.b16 %v5234
        %v6608 = vunpack.c.h.b16 %v5234
        %v6609 = vunpack.c.l.b16 %v5235
        %v6610 = vunpack.c.h.b16 %v5235
        %v6611 = vunpack.c.l.b16 %v5236
        %v6612 = vunpack.c.h.b16 %v5236
        %v6613 = vunpack.c.l.b16 %v5237
        %v6614 = vunpack.c.h.b16 %v5237
        %v6615 = vunpack.c.l.b16 %v5238
        %v6616 = vunpack.c.h.b16 %v5238
        %v6617 = vunpack.c.l.b16 %v5239
        %v6618 = vunpack.c.h.b16 %v5239
        %v6619 = vunpack.c.l.b16 %v5240
        %v6620 = vunpack.c.h.b16 %v5240
        %v6621 = vunpack.c.l.b16 %v5241
        %v6622 = vunpack.c.h.b16 %v5241
        %v6623 = vunpack.c.l.b16 %v5242
        %v6624 = vunpack.c.h.b16 %v5242
        %v6625 = vunpack.c.l.b16 %v5243
        %v6626 = vunpack.c.h.b16 %v5243
        %v6627 = vunpack.c.l.b16 %v5244
        %v6628 = vunpack.c.h.b16 %v5244
        %v6629 = vunpack.c.l.b16 %v5245
        %v6630 = vunpack.c.h.b16 %v5245
        %v6631 = vunpack.c.l.b16 %v5246
        %v6632 = vunpack.c.h.b16 %v5246
        %v6633 = vunpack.c.l.b16 %v5247
        %v6634 = vunpack.c.h.b16 %v5247
        %v6635 = vunpack.c.l.b16 %v5248
        %v6636 = vunpack.c.h.b16 %v5248
        %v6637 = vunpack.c.l.b16 %v5249
        %v6638 = vunpack.c.h.b16 %v5249
        %v6639 = vunpack.c.l.b16 %v5250
        %v6640 = vunpack.c.h.b16 %v5250
        %v6641 = vunpack.c.l.b16 %v5251
        %v6642 = vunpack.c.h.b16 %v5251
        %v6643 = vunpack.c.l.b16 %v5252
        %v6644 = vunpack.c.h.b16 %v5252
        %v6645 = vunpack.c.l.b16 %v5253
        %v6646 = vunpack.c.h.b16 %v5253
        %v6647 = vunpack.c.l.b16 %v5254
        %v6648 = vunpack.c.h.b16 %v5254
        %v6649 = vunpack.c.l.b16 %v5255
        %v6650 = vunpack.c.h.b16 %v5255
        %v6651 = vunpack.c.l.b16 %v5256
        %v6652 = vunpack.c.h.b16 %v5256
        %v6653 = vunpack.c.l.b16 %v5257
        %v6654 = vunpack.c.h.b16 %v5257
        %v6655 = vunpack.c.l.b16 %v5258
        %v6656 = vunpack.c.h.b16 %v5258
        %v6657 = vunpack.c.l.b16 %v5259
        %v6658 = vunpack.c.h.b16 %v5259
        %v6659 = vunpack.c.l.b16 %v5260
        %v6660 = vunpack.c.h.b16 %v5260
        %v6661 = vunpack.c.l.b16 %v5261
        %v6662 = vunpack.c.h.b16 %v5261
        %v6663 = vunpack.c.l.b16 %v5262
        %v6664 = vunpack.c.h.b16 %v5262
        %v6665 = vunpack.c.l.b16 %v5263
        %v6666 = vunpack.c.h.b16 %v5263
        %v6667 = vunpack.c.l.b16 %v5264
        %v6668 = vunpack.c.h.b16 %v5264
        %v6669 = vunpack.c.l.b16 %v5265
        %v6670 = vunpack.c.h.b16 %v5265
        %v6671 = vunpack.c.l.b16 %v5266
        %v6672 = vunpack.c.h.b16 %v5266
        %v6673 = vunpack.c.l.b16 %v5267
        %v6674 = vunpack.c.h.b16 %v5267
        %v6675 = vunpack.c.l.b16 %v5268
        %v6676 = vunpack.c.h.b16 %v5268
        %v6677 = vunpack.c.l.b16 %v5269
        %v6678 = vunpack.c.h.b16 %v5269
        %v6679 = vunpack.c.l.b16 %v5270
        %v6680 = vunpack.c.h.b16 %v5270
        %v6681 = vunpack.c.l.b16 %v5271
        %v6682 = vunpack.c.h.b16 %v5271
        %v6683 = vunpack.c.l.b16 %v5272
        %v6684 = vunpack.c.h.b16 %v5272
        %v6685 = vunpack.c.l.b16 %v5273
        %v6686 = vunpack.c.h.b16 %v5273
        %v6687 = vunpack.c.l.b16 %v5274
        %v6688 = vunpack.c.h.b16 %v5274
        %v6689 = vunpack.c.l.b16 %v5275
        %v6690 = vunpack.c.h.b16 %v5275
        %v6691 = vunpack.c.l.b16 %v5276
        %v6692 = vunpack.c.h.b16 %v5276
        %v6693 = vunpack.c.l.b16 %v5277
        %v6694 = vunpack.c.h.b16 %v5277
        %v6695 = vunpack.c.l.b16 %v5278
        %v6696 = vunpack.c.h.b16 %v5278
        %v6697 = vunpack.c.l.b16 %v5279
        %v6698 = vunpack.c.h.b16 %v5279
        %v6699 = vunpack.c.l.b16 %v5280
        %v6700 = vunpack.c.h.b16 %v5280
        %v6701 = vunpack.c.l.b16 %v5281
        %v6702 = vunpack.c.h.b16 %v5281
        %v6703 = vunpack.c.l.b16 %v5282
        %v6704 = vunpack.c.h.b16 %v5282
        %v6705 = vunpack.c.l.b16 %v5283
        %v6706 = vunpack.c.h.b16 %v5283
        %v6707 = vunpack.c.l.b16 %v5284
        %v6708 = vunpack.c.h.b16 %v5284
        %v6709 = vunpack.c.l.b16 %v5285
        %v6710 = vunpack.c.h.b16 %v5285
        %v6711 = vunpack.c.l.b16 %v5286
        %v6712 = vunpack.c.h.b16 %v5286
        %v6713 = vunpack.c.l.b16 %v5287
        %v6714 = vunpack.c.h.b16 %v5287
        %v6715 = vunpack.c.l.b16 %v5288
        %v6716 = vunpack.c.h.b16 %v5288
        %v6717 = vunpack.c.l.b16 %v5289
        %v6718 = vunpack.c.h.b16 %v5289
        %v6719 = vunpack.c.l.b16 %v5290
        %v6720 = vunpack.c.h.b16 %v5290
        %v6721 = vunpack.c.l.b16 %v5291
        %v6722 = vunpack.c.h.b16 %v5291
        %v6723 = vunpack.c.l.b16 %v5292
        %v6724 = vunpack.c.h.b16 %v5292
        %v6725 = vunpack.c.l.b16 %v5293
        %v6726 = vunpack.c.h.b16 %v5293
        %v6727 = vunpack.c.l.b16 %v5294
        %v6728 = vunpack.c.h.b16 %v5294
        %v6729 = vunpack.c.l.b16 %v5295
        %v6730 = vunpack.c.h.b16 %v5295
        %v6731 = vunpack.c.l.b16 %v5296
        %v6732 = vunpack.c.h.b16 %v5296
        %v6733 = vunpack.c.l.b16 %v5297
        %v6734 = vunpack.c.h.b16 %v5297
        %v6735 = vunpack.c.l.b16 %v5298
        %v6736 = vunpack.c.h.b16 %v5298
        %v6737 = vunpack.c.l.b16 %v5299
        %v6738 = vunpack.c.h.b16 %v5299
        %v6739 = vunpack.c.l.b16 %v5300
        %v6740 = vunpack.c.h.b16 %v5300
        %v6741 = vunpack.c.l.b16 %v5301
        %v6742 = vunpack.c.h.b16 %v5301
        %v6743 = vunpack.c.l.b16 %v5302
        %v6744 = vunpack.c.h.b16 %v5302
        %v6745 = vunpack.c.l.b16 %v5303
        %v6746 = vunpack.c.h.b16 %v5303
        %v6747 = vunpack.c.l.b16 %v5304
        %v6748 = vunpack.c.h.b16 %v5304
        %v6749 = vunpack.c.l.b16 %v5305
        %v6750 = vunpack.c.h.b16 %v5305
        %v6751 = vunpack.c.l.b16 %v5306
        %v6752 = vunpack.c.h.b16 %v5306
        %v6753 = vunpack.c.l.b16 %v5307
        %v6754 = vunpack.c.h.b16 %v5307
        %v6755 = vunpack.c.l.b16 %v5308
        %v6756 = vunpack.c.h.b16 %v5308
        %v6757 = vunpack.c.l.b16 %v5309
        %v6758 = vunpack.c.h.b16 %v5309
        %v6759 = vunpack.c.l.b16 %v5310
        %v6760 = vunpack.c.h.b16 %v5310
        %v6761 = vunpack.c.l.b16 %v5311
        %v6762 = vunpack.c.h.b16 %v5311
        %v6763 = vunpack.c.l.b16 %v5312
        %v6764 = vunpack.c.h.b16 %v5312
        %v6765 = vunpack.c.l.b16 %v5313
        %v6766 = vunpack.c.h.b16 %v5313
        %v6767 = vunpack.c.l.b16 %v5314
        %v6768 = vunpack.c.h.b16 %v5314
        %v6769 = vunpack.c.l.b16 %v5315
        %v6770 = vunpack.c.h.b16 %v5315
        %v6771 = vunpack.c.l.b16 %v5316
        %v6772 = vunpack.c.h.b16 %v5316
        %v6773 = vunpack.c.l.b16 %v5317
        %v6774 = vunpack.c.h.b16 %v5317
        %v6775 = vunpack.c.l.b16 %v5318
        %v6776 = vunpack.c.h.b16 %v5318
        %v6777 = vunpack.c.l.b16 %v5319
        %v6778 = vunpack.c.h.b16 %v5319
        %v6779 = vunpack.c.l.b16 %v5320
        %v6780 = vunpack.c.h.b16 %v5320
        %v6781 = vunpack.c.l.b16 %v5321
        %v6782 = vunpack.c.h.b16 %v5321
        %v6783 = vunpack.c.l.b16 %v5322
        %v6784 = vunpack.c.h.b16 %v5322
        %v6785 = vunpack.c.l.b16 %v5323
        %v6786 = vunpack.c.h.b16 %v5323
        %v6787 = vunpack.c.l.b16 %v5324
        %v6788 = vunpack.c.h.b16 %v5324
        %v6789 = vunpack.c.l.b16 %v5325
        %v6790 = vunpack.c.h.b16 %v5325
        %v6791 = vunpack.c.l.b16 %v5326
        %v6792 = vunpack.c.h.b16 %v5326
        %v6793 = vunpack.c.l.b16 %v5327
        %v6794 = vunpack.c.h.b16 %v5327
        %v6795 = vunpack.c.l.b16 %v5328
        %v6796 = vunpack.c.h.b16 %v5328
        %v6797 = vunpack.c.l.b16 %v5329
        %v6798 = vunpack.c.h.b16 %v5329
        %v6799 = vunpack.c.l.b16 %v5330
        %v6800 = vunpack.c.h.b16 %v5330
        %v6801 = vunpack.c.l.b16 %v5331
        %v6802 = vunpack.c.h.b16 %v5331
        %v6803 = vunpack.c.l.b16 %v5332
        %v6804 = vunpack.c.h.b16 %v5332
        %v6805 = vunpack.c.l.b16 %v5333
        %v6806 = vunpack.c.h.b16 %v5333
        %v6807 = vunpack.c.l.b16 %v5334
        %v6808 = vunpack.c.h.b16 %v5334
        %v6809 = vunpack.c.l.b16 %v5335
        %v6810 = vunpack.c.h.b16 %v5335
        %v6811 = vunpack.c.l.b16 %v5336
        %v6812 = vunpack.c.h.b16 %v5336
        %v6813 = vunpack.c.l.b16 %v5337
        %v6814 = vunpack.c.h.b16 %v5337
        %v6815 = vunpack.c.l.b16 %v5338
        %v6816 = vunpack.c.h.b16 %v5338
        %v6817 = vunpack.c.l.b16 %v5339
        %v6818 = vunpack.c.h.b16 %v5339
        %v6819 = vunpack.c.l.b16 %v5340
        %v6820 = vunpack.c.h.b16 %v5340
        %v6821 = vunpack.c.l.b16 %v5341
        %v6822 = vunpack.c.h.b16 %v5341
        %v6823 = vunpack.c.l.b16 %v5342
        %v6824 = vunpack.c.h.b16 %v5342
        %v6825 = vunpack.c.l.b16 %v5343
        %v6826 = vunpack.c.h.b16 %v5343
        %v6827 = vunpack.c.l.b16 %v5344
        %v6828 = vunpack.c.h.b16 %v5344
        %v6829 = vunpack.c.l.b16 %v5345
        %v6830 = vunpack.c.h.b16 %v5345
        %v6831 = vunpack.c.l.b16 %v5346
        %v6832 = vunpack.c.h.b16 %v5346
        %v6833 = vunpack.c.l.b16 %v5347
        %v6834 = vunpack.c.h.b16 %v5347
        %v6835 = vunpack.c.l.b16 %v5348
        %v6836 = vunpack.c.h.b16 %v5348
        %v6837 = vunpack.c.l.b16 %v5349
        %v6838 = vunpack.c.h.b16 %v5349
        %v6839 = vunpack.c.l.b16 %v5350
        %v6840 = vunpack.c.h.b16 %v5350
        %v6841 = vunpack.c.l.b16 %v5351
        %v6842 = vunpack.c.h.b16 %v5351
        %v6843 = vunpack.c.l.b16 %v5352
        %v6844 = vunpack.c.h.b16 %v5352
        %v6845 = vunpack.c.l.b16 %v5353
        %v6846 = vunpack.c.h.b16 %v5353
        %v6847 = vunpack.c.l.b16 %v5354
        %v6848 = vunpack.c.h.b16 %v5354
        %v6849 = vunpack.c.l.b16 %v5355
        %v6850 = vunpack.c.h.b16 %v5355
        %v6851 = vunpack.c.l.b16 %v5356
        %v6852 = vunpack.c.h.b16 %v5356
        %v6853 = vunpack.c.l.b16 %v5357
        %v6854 = vunpack.c.h.b16 %v5357
        %v6855 = vunpack.c.l.b16 %v5358
        %v6856 = vunpack.c.h.b16 %v5358
        %v6857 = vunpack.c.l.b16 %v5359
        %v6858 = vunpack.c.h.b16 %v5359
        %v6859 = vunpack.c.l.b16 %v5360
        %v6860 = vunpack.c.h.b16 %v5360
        %v6861 = vunpack.c.l.b16 %v5361
        %v6862 = vunpack.c.h.b16 %v5361
        %v6863 = vunpack.c.l.b16 %v5362
        %v6864 = vunpack.c.h.b16 %v5362
        %v6865 = vunpack.c.l.b16 %v5363
        %v6866 = vunpack.c.h.b16 %v5363
        %v6867 = vunpack.c.l.b16 %v5364
        %v6868 = vunpack.c.h.b16 %v5364
        %v6869 = vunpack.c.l.b16 %v5365
        %v6870 = vunpack.c.h.b16 %v5365
        %v6871 = vunpack.c.l.b16 %v5366
        %v6872 = vunpack.c.h.b16 %v5366
        %v6873 = vunpack.c.l.b16 %v5367
        %v6874 = vunpack.c.h.b16 %v5367
        %v6875 = vunpack.c.l.b16 %v5368
        %v6876 = vunpack.c.h.b16 %v5368
        %v6877 = vunpack.c.l.b16 %v5369
        %v6878 = vunpack.c.h.b16 %v5369
        %v6879 = vunpack.c.l.b16 %v5370
        %v6880 = vunpack.c.h.b16 %v5370
        %v6881 = vunpack.c.l.b16 %v5371
        %v6882 = vunpack.c.h.b16 %v5371
        %v6883 = vunpack.c.l.b16 %v5372
        %v6884 = vunpack.c.h.b16 %v5372
        %v6885 = vunpack.c.l.b16 %v5373
        %v6886 = vunpack.c.h.b16 %v5373
        %v6887 = vunpack.c.l.b16 %v5374
        %v6888 = vunpack.c.h.b16 %v5374
        %v6889 = vunpack.c.l.b16 %v5375
        %v6890 = vunpack.c.h.b16 %v5375
        %v6891 = vunpack.c.l.b16 %v5376
        %v6892 = vunpack.c.h.b16 %v5376
        %v6893 = vunpack.c.l.b16 %v5377
        %v6894 = vunpack.c.h.b16 %v5377
        %v6895 = vunpack.c.l.b16 %v5378
        %v6896 = vunpack.c.h.b16 %v5378
        %v6897 = vunpack.c.l.b16 %v5379
        %v6898 = vunpack.c.h.b16 %v5379
        %v6899 = vunpack.c.l.b16 %v5380
        %v6900 = vunpack.c.h.b16 %v5380
        %v6901 = vunpack.c.l.b16 %v5381
        %v6902 = vunpack.c.h.b16 %v5381
        %v6903 = vunpack.c.l.b16 %v5382
        %v6904 = vunpack.c.h.b16 %v5382
        %v6905 = vunpack.c.l.b16 %v5383
        %v6906 = vunpack.c.h.b16 %v5383
        %v6907 = vunpack.c.l.b16 %v5384
        %v6908 = vunpack.c.h.b16 %v5384
        %v6909 = vunpack.c.l.b16 %v5385
        %v6910 = vunpack.c.h.b16 %v5385
        %v6911 = vunpack.c.l.b16 %v5386
        %v6912 = vunpack.c.h.b16 %v5386
        %v6913 = vunpack.c.l.b16 %v5387
        %v6914 = vunpack.c.h.b16 %v5387
        %v6915 = vunpack.c.l.b16 %v5388
        %v6916 = vunpack.c.h.b16 %v5388
        %v6917 = vunpack.c.l.b16 %v5389
        %v6918 = vunpack.c.h.b16 %v5389
        %v6919 = vunpack.c.l.b16 %v5390
        %v6920 = vunpack.c.h.b16 %v5390
        %v6921 = vunpack.c.l.b16 %v5391
        %v6922 = vunpack.c.h.b16 %v5391
        %v6923 = vunpack.c.l.b16 %v5392
        %v6924 = vunpack.c.h.b16 %v5392
        %v6925 = vunpack.c.l.b16 %v5393
        %v6926 = vunpack.c.h.b16 %v5393
        %v6927 = vunpack.c.l.b16 %v5394
        %v6928 = vunpack.c.h.b16 %v5394
        %v6929 = vunpack.c.l.b16 %v5395
        %v6930 = vunpack.c.h.b16 %v5395
        %v6931 = vunpack.c.l.b16 %v5396
        %v6932 = vunpack.c.h.b16 %v5396
        %v6933 = vunpack.c.l.b16 %v5397
        %v6934 = vunpack.c.h.b16 %v5397
        %v6935 = vunpack.c.l.b16 %v5398
        %v6936 = vunpack.c.h.b16 %v5398
        %v6937 = vunpack.c.l.b16 %v5399
        %v6938 = vunpack.c.h.b16 %v5399
        %v6939 = vunpack.c.l.b16 %v5400
        %v6940 = vunpack.c.h.b16 %v5400
        %v6941 = vunpack.c.l.b16 %v5401
        %v6942 = vunpack.c.h.b16 %v5401
        %v6943 = vunpack.c.l.b16 %v5402
        %v6944 = vunpack.c.h.b16 %v5402
        %v6945 = vunpack.c.l.b16 %v5403
        %v6946 = vunpack.c.h.b16 %v5403
        %v6947 = vunpack.c.l.b16 %v5404
        %v6948 = vunpack.c.h.b16 %v5404
        %v6949 = vunpack.c.l.b16 %v5405
        %v6950 = vunpack.c.h.b16 %v5405
        %v6951 = vunpack.c.l.b16 %v5406
        %v6952 = vunpack.c.h.b16 %v5406
        %v6953 = vunpack.c.l.b16 %v5407
        %v6954 = vunpack.c.h.b16 %v5407
        %v6955 = vunpack.c.l.b16 %v5408
        %v6956 = vunpack.c.h.b16 %v5408
        %v6957 = vunpack.c.l.b16 %v5409
        %v6958 = vunpack.c.h.b16 %v5409
        %v6959 = vunpack.c.l.b16 %v5410
        %v6960 = vunpack.c.h.b16 %v5410
        %v6961 = vunpack.c.l.b16 %v5411
        %v6962 = vunpack.c.h.b16 %v5411
        %v6963 = vunpack.c.l.b16 %v5412
        %v6964 = vunpack.c.h.b16 %v5412
        %v6965 = vunpack.c.l.b16 %v5413
        %v6966 = vunpack.c.h.b16 %v5413
        %v6967 = vunpack.c.l.b16 %v5414
        %v6968 = vunpack.c.h.b16 %v5414
        %v6969 = vunpack.c.l.b16 %v5415
        %v6970 = vunpack.c.h.b16 %v5415
        %v6971 = vunpack.c.l.b16 %v5416
        %v6972 = vunpack.c.h.b16 %v5416
        %v6973 = vunpack.c.l.b16 %v5417
        %v6974 = vunpack.c.h.b16 %v5417
        %v6975 = vunpack.c.l.b16 %v5418
        %v6976 = vunpack.c.h.b16 %v5418
        %v6977 = vunpack.c.l.b16 %v5419
        %v6978 = vunpack.c.h.b16 %v5419
        %v6979 = vunpack.c.l.b16 %v5420
        %v6980 = vunpack.c.h.b16 %v5420
        %v6981 = vunpack.c.l.b16 %v5421
        %v6982 = vunpack.c.h.b16 %v5421
        %v6983 = vunpack.c.l.b16 %v5422
        %v6984 = vunpack.c.h.b16 %v5422
        %v6985 = vunpack.c.l.b16 %v5423
        %v6986 = vunpack.c.h.b16 %v5423
        %v6987 = vunpack.c.l.b16 %v5424
        %v6988 = vunpack.c.h.b16 %v5424
        %v6989 = vunpack.c.l.b16 %v5425
        %v6990 = vunpack.c.h.b16 %v5425
        %v6991 = vunpack.c.l.b16 %v5426
        %v6992 = vunpack.c.h.b16 %v5426
        %v6993 = vunpack.c.l.b16 %v5427
        %v6994 = vunpack.c.h.b16 %v5427
        %v6995 = vunpack.c.l.b16 %v5428
        %v6996 = vunpack.c.h.b16 %v5428
        %v6997 = vunpack.c.l.b16 %v5429
        %v6998 = vunpack.c.h.b16 %v5429
        %v6999 = vunpack.c.l.b16 %v5430
        %v7000 = vunpack.c.h.b16 %v5430
        %v7001 = vunpack.c.l.b16 %v5431
        %v7002 = vunpack.c.h.b16 %v5431
        %v7003 = vunpack.c.l.b16 %v5432
        %v7004 = vunpack.c.h.b16 %v5432
        %v7005 = vunpack.c.l.b16 %v5433
        %v7006 = vunpack.c.h.b16 %v5433
        %v7007 = vunpack.c.l.b16 %v5434
        %v7008 = vunpack.c.h.b16 %v5434
        %v7009 = vunpack.c.l.b16 %v5435
        %v7010 = vunpack.c.h.b16 %v5435
        %v7011 = vunpack.c.l.b16 %v5436
        %v7012 = vunpack.c.h.b16 %v5436
        %v7013 = vunpack.c.l.b16 %v5437
        %v7014 = vunpack.c.h.b16 %v5437
        %v7015 = vunpack.c.l.b16 %v5438
        %v7016 = vunpack.c.h.b16 %v5438
        %v7017 = vunpack.c.l.b16 %v5439
        %v7018 = vunpack.c.h.b16 %v5439
        %v7019 = vunpack.c.l.b16 %v5440
        %v7020 = vunpack.c.h.b16 %v5440
        %v7021 = vunpack.c.l.b16 %v5441
        %v7022 = vunpack.c.h.b16 %v5441
        %v7023 = vunpack.c.l.b16 %v5442
        %v7024 = vunpack.c.h.b16 %v5442
        %v7025 = vunpack.c.l.b16 %v5443
        %v7026 = vunpack.c.h.b16 %v5443
        %v7027 = vunpack.c.l.b16 %v5444
        %v7028 = vunpack.c.h.b16 %v5444
        %v7029 = vunpack.c.l.b16 %v5445
        %v7030 = vunpack.c.h.b16 %v5445
        %v7031 = vunpack.c.l.b16 %v5446
        %v7032 = vunpack.c.h.b16 %v5446
        %v7033 = vunpack.c.l.b16 %v5447
        %v7034 = vunpack.c.h.b16 %v5447
        %v7035 = vunpack.c.l.b16 %v5448
        %v7036 = vunpack.c.h.b16 %v5448
        %v7037 = vunpack.c.l.b16 %v5449
        %v7038 = vunpack.c.h.b16 %v5449
        %v7039 = vunpack.c.l.b16 %v5450
        %v7040 = vunpack.c.h.b16 %v5450
        %v7041 = vunpack.c.l.b16 %v5451
        %v7042 = vunpack.c.h.b16 %v5451
        %v7043 = vunpack.c.l.b16 %v5452
        %v7044 = vunpack.c.h.b16 %v5452
        %v7045 = vunpack.c.l.b16 %v5453
        %v7046 = vunpack.c.h.b16 %v5453
        %v7047 = vunpack.c.l.b16 %v5454
        %v7048 = vunpack.c.h.b16 %v5454
        %v7049 = vunpack.c.l.b16 %v5455
        %v7050 = vunpack.c.h.b16 %v5455
        %v7051 = vunpack.c.l.b16 %v5456
        %v7052 = vunpack.c.h.b16 %v5456
        %v7053 = vunpack.c.l.b16 %v5457
        %v7054 = vunpack.c.h.b16 %v5457
        %v7055 = vunpack.c.l.b16 %v5458
        %v7056 = vunpack.c.h.b16 %v5458
        %v7057 = vunpack.c.l.b16 %v5459
        %v7058 = vunpack.c.h.b16 %v5459
        %v7059 = vunpack.c.l.b16 %v5460
        %v7060 = vunpack.c.h.b16 %v5460
        %v7061 = vunpack.c.l.b16 %v5461
        %v7062 = vunpack.c.h.b16 %v5461
        %v7063 = vunpack.c.l.b16 %v5462
        %v7064 = vunpack.c.h.b16 %v5462
        %v7065 = vunpack.c.l.b16 %v5463
        %v7066 = vunpack.c.h.b16 %v5463
        %v7067 = vunpack.c.l.b16 %v5464
        %v7068 = vunpack.c.h.b16 %v5464
        %v7069 = vunpack.c.l.b16 %v5465
        %v7070 = vunpack.c.h.b16 %v5465
        %v7071 = vunpack.c.l.b16 %v5466
        %v7072 = vunpack.c.h.b16 %v5466
        %v7073 = vunpack.c.l.b16 %v5467
        %v7074 = vunpack.c.h.b16 %v5467
        %v7075 = vunpack.c.l.b16 %v5468
        %v7076 = vunpack.c.h.b16 %v5468
        %v7077 = vunpack.c.l.b16 %v5469
        %v7078 = vunpack.c.h.b16 %v5469
        %v7079 = vunpack.c.l.b16 %v5470
        %v7080 = vunpack.c.h.b16 %v5470
        %v7081 = vunpack.c.l.b16 %v5471
        %v7082 = vunpack.c.h.b16 %v5471
        %v7083 = vunpack.c.l.b16 %v5472
        %v7084 = vunpack.c.h.b16 %v5472
        %v7085 = vunpack.c.l.b16 %v5473
        %v7086 = vunpack.c.h.b16 %v5473
        %v7087 = vunpack.c.l.b16 %v5474
        %v7088 = vunpack.c.h.b16 %v5474
        %v7089 = vunpack.c.l.b16 %v5475
        %v7090 = vunpack.c.h.b16 %v5475
        %v7091 = vunpack.c.l.b16 %v5476
        %v7092 = vunpack.c.h.b16 %v5476
        %v7093 = vunpack.c.l.b16 %v5477
        %v7094 = vunpack.c.h.b16 %v5477
        %v7095 = vunpack.c.l.b16 %v5478
        %v7096 = vunpack.c.h.b16 %v5478
        %v7097 = vunpack.c.l.b16 %v5479
        %v7098 = vunpack.c.h.b16 %v5479
        %v7099 = vunpack.c.l.b16 %v5480
        %v7100 = vunpack.c.h.b16 %v5480
        %v7101 = vunpack.c.l.b16 %v5481
        %v7102 = vunpack.c.h.b16 %v5481
        %v7103 = vunpack.c.l.b16 %v5482
        %v7104 = vunpack.c.h.b16 %v5482
        %v7105 = vunpack.c.l.b16 %v5483
        %v7106 = vunpack.c.h.b16 %v5483
        %v7107 = vunpack.c.l.b16 %v5484
        %v7108 = vunpack.c.h.b16 %v5484
        %v7109 = vunpack.c.l.b16 %v5485
        %v7110 = vunpack.c.h.b16 %v5485
        %v7111 = vunpack.c.l.b16 %v5486
        %v7112 = vunpack.c.h.b16 %v5486
        %v7113 = vunpack.c.l.b16 %v5487
        %v7114 = vunpack.c.h.b16 %v5487
        %v7115 = vunpack.c.l.b16 %v5488
        %v7116 = vunpack.c.h.b16 %v5488
        %v7117 = vunpack.c.l.b16 %v5489
        %v7118 = vunpack.c.h.b16 %v5489
        %v7119 = vunpack.c.l.b16 %v5490
        %v7120 = vunpack.c.h.b16 %v5490
        %v7121 = vunpack.c.l.b16 %v5491
        %v7122 = vunpack.c.h.b16 %v5491
        %v7123 = vunpack.c.l.b16 %v5492
        %v7124 = vunpack.c.h.b16 %v5492
        %v7125 = vunpack.c.l.b16 %v5493
        %v7126 = vunpack.c.h.b16 %v5493
        %v7127 = vunpack.c.l.b16 %v5494
        %v7128 = vunpack.c.h.b16 %v5494
        %v7129 = vunpack.c.l.b16 %v5495
        %v7130 = vunpack.c.h.b16 %v5495
        %v7131 = vunpack.c.l.b16 %v5496
        %v7132 = vunpack.c.h.b16 %v5496
        %v7133 = vunpack.c.l.b16 %v5497
        %v7134 = vunpack.c.h.b16 %v5497
        %v7135 = vunpack.c.l.b16 %v5498
        %v7136 = vunpack.c.h.b16 %v5498
        %v7137 = vunpack.c.l.b16 %v5499
        %v7138 = vunpack.c.h.b16 %v5499
        %v7139 = vunpack.c.l.b16 %v5500
        %v7140 = vunpack.c.h.b16 %v5500
        %v7141 = vunpack.c.l.b16 %v5501
        %v7142 = vunpack.c.h.b16 %v5501
        %v7143 = vunpack.c.l.b16 %v5502
        %v7144 = vunpack.c.h.b16 %v5502
        %v7145 = vunpack.c.l.b16 %v5503
        %v7146 = vunpack.c.h.b16 %v5503
        %v7147 = vunpack.c.l.b16 %v5504
        %v7148 = vunpack.c.h.b16 %v5504
        %v7149 = vunpack.c.l.b16 %v5505
        %v7150 = vunpack.c.h.b16 %v5505
        %v7151 = vunpack.c.l.b16 %v5506
        %v7152 = vunpack.c.h.b16 %v5506
        %v7153 = vunpack.c.l.b16 %v5507
        %v7154 = vunpack.c.h.b16 %v5507
        %v7155 = vunpack.c.l.b16 %v5508
        %v7156 = vunpack.c.h.b16 %v5508
        %v7157 = vunpack.c.l.b16 %v5509
        %v7158 = vunpack.c.h.b16 %v5509
        %v7159 = vunpack.c.l.b16 %v5510
        %v7160 = vunpack.c.h.b16 %v5510
        %v7161 = vunpack.c.l.b16 %v5511
        %v7162 = vunpack.c.h.b16 %v5511
        %v7163 = vunpack.c.l.b16 %v5512
        %v7164 = vunpack.c.h.b16 %v5512
        %v7165 = vunpack.c.l.b16 %v5513
        %v7166 = vunpack.c.h.b16 %v5513
        %v7167 = vunpack.c.l.b16 %v5514
        %v7168 = vunpack.c.h.b16 %v5514
        %v7169 = vunpack.c.l.b16 %v5515
        %v7170 = vunpack.c.h.b16 %v5515
        %v7171 = vunpack.c.l.b16 %v5516
        %v7172 = vunpack.c.h.b16 %v5516
        %v7173 = vunpack.c.l.b16 %v5517
        %v7174 = vunpack.c.h.b16 %v5517
        %v7175 = vunpack.c.l.b16 %v5518
        %v7176 = vunpack.c.h.b16 %v5518
        %v7177 = vunpack.c.l.b16 %v5519
        %v7178 = vunpack.c.h.b16 %v5519
        %v7179 = vunpack.c.l.b16 %v5520
        %v7180 = vunpack.c.h.b16 %v5520
        %v7181 = vunpack.c.l.b16 %v5521
        %v7182 = vunpack.c.h.b16 %v5521
        %v7183 = vunpack.c.l.b16 %v5522
        %v7184 = vunpack.c.h.b16 %v5522
        %v7185 = vunpack.c.l.b16 %v5523
        %v7186 = vunpack.c.h.b16 %v5523
        %v7187 = vunpack.c.l.b16 %v5524
        %v7188 = vunpack.c.h.b16 %v5524
        %v7189 = vunpack.c.l.b16 %v5525
        %v7190 = vunpack.c.h.b16 %v5525
        %v7191 = vunpack.c.l.b16 %v5526
        %v7192 = vunpack.c.h.b16 %v5526
        %v7193 = vunpack.c.l.b16 %v5527
        %v7194 = vunpack.c.h.b16 %v5527
        %v7195 = vunpack.c.l.b16 %v5528
        %v7196 = vunpack.c.h.b16 %v5528
        %v7197 = vunpack.c.l.b16 %v5529
        %v7198 = vunpack.c.h.b16 %v5529
        %v7199 = vunpack.c.l.b16 %v5530
        %v7200 = vunpack.c.h.b16 %v5530
        %v7201 = vunpack.c.l.b16 %v5531
        %v7202 = vunpack.c.h.b16 %v5531
        %v7203 = vunpack.c.l.b16 %v5532
        %v7204 = vunpack.c.h.b16 %v5532
        %v7205 = vunpack.c.l.b16 %v5533
        %v7206 = vunpack.c.h.b16 %v5533
        %v7207 = vunpack.c.l.b16 %v5534
        %v7208 = vunpack.c.h.b16 %v5534
        %v7209 = vunpack.c.l.b16 %v5535
        %v7210 = vunpack.c.h.b16 %v5535
        %v7211 = vunpack.c.l.b16 %v5536
        %v7212 = vunpack.c.h.b16 %v5536
        %v7213 = vunpack.c.l.b16 %v5537
        %v7214 = vunpack.c.h.b16 %v5537
        %v7215 = vunpack.c.l.b16 %v5538
        %v7216 = vunpack.c.h.b16 %v5538
        %v7217 = vunpack.c.l.b16 %v5539
        %v7218 = vunpack.c.h.b16 %v5539
        %v7219 = vunpack.c.l.b16 %v5540
        %v7220 = vunpack.c.h.b16 %v5540
        %v7221 = vunpack.c.l.b16 %v5541
        %v7222 = vunpack.c.h.b16 %v5541
        %v7223 = vunpack.c.l.b16 %v5542
        %v7224 = vunpack.c.h.b16 %v5542
        %v7225 = vunpack.c.l.b16 %v5543
        %v7226 = vunpack.c.h.b16 %v5543
        %v7227 = vunpack.c.l.b16 %v5544
        %v7228 = vunpack.c.h.b16 %v5544
        %v7229 = vunpack.c.l.b16 %v5545
        %v7230 = vunpack.c.h.b16 %v5545
        %v7231 = vunpack.c.l.b16 %v5546
        %v7232 = vunpack.c.h.b16 %v5546
        %v7233 = vunpack.c.l.b16 %v5547
        %v7234 = vunpack.c.h.b16 %v5547
        %v7235 = vunpack.c.l.b16 %v5548
        %v7236 = vunpack.c.h.b16 %v5548
        %v7237 = vunpack.c.l.b16 %v5549
        %v7238 = vunpack.c.h.b16 %v5549
        %v7239 = vunpack.c.l.b16 %v5550
        %v7240 = vunpack.c.h.b16 %v5550
        %v7241 = vunpack.c.l.b16 %v5551
        %v7242 = vunpack.c.h.b16 %v5551
        %v7243 = vunpack.c.l.b16 %v5552
        %v7244 = vunpack.c.h.b16 %v5552
        %v7245 = vunpack.c.l.b16 %v5553
        %v7246 = vunpack.c.h.b16 %v5553
        %v7247 = vunpack.c.l.b16 %v5554
        %v7248 = vunpack.c.h.b16 %v5554
        %v7249 = vunpack.c.l.b16 %v5555
        %v7250 = vunpack.c.h.b16 %v5555
        %v7251 = vunpack.c.l.b16 %v5556
        %v7252 = vunpack.c.h.b16 %v5556
        %v7253 = vunpack.c.l.b16 %v5557
        %v7254 = vunpack.c.h.b16 %v5557
        %v7255 = vunpack.c.l.b16 %v5558
        %v7256 = vunpack.c.h.b16 %v5558
        %v7257 = vunpack.c.l.b16 %v5559
        %v7258 = vunpack.c.h.b16 %v5559
        %v7259 = vunpack.c.l.b16 %v5560
        %v7260 = vunpack.c.h.b16 %v5560
        %v7261 = vunpack.c.l.b16 %v5561
        %v7262 = vunpack.c.h.b16 %v5561
        %v7263 = vunpack.c.l.b16 %v5562
        %v7264 = vunpack.c.h.b16 %v5562
        %v7265 = vunpack.c.l.b16 %v5563
        %v7266 = vunpack.c.h.b16 %v5563
        %v7267 = vunpack.c.l.b16 %v5564
        %v7268 = vunpack.c.h.b16 %v5564
        %v7269 = vunpack.c.l.b16 %v5565
        %v7270 = vunpack.c.h.b16 %v5565
        %v7271 = vunpack.c.l.b16 %v5566
        %v7272 = vunpack.c.h.b16 %v5566
        %v7273 = vunpack.c.l.b16 %v5567
        %v7274 = vunpack.c.h.b16 %v5567
        %v7275 = vunpack.c.l.b16 %v5568
        %v7276 = vunpack.c.h.b16 %v5568
        %v7277 = vunpack.c.l.b16 %v5569
        %v7278 = vunpack.c.h.b16 %v5569
        %v7279 = vunpack.c.l.b16 %v5570
        %v7280 = vunpack.c.h.b16 %v5570
        %v7281 = vunpack.c.l.b16 %v5571
        %v7282 = vunpack.c.h.b16 %v5571
        %v7283 = vunpack.c.l.b16 %v5572
        %v7284 = vunpack.c.h.b16 %v5572
        %v7285 = vunpack.c.l.b16 %v5573
        %v7286 = vunpack.c.h.b16 %v5573
        %v7287 = vunpack.c.l.b16 %v5574
        %v7288 = vunpack.c.h.b16 %v5574
        %v7289 = vunpack.c.l.b16 %v5575
        %v7290 = vunpack.c.h.b16 %v5575
        %v7291 = vunpack.c.l.b16 %v5576
        %v7292 = vunpack.c.h.b16 %v5576
        %v7293 = vunpack.c.l.b16 %v5577
        %v7294 = vunpack.c.h.b16 %v5577
        %v7295 = vunpack.c.l.b16 %v5578
        %v7296 = vunpack.c.h.b16 %v5578
        %v7297 = vunpack.c.l.b16 %v5579
        %v7298 = vunpack.c.h.b16 %v5579
        %v7299 = vunpack.c.l.b16 %v5580
        %v7300 = vunpack.c.h.b16 %v5580
        %v7301 = vunpack.c.l.b16 %v5581
        %v7302 = vunpack.c.h.b16 %v5581
        %v7303 = vunpack.c.l.b16 %v5582
        %v7304 = vunpack.c.h.b16 %v5582
        %v7305 = vunpack.c.l.b16 %v5583
        %v7306 = vunpack.c.h.b16 %v5583
        %v7307 = vunpack.c.l.b16 %v5584
        %v7308 = vunpack.c.h.b16 %v5584
        %v7309 = vunpack.c.l.b16 %v5585
        %v7310 = vunpack.c.h.b16 %v5585
        %v7311 = vunpack.c.l.b16 %v5586
        %v7312 = vunpack.c.h.b16 %v5586
        %v7313 = vunpack.c.l.b16 %v5587
        %v7314 = vunpack.c.h.b16 %v5587
        %v7315 = vunpack.c.l.b16 %v5588
        %v7316 = vunpack.c.h.b16 %v5588
        %v7317 = vunpack.c.l.b16 %v5589
        %v7318 = vunpack.c.h.b16 %v5589
        %v7319 = vunpack.c.l.b16 %v5590
        %v7320 = vunpack.c.h.b16 %v5590
        %v7321 = vunpack.c.l.b16 %v5591
        %v7322 = vunpack.c.h.b16 %v5591
        %v7323 = vunpack.c.l.b16 %v5592
        %v7324 = vunpack.c.h.b16 %v5592
        %v7325 = vunpack.c.l.b16 %v5593
        %v7326 = vunpack.c.h.b16 %v5593
        %v7327 = vunpack.c.l.b16 %v5594
        %v7328 = vunpack.c.h.b16 %v5594
        %v7329 = vunpack.c.l.b16 %v5595
        %v7330 = vunpack.c.h.b16 %v5595
        %v7331 = vunpack.c.l.b16 %v5596
        %v7332 = vunpack.c.h.b16 %v5596
        %v7333 = vunpack.c.l.b16 %v5597
        %v7334 = vunpack.c.h.b16 %v5597
        %v7335 = vunpack.c.l.b16 %v5598
        %v7336 = vunpack.c.h.b16 %v5598
        %v7337 = vunpack.c.l.b16 %v5599
        %v7338 = vunpack.c.h.b16 %v5599
        %v7339 = vunpack.c.l.b16 %v5600
        %v7340 = vunpack.c.h.b16 %v5600
        %v7341 = vunpack.c.l.b16 %v5601
        %v7342 = vunpack.c.h.b16 %v5601
        %v7343 = vunpack.c.l.b16 %v5602
        %v7344 = vunpack.c.h.b16 %v5602
        %v7345 = vunpack.c.l.b16 %v5603
        %v7346 = vunpack.c.h.b16 %v5603
        %v7347 = vunpack.c.l.b16 %v5604
        %v7348 = vunpack.c.h.b16 %v5604
        %v7349 = vunpack.c.l.b16 %v5605
        %v7350 = vunpack.c.h.b16 %v5605
        %v7351 = vunpack.c.l.b16 %v5606
        %v7352 = vunpack.c.h.b16 %v5606
        %v7353 = vunpack.c.l.b16 %v5607
        %v7354 = vunpack.c.h.b16 %v5607
        %v7355 = vunpack.c.l.b16 %v5608
        %v7356 = vunpack.c.h.b16 %v5608
        %v7357 = vunpack.c.l.b16 %v5609
        %v7358 = vunpack.c.h.b16 %v5609
        %v7359 = vunpack.c.l.b16 %v5610
        %v7360 = vunpack.c.h.b16 %v5610
        %v7361 = vunpack.c.l.b16 %v5611
        %v7362 = vunpack.c.h.b16 %v5611
        %v7363 = vunpack.c.l.b16 %v5612
        %v7364 = vunpack.c.h.b16 %v5612
        %v7365 = vunpack.c.l.b16 %v5613
        %v7366 = vunpack.c.h.b16 %v5613
        %v7367 = vunpack.c.l.b16 %v5614
        %v7368 = vunpack.c.h.b16 %v5614
        %v7369 = vunpack.c.l.b16 %v5615
        %v7370 = vunpack.c.h.b16 %v5615
        %v7371 = vunpack.c.l.b16 %v5616
        %v7372 = vunpack.c.h.b16 %v5616
        %v7373 = vunpack.c.l.b16 %v5617
        %v7374 = vunpack.c.h.b16 %v5617
        %v7375 = vunpack.c.l.b16 %v5618
        %v7376 = vunpack.c.h.b16 %v5618
        %v7377 = vunpack.c.l.b16 %v5619
        %v7378 = vunpack.c.h.b16 %v5619
        %v7379 = vunpack.c.l.b16 %v5620
        %v7380 = vunpack.c.h.b16 %v5620
        %v7381 = vunpack.c.l.b16 %v5621
        %v7382 = vunpack.c.h.b16 %v5621
        %v7383 = vunpack.c.l.b16 %v5622
        %v7384 = vunpack.c.h.b16 %v5622
        %v7385 = vunpack.c.l.b16 %v5623
        %v7386 = vunpack.c.h.b16 %v5623
        %v7387 = vunpack.c.l.b16 %v5624
        %v7388 = vunpack.c.h.b16 %v5624
        %v7389 = vunpack.c.l.b16 %v5625
        %v7390 = vunpack.c.h.b16 %v5625
        %v7391 = vunpack.c.l.b16 %v5626
        %v7392 = vunpack.c.h.b16 %v5626
        %v7393 = vunpack.c.l.b16 %v5627
        %v7394 = vunpack.c.h.b16 %v5627
        %v7395 = vunpack.c.l.b16 %v5628
        %v7396 = vunpack.c.h.b16 %v5628
        %v7397 = vunpack.c.l.b16 %v5629
        %v7398 = vunpack.c.h.b16 %v5629
        %v7399 = vunpack.c.l.b16 %v5630
        %v7400 = vunpack.c.h.b16 %v5630
        %v7401 = vunpack.c.l.b16 %v5631
        %v7402 = vunpack.c.h.b16 %v5631
        %v7403 = vunpack.c.l.b16 %v5632
        %v7404 = vunpack.c.h.b16 %v5632
        %v7405 = vunpack.c.l.b16 %v5633
        %v7406 = vunpack.c.h.b16 %v5633
        %v7407 = vunpack.c.l.b16 %v5634
        %v7408 = vunpack.c.h.b16 %v5634
        %v7409 = vunpack.c.l.b16 %v5635
        %v7410 = vunpack.c.h.b16 %v5635
        %v7411 = vunpack.c.l.b16 %v5636
        %v7412 = vunpack.c.h.b16 %v5636
        %v7413 = vunpack.c.l.b16 %v5637
        %v7414 = vunpack.c.h.b16 %v5637
        %v7415 = vunpack.c.l.b16 %v5638
        %v7416 = vunpack.c.h.b16 %v5638
        %v7417 = vunpack.c.l.b16 %v5639
        %v7418 = vunpack.c.h.b16 %v5639
        %v7419 = vunpack.c.l.b16 %v5640
        %v7420 = vunpack.c.h.b16 %v5640
        %v7421 = vunpack.c.l.b16 %v5641
        %v7422 = vunpack.c.h.b16 %v5641
        %v7423 = vunpack.c.l.b16 %v5642
        %v7424 = vunpack.c.h.b16 %v5642
        %v7425 = vunpack.c.l.b16 %v5643
        %v7426 = vunpack.c.h.b16 %v5643
        %v7427 = vunpack.c.l.b16 %v5644
        %v7428 = vunpack.c.h.b16 %v5644
        %v7429 = vunpack.c.l.b16 %v5645
        %v7430 = vunpack.c.h.b16 %v5645
        %v7431 = vunpack.c.l.b16 %v5646
        %v7432 = vunpack.c.h.b16 %v5646
        %v7433 = vunpack.c.l.b16 %v5647
        %v7434 = vunpack.c.h.b16 %v5647
        %v7435 = vunpack.c.l.b16 %v5648
        %v7436 = vunpack.c.h.b16 %v5648
        %v7437 = vunpack.c.l.b16 %v5649
        %v7438 = vunpack.c.h.b16 %v5649
        %v7439 = vunpack.c.l.b16 %v5650
        %v7440 = vunpack.c.h.b16 %v5650
        %v7441 = vunpack.c.l.b16 %v5651
        %v7442 = vunpack.c.h.b16 %v5651
        %v7443 = vunpack.c.l.b16 %v5652
        %v7444 = vunpack.c.h.b16 %v5652
        %v7445 = vunpack.c.l.b16 %v5653
        %v7446 = vunpack.c.h.b16 %v5653
        %v7447 = vunpack.c.l.b16 %v5654
        %v7448 = vunpack.c.h.b16 %v5654
        %v7449 = vunpack.c.l.b16 %v5655
        %v7450 = vunpack.c.h.b16 %v5655
        %v7451 = vunpack.c.l.b16 %v5656
        %v7452 = vunpack.c.h.b16 %v5656
        %v7453 = vunpack.c.l.b16 %v5657
        %v7454 = vunpack.c.h.b16 %v5657
        %v7455 = vunpack.c.l.b16 %v5658
        %v7456 = vunpack.c.h.b16 %v5658
        %v7457 = vunpack.c.l.b16 %v5659
        %v7458 = vunpack.c.h.b16 %v5659
        %v7459 = vunpack.c.l.b16 %v5660
        %v7460 = vunpack.c.h.b16 %v5660
        %v7461 = vunpack.c.l.b16 %v5661
        %v7462 = vunpack.c.h.b16 %v5661
        %v7463 = vunpack.c.l.b16 %v5662
        %v7464 = vunpack.c.h.b16 %v5662
        %v7465 = vunpack.c.l.b16 %v5663
        %v7466 = vunpack.c.h.b16 %v5663
        %v7467 = vunpack.c.l.b16 %v5664
        %v7468 = vunpack.c.h.b16 %v5664
        %v7469 = vunpack.c.l.b16 %v5665
        %v7470 = vunpack.c.h.b16 %v5665
        %v7471 = vunpack.c.l.b16 %v5666
        %v7472 = vunpack.c.h.b16 %v5666
        %v7473 = vunpack.c.l.b16 %v5667
        %v7474 = vunpack.c.h.b16 %v5667
        %v7475 = vunpack.c.l.b16 %v5668
        %v7476 = vunpack.c.h.b16 %v5668
        %v7477 = vunpack.c.l.b16 %v5669
        %v7478 = vunpack.c.h.b16 %v5669
        %v7479 = vunpack.c.l.b16 %v5670
        %v7480 = vunpack.c.h.b16 %v5670
        %v7481 = vunpack.c.l.b16 %v5671
        %v7482 = vunpack.c.h.b16 %v5671
        %v7483 = vunpack.c.l.b16 %v5672
        %v7484 = vunpack.c.h.b16 %v5672
        %v7485 = vunpack.c.l.b16 %v5673
        %v7486 = vunpack.c.h.b16 %v5673
        %v7487 = vunpack.c.l.b16 %v5674
        %v7488 = vunpack.c.h.b16 %v5674
        %v7489 = vunpack.c.l.b16 %v5675
        %v7490 = vunpack.c.h.b16 %v5675
        %v7491 = vunpack.c.l.b16 %v5676
        %v7492 = vunpack.c.h.b16 %v5676
        %v7493 = vunpack.c.l.b16 %v5677
        %v7494 = vunpack.c.h.b16 %v5677
        %v7495 = vunpack.c.l.b16 %v5678
        %v7496 = vunpack.c.h.b16 %v5678
        %v7497 = vunpack.c.l.b16 %v5679
        %v7498 = vunpack.c.h.b16 %v5679
        %v7499 = vunpack.c.l.b16 %v5680
        %v7500 = vunpack.c.h.b16 %v5680
        %v7501 = vunpack.c.l.b16 %v5681
        %v7502 = vunpack.c.h.b16 %v5681
        %v7503 = vunpack.c.l.b16 %v5682
        %v7504 = vunpack.c.h.b16 %v5682
        %v7505 = vunpack.c.l.b16 %v5683
        %v7506 = vunpack.c.h.b16 %v5683
        %v7507 = vunpack.c.l.b16 %v5684
        %v7508 = vunpack.c.h.b16 %v5684
        %v7509 = vunpack.c.l.b16 %v5685
        %v7510 = vunpack.c.h.b16 %v5685
        %v7511 = vunpack.c.l.b16 %v5686
        %v7512 = vunpack.c.h.b16 %v5686
        %v7513 = vunpack.c.l.b16 %v5687
        %v7514 = vunpack.c.h.b16 %v5687
        %v7515 = vunpack.c.l.b16 %v5688
        %v7516 = vunpack.c.h.b16 %v5688
        %v7517 = vunpack.c.l.b16 %v5689
        %v7518 = vunpack.c.h.b16 %v5689
        %v7519 = vunpack.c.l.b16 %v5690
        %v7520 = vunpack.c.h.b16 %v5690
        %v7521 = vunpack.c.l.b16 %v5691
        %v7522 = vunpack.c.h.b16 %v5691
        %v7523 = vunpack.c.l.b16 %v5692
        %v7524 = vunpack.c.h.b16 %v5692
        %v7525 = vunpack.c.l.b16 %v5693
        %v7526 = vunpack.c.h.b16 %v5693
        %v7527 = vunpack.c.l.b16 %v5694
        %v7528 = vunpack.c.h.b16 %v5694
        %v7529 = vunpack.c.l.b16 %v5695
        %v7530 = vunpack.c.h.b16 %v5695
        %v7531 = vunpack.c.l.b16 %v5696
        %v7532 = vunpack.c.h.b16 %v5696
        %v7533 = vunpack.c.l.b16 %v5697
        %v7534 = vunpack.c.h.b16 %v5697
        %v7535 = vunpack.c.l.b16 %v5698
        %v7536 = vunpack.c.h.b16 %v5698
        %v7537 = vunpack.c.l.b16 %v5699
        %v7538 = vunpack.c.h.b16 %v5699
        %v7539 = vunpack.c.l.b16 %v5700
        %v7540 = vunpack.c.h.b16 %v5700
        %v7541 = vunpack.c.l.b16 %v5701
        %v7542 = vunpack.c.h.b16 %v5701
        %v7543 = vunpack.c.l.b16 %v5702
        %v7544 = vunpack.c.h.b16 %v5702
        %v7545 = vunpack.c.l.b16 %v5703
        %v7546 = vunpack.c.h.b16 %v5703
        %v7547 = vunpack.c.l.b16 %v5704
        %v7548 = vunpack.c.h.b16 %v5704
        %v7549 = vunpack.c.l.b16 %v5705
        %v7550 = vunpack.c.h.b16 %v5705
        %v7551 = vunpack.c.l.b16 %v5706
        %v7552 = vunpack.c.h.b16 %v5706
        %v7553 = vunpack.c.l.b16 %v5707
        %v7554 = vunpack.c.h.b16 %v5707
        %v7555 = vunpack.c.l.b16 %v5708
        %v7556 = vunpack.c.h.b16 %v5708
        %v7557 = vunpack.c.l.b16 %v5709
        %v7558 = vunpack.c.h.b16 %v5709
        %v7559 = vunpack.c.l.b16 %v5710
        %v7560 = vunpack.c.h.b16 %v5710
        %v7561 = vunpack.c.l.b16 %v5711
        %v7562 = vunpack.c.h.b16 %v5711
        %v7563 = vunpack.c.l.b16 %v5712
        %v7564 = vunpack.c.h.b16 %v5712
        %v7565 = vunpack.c.l.b16 %v5713
        %v7566 = vunpack.c.h.b16 %v5713
        %v7567 = vunpack.c.l.b16 %v5714
        %v7568 = vunpack.c.h.b16 %v5714
        %v7569 = vunpack.c.l.b16 %v5715
        %v7570 = vunpack.c.h.b16 %v5715
        %v7571 = vunpack.c.l.b16 %v5716
        %v7572 = vunpack.c.h.b16 %v5716
        %v7573 = vunpack.c.l.b16 %v5717
        %v7574 = vunpack.c.h.b16 %v5717
        %v7575 = vunpack.c.l.b16 %v5718
        %v7576 = vunpack.c.h.b16 %v5718
        %v7577 = vunpack.c.l.b16 %v5719
        %v7578 = vunpack.c.h.b16 %v5719
        %v7579 = vunpack.c.l.b16 %v5720
        %v7580 = vunpack.c.h.b16 %v5720
        %v7581 = vunpack.c.l.b16 %v5721
        %v7582 = vunpack.c.h.b16 %v5721
        %v7583 = vunpack.c.l.b16 %v5722
        %v7584 = vunpack.c.h.b16 %v5722
        %v7585 = vunpack.c.l.b16 %v5723
        %v7586 = vunpack.c.h.b16 %v5723
        %v7587 = vunpack.c.l.b16 %v5724
        %v7588 = vunpack.c.h.b16 %v5724
        %v7589 = vunpack.c.l.b16 %v5725
        %v7590 = vunpack.c.h.b16 %v5725
        %v7591 = vunpack.c.l.b16 %v5726
        %v7592 = vunpack.c.h.b16 %v5726
        %v7593 = vunpack.c.l.b16 %v5727
        %v7594 = vunpack.c.h.b16 %v5727
        %v7595 = vunpack.c.l.b16 %v5728
        %v7596 = vunpack.c.h.b16 %v5728
        %v7597 = vunpack.c.l.b16 %v5729
        %v7598 = vunpack.c.h.b16 %v5729
        %v7599 = vunpack.c.l.b16 %v5730
        %v7600 = vunpack.c.h.b16 %v5730
        %v7601 = vunpack.c.l.b16 %v5731
        %v7602 = vunpack.c.h.b16 %v5731
        %v7603 = vunpack.c.l.b16 %v5732
        %v7604 = vunpack.c.h.b16 %v5732
        %v7605 = vunpack.c.l.b16 %v5733
        %v7606 = vunpack.c.h.b16 %v5733
        %v7607 = vunpack.c.l.b16 %v5734
        %v7608 = vunpack.c.h.b16 %v5734
        %v7609 = vunpack.c.l.b16 %v5735
        %v7610 = vunpack.c.h.b16 %v5735
        %v7611 = vunpack.c.l.b16 %v5736
        %v7612 = vunpack.c.h.b16 %v5736
        %v7613 = vunpack.c.l.b16 %v5737
        %v7614 = vunpack.c.h.b16 %v5737
        %v7615 = vunpack.c.l.b16 %v5738
        %v7616 = vunpack.c.h.b16 %v5738
        %v7617 = vunpack.c.l.b16 %v5739
        %v7618 = vunpack.c.h.b16 %v5739
        %v7619 = vunpack.c.l.b16 %v5740
        %v7620 = vunpack.c.h.b16 %v5740
        %v7621 = vunpack.c.l.b16 %v5741
        %v7622 = vunpack.c.h.b16 %v5741
        %v7623 = vunpack.c.l.b16 %v5742
        %v7624 = vunpack.c.h.b16 %v5742
        %v7625 = vunpack.c.l.b16 %v5743
        %v7626 = vunpack.c.h.b16 %v5743
        %v7627 = vunpack.c.l.b16 %v5744
        %v7628 = vunpack.c.h.b16 %v5744
        %v7629 = vunpack.c.l.b16 %v5745
        %v7630 = vunpack.c.h.b16 %v5745
        %v7631 = vunpack.c.l.b16 %v5746
        %v7632 = vunpack.c.h.b16 %v5746
        %v7633 = vunpack.c.l.b16 %v5747
        %v7634 = vunpack.c.h.b16 %v5747
        %v7635 = vunpack.c.l.b16 %v5748
        %v7636 = vunpack.c.h.b16 %v5748
        %v7637 = vunpack.c.l.b16 %v5749
        %v7638 = vunpack.c.h.b16 %v5749
        %v7639 = vunpack.c.l.b16 %v5750
        %v7640 = vunpack.c.h.b16 %v5750
        %v7641 = vunpack.c.l.b16 %v5751
        %v7642 = vunpack.c.h.b16 %v5751
        %v7643 = vunpack.c.l.b16 %v5752
        %v7644 = vunpack.c.h.b16 %v5752
        %v7645 = vunpack.c.l.b16 %v5753
        %v7646 = vunpack.c.h.b16 %v5753
        %v7647 = vunpack.c.l.b16 %v5754
        %v7648 = vunpack.c.h.b16 %v5754
        %v7649 = vunpack.c.l.b16 %v5755
        %v7650 = vunpack.c.h.b16 %v5755
        %v7651 = vunpack.c.l.b16 %v5756
        %v7652 = vunpack.c.h.b16 %v5756
        %v7653 = vunpack.c.l.b16 %v5757
        %v7654 = vunpack.c.h.b16 %v5757
        %v7655 = vunpack.c.l.b16 %v5758
        %v7656 = vunpack.c.h.b16 %v5758
        %v7657 = vunpack.c.l.b16 %v5759
        %v7658 = vunpack.c.h.b16 %v5759
        %v7659 = vunpack.c.l.b16 %v5760
        %v7660 = vunpack.c.h.b16 %v5760
        %v7661 = vunpack.c.l.b16 %v5761
        %v7662 = vunpack.c.h.b16 %v5761
        %v7663 = vunpack.c.l.b16 %v5762
        %v7664 = vunpack.c.h.b16 %v5762
        %v7665 = vunpack.c.l.b16 %v5763
        %v7666 = vunpack.c.h.b16 %v5763
        %v7667 = vunpack.c.l.b16 %v5764
        %v7668 = vunpack.c.h.b16 %v5764
        %v7669 = vunpack.c.l.b16 %v5765
        %v7670 = vunpack.c.h.b16 %v5765
        %v7671 = vunpack.c.l.b16 %v5766
        %v7672 = vunpack.c.h.b16 %v5766
        %v7673 = vunpack.c.l.b16 %v5767
        %v7674 = vunpack.c.h.b16 %v5767
        %v7675 = vunpack.c.l.b16 %v5768
        %v7676 = vunpack.c.h.b16 %v5768
        %v7677 = vunpack.c.l.b16 %v5769
        %v7678 = vunpack.c.h.b16 %v5769
        %v7679 = vunpack.c.l.b16 %v5770
        %v7680 = vunpack.c.h.b16 %v5770
        %v7681 = vunpack.c.l.b16 %v5771
        %v7682 = vunpack.c.h.b16 %v5771
        %v7683 = vunpack.c.l.b16 %v5772
        %v7684 = vunpack.c.h.b16 %v5772
        %v7685 = vunpack.c.l.b16 %v5773
        %v7686 = vunpack.c.h.b16 %v5773
        %v7687 = vunpack.c.l.b16 %v5774
        %v7688 = vunpack.c.h.b16 %v5774
        %v7689 = vunpack.c.l.b16 %v5775
        %v7690 = vunpack.c.h.b16 %v5775
        %v7691 = vunpack.c.l.b16 %v5776
        %v7692 = vunpack.c.h.b16 %v5776
        %v7693 = vunpack.c.l.b16 %v5777
        %v7694 = vunpack.c.h.b16 %v5777
        %v7695 = vunpack.c.l.b16 %v5778
        %v7696 = vunpack.c.h.b16 %v5778
        %v7697 = vunpack.c.l.b16 %v5779
        %v7698 = vunpack.c.h.b16 %v5779
        %v7699 = vunpack.c.l.b16 %v5780
        %v7700 = vunpack.c.h.b16 %v5780
        %v7701 = vpack.c.b16 %v6441, %v6421
        %v7702 = vpack.c.b16 %v6442, %v6422
        %v7703 = vpack.c.b16 %v6443, %v6423
        %v7704 = vpack.c.b16 %v6444, %v6424
        %v7705 = vpack.c.b16 %v6445, %v6425
        %v7706 = vpack.c.b16 %v6446, %v6426
        %v7707 = vpack.c.b16 %v6447, %v6427
        %v7708 = vpack.c.b16 %v6448, %v6428
        %v7709 = vpack.c.b16 %v6449, %v6429
        %v7710 = vpack.c.b16 %v6450, %v6430
        %v7711 = vpack.c.b16 %v6451, %v6431
        %v7712 = vpack.c.b16 %v6452, %v6432
        %v7713 = vpack.c.b16 %v6453, %v6433
        %v7714 = vpack.c.b16 %v6454, %v6434
        %v7715 = vpack.c.b16 %v6455, %v6435
        %v7716 = vpack.c.b16 %v6456, %v6436
        %v7717 = vpack.c.b16 %v6457, %v6437
        %v7718 = vpack.c.b16 %v6458, %v6438
        %v7719 = vpack.c.b16 %v6459, %v6439
        %v7720 = vpack.c.b16 %v6460, %v6440
        %v7721 = vpack.c.b16 %v6481, %v6461
        %v7722 = vpack.c.b16 %v6482, %v6462
        %v7723 = vpack.c.b16 %v6483, %v6463
        %v7724 = vpack.c.b16 %v6484, %v6464
        %v7725 = vpack.c.b16 %v6485, %v6465
        %v7726 = vpack.c.b16 %v6486, %v6466
        %v7727 = vpack.c.b16 %v6487, %v6467
        %v7728 = vpack.c.b16 %v6488, %v6468
        %v7729 = vpack.c.b16 %v6489, %v6469
        %v7730 = vpack.c.b16 %v6490, %v6470
        %v7731 = vpack.c.b16 %v6491, %v6471
        %v7732 = vpack.c.b16 %v6492, %v6472
        %v7733 = vpack.c.b16 %v6493, %v6473
        %v7734 = vpack.c.b16 %v6494, %v6474
        %v7735 = vpack.c.b16 %v6495, %v6475
        %v7736 = vpack.c.b16 %v6496, %v6476
        %v7737 = vpack.c.b16 %v6497, %v6477
        %v7738 = vpack.c.b16 %v6498, %v6478
        %v7739 = vpack.c.b16 %v6499, %v6479
        %v7740 = vpack.c.b16 %v6500, %v6480
        %v7741 = vpack.c.b16 %v6521, %v6501
        %v7742 = vpack.c.b16 %v6522, %v6502
        %v7743 = vpack.c.b16 %v6523, %v6503
        %v7744 = vpack.c.b16 %v6524, %v6504
        %v7745 = vpack.c.b16 %v6525, %v6505
        %v7746 = vpack.c.b16 %v6526, %v6506
        %v7747 = vpack.c.b16 %v6527, %v6507
        %v7748 = vpack.c.b16 %v6528, %v6508
        %v7749 = vpack.c.b16 %v6529, %v6509
        %v7750 = vpack.c.b16 %v6530, %v6510
        %v7751 = vpack.c.b16 %v6531, %v6511
        %v7752 = vpack.c.b16 %v6532, %v6512
        %v7753 = vpack.c.b16 %v6533, %v6513
        %v7754 = vpack.c.b16 %v6534, %v6514
        %v7755 = vpack.c.b16 %v6535, %v6515
        %v7756 = vpack.c.b16 %v6536, %v6516
        %v7757 = vpack.c.b16 %v6537, %v6517
        %v7758 = vpack.c.b16 %v6538, %v6518
        %v7759 = vpack.c.b16 %v6539, %v6519
        %v7760 = vpack.c.b16 %v6540, %v6520
        %v7761 = vpack.c.b16 %v6561, %v6541
        %v7762 = vpack.c.b16 %v6562, %v6542
        %v7763 = vpack.c.b16 %v6563, %v6543
        %v7764 = vpack.c.b16 %v6564, %v6544
        %v7765 = vpack.c.b16 %v6565, %v6545
        %v7766 = vpack.c.b16 %v6566, %v6546
        %v7767 = vpack.c.b16 %v6567, %v6547
        %v7768 = vpack.c.b16 %v6568, %v6548
        %v7769 = vpack.c.b16 %v6569, %v6549
        %v7770 = vpack.c.b16 %v6570, %v6550
        %v7771 = vpack.c.b16 %v6571, %v6551
        %v7772 = vpack.c.b16 %v6572, %v6552
        %v7773 = vpack.c.b16 %v6573, %v6553
        %v7774 = vpack.c.b16 %v6574, %v6554
        %v7775 = vpack.c.b16 %v6575, %v6555
        %v7776 = vpack.c.b16 %v6576, %v6556
        %v7777 = vpack.c.b16 %v6577, %v6557
        %v7778 = vpack.c.b16 %v6578, %v6558
        %v7779 = vpack.c.b16 %v6579, %v6559
        %v7780 = vpack.c.b16 %v6580, %v6560
        %v7781 = vpack.c.b16 %v6601, %v6581
        %v7782 = vpack.c.b16 %v6602, %v6582
        %v7783 = vpack.c.b16 %v6603, %v6583
        %v7784 = vpack.c.b16 %v6604, %v6584
        %v7785 = vpack.c.b16 %v6605, %v6585
        %v7786 = vpack.c.b16 %v6606, %v6586
        %v7787 = vpack.c.b16 %v6607, %v6587
        %v7788 = vpack.c.b16 %v6608, %v6588
        %v7789 = vpack.c.b16 %v6609, %v6589
        %v7790 = vpack.c.b16 %v6610, %v6590
        %v7791 = vpack.c.b16 %v6611, %v6591
        %v7792 = vpack.c.b16 %v6612, %v6592
        %v7793 = vpack.c.b16 %v6613, %v6593
        %v7794 = vpack.c.b16 %v6614, %v6594
        %v7795 = vpack.c.b16 %v6615, %v6595
        %v7796 = vpack.c.b16 %v6616, %v6596
        %v7797 = vpack.c.b16 %v6617, %v6597
        %v7798 = vpack.c.b16 %v6618, %v6598
        %v7799 = vpack.c.b16 %v6619, %v6599
        %v7800 = vpack.c.b16 %v6620, %v6600
        %v7801 = vpack.c.b16 %v6641, %v6621
        %v7802 = vpack.c.b16 %v6642, %v6622
        %v7803 = vpack.c.b16 %v6643, %v6623
        %v7804 = vpack.c.b16 %v6644, %v6624
        %v7805 = vpack.c.b16 %v6645, %v6625
        %v7806 = vpack.c.b16 %v6646, %v6626
        %v7807 = vpack.c.b16 %v6647, %v6627
        %v7808 = vpack.c.b16 %v6648, %v6628
        %v7809 = vpack.c.b16 %v6649, %v6629
        %v7810 = vpack.c.b16 %v6650, %v6630
        %v7811 = vpack.c.b16 %v6651, %v6631
        %v7812 = vpack.c.b16 %v6652, %v6632
        %v7813 = vpack.c.b16 %v6653, %v6633
        %v7814 = vpack.c.b16 %v6654, %v6634
        %v7815 = vpack.c.b16 %v6655, %v6635
        %v7816 = vpack.c.b16 %v6656, %v6636
        %v7817 = vpack.c.b16 %v6657, %v6637
        %v7818 = vpack.c.b16 %v6658, %v6638
        %v7819 = vpack.c.b16 %v6659, %v6639
        %v7820 = vpack.c.b16 %v6660, %v6640
        %v7821 = vpack.c.b16 %v6681, %v6661
        %v7822 = vpack.c.b16 %v6682, %v6662
        %v7823 = vpack.c.b16 %v6683, %v6663
        %v7824 = vpack.c.b16 %v6684, %v6664
        %v7825 = vpack.c.b16 %v6685, %v6665
        %v7826 = vpack.c.b16 %v6686, %v6666
        %v7827 = vpack.c.b16 %v6687, %v6667
        %v7828 = vpack.c.b16 %v6688, %v6668
        %v7829 = vpack.c.b16 %v6689, %v6669
        %v7830 = vpack.c.b16 %v6690, %v6670
        %v7831 = vpack.c.b16 %v6691, %v6671
        %v7832 = vpack.c.b16 %v6692, %v6672
        %v7833 = vpack.c.b16 %v6693, %v6673
        %v7834 = vpack.c.b16 %v6694, %v6674
        %v7835 = vpack.c.b16 %v6695, %v6675
        %v7836 = vpack.c.b16 %v6696, %v6676
        %v7837 = vpack.c.b16 %v6697, %v6677
        %v7838 = vpack.c.b16 %v6698, %v6678
        %v7839 = vpack.c.b16 %v6699, %v6679
        %v7840 = vpack.c.b16 %v6700, %v6680
        %v7841 = vpack.c.b16 %v6721, %v6701
        %v7842 = vpack.c.b16 %v6722, %v6702
        %v7843 = vpack.c.b16 %v6723, %v6703
        %v7844 = vpack.c.b16 %v6724, %v6704
        %v7845 = vpack.c.b16 %v6725, %v6705
        %v7846 = vpack.c.b16 %v6726, %v6706
        %v7847 = vpack.c.b16 %v6727, %v6707
        %v7848 = vpack.c.b16 %v6728, %v6708
        %v7849 = vpack.c.b16 %v6729, %v6709
        %v7850 = vpack.c.b16 %v6730, %v6710
        %v7851 = vpack.c.b16 %v6731, %v6711
        %v7852 = vpack.c.b16 %v6732, %v6712
        %v7853 = vpack.c.b16 %v6733, %v6713
        %v7854 = vpack.c.b16 %v6734, %v6714
        %v7855 = vpack.c.b16 %v6735, %v6715
        %v7856 = vpack.c.b16 %v6736, %v6716
        %v7857 = vpack.c.b16 %v6737, %v6717
        %v7858 = vpack.c.b16 %v6738, %v6718
        %v7859 = vpack.c.b16 %v6739, %v6719
        %v7860 = vpack.c.b16 %v6740, %v6720
        %v7861 = vpack.c.b16 %v6761, %v6741
        %v7862 = vpack.c.b16 %v6762, %v6742
        %v7863 = vpack.c.b16 %v6763, %v6743
        %v7864 = vpack.c.b16 %v6764, %v6744
        %v7865 = vpack.c.b16 %v6765, %v6745
        %v7866 = vpack.c.b16 %v6766, %v6746
        %v7867 = vpack.c.b16 %v6767, %v6747
        %v7868 = vpack.c.b16 %v6768, %v6748
        %v7869 = vpack.c.b16 %v6769, %v6749
        %v7870 = vpack.c.b16 %v6770, %v6750
        %v7871 = vpack.c.b16 %v6771, %v6751
        %v7872 = vpack.c.b16 %v6772, %v6752
        %v7873 = vpack.c.b16 %v6773, %v6753
        %v7874 = vpack.c.b16 %v6774, %v6754
        %v7875 = vpack.c.b16 %v6775, %v6755
        %v7876 = vpack.c.b16 %v6776, %v6756
        %v7877 = vpack.c.b16 %v6777, %v6757
        %v7878 = vpack.c.b16 %v6778, %v6758
        %v7879 = vpack.c.b16 %v6779, %v6759
        %v7880 = vpack.c.b16 %v6780, %v6760
        %v7881 = vpack.c.b16 %v6801, %v6781
        %v7882 = vpack.c.b16 %v6802, %v6782
        %v7883 = vpack.c.b16 %v6803, %v6783
        %v7884 = vpack.c.b16 %v6804, %v6784
        %v7885 = vpack.c.b16 %v6805, %v6785
        %v7886 = vpack.c.b16 %v6806, %v6786
        %v7887 = vpack.c.b16 %v6807, %v6787
        %v7888 = vpack.c.b16 %v6808, %v6788
        %v7889 = vpack.c.b16 %v6809, %v6789
        %v7890 = vpack.c.b16 %v6810, %v6790
        %v7891 = vpack.c.b16 %v6811, %v6791
        %v7892 = vpack.c.b16 %v6812, %v6792
        %v7893 = vpack.c.b16 %v6813, %v6793
        %v7894 = vpack.c.b16 %v6814, %v6794
        %v7895 = vpack.c.b16 %v6815, %v6795
        %v7896 = vpack.c.b16 %v6816, %v6796
        %v7897 = vpack.c.b16 %v6817, %v6797
        %v7898 = vpack.c.b16 %v6818, %v6798
        %v7899 = vpack.c.b16 %v6819, %v6799
        %v7900 = vpack.c.b16 %v6820, %v6800
        %v7901 = vpack.c.b16 %v6841, %v6821
        %v7902 = vpack.c.b16 %v6842, %v6822
        %v7903 = vpack.c.b16 %v6843, %v6823
        %v7904 = vpack.c.b16 %v6844, %v6824
        %v7905 = vpack.c.b16 %v6845, %v6825
        %v7906 = vpack.c.b16 %v6846, %v6826
        %v7907 = vpack.c.b16 %v6847, %v6827
        %v7908 = vpack.c.b16 %v6848, %v6828
        %v7909 = vpack.c.b16 %v6849, %v6829
        %v7910 = vpack.c.b16 %v6850, %v6830
        %v7911 = vpack.c.b16 %v6851, %v6831
        %v7912 = vpack.c.b16 %v6852, %v6832
        %v7913 = vpack.c.b16 %v6853, %v6833
        %v7914 = vpack.c.b16 %v6854, %v6834
        %v7915 = vpack.c.b16 %v6855, %v6835
        %v7916 = vpack.c.b16 %v6856, %v6836
        %v7917 = vpack.c.b16 %v6857, %v6837
        %v7918 = vpack.c.b16 %v6858, %v6838
        %v7919 = vpack.c.b16 %v6859, %v6839
        %v7920 = vpack.c.b16 %v6860, %v6840
        %v7921 = vpack.c.b16 %v6881, %v6861
        %v7922 = vpack.c.b16 %v6882, %v6862
        %v7923 = vpack.c.b16 %v6883, %v6863
        %v7924 = vpack.c.b16 %v6884, %v6864
        %v7925 = vpack.c.b16 %v6885, %v6865
        %v7926 = vpack.c.b16 %v6886, %v6866
        %v7927 = vpack.c.b16 %v6887, %v6867
        %v7928 = vpack.c.b16 %v6888, %v6868
        %v7929 = vpack.c.b16 %v6889, %v6869
        %v7930 = vpack.c.b16 %v6890, %v6870
        %v7931 = vpack.c.b16 %v6891, %v6871
        %v7932 = vpack.c.b16 %v6892, %v6872
        %v7933 = vpack.c.b16 %v6893, %v6873
        %v7934 = vpack.c.b16 %v6894, %v6874
        %v7935 = vpack.c.b16 %v6895, %v6875
        %v7936 = vpack.c.b16 %v6896, %v6876
        %v7937 = vpack.c.b16 %v6897, %v6877
        %v7938 = vpack.c.b16 %v6898, %v6878
        %v7939 = vpack.c.b16 %v6899, %v6879
        %v7940 = vpack.c.b16 %v6900, %v6880
        %v7941 = vpack.c.b16 %v6921, %v6901
        %v7942 = vpack.c.b16 %v6922, %v6902
        %v7943 = vpack.c.b16 %v6923, %v6903
        %v7944 = vpack.c.b16 %v6924, %v6904
        %v7945 = vpack.c.b16 %v6925, %v6905
        %v7946 = vpack.c.b16 %v6926, %v6906
        %v7947 = vpack.c.b16 %v6927, %v6907
        %v7948 = vpack.c.b16 %v6928, %v6908
        %v7949 = vpack.c.b16 %v6929, %v6909
        %v7950 = vpack.c.b16 %v6930, %v6910
        %v7951 = vpack.c.b16 %v6931, %v6911
        %v7952 = vpack.c.b16 %v6932, %v6912
        %v7953 = vpack.c.b16 %v6933, %v6913
        %v7954 = vpack.c.b16 %v6934, %v6914
        %v7955 = vpack.c.b16 %v6935, %v6915
        %v7956 = vpack.c.b16 %v6936, %v6916
        %v7957 = vpack.c.b16 %v6937, %v6917
        %v7958 = vpack.c.b16 %v6938, %v6918
        %v7959 = vpack.c.b16 %v6939, %v6919
        %v7960 = vpack.c.b16 %v6940, %v6920
        %v7961 = vpack.c.b16 %v6961, %v6941
        %v7962 = vpack.c.b16 %v6962, %v6942
        %v7963 = vpack.c.b16 %v6963, %v6943
        %v7964 = vpack.c.b16 %v6964, %v6944
        %v7965 = vpack.c.b16 %v6965, %v6945
        %v7966 = vpack.c.b16 %v6966, %v6946
        %v7967 = vpack.c.b16 %v6967, %v6947
        %v7968 = vpack.c.b16 %v6968, %v6948
        %v7969 = vpack.c.b16 %v6969, %v6949
        %v7970 = vpack.c.b16 %v6970, %v6950
        %v7971 = vpack.c.b16 %v6971, %v6951
        %v7972 = vpack.c.b16 %v6972, %v6952
        %v7973 = vpack.c.b16 %v6973, %v6953
        %v7974 = vpack.c.b16 %v6974, %v6954
        %v7975 = vpack.c.b16 %v6975, %v6955
        %v7976 = vpack.c.b16 %v6976, %v6956
        %v7977 = vpack.c.b16 %v6977, %v6957
        %v7978 = vpack.c.b16 %v6978, %v6958
        %v7979 = vpack.c.b16 %v6979, %v6959
        %v7980 = vpack.c.b16 %v6980, %v6960
        %v7981 = vpack.c.b16 %v7001, %v6981
        %v7982 = vpack.c.b16 %v7002, %v6982
        %v7983 = vpack.c.b16 %v7003, %v6983
        %v7984 = vpack.c.b16 %v7004, %v6984
        %v7985 = vpack.c.b16 %v7005, %v6985
        %v7986 = vpack.c.b16 %v7006, %v6986
        %v7987 = vpack.c.b16 %v7007, %v6987
        %v7988 = vpack.c.b16 %v7008, %v6988
        %v7989 = vpack.c.b16 %v7009, %v6989
        %v7990 = vpack.c.b16 %v7010, %v6990
        %v7991 = vpack.c.b16 %v7011, %v6991
        %v7992 = vpack.c.b16 %v7012, %v6992
        %v7993 = vpack.c.b16 %v7013, %v6993
        %v7994 = vpack.c.b16 %v7014, %v6994
        %v7995 = vpack.c.b16 %v7015, %v6995
        %v7996 = vpack.c.b16 %v7016, %v6996
        %v7997 = vpack.c.b16 %v7017, %v6997
        %v7998 = vpack.c.b16 %v7018, %v6998
        %v7999 = vpack.c.b16 %v7019, %v6999
        %v8000 = vpack.c.b16 %v7020, %v7000
        %v8001 = vpack.c.b16 %v7041, %v7021
        %v8002 = vpack.c.b16 %v7042, %v7022
        %v8003 = vpack.c.b16 %v7043, %v7023
        %v8004 = vpack.c.b16 %v7044, %v7024
        %v8005 = vpack.c.b16 %v7045, %v7025
        %v8006 = vpack.c.b16 %v7046, %v7026
        %v8007 = vpack.c.b16 %v7047, %v7027
        %v8008 = vpack.c.b16 %v7048, %v7028
        %v8009 = vpack.c.b16 %v7049, %v7029
        %v8010 = vpack.c.b16 %v7050, %v7030
        %v8011 = vpack.c.b16 %v7051, %v7031
        %v8012 = vpack.c.b16 %v7052, %v7032
        %v8013 = vpack.c.b16 %v7053, %v7033
        %v8014 = vpack.c.b16 %v7054, %v7034
        %v8015 = vpack.c.b16 %v7055, %v7035
        %v8016 = vpack.c.b16 %v7056, %v7036
        %v8017 = vpack.c.b16 %v7057, %v7037
        %v8018 = vpack.c.b16 %v7058, %v7038
        %v8019 = vpack.c.b16 %v7059, %v7039
        %v8020 = vpack.c.b16 %v7060, %v7040
        %v8021 = vpack.c.b16 %v7081, %v7061
        %v8022 = vpack.c.b16 %v7082, %v7062
        %v8023 = vpack.c.b16 %v7083, %v7063
        %v8024 = vpack.c.b16 %v7084, %v7064
        %v8025 = vpack.c.b16 %v7085, %v7065
        %v8026 = vpack.c.b16 %v7086, %v7066
        %v8027 = vpack.c.b16 %v7087, %v7067
        %v8028 = vpack.c.b16 %v7088, %v7068
        %v8029 = vpack.c.b16 %v7089, %v7069
        %v8030 = vpack.c.b16 %v7090, %v7070
        %v8031 = vpack.c.b16 %v7091, %v7071
        %v8032 = vpack.c.b16 %v7092, %v7072
        %v8033 = vpack.c.b16 %v7093, %v7073
        %v8034 = vpack.c.b16 %v7094, %v7074
        %v8035 = vpack.c.b16 %v7095, %v7075
        %v8036 = vpack.c.b16 %v7096, %v7076
        %v8037 = vpack.c.b16 %v7097, %v7077
        %v8038 = vpack.c.b16 %v7098, %v7078
        %v8039 = vpack.c.b16 %v7099, %v7079
        %v8040 = vpack.c.b16 %v7100, %v7080
        %v8041 = vpack.c.b16 %v7121, %v7101
        %v8042 = vpack.c.b16 %v7122, %v7102
        %v8043 = vpack.c.b16 %v7123, %v7103
        %v8044 = vpack.c.b16 %v7124, %v7104
        %v8045 = vpack.c.b16 %v7125, %v7105
        %v8046 = vpack.c.b16 %v7126, %v7106
        %v8047 = vpack.c.b16 %v7127, %v7107
        %v8048 = vpack.c.b16 %v7128, %v7108
        %v8049 = vpack.c.b16 %v7129, %v7109
        %v8050 = vpack.c.b16 %v7130, %v7110
        %v8051 = vpack.c.b16 %v7131, %v7111
        %v8052 = vpack.c.b16 %v7132, %v7112
        %v8053 = vpack.c.b16 %v7133, %v7113
        %v8054 = vpack.c.b16 %v7134, %v7114
        %v8055 = vpack.c.b16 %v7135, %v7115
        %v8056 = vpack.c.b16 %v7136, %v7116
        %v8057 = vpack.c.b16 %v7137, %v7117
        %v8058 = vpack.c.b16 %v7138, %v7118
        %v8059 = vpack.c.b16 %v7139, %v7119
        %v8060 = vpack.c.b16 %v7140, %v7120
        %v8061 = vpack.c.b16 %v7161, %v7141
        %v8062 = vpack.c.b16 %v7162, %v7142
        %v8063 = vpack.c.b16 %v7163, %v7143
        %v8064 = vpack.c.b16 %v7164, %v7144
        %v8065 = vpack.c.b16 %v7165, %v7145
        %v8066 = vpack.c.b16 %v7166, %v7146
        %v8067 = vpack.c.b16 %v7167, %v7147
        %v8068 = vpack.c.b16 %v7168, %v7148
        %v8069 = vpack.c.b16 %v7169, %v7149
        %v8070 = vpack.c.b16 %v7170, %v7150
        %v8071 = vpack.c.b16 %v7171, %v7151
        %v8072 = vpack.c.b16 %v7172, %v7152
        %v8073 = vpack.c.b16 %v7173, %v7153
        %v8074 = vpack.c.b16 %v7174, %v7154
        %v8075 = vpack.c.b16 %v7175, %v7155
        %v8076 = vpack.c.b16 %v7176, %v7156
        %v8077 = vpack.c.b16 %v7177, %v7157
        %v8078 = vpack.c.b16 %v7178, %v7158
        %v8079 = vpack.c.b16 %v7179, %v7159
        %v8080 = vpack.c.b16 %v7180, %v7160
        %v8081 = vpack.c.b16 %v7201, %v7181
        %v8082 = vpack.c.b16 %v7202, %v7182
        %v8083 = vpack.c.b16 %v7203, %v7183
        %v8084 = vpack.c.b16 %v7204, %v7184
        %v8085 = vpack.c.b16 %v7205, %v7185
        %v8086 = vpack.c.b16 %v7206, %v7186
        %v8087 = vpack.c.b16 %v7207, %v7187
        %v8088 = vpack.c.b16 %v7208, %v7188
        %v8089 = vpack.c.b16 %v7209, %v7189
        %v8090 = vpack.c.b16 %v7210, %v7190
        %v8091 = vpack.c.b16 %v7211, %v7191
        %v8092 = vpack.c.b16 %v7212, %v7192
        %v8093 = vpack.c.b16 %v7213, %v7193
        %v8094 = vpack.c.b16 %v7214, %v7194
        %v8095 = vpack.c.b16 %v7215, %v7195
        %v8096 = vpack.c.b16 %v7216, %v7196
        %v8097 = vpack.c.b16 %v7217, %v7197
        %v8098 = vpack.c.b16 %v7218, %v7198
        %v8099 = vpack.c.b16 %v7219, %v7199
        %v8100 = vpack.c.b16 %v7220, %v7200
        %v8101 = vpack.c.b16 %v7241, %v7221
        %v8102 = vpack.c.b16 %v7242, %v7222
        %v8103 = vpack.c.b16 %v7243, %v7223
        %v8104 = vpack.c.b16 %v7244, %v7224
        %v8105 = vpack.c.b16 %v7245, %v7225
        %v8106 = vpack.c.b16 %v7246, %v7226
        %v8107 = vpack.c.b16 %v7247, %v7227
        %v8108 = vpack.c.b16 %v7248, %v7228
        %v8109 = vpack.c.b16 %v7249, %v7229
        %v8110 = vpack.c.b16 %v7250, %v7230
        %v8111 = vpack.c.b16 %v7251, %v7231
        %v8112 = vpack.c.b16 %v7252, %v7232
        %v8113 = vpack.c.b16 %v7253, %v7233
        %v8114 = vpack.c.b16 %v7254, %v7234
        %v8115 = vpack.c.b16 %v7255, %v7235
        %v8116 = vpack.c.b16 %v7256, %v7236
        %v8117 = vpack.c.b16 %v7257, %v7237
        %v8118 = vpack.c.b16 %v7258, %v7238
        %v8119 = vpack.c.b16 %v7259, %v7239
        %v8120 = vpack.c.b16 %v7260, %v7240
        %v8121 = vpack.c.b16 %v7281, %v7261
        %v8122 = vpack.c.b16 %v7282, %v7262
        %v8123 = vpack.c.b16 %v7283, %v7263
        %v8124 = vpack.c.b16 %v7284, %v7264
        %v8125 = vpack.c.b16 %v7285, %v7265
        %v8126 = vpack.c.b16 %v7286, %v7266
        %v8127 = vpack.c.b16 %v7287, %v7267
        %v8128 = vpack.c.b16 %v7288, %v7268
        %v8129 = vpack.c.b16 %v7289, %v7269
        %v8130 = vpack.c.b16 %v7290, %v7270
        %v8131 = vpack.c.b16 %v7291, %v7271
        %v8132 = vpack.c.b16 %v7292, %v7272
        %v8133 = vpack.c.b16 %v7293, %v7273
        %v8134 = vpack.c.b16 %v7294, %v7274
        %v8135 = vpack.c.b16 %v7295, %v7275
        %v8136 = vpack.c.b16 %v7296, %v7276
        %v8137 = vpack.c.b16 %v7297, %v7277
        %v8138 = vpack.c.b16 %v7298, %v7278
        %v8139 = vpack.c.b16 %v7299, %v7279
        %v8140 = vpack.c.b16 %v7300, %v7280
        %v8141 = vpack.c.b16 %v7321, %v7301
        %v8142 = vpack.c.b16 %v7322, %v7302
        %v8143 = vpack.c.b16 %v7323, %v7303
        %v8144 = vpack.c.b16 %v7324, %v7304
        %v8145 = vpack.c.b16 %v7325, %v7305
        %v8146 = vpack.c.b16 %v7326, %v7306
        %v8147 = vpack.c.b16 %v7327, %v7307
        %v8148 = vpack.c.b16 %v7328, %v7308
        %v8149 = vpack.c.b16 %v7329, %v7309
        %v8150 = vpack.c.b16 %v7330, %v7310
        %v8151 = vpack.c.b16 %v7331, %v7311
        %v8152 = vpack.c.b16 %v7332, %v7312
        %v8153 = vpack.c.b16 %v7333, %v7313
        %v8154 = vpack.c.b16 %v7334, %v7314
        %v8155 = vpack.c.b16 %v7335, %v7315
        %v8156 = vpack.c.b16 %v7336, %v7316
        %v8157 = vpack.c.b16 %v7337, %v7317
        %v8158 = vpack.c.b16 %v7338, %v7318
        %v8159 = vpack.c.b16 %v7339, %v7319
        %v8160 = vpack.c.b16 %v7340, %v7320
        %v8161 = vpack.c.b16 %v7361, %v7341
        %v8162 = vpack.c.b16 %v7362, %v7342
        %v8163 = vpack.c.b16 %v7363, %v7343
        %v8164 = vpack.c.b16 %v7364, %v7344
        %v8165 = vpack.c.b16 %v7365, %v7345
        %v8166 = vpack.c.b16 %v7366, %v7346
        %v8167 = vpack.c.b16 %v7367, %v7347
        %v8168 = vpack.c.b16 %v7368, %v7348
        %v8169 = vpack.c.b16 %v7369, %v7349
        %v8170 = vpack.c.b16 %v7370, %v7350
        %v8171 = vpack.c.b16 %v7371, %v7351
        %v8172 = vpack.c.b16 %v7372, %v7352
        %v8173 = vpack.c.b16 %v7373, %v7353
        %v8174 = vpack.c.b16 %v7374, %v7354
        %v8175 = vpack.c.b16 %v7375, %v7355
        %v8176 = vpack.c.b16 %v7376, %v7356
        %v8177 = vpack.c.b16 %v7377, %v7357
        %v8178 = vpack.c.b16 %v7378, %v7358
        %v8179 = vpack.c.b16 %v7379, %v7359
        %v8180 = vpack.c.b16 %v7380, %v7360
        %v8181 = vpack.c.b16 %v7401, %v7381
        %v8182 = vpack.c.b16 %v7402, %v7382
        %v8183 = vpack.c.b16 %v7403, %v7383
        %v8184 = vpack.c.b16 %v7404, %v7384
        %v8185 = vpack.c.b16 %v7405, %v7385
        %v8186 = vpack.c.b16 %v7406, %v7386
        %v8187 = vpack.c.b16 %v7407, %v7387
        %v8188 = vpack.c.b16 %v7408, %v7388
        %v8189 = vpack.c.b16 %v7409, %v7389
        %v8190 = vpack.c.b16 %v7410, %v7390
        %v8191 = vpack.c.b16 %v7411, %v7391
        %v8192 = vpack.c.b16 %v7412, %v7392
        %v8193 = vpack.c.b16 %v7413, %v7393
        %v8194 = vpack.c.b16 %v7414, %v7394
        %v8195 = vpack.c.b16 %v7415, %v7395
        %v8196 = vpack.c.b16 %v7416, %v7396
        %v8197 = vpack.c.b16 %v7417, %v7397
        %v8198 = vpack.c.b16 %v7418, %v7398
        %v8199 = vpack.c.b16 %v7419, %v7399
        %v8200 = vpack.c.b16 %v7420, %v7400
        %v8201 = vpack.c.b16 %v7441, %v7421
        %v8202 = vpack.c.b16 %v7442, %v7422
        %v8203 = vpack.c.b16 %v7443, %v7423
        %v8204 = vpack.c.b16 %v7444, %v7424
        %v8205 = vpack.c.b16 %v7445, %v7425
        %v8206 = vpack.c.b16 %v7446, %v7426
        %v8207 = vpack.c.b16 %v7447, %v7427
        %v8208 = vpack.c.b16 %v7448, %v7428
        %v8209 = vpack.c.b16 %v7449, %v7429
        %v8210 = vpack.c.b16 %v7450, %v7430
        %v8211 = vpack.c.b16 %v7451, %v7431
        %v8212 = vpack.c.b16 %v7452, %v7432
        %v8213 = vpack.c.b16 %v7453, %v7433
        %v8214 = vpack.c.b16 %v7454, %v7434
        %v8215 = vpack.c.b16 %v7455, %v7435
        %v8216 = vpack.c.b16 %v7456, %v7436
        %v8217 = vpack.c.b16 %v7457, %v7437
        %v8218 = vpack.c.b16 %v7458, %v7438
        %v8219 = vpack.c.b16 %v7459, %v7439
        %v8220 = vpack.c.b16 %v7460, %v7440
        %v8221 = vpack.c.b16 %v7481, %v7461
        %v8222 = vpack.c.b16 %v7482, %v7462
        %v8223 = vpack.c.b16 %v7483, %v7463
        %v8224 = vpack.c.b16 %v7484, %v7464
        %v8225 = vpack.c.b16 %v7485, %v7465
        %v8226 = vpack.c.b16 %v7486, %v7466
        %v8227 = vpack.c.b16 %v7487, %v7467
        %v8228 = vpack.c.b16 %v7488, %v7468
        %v8229 = vpack.c.b16 %v7489, %v7469
        %v8230 = vpack.c.b16 %v7490, %v7470
        %v8231 = vpack.c.b16 %v7491, %v7471
        %v8232 = vpack.c.b16 %v7492, %v7472
        %v8233 = vpack.c.b16 %v7493, %v7473
        %v8234 = vpack.c.b16 %v7494, %v7474
        %v8235 = vpack.c.b16 %v7495, %v7475
        %v8236 = vpack.c.b16 %v7496, %v7476
        %v8237 = vpack.c.b16 %v7497, %v7477
        %v8238 = vpack.c.b16 %v7498, %v7478
        %v8239 = vpack.c.b16 %v7499, %v7479
        %v8240 = vpack.c.b16 %v7500, %v7480
        %v8241 = vpack.c.b16 %v7521, %v7501
        %v8242 = vpack.c.b16 %v7522, %v7502
        %v8243 = vpack.c.b16 %v7523, %v7503
        %v8244 = vpack.c.b16 %v7524, %v7504
        %v8245 = vpack.c.b16 %v7525, %v7505
        %v8246 = vpack.c.b16 %v7526, %v7506
        %v8247 = vpack.c.b16 %v7527, %v7507
        %v8248 = vpack.c.b16 %v7528, %v7508
        %v8249 = vpack.c.b16 %v7529, %v7509
        %v8250 = vpack.c.b16 %v7530, %v7510
        %v8251 = vpack.c.b16 %v7531, %v7511
        %v8252 = vpack.c.b16 %v7532, %v7512
        %v8253 = vpack.c.b16 %v7533, %v7513
        %v8254 = vpack.c.b16 %v7534, %v7514
        %v8255 = vpack.c.b16 %v7535, %v7515
        %v8256 = vpack.c.b16 %v7536, %v7516
        %v8257 = vpack.c.b16 %v7537, %v7517
        %v8258 = vpack.c.b16 %v7538, %v7518
        %v8259 = vpack.c.b16 %v7539, %v7519
        %v8260 = vpack.c.b16 %v7540, %v7520
        %v8261 = vpack.c.b16 %v7561, %v7541
        %v8262 = vpack.c.b16 %v7562, %v7542
        %v8263 = vpack.c.b16 %v7563, %v7543
        %v8264 = vpack.c.b16 %v7564, %v7544
        %v8265 = vpack.c.b16 %v7565, %v7545
        %v8266 = vpack.c.b16 %v7566, %v7546
        %v8267 = vpack.c.b16 %v7567, %v7547
        %v8268 = vpack.c.b16 %v7568, %v7548
        %v8269 = vpack.c.b16 %v7569, %v7549
        %v8270 = vpack.c.b16 %v7570, %v7550
        %v8271 = vpack.c.b16 %v7571, %v7551
        %v8272 = vpack.c.b16 %v7572, %v7552
        %v8273 = vpack.c.b16 %v7573, %v7553
        %v8274 = vpack.c.b16 %v7574, %v7554
        %v8275 = vpack.c.b16 %v7575, %v7555
        %v8276 = vpack.c.b16 %v7576, %v7556
        %v8277 = vpack.c.b16 %v7577, %v7557
        %v8278 = vpack.c.b16 %v7578, %v7558
        %v8279 = vpack.c.b16 %v7579, %v7559
        %v8280 = vpack.c.b16 %v7580, %v7560
        %v8281 = vpack.c.b16 %v7601, %v7581
        %v8282 = vpack.c.b16 %v7602, %v7582
        %v8283 = vpack.c.b16 %v7603, %v7583
        %v8284 = vpack.c.b16 %v7604, %v7584
        %v8285 = vpack.c.b16 %v7605, %v7585
        %v8286 = vpack.c.b16 %v7606, %v7586
        %v8287 = vpack.c.b16 %v7607, %v7587
        %v8288 = vpack.c.b16 %v7608, %v7588
        %v8289 = vpack.c.b16 %v7609, %v7589
        %v8290 = vpack.c.b16 %v7610, %v7590
        %v8291 = vpack.c.b16 %v7611, %v7591
        %v8292 = vpack.c.b16 %v7612, %v7592
        %v8293 = vpack.c.b16 %v7613, %v7593
        %v8294 = vpack.c.b16 %v7614, %v7594
        %v8295 = vpack.c.b16 %v7615, %v7595
        %v8296 = vpack.c.b16 %v7616, %v7596
        %v8297 = vpack.c.b16 %v7617, %v7597
        %v8298 = vpack.c.b16 %v7618, %v7598
        %v8299 = vpack.c.b16 %v7619, %v7599
        %v8300 = vpack.c.b16 %v7620, %v7600
        %v8301 = vpack.c.b16 %v7641, %v7621
        %v8302 = vpack.c.b16 %v7642, %v7622
        %v8303 = vpack.c.b16 %v7643, %v7623
        %v8304 = vpack.c.b16 %v7644, %v7624
        %v8305 = vpack.c.b16 %v7645, %v7625
        %v8306 = vpack.c.b16 %v7646, %v7626
        %v8307 = vpack.c.b16 %v7647, %v7627
        %v8308 = vpack.c.b16 %v7648, %v7628
        %v8309 = vpack.c.b16 %v7649, %v7629
        %v8310 = vpack.c.b16 %v7650, %v7630
        %v8311 = vpack.c.b16 %v7651, %v7631
        %v8312 = vpack.c.b16 %v7652, %v7632
        %v8313 = vpack.c.b16 %v7653, %v7633
        %v8314 = vpack.c.b16 %v7654, %v7634
        %v8315 = vpack.c.b16 %v7655, %v7635
        %v8316 = vpack.c.b16 %v7656, %v7636
        %v8317 = vpack.c.b16 %v7657, %v7637
        %v8318 = vpack.c.b16 %v7658, %v7638
        %v8319 = vpack.c.b16 %v7659, %v7639
        %v8320 = vpack.c.b16 %v7660, %v7640
        %v8321 = vpack.c.b16 %v7681, %v7661
        %v8322 = vpack.c.b16 %v7682, %v7662
        %v8323 = vpack.c.b16 %v7683, %v7663
        %v8324 = vpack.c.b16 %v7684, %v7664
        %v8325 = vpack.c.b16 %v7685, %v7665
        %v8326 = vpack.c.b16 %v7686, %v7666
        %v8327 = vpack.c.b16 %v7687, %v7667
        %v8328 = vpack.c.b16 %v7688, %v7668
        %v8329 = vpack.c.b16 %v7689, %v7669
        %v8330 = vpack.c.b16 %v7690, %v7670
        %v8331 = vpack.c.b16 %v7691, %v7671
        %v8332 = vpack.c.b16 %v7692, %v7672
        %v8333 = vpack.c.b16 %v7693, %v7673
        %v8334 = vpack.c.b16 %v7694, %v7674
        %v8335 = vpack.c.b16 %v7695, %v7675
        %v8336 = vpack.c.b16 %v7696, %v7676
        %v8337 = vpack.c.b16 %v7697, %v7677
        %v8338 = vpack.c.b16 %v7698, %v7678
        %v8339 = vpack.c.b16 %v7699, %v7679
        %v8340 = vpack.c.b16 %v7700, %v7680
        %8981 = vmatprep.subr.bf16.mxu0 %v7702
        %8982 = vmatpush1.bf16.msra.mxu0 %v7701
        %8983 = vmatprep.subr.bf16.mxu0 %v7722
        %8984 = vmatpush1.bf16.msra.mxu0 %v7721
        %8985 = vmatprep.subr.bf16.mxu0 %v7742
        %8986 = vmatpush1.bf16.msra.mxu0 %v7741
        %8987 = vmatprep.subr.bf16.mxu0 %v7762
        %8988 = vmatpush1.bf16.msra.mxu0 %v7761
        %8989 = vmatprep.subr.bf16.mxu0 %v7782
        %8990 = vmatpush1.bf16.msra.mxu0 %v7781
        %8991 = vmatprep.subr.bf16.mxu0 %v7802
        %8992 = vmatpush1.bf16.msra.mxu0 %v7801
        %8993 = vmatprep.subr.bf16.mxu0 %v7822
        %8994 = vmatpush1.bf16.msra.mxu0 %v7821
        %8995 = vmatprep.subr.bf16.mxu0 %v7842
        %8996 = vmatpush1.bf16.msra.mxu0 %v7841
        %8997 = vmatprep.subr.bf16.mxu0 %v7862
        %8998 = vmatpush1.bf16.msra.mxu0 %v7861
        %8999 = vmatprep.subr.bf16.mxu0 %v7882
        %9000 = vmatpush1.bf16.msra.mxu0 %v7881
        %9001 = vmatprep.subr.bf16.mxu0 %v7902
        %9002 = vmatpush1.bf16.msra.mxu0 %v7901
        %9003 = vmatprep.subr.bf16.mxu0 %v7922
        %9004 = vmatpush1.bf16.msra.mxu0 %v7921
        %9005 = vmatprep.subr.bf16.mxu0 %v7942
        %9006 = vmatpush1.bf16.msra.mxu0 %v7941
        %9007 = vmatprep.subr.bf16.mxu0 %v7962
        %9008 = vmatpush1.bf16.msra.mxu0 %v7961
        %9009 = vmatprep.subr.bf16.mxu0 %v7982
        %9010 = vmatpush1.bf16.msra.mxu0 %v7981
        %9011 = vmatprep.subr.bf16.mxu0 %v8002
        %9012 = vmatpush1.bf16.msra.mxu0 %v8001
        %9013 = vmatprep.mubr.bf16.mxu0 %v5138
        %9014 = vmatmul.mubr.bf16.gmra.mrb[0].mxu0 %v5137
        %v9015 = vpop.f32.mrb[0].mxu0
        %v9016 = vadd.f32 0.0, %v9015
        %v9017 = vpop.f32.mrb[0].mxu0
        %v9018 = vadd.f32 0.0, %v9017
        %v9019 = vpop.f32.mrb[0].mxu0
        %v9020 = vpop.f32.mrb[0].mxu0
        %9021 = vdwg.mxu0
        %9022 = vmatprep.subr.bf16.mxu0 %v8022
        %9023 = vmatpush1.bf16.msra.mxu0 %v8021
        %9024 = vmatprep.subr.bf16.mxu0 %v8042
        %9025 = vmatpush1.bf16.msra.mxu0 %v8041
        %9026 = vmatprep.subr.bf16.mxu0 %v8062
        %9027 = vmatpush1.bf16.msra.mxu0 %v8061
        %9028 = vmatprep.subr.bf16.mxu0 %v8082
        %9029 = vmatpush1.bf16.msra.mxu0 %v8081
        %9030 = vmatprep.subr.bf16.mxu0 %v8102
        %9031 = vmatpush1.bf16.msra.mxu0 %v8101
        %9032 = vmatprep.subr.bf16.mxu0 %v8122
        %9033 = vmatpush1.bf16.msra.mxu0 %v8121
        %9034 = vmatprep.subr.bf16.mxu0 %v8142
        %9035 = vmatpush1.bf16.msra.mxu0 %v8141
        %9036 = vmatprep.subr.bf16.mxu0 %v8162
        %9037 = vmatpush1.bf16.msra.mxu0 %v8161
        %9038 = vmatprep.subr.bf16.mxu0 %v8182
        %9039 = vmatpush1.bf16.msra.mxu0 %v8181
        %9040 = vmatprep.subr.bf16.mxu0 %v8202
        %9041 = vmatpush1.bf16.msra.mxu0 %v8201
        %9042 = vmatprep.subr.bf16.mxu0 %v8222
        %9043 = vmatpush1.bf16.msra.mxu0 %v8221
        %9044 = vmatprep.subr.bf16.mxu0 %v8242
        %9045 = vmatpush1.bf16.msra.mxu0 %v8241
        %9046 = vmatprep.subr.bf16.mxu0 %v8262
        %9047 = vmatpush1.bf16.msra.mxu0 %v8261
        %9048 = vmatprep.subr.bf16.mxu0 %v8282
        %9049 = vmatpush1.bf16.msra.mxu0 %v8281
        %9050 = vmatprep.subr.bf16.mxu0 %v8302
        %9051 = vmatpush1.bf16.msra.mxu0 %v8301
        %9052 = vmatprep.subr.bf16.mxu0 %v8322
        %9053 = vmatpush1.bf16.msra.mxu0 %v8321
        %9054 = vmatprep.mubr.bf16.mxu0 %v5140
        %9055 = vmatmul.mubr.bf16.gmra.mrb[0].mxu0 %v5139
        %v9056 = vpop.f32.mrb[0].mxu0
        %v9057 = vadd.f32 %v9016, %v9056
        %v9058 = vpop.f32.mrb[0].mxu0
        %v9059 = vadd.f32 %v9018, %v9058
        %v9060 = vpop.f32.mrb[0].mxu0
        %v9061 = vpop.f32.mrb[0].mxu0
        %9062 = vdwg.mxu0
        %9063 = vmatprep.subr.bf16.mxu0 %v7704
        %9064 = vmatpush1.bf16.msra.mxu0 %v7703
        %9065 = vmatprep.subr.bf16.mxu0 %v7724
        %9066 = vmatpush1.bf16.msra.mxu0 %v7723
        %9067 = vmatprep.subr.bf16.mxu0 %v7744
        %9068 = vmatpush1.bf16.msra.mxu0 %v7743
        %9069 = vmatprep.subr.bf16.mxu0 %v7764
        %9070 = vmatpush1.bf16.msra.mxu0 %v7763
        %9071 = vmatprep.subr.bf16.mxu0 %v7784
        %9072 = vmatpush1.bf16.msra.mxu0 %v7783
        %9073 = vmatprep.subr.bf16.mxu0 %v7804
        %9074 = vmatpush1.bf16.msra.mxu0 %v7803
        %9075 = vmatprep.subr.bf16.mxu0 %v7824
        %9076 = vmatpush1.bf16.msra.mxu0 %v7823
        %9077 = vmatprep.subr.bf16.mxu0 %v7844
        %9078 = vmatpush1.bf16.msra.mxu0 %v7843
        %9079 = vmatprep.subr.bf16.mxu0 %v7864
        %9080 = vmatpush1.bf16.msra.mxu0 %v7863
        %9081 = vmatprep.subr.bf16.mxu0 %v7884
        %9082 = vmatpush1.bf16.msra.mxu0 %v7883
        %9083 = vmatprep.subr.bf16.mxu0 %v7904
        %9084 = vmatpush1.bf16.msra.mxu0 %v7903
        %9085 = vmatprep.subr.bf16.mxu0 %v7924
        %9086 = vmatpush1.bf16.msra.mxu0 %v7923
        %9087 = vmatprep.subr.bf16.mxu0 %v7944
        %9088 = vmatpush1.bf16.msra.mxu0 %v7943
        %9089 = vmatprep.subr.bf16.mxu0 %v7964
        %9090 = vmatpush1.bf16.msra.mxu0 %v7963
        %9091 = vmatprep.subr.bf16.mxu0 %v7984
        %9092 = vmatpush1.bf16.msra.mxu0 %v7983
        %9093 = vmatprep.subr.bf16.mxu0 %v8004
        %9094 = vmatpush1.bf16.msra.mxu0 %v8003
        %9095 = vmatprep.mubr.bf16.mxu0 %v5138
        %9096 = vmatmul.mubr.bf16.gmra.mrb[0].mxu0 %v5137
        %v9097 = vpop.f32.mrb[0].mxu0
        %v9098 = vadd.f32 0.0, %v9097
        %v9099 = vpop.f32.mrb[0].mxu0
        %v9100 = vadd.f32 0.0, %v9099
        %v9101 = vpop.f32.mrb[0].mxu0
        %v9102 = vpop.f32.mrb[0].mxu0
        %9103 = vdwg.mxu0
        %9104 = vmatprep.subr.bf16.mxu0 %v8024
        %9105 = vmatpush1.bf16.msra.mxu0 %v8023
        %9106 = vmatprep.subr.bf16.mxu0 %v8044
        %9107 = vmatpush1.bf16.msra.mxu0 %v8043
        %9108 = vmatprep.subr.bf16.mxu0 %v8064
        %9109 = vmatpush1.bf16.msra.mxu0 %v8063
        %9110 = vmatprep.subr.bf16.mxu0 %v8084
        %9111 = vmatpush1.bf16.msra.mxu0 %v8083
        %9112 = vmatprep.subr.bf16.mxu0 %v8104
        %9113 = vmatpush1.bf16.msra.mxu0 %v8103
        %9114 = vmatprep.subr.bf16.mxu0 %v8124
        %9115 = vmatpush1.bf16.msra.mxu0 %v8123
        %9116 = vmatprep.subr.bf16.mxu0 %v8144
        %9117 = vmatpush1.bf16.msra.mxu0 %v8143
        %9118 = vmatprep.subr.bf16.mxu0 %v8164
        %9119 = vmatpush1.bf16.msra.mxu0 %v8163
        %9120 = vmatprep.subr.bf16.mxu0 %v8184
        %9121 = vmatpush1.bf16.msra.mxu0 %v8183
        %9122 = vmatprep.subr.bf16.mxu0 %v8204
        %9123 = vmatpush1.bf16.msra.mxu0 %v8203
        %9124 = vmatprep.subr.bf16.mxu0 %v8224
        %9125 = vmatpush1.bf16.msra.mxu0 %v8223
        %9126 = vmatprep.subr.bf16.mxu0 %v8244
        %9127 = vmatpush1.bf16.msra.mxu0 %v8243
        %9128 = vmatprep.subr.bf16.mxu0 %v8264
        %9129 = vmatpush1.bf16.msra.mxu0 %v8263
        %9130 = vmatprep.subr.bf16.mxu0 %v8284
        %9131 = vmatpush1.bf16.msra.mxu0 %v8283
        %9132 = vmatprep.subr.bf16.mxu0 %v8304
        %9133 = vmatpush1.bf16.msra.mxu0 %v8303
        %9134 = vmatprep.subr.bf16.mxu0 %v8324
        %9135 = vmatpush1.bf16.msra.mxu0 %v8323
        %9136 = vmatprep.mubr.bf16.mxu0 %v5140
        %9137 = vmatmul.mubr.bf16.gmra.mrb[0].mxu0 %v5139
        %v9138 = vpop.f32.mrb[0].mxu0
        %v9139 = vadd.f32 %v9098, %v9138
        %v9140 = vpop.f32.mrb[0].mxu0
        %v9141 = vadd.f32 %v9100, %v9140
        %v9142 = vpop.f32.mrb[0].mxu0
        %v9143 = vpop.f32.mrb[0].mxu0
        %9144 = vdwg.mxu0
        %9145 = vmatprep.subr.bf16.mxu0 %v7706
        %9146 = vmatpush1.bf16.msra.mxu0 %v7705
        %9147 = vmatprep.subr.bf16.mxu0 %v7726
        %9148 = vmatpush1.bf16.msra.mxu0 %v7725
        %9149 = vmatprep.subr.bf16.mxu0 %v7746
        %9150 = vmatpush1.bf16.msra.mxu0 %v7745
        %9151 = vmatprep.subr.bf16.mxu0 %v7766
        %9152 = vmatpush1.bf16.msra.mxu0 %v7765
        %9153 = vmatprep.subr.bf16.mxu0 %v7786
        %9154 = vmatpush1.bf16.msra.mxu0 %v7785
        %9155 = vmatprep.subr.bf16.mxu0 %v7806
        %9156 = vmatpush1.bf16.msra.mxu0 %v7805
        %9157 = vmatprep.subr.bf16.mxu0 %v7826
        %9158 = vmatpush1.bf16.msra.mxu0 %v7825
        %9159 = vmatprep.subr.bf16.mxu0 %v7846
        %9160 = vmatpush1.bf16.msra.mxu0 %v7845
        %9161 = vmatprep.subr.bf16.mxu0 %v7866
        %9162 = vmatpush1.bf16.msra.mxu0 %v7865
        %9163 = vmatprep.subr.bf16.mxu0 %v7886
        %9164 = vmatpush1.bf16.msra.mxu0 %v7885
        %9165 = vmatprep.subr.bf16.mxu0 %v7906
        %9166 = vmatpush1.bf16.msra.mxu0 %v7905
        %9167 = vmatprep.subr.bf16.mxu0 %v7926
        %9168 = vmatpush1.bf16.msra.mxu0 %v7925
        %9169 = vmatprep.subr.bf16.mxu0 %v7946
        %9170 = vmatpush1.bf16.msra.mxu0 %v7945
        %9171 = vmatprep.subr.bf16.mxu0 %v7966
        %9172 = vmatpush1.bf16.msra.mxu0 %v7965
        %9173 = vmatprep.subr.bf16.mxu0 %v7986
        %9174 = vmatpush1.bf16.msra.mxu0 %v7985
        %9175 = vmatprep.subr.bf16.mxu0 %v8006
        %9176 = vmatpush1.bf16.msra.mxu0 %v8005
        %9177 = vmatprep.mubr.bf16.mxu0 %v5138
        %9178 = vmatmul.mubr.bf16.gmra.mrb[0].mxu0 %v5137
        %v9179 = vpop.f32.mrb[0].mxu0
        %v9180 = vadd.f32 0.0, %v9179
        %v9181 = vpop.f32.mrb[0].mxu0
        %v9182 = vadd.f32 0.0, %v9181
        %v9183 = vpop.f32.mrb[0].mxu0
        %v9184 = vpop.f32.mrb[0].mxu0
        %9185 = vdwg.mxu0
        %9186 = vmatprep.subr.bf16.mxu0 %v8026
        %9187 = vmatpush1.bf16.msra.mxu0 %v8025
        %9188 = vmatprep.subr.bf16.mxu0 %v8046
        %9189 = vmatpush1.bf16.msra.mxu0 %v8045
        %9190 = vmatprep.subr.bf16.mxu0 %v8066
        %9191 = vmatpush1.bf16.msra.mxu0 %v8065
        %9192 = vmatprep.subr.bf16.mxu0 %v8086
        %9193 = vmatpush1.bf16.msra.mxu0 %v8085
        %9194 = vmatprep.subr.bf16.mxu0 %v8106
        %9195 = vmatpush1.bf16.msra.mxu0 %v8105
        %9196 = vmatprep.subr.bf16.mxu0 %v8126
        %9197 = vmatpush1.bf16.msra.mxu0 %v8125
        %9198 = vmatprep.subr.bf16.mxu0 %v8146
        %9199 = vmatpush1.bf16.msra.mxu0 %v8145
        %9200 = vmatprep.subr.bf16.mxu0 %v8166
        %9201 = vmatpush1.bf16.msra.mxu0 %v8165
        %9202 = vmatprep.subr.bf16.mxu0 %v8186
        %9203 = vmatpush1.bf16.msra.mxu0 %v8185
        %9204 = vmatprep.subr.bf16.mxu0 %v8206
        %9205 = vmatpush1.bf16.msra.mxu0 %v8205
        %9206 = vmatprep.subr.bf16.mxu0 %v8226
        %9207 = vmatpush1.bf16.msra.mxu0 %v8225
        %9208 = vmatprep.subr.bf16.mxu0 %v8246
        %9209 = vmatpush1.bf16.msra.mxu0 %v8245
        %9210 = vmatprep.subr.bf16.mxu0 %v8266
        %9211 = vmatpush1.bf16.msra.mxu0 %v8265
        %9212 = vmatprep.subr.bf16.mxu0 %v8286
        %9213 = vmatpush1.bf16.msra.mxu0 %v8285
        %9214 = vmatprep.subr.bf16.mxu0 %v8306
        %9215 = vmatpush1.bf16.msra.mxu0 %v8305
        %9216 = vmatprep.subr.bf16.mxu0 %v8326
        %9217 = vmatpush1.bf16.msra.mxu0 %v8325
        %9218 = vmatprep.mubr.bf16.mxu0 %v5140
        %9219 = vmatmul.mubr.bf16.gmra.mrb[0].mxu0 %v5139
        %v9220 = vpop.f32.mrb[0].mxu0
        %v9221 = vadd.f32 %v9180, %v9220
        %v9222 = vpop.f32.mrb[0].mxu0
        %v9223 = vadd.f32 %v9182, %v9222
        %v9224 = vpop.f32.mrb[0].mxu0
        %v9225 = vpop.f32.mrb[0].mxu0
        %9226 = vdwg.mxu0
        %9227 = vmatprep.subr.bf16.mxu0 %v7708
        %9228 = vmatpush1.bf16.msra.mxu0 %v7707
        %9229 = vmatprep.subr.bf16.mxu0 %v7728
        %9230 = vmatpush1.bf16.msra.mxu0 %v7727
        %9231 = vmatprep.subr.bf16.mxu0 %v7748
        %9232 = vmatpush1.bf16.msra.mxu0 %v7747
        %9233 = vmatprep.subr.bf16.mxu0 %v7768
        %9234 = vmatpush1.bf16.msra.mxu0 %v7767
        %9235 = vmatprep.subr.bf16.mxu0 %v7788
        %9236 = vmatpush1.bf16.msra.mxu0 %v7787
        %9237 = vmatprep.subr.bf16.mxu0 %v7808
        %9238 = vmatpush1.bf16.msra.mxu0 %v7807
        %9239 = vmatprep.subr.bf16.mxu0 %v7828
        %9240 = vmatpush1.bf16.msra.mxu0 %v7827
        %9241 = vmatprep.subr.bf16.mxu0 %v7848
        %9242 = vmatpush1.bf16.msra.mxu0 %v7847
        %9243 = vmatprep.subr.bf16.mxu0 %v7868
        %9244 = vmatpush1.bf16.msra.mxu0 %v7867
        %9245 = vmatprep.subr.bf16.mxu0 %v7888
        %9246 = vmatpush1.bf16.msra.mxu0 %v7887
        %9247 = vmatprep.subr.bf16.mxu0 %v7908
        %9248 = vmatpush1.bf16.msra.mxu0 %v7907
        %9249 = vmatprep.subr.bf16.mxu0 %v7928
        %9250 = vmatpush1.bf16.msra.mxu0 %v7927
        %9251 = vmatprep.subr.bf16.mxu0 %v7948
        %9252 = vmatpush1.bf16.msra.mxu0 %v7947
        %9253 = vmatprep.subr.bf16.mxu0 %v7968
        %9254 = vmatpush1.bf16.msra.mxu0 %v7967
        %9255 = vmatprep.subr.bf16.mxu0 %v7988
        %9256 = vmatpush1.bf16.msra.mxu0 %v7987
        %9257 = vmatprep.subr.bf16.mxu0 %v8008
        %9258 = vmatpush1.bf16.msra.mxu0 %v8007
        %9259 = vmatprep.mubr.bf16.mxu0 %v5138
        %9260 = vmatmul.mubr.bf16.gmra.mrb[0].mxu0 %v5137
        %v9261 = vpop.f32.mrb[0].mxu0
        %v9262 = vadd.f32 0.0, %v9261
        %v9263 = vpop.f32.mrb[0].mxu0
        %v9264 = vadd.f32 0.0, %v9263
        %v9265 = vpop.f32.mrb[0].mxu0
        %v9266 = vpop.f32.mrb[0].mxu0
        %9267 = vdwg.mxu0
        %9268 = vmatprep.subr.bf16.mxu0 %v8028
        %9269 = vmatpush1.bf16.msra.mxu0 %v8027
        %9270 = vmatprep.subr.bf16.mxu0 %v8048
        %9271 = vmatpush1.bf16.msra.mxu0 %v8047
        %9272 = vmatprep.subr.bf16.mxu0 %v8068
        %9273 = vmatpush1.bf16.msra.mxu0 %v8067
        %9274 = vmatprep.subr.bf16.mxu0 %v8088
        %9275 = vmatpush1.bf16.msra.mxu0 %v8087
        %9276 = vmatprep.subr.bf16.mxu0 %v8108
        %9277 = vmatpush1.bf16.msra.mxu0 %v8107
        %9278 = vmatprep.subr.bf16.mxu0 %v8128
        %9279 = vmatpush1.bf16.msra.mxu0 %v8127
        %9280 = vmatprep.subr.bf16.mxu0 %v8148
        %9281 = vmatpush1.bf16.msra.mxu0 %v8147
        %9282 = vmatprep.subr.bf16.mxu0 %v8168
        %9283 = vmatpush1.bf16.msra.mxu0 %v8167
        %9284 = vmatprep.subr.bf16.mxu0 %v8188
        %9285 = vmatpush1.bf16.msra.mxu0 %v8187
        %9286 = vmatprep.subr.bf16.mxu0 %v8208
        %9287 = vmatpush1.bf16.msra.mxu0 %v8207
        %9288 = vmatprep.subr.bf16.mxu0 %v8228
        %9289 = vmatpush1.bf16.msra.mxu0 %v8227
        %9290 = vmatprep.subr.bf16.mxu0 %v8248
        %9291 = vmatpush1.bf16.msra.mxu0 %v8247
        %9292 = vmatprep.subr.bf16.mxu0 %v8268
        %9293 = vmatpush1.bf16.msra.mxu0 %v8267
        %9294 = vmatprep.subr.bf16.mxu0 %v8288
        %9295 = vmatpush1.bf16.msra.mxu0 %v8287
        %9296 = vmatprep.subr.bf16.mxu0 %v8308
        %9297 = vmatpush1.bf16.msra.mxu0 %v8307
        %9298 = vmatprep.subr.bf16.mxu0 %v8328
        %9299 = vmatpush1.bf16.msra.mxu0 %v8327
        %9300 = vmatprep.mubr.bf16.mxu0 %v5140
        %9301 = vmatmul.mubr.bf16.gmra.mrb[0].mxu0 %v5139
        %v9302 = vpop.f32.mrb[0].mxu0
        %v9303 = vadd.f32 %v9262, %v9302
        %v9304 = vpop.f32.mrb[0].mxu0
        %v9305 = vadd.f32 %v9264, %v9304
        %v9306 = vpop.f32.mrb[0].mxu0
        %v9307 = vpop.f32.mrb[0].mxu0
        %9308 = vdwg.mxu0
        %9309 = vmatprep.subr.bf16.mxu0 %v7710
        %9310 = vmatpush1.bf16.msra.mxu0 %v7709
        %9311 = vmatprep.subr.bf16.mxu0 %v7730
        %9312 = vmatpush1.bf16.msra.mxu0 %v7729
        %9313 = vmatprep.subr.bf16.mxu0 %v7750
        %9314 = vmatpush1.bf16.msra.mxu0 %v7749
        %9315 = vmatprep.subr.bf16.mxu0 %v7770
        %9316 = vmatpush1.bf16.msra.mxu0 %v7769
        %9317 = vmatprep.subr.bf16.mxu0 %v7790
        %9318 = vmatpush1.bf16.msra.mxu0 %v7789
        %9319 = vmatprep.subr.bf16.mxu0 %v7810
        %9320 = vmatpush1.bf16.msra.mxu0 %v7809
        %9321 = vmatprep.subr.bf16.mxu0 %v7830
        %9322 = vmatpush1.bf16.msra.mxu0 %v7829
        %9323 = vmatprep.subr.bf16.mxu0 %v7850
        %9324 = vmatpush1.bf16.msra.mxu0 %v7849
        %9325 = vmatprep.subr.bf16.mxu0 %v7870
        %9326 = vmatpush1.bf16.msra.mxu0 %v7869
        %9327 = vmatprep.subr.bf16.mxu0 %v7890
        %9328 = vmatpush1.bf16.msra.mxu0 %v7889
        %9329 = vmatprep.subr.bf16.mxu0 %v7910
        %9330 = vmatpush1.bf16.msra.mxu0 %v7909
        %9331 = vmatprep.subr.bf16.mxu0 %v7930
        %9332 = vmatpush1.bf16.msra.mxu0 %v7929
        %9333 = vmatprep.subr.bf16.mxu0 %v7950
        %9334 = vmatpush1.bf16.msra.mxu0 %v7949
        %9335 = vmatprep.subr.bf16.mxu0 %v7970
        %9336 = vmatpush1.bf16.msra.mxu0 %v7969
        %9337 = vmatprep.subr.bf16.mxu0 %v7990
        %9338 = vmatpush1.bf16.msra.mxu0 %v7989
        %9339 = vmatprep.subr.bf16.mxu0 %v8010
        %9340 = vmatpush1.bf16.msra.mxu0 %v8009
        %9341 = vmatprep.mubr.bf16.mxu0 %v5138
        %9342 = vmatmul.mubr.bf16.gmra.mrb[0].mxu0 %v5137
        %v9343 = vpop.f32.mrb[0].mxu0
        %v9344 = vadd.f32 0.0, %v9343
        %v9345 = vpop.f32.mrb[0].mxu0
        %v9346 = vadd.f32 0.0, %v9345
        %v9347 = vpop.f32.mrb[0].mxu0
        %v9348 = vpop.f32.mrb[0].mxu0
        %9349 = vdwg.mxu0
        %9350 = vmatprep.subr.bf16.mxu0 %v8030
        %9351 = vmatpush1.bf16.msra.mxu0 %v8029
        %9352 = vmatprep.subr.bf16.mxu0 %v8050
        %9353 = vmatpush1.bf16.msra.mxu0 %v8049
        %9354 = vmatprep.subr.bf16.mxu0 %v8070
        %9355 = vmatpush1.bf16.msra.mxu0 %v8069
        %9356 = vmatprep.subr.bf16.mxu0 %v8090
        %9357 = vmatpush1.bf16.msra.mxu0 %v8089
        %9358 = vmatprep.subr.bf16.mxu0 %v8110
        %9359 = vmatpush1.bf16.msra.mxu0 %v8109
        %9360 = vmatprep.subr.bf16.mxu0 %v8130
        %9361 = vmatpush1.bf16.msra.mxu0 %v8129
        %9362 = vmatprep.subr.bf16.mxu0 %v8150
        %9363 = vmatpush1.bf16.msra.mxu0 %v8149
        %9364 = vmatprep.subr.bf16.mxu0 %v8170
        %9365 = vmatpush1.bf16.msra.mxu0 %v8169
        %9366 = vmatprep.subr.bf16.mxu0 %v8190
        %9367 = vmatpush1.bf16.msra.mxu0 %v8189
        %9368 = vmatprep.subr.bf16.mxu0 %v8210
        %9369 = vmatpush1.bf16.msra.mxu0 %v8209
        %9370 = vmatprep.subr.bf16.mxu0 %v8230
        %9371 = vmatpush1.bf16.msra.mxu0 %v8229
        %9372 = vmatprep.subr.bf16.mxu0 %v8250
        %9373 = vmatpush1.bf16.msra.mxu0 %v8249
        %9374 = vmatprep.subr.bf16.mxu0 %v8270
        %9375 = vmatpush1.bf16.msra.mxu0 %v8269
        %9376 = vmatprep.subr.bf16.mxu0 %v8290
        %9377 = vmatpush1.bf16.msra.mxu0 %v8289
        %9378 = vmatprep.subr.bf16.mxu0 %v8310
        %9379 = vmatpush1.bf16.msra.mxu0 %v8309
        %9380 = vmatprep.subr.bf16.mxu0 %v8330
        %9381 = vmatpush1.bf16.msra.mxu0 %v8329
        %9382 = vmatprep.mubr.bf16.mxu0 %v5140
        %9383 = vmatmul.mubr.bf16.gmra.mrb[0].mxu0 %v5139
        %v9384 = vpop.f32.mrb[0].mxu0
        %v9385 = vadd.f32 %v9344, %v9384
        %v9386 = vpop.f32.mrb[0].mxu0
        %v9387 = vadd.f32 %v9346, %v9386
        %v9388 = vpop.f32.mrb[0].mxu0
        %v9389 = vpop.f32.mrb[0].mxu0
        %9390 = vdwg.mxu0
        %9391 = vmatprep.subr.bf16.mxu0 %v7712
        %9392 = vmatpush1.bf16.msra.mxu0 %v7711
        %9393 = vmatprep.subr.bf16.mxu0 %v7732
        %9394 = vmatpush1.bf16.msra.mxu0 %v7731
        %9395 = vmatprep.subr.bf16.mxu0 %v7752
        %9396 = vmatpush1.bf16.msra.mxu0 %v7751
        %9397 = vmatprep.subr.bf16.mxu0 %v7772
        %9398 = vmatpush1.bf16.msra.mxu0 %v7771
        %9399 = vmatprep.subr.bf16.mxu0 %v7792
        %9400 = vmatpush1.bf16.msra.mxu0 %v7791
        %9401 = vmatprep.subr.bf16.mxu0 %v7812
        %9402 = vmatpush1.bf16.msra.mxu0 %v7811
        %9403 = vmatprep.subr.bf16.mxu0 %v7832
        %9404 = vmatpush1.bf16.msra.mxu0 %v7831
        %9405 = vmatprep.subr.bf16.mxu0 %v7852
        %9406 = vmatpush1.bf16.msra.mxu0 %v7851
        %9407 = vmatprep.subr.bf16.mxu0 %v7872
        %9408 = vmatpush1.bf16.msra.mxu0 %v7871
        %9409 = vmatprep.subr.bf16.mxu0 %v7892
        %9410 = vmatpush1.bf16.msra.mxu0 %v7891
        %9411 = vmatprep.subr.bf16.mxu0 %v7912
        %9412 = vmatpush1.bf16.msra.mxu0 %v7911
        %9413 = vmatprep.subr.bf16.mxu0 %v7932
        %9414 = vmatpush1.bf16.msra.mxu0 %v7931
        %9415 = vmatprep.subr.bf16.mxu0 %v7952
        %9416 = vmatpush1.bf16.msra.mxu0 %v7951
        %9417 = vmatprep.subr.bf16.mxu0 %v7972
        %9418 = vmatpush1.bf16.msra.mxu0 %v7971
        %9419 = vmatprep.subr.bf16.mxu0 %v7992
        %9420 = vmatpush1.bf16.msra.mxu0 %v7991
        %9421 = vmatprep.subr.bf16.mxu0 %v8012
        %9422 = vmatpush1.bf16.msra.mxu0 %v8011
        %9423 = vmatprep.mubr.bf16.mxu0 %v5138
        %9424 = vmatmul.mubr.bf16.gmra.mrb[0].mxu0 %v5137
        %v9425 = vpop.f32.mrb[0].mxu0
        %v9426 = vadd.f32 0.0, %v9425
        %v9427 = vpop.f32.mrb[0].mxu0
        %v9428 = vadd.f32 0.0, %v9427
        %v9429 = vpop.f32.mrb[0].mxu0
        %v9430 = vpop.f32.mrb[0].mxu0
        %9431 = vdwg.mxu0
        %9432 = vmatprep.subr.bf16.mxu0 %v8032
        %9433 = vmatpush1.bf16.msra.mxu0 %v8031
        %9434 = vmatprep.subr.bf16.mxu0 %v8052
        %9435 = vmatpush1.bf16.msra.mxu0 %v8051
        %9436 = vmatprep.subr.bf16.mxu0 %v8072
        %9437 = vmatpush1.bf16.msra.mxu0 %v8071
        %9438 = vmatprep.subr.bf16.mxu0 %v8092
        %9439 = vmatpush1.bf16.msra.mxu0 %v8091
        %9440 = vmatprep.subr.bf16.mxu0 %v8112
        %9441 = vmatpush1.bf16.msra.mxu0 %v8111
        %9442 = vmatprep.subr.bf16.mxu0 %v8132
        %9443 = vmatpush1.bf16.msra.mxu0 %v8131
        %9444 = vmatprep.subr.bf16.mxu0 %v8152
        %9445 = vmatpush1.bf16.msra.mxu0 %v8151
        %9446 = vmatprep.subr.bf16.mxu0 %v8172
        %9447 = vmatpush1.bf16.msra.mxu0 %v8171
        %9448 = vmatprep.subr.bf16.mxu0 %v8192
        %9449 = vmatpush1.bf16.msra.mxu0 %v8191
        %9450 = vmatprep.subr.bf16.mxu0 %v8212
        %9451 = vmatpush1.bf16.msra.mxu0 %v8211
        %9452 = vmatprep.subr.bf16.mxu0 %v8232
        %9453 = vmatpush1.bf16.msra.mxu0 %v8231
        %9454 = vmatprep.subr.bf16.mxu0 %v8252
        %9455 = vmatpush1.bf16.msra.mxu0 %v8251
        %9456 = vmatprep.subr.bf16.mxu0 %v8272
        %9457 = vmatpush1.bf16.msra.mxu0 %v8271
        %9458 = vmatprep.subr.bf16.mxu0 %v8292
        %9459 = vmatpush1.bf16.msra.mxu0 %v8291
        %9460 = vmatprep.subr.bf16.mxu0 %v8312
        %9461 = vmatpush1.bf16.msra.mxu0 %v8311
        %9462 = vmatprep.subr.bf16.mxu0 %v8332
        %9463 = vmatpush1.bf16.msra.mxu0 %v8331
        %9464 = vmatprep.mubr.bf16.mxu0 %v5140
        %9465 = vmatmul.mubr.bf16.gmra.mrb[0].mxu0 %v5139
        %v9466 = vpop.f32.mrb[0].mxu0
        %v9467 = vadd.f32 %v9426, %v9466
        %v9468 = vpop.f32.mrb[0].mxu0
        %v9469 = vadd.f32 %v9428, %v9468
        %v9470 = vpop.f32.mrb[0].mxu0
        %v9471 = vpop.f32.mrb[0].mxu0
        %9472 = vdwg.mxu0
        %9473 = vmatprep.subr.bf16.mxu0 %v7714
        %9474 = vmatpush1.bf16.msra.mxu0 %v7713
        %9475 = vmatprep.subr.bf16.mxu0 %v7734
        %9476 = vmatpush1.bf16.msra.mxu0 %v7733
        %9477 = vmatprep.subr.bf16.mxu0 %v7754
        %9478 = vmatpush1.bf16.msra.mxu0 %v7753
        %9479 = vmatprep.subr.bf16.mxu0 %v7774
        %9480 = vmatpush1.bf16.msra.mxu0 %v7773
        %9481 = vmatprep.subr.bf16.mxu0 %v7794
        %9482 = vmatpush1.bf16.msra.mxu0 %v7793
        %9483 = vmatprep.subr.bf16.mxu0 %v7814
        %9484 = vmatpush1.bf16.msra.mxu0 %v7813
        %9485 = vmatprep.subr.bf16.mxu0 %v7834
        %9486 = vmatpush1.bf16.msra.mxu0 %v7833
        %9487 = vmatprep.subr.bf16.mxu0 %v7854
        %9488 = vmatpush1.bf16.msra.mxu0 %v7853
        %9489 = vmatprep.subr.bf16.mxu0 %v7874
        %9490 = vmatpush1.bf16.msra.mxu0 %v7873
        %9491 = vmatprep.subr.bf16.mxu0 %v7894
        %9492 = vmatpush1.bf16.msra.mxu0 %v7893
        %9493 = vmatprep.subr.bf16.mxu0 %v7914
        %9494 = vmatpush1.bf16.msra.mxu0 %v7913
        %9495 = vmatprep.subr.bf16.mxu0 %v7934
        %9496 = vmatpush1.bf16.msra.mxu0 %v7933
        %9497 = vmatprep.subr.bf16.mxu0 %v7954
        %9498 = vmatpush1.bf16.msra.mxu0 %v7953
        %9499 = vmatprep.subr.bf16.mxu0 %v7974
        %9500 = vmatpush1.bf16.msra.mxu0 %v7973
        %9501 = vmatprep.subr.bf16.mxu0 %v7994
        %9502 = vmatpush1.bf16.msra.mxu0 %v7993
        %9503 = vmatprep.subr.bf16.mxu0 %v8014
        %9504 = vmatpush1.bf16.msra.mxu0 %v8013
        %9505 = vmatprep.mubr.bf16.mxu0 %v5138
        %9506 = vmatmul.mubr.bf16.gmra.mrb[0].mxu0 %v5137
        %v9507 = vpop.f32.mrb[0].mxu0
        %v9508 = vadd.f32 0.0, %v9507
        %v9509 = vpop.f32.mrb[0].mxu0
        %v9510 = vadd.f32 0.0, %v9509
        %v9511 = vpop.f32.mrb[0].mxu0
        %v9512 = vpop.f32.mrb[0].mxu0
        %9513 = vdwg.mxu0
        %9514 = vmatprep.subr.bf16.mxu0 %v8034
        %9515 = vmatpush1.bf16.msra.mxu0 %v8033
        %9516 = vmatprep.subr.bf16.mxu0 %v8054
        %9517 = vmatpush1.bf16.msra.mxu0 %v8053
        %9518 = vmatprep.subr.bf16.mxu0 %v8074
        %9519 = vmatpush1.bf16.msra.mxu0 %v8073
        %9520 = vmatprep.subr.bf16.mxu0 %v8094
        %9521 = vmatpush1.bf16.msra.mxu0 %v8093
        %9522 = vmatprep.subr.bf16.mxu0 %v8114
        %9523 = vmatpush1.bf16.msra.mxu0 %v8113
        %9524 = vmatprep.subr.bf16.mxu0 %v8134
        %9525 = vmatpush1.bf16.msra.mxu0 %v8133
        %9526 = vmatprep.subr.bf16.mxu0 %v8154
        %9527 = vmatpush1.bf16.msra.mxu0 %v8153
        %9528 = vmatprep.subr.bf16.mxu0 %v8174
        %9529 = vmatpush1.bf16.msra.mxu0 %v8173
        %9530 = vmatprep.subr.bf16.mxu0 %v8194
        %9531 = vmatpush1.bf16.msra.mxu0 %v8193
        %9532 = vmatprep.subr.bf16.mxu0 %v8214
        %9533 = vmatpush1.bf16.msra.mxu0 %v8213
        %9534 = vmatprep.subr.bf16.mxu0 %v8234
        %9535 = vmatpush1.bf16.msra.mxu0 %v8233
        %9536 = vmatprep.subr.bf16.mxu0 %v8254
        %9537 = vmatpush1.bf16.msra.mxu0 %v8253
        %9538 = vmatprep.subr.bf16.mxu0 %v8274
        %9539 = vmatpush1.bf16.msra.mxu0 %v8273
        %9540 = vmatprep.subr.bf16.mxu0 %v8294
        %9541 = vmatpush1.bf16.msra.mxu0 %v8293
        %9542 = vmatprep.subr.bf16.mxu0 %v8314
        %9543 = vmatpush1.bf16.msra.mxu0 %v8313
        %9544 = vmatprep.subr.bf16.mxu0 %v8334
        %9545 = vmatpush1.bf16.msra.mxu0 %v8333
        %9546 = vmatprep.mubr.bf16.mxu0 %v5140
        %9547 = vmatmul.mubr.bf16.gmra.mrb[0].mxu0 %v5139
        %v9548 = vpop.f32.mrb[0].mxu0
        %v9549 = vadd.f32 %v9508, %v9548
        %v9550 = vpop.f32.mrb[0].mxu0
        %v9551 = vadd.f32 %v9510, %v9550
        %v9552 = vpop.f32.mrb[0].mxu0
        %v9553 = vpop.f32.mrb[0].mxu0
        %9554 = vdwg.mxu0
        %9555 = vmatprep.subr.bf16.mxu0 %v7716
        %9556 = vmatpush1.bf16.msra.mxu0 %v7715
        %9557 = vmatprep.subr.bf16.mxu0 %v7736
        %9558 = vmatpush1.bf16.msra.mxu0 %v7735
        %9559 = vmatprep.subr.bf16.mxu0 %v7756
        %9560 = vmatpush1.bf16.msra.mxu0 %v7755
        %9561 = vmatprep.subr.bf16.mxu0 %v7776
        %9562 = vmatpush1.bf16.msra.mxu0 %v7775
        %9563 = vmatprep.subr.bf16.mxu0 %v7796
        %9564 = vmatpush1.bf16.msra.mxu0 %v7795
        %9565 = vmatprep.subr.bf16.mxu0 %v7816
        %9566 = vmatpush1.bf16.msra.mxu0 %v7815
        %9567 = vmatprep.subr.bf16.mxu0 %v7836
        %9568 = vmatpush1.bf16.msra.mxu0 %v7835
        %9569 = vmatprep.subr.bf16.mxu0 %v7856
        %9570 = vmatpush1.bf16.msra.mxu0 %v7855
        %9571 = vmatprep.subr.bf16.mxu0 %v7876
        %9572 = vmatpush1.bf16.msra.mxu0 %v7875
        %9573 = vmatprep.subr.bf16.mxu0 %v7896
        %9574 = vmatpush1.bf16.msra.mxu0 %v7895
        %9575 = vmatprep.subr.bf16.mxu0 %v7916
        %9576 = vmatpush1.bf16.msra.mxu0 %v7915
        %9577 = vmatprep.subr.bf16.mxu0 %v7936
        %9578 = vmatpush1.bf16.msra.mxu0 %v7935
        %9579 = vmatprep.subr.bf16.mxu0 %v7956
        %9580 = vmatpush1.bf16.msra.mxu0 %v7955
        %9581 = vmatprep.subr.bf16.mxu0 %v7976
        %9582 = vmatpush1.bf16.msra.mxu0 %v7975
        %9583 = vmatprep.subr.bf16.mxu0 %v7996
        %9584 = vmatpush1.bf16.msra.mxu0 %v7995
        %9585 = vmatprep.subr.bf16.mxu0 %v8016
        %9586 = vmatpush1.bf16.msra.mxu0 %v8015
        %9587 = vmatprep.mubr.bf16.mxu0 %v5138
        %9588 = vmatmul.mubr.bf16.gmra.mrb[0].mxu0 %v5137
        %v9589 = vpop.f32.mrb[0].mxu0
        %v9590 = vadd.f32 0.0, %v9589
        %v9591 = vpop.f32.mrb[0].mxu0
        %v9592 = vadd.f32 0.0, %v9591
        %v9593 = vpop.f32.mrb[0].mxu0
        %v9594 = vpop.f32.mrb[0].mxu0
        %9595 = vdwg.mxu0
        %9596 = vmatprep.subr.bf16.mxu0 %v8036
        %9597 = vmatpush1.bf16.msra.mxu0 %v8035
        %9598 = vmatprep.subr.bf16.mxu0 %v8056
        %9599 = vmatpush1.bf16.msra.mxu0 %v8055
        %9600 = vmatprep.subr.bf16.mxu0 %v8076
        %9601 = vmatpush1.bf16.msra.mxu0 %v8075
        %9602 = vmatprep.subr.bf16.mxu0 %v8096
        %9603 = vmatpush1.bf16.msra.mxu0 %v8095
        %9604 = vmatprep.subr.bf16.mxu0 %v8116
        %9605 = vmatpush1.bf16.msra.mxu0 %v8115
        %9606 = vmatprep.subr.bf16.mxu0 %v8136
        %9607 = vmatpush1.bf16.msra.mxu0 %v8135
        %9608 = vmatprep.subr.bf16.mxu0 %v8156
        %9609 = vmatpush1.bf16.msra.mxu0 %v8155
        %9610 = vmatprep.subr.bf16.mxu0 %v8176
        %9611 = vmatpush1.bf16.msra.mxu0 %v8175
        %9612 = vmatprep.subr.bf16.mxu0 %v8196
        %9613 = vmatpush1.bf16.msra.mxu0 %v8195
        %9614 = vmatprep.subr.bf16.mxu0 %v8216
        %9615 = vmatpush1.bf16.msra.mxu0 %v8215
        %9616 = vmatprep.subr.bf16.mxu0 %v8236
        %9617 = vmatpush1.bf16.msra.mxu0 %v8235
        %9618 = vmatprep.subr.bf16.mxu0 %v8256
        %9619 = vmatpush1.bf16.msra.mxu0 %v8255
        %9620 = vmatprep.subr.bf16.mxu0 %v8276
        %9621 = vmatpush1.bf16.msra.mxu0 %v8275
        %9622 = vmatprep.subr.bf16.mxu0 %v8296
        %9623 = vmatpush1.bf16.msra.mxu0 %v8295
        %9624 = vmatprep.subr.bf16.mxu0 %v8316
        %9625 = vmatpush1.bf16.msra.mxu0 %v8315
        %9626 = vmatprep.subr.bf16.mxu0 %v8336
        %9627 = vmatpush1.bf16.msra.mxu0 %v8335
        %9628 = vmatprep.mubr.bf16.mxu0 %v5140
        %9629 = vmatmul.mubr.bf16.gmra.mrb[0].mxu0 %v5139
        %v9630 = vpop.f32.mrb[0].mxu0
        %v9631 = vadd.f32 %v9590, %v9630
        %v9632 = vpop.f32.mrb[0].mxu0
        %v9633 = vadd.f32 %v9592, %v9632
        %v9634 = vpop.f32.mrb[0].mxu0
        %v9635 = vpop.f32.mrb[0].mxu0
        %9636 = vdwg.mxu0
        %9637 = vmatprep.subr.bf16.mxu0 %v7718
        %9638 = vmatpush1.bf16.msra.mxu0 %v7717
        %9639 = vmatprep.subr.bf16.mxu0 %v7738
        %9640 = vmatpush1.bf16.msra.mxu0 %v7737
        %9641 = vmatprep.subr.bf16.mxu0 %v7758
        %9642 = vmatpush1.bf16.msra.mxu0 %v7757
        %9643 = vmatprep.subr.bf16.mxu0 %v7778
        %9644 = vmatpush1.bf16.msra.mxu0 %v7777
        %9645 = vmatprep.subr.bf16.mxu0 %v7798
        %9646 = vmatpush1.bf16.msra.mxu0 %v7797
        %9647 = vmatprep.subr.bf16.mxu0 %v7818
        %9648 = vmatpush1.bf16.msra.mxu0 %v7817
        %9649 = vmatprep.subr.bf16.mxu0 %v7838
        %9650 = vmatpush1.bf16.msra.mxu0 %v7837
        %9651 = vmatprep.subr.bf16.mxu0 %v7858
        %9652 = vmatpush1.bf16.msra.mxu0 %v7857
        %9653 = vmatprep.subr.bf16.mxu0 %v7878
        %9654 = vmatpush1.bf16.msra.mxu0 %v7877
        %9655 = vmatprep.subr.bf16.mxu0 %v7898
        %9656 = vmatpush1.bf16.msra.mxu0 %v7897
        %9657 = vmatprep.subr.bf16.mxu0 %v7918
        %9658 = vmatpush1.bf16.msra.mxu0 %v7917
        %9659 = vmatprep.subr.bf16.mxu0 %v7938
        %9660 = vmatpush1.bf16.msra.mxu0 %v7937
        %9661 = vmatprep.subr.bf16.mxu0 %v7958
        %9662 = vmatpush1.bf16.msra.mxu0 %v7957
        %9663 = vmatprep.subr.bf16.mxu0 %v7978
        %9664 = vmatpush1.bf16.msra.mxu0 %v7977
        %9665 = vmatprep.subr.bf16.mxu0 %v7998
        %9666 = vmatpush1.bf16.msra.mxu0 %v7997
        %9667 = vmatprep.subr.bf16.mxu0 %v8018
        %9668 = vmatpush1.bf16.msra.mxu0 %v8017
        %9669 = vmatprep.mubr.bf16.mxu0 %v5138
        %9670 = vmatmul.mubr.bf16.gmra.mrb[0].mxu0 %v5137
        %v9671 = vpop.f32.mrb[0].mxu0
        %v9672 = vadd.f32 0.0, %v9671
        %v9673 = vpop.f32.mrb[0].mxu0
        %v9674 = vadd.f32 0.0, %v9673
        %v9675 = vpop.f32.mrb[0].mxu0
        %v9676 = vpop.f32.mrb[0].mxu0
        %9677 = vdwg.mxu0
        %9678 = vmatprep.subr.bf16.mxu0 %v8038
        %9679 = vmatpush1.bf16.msra.mxu0 %v8037
        %9680 = vmatprep.subr.bf16.mxu0 %v8058
        %9681 = vmatpush1.bf16.msra.mxu0 %v8057
        %9682 = vmatprep.subr.bf16.mxu0 %v8078
        %9683 = vmatpush1.bf16.msra.mxu0 %v8077
        %9684 = vmatprep.subr.bf16.mxu0 %v8098
        %9685 = vmatpush1.bf16.msra.mxu0 %v8097
        %9686 = vmatprep.subr.bf16.mxu0 %v8118
        %9687 = vmatpush1.bf16.msra.mxu0 %v8117
        %9688 = vmatprep.subr.bf16.mxu0 %v8138
        %9689 = vmatpush1.bf16.msra.mxu0 %v8137
        %9690 = vmatprep.subr.bf16.mxu0 %v8158
        %9691 = vmatpush1.bf16.msra.mxu0 %v8157
        %9692 = vmatprep.subr.bf16.mxu0 %v8178
        %9693 = vmatpush1.bf16.msra.mxu0 %v8177
        %9694 = vmatprep.subr.bf16.mxu0 %v8198
        %9695 = vmatpush1.bf16.msra.mxu0 %v8197
        %9696 = vmatprep.subr.bf16.mxu0 %v8218
        %9697 = vmatpush1.bf16.msra.mxu0 %v8217
        %9698 = vmatprep.subr.bf16.mxu0 %v8238
        %9699 = vmatpush1.bf16.msra.mxu0 %v8237
        %9700 = vmatprep.subr.bf16.mxu0 %v8258
        %9701 = vmatpush1.bf16.msra.mxu0 %v8257
        %9702 = vmatprep.subr.bf16.mxu0 %v8278
        %9703 = vmatpush1.bf16.msra.mxu0 %v8277
        %9704 = vmatprep.subr.bf16.mxu0 %v8298
        %9705 = vmatpush1.bf16.msra.mxu0 %v8297
        %9706 = vmatprep.subr.bf16.mxu0 %v8318
        %9707 = vmatpush1.bf16.msra.mxu0 %v8317
        %9708 = vmatprep.subr.bf16.mxu0 %v8338
        %9709 = vmatpush1.bf16.msra.mxu0 %v8337
        %9710 = vmatprep.mubr.bf16.mxu0 %v5140
        %9711 = vmatmul.mubr.bf16.gmra.mrb[0].mxu0 %v5139
        %v9712 = vpop.f32.mrb[0].mxu0
        %v9713 = vadd.f32 %v9672, %v9712
        %v9714 = vpop.f32.mrb[0].mxu0
        %v9715 = vadd.f32 %v9674, %v9714
        %v9716 = vpop.f32.mrb[0].mxu0
        %v9717 = vpop.f32.mrb[0].mxu0
        %9718 = vdwg.mxu0
        %9719 = vmatprep.subr.bf16.mxu0 %v7720
        %9720 = vmatpush1.bf16.msra.mxu0 %v7719
        %9721 = vmatprep.subr.bf16.mxu0 %v7740
        %9722 = vmatpush1.bf16.msra.mxu0 %v7739
        %9723 = vmatprep.subr.bf16.mxu0 %v7760
        %9724 = vmatpush1.bf16.msra.mxu0 %v7759
        %9725 = vmatprep.subr.bf16.mxu0 %v7780
        %9726 = vmatpush1.bf16.msra.mxu0 %v7779
        %9727 = vmatprep.subr.bf16.mxu0 %v7800
        %9728 = vmatpush1.bf16.msra.mxu0 %v7799
        %9729 = vmatprep.subr.bf16.mxu0 %v7820
        %9730 = vmatpush1.bf16.msra.mxu0 %v7819
        %9731 = vmatprep.subr.bf16.mxu0 %v7840
        %9732 = vmatpush1.bf16.msra.mxu0 %v7839
        %9733 = vmatprep.subr.bf16.mxu0 %v7860
        %9734 = vmatpush1.bf16.msra.mxu0 %v7859
        %9735 = vmatprep.subr.bf16.mxu0 %v7880
        %9736 = vmatpush1.bf16.msra.mxu0 %v7879
        %9737 = vmatprep.subr.bf16.mxu0 %v7900
        %9738 = vmatpush1.bf16.msra.mxu0 %v7899
        %9739 = vmatprep.subr.bf16.mxu0 %v7920
        %9740 = vmatpush1.bf16.msra.mxu0 %v7919
        %9741 = vmatprep.subr.bf16.mxu0 %v7940
        %9742 = vmatpush1.bf16.msra.mxu0 %v7939
        %9743 = vmatprep.subr.bf16.mxu0 %v7960
        %9744 = vmatpush1.bf16.msra.mxu0 %v7959
        %9745 = vmatprep.subr.bf16.mxu0 %v7980
        %9746 = vmatpush1.bf16.msra.mxu0 %v7979
        %9747 = vmatprep.subr.bf16.mxu0 %v8000
        %9748 = vmatpush1.bf16.msra.mxu0 %v7999
        %9749 = vmatprep.subr.bf16.mxu0 %v8020
        %9750 = vmatpush1.bf16.msra.mxu0 %v8019
        %9751 = vmatprep.mubr.bf16.mxu0 %v5138
        %9752 = vmatmul.mubr.bf16.gmra.mrb[0].mxu0 %v5137
        %v9753 = vpop.f32.mrb[0].mxu0
        %v9754 = vadd.f32 0.0, %v9753
        %v9755 = vpop.f32.mrb[0].mxu0
        %v9756 = vadd.f32 0.0, %v9755
        %v9757 = vpop.f32.mrb[0].mxu0
        %v9758 = vpop.f32.mrb[0].mxu0
        %9759 = vdwg.mxu0
        %9760 = vmatprep.subr.bf16.mxu0 %v8040
        %9761 = vmatpush1.bf16.msra.mxu0 %v8039
        %9762 = vmatprep.subr.bf16.mxu0 %v8060
        %9763 = vmatpush1.bf16.msra.mxu0 %v8059
        %9764 = vmatprep.subr.bf16.mxu0 %v8080
        %9765 = vmatpush1.bf16.msra.mxu0 %v8079
        %9766 = vmatprep.subr.bf16.mxu0 %v8100
        %9767 = vmatpush1.bf16.msra.mxu0 %v8099
        %9768 = vmatprep.subr.bf16.mxu0 %v8120
        %9769 = vmatpush1.bf16.msra.mxu0 %v8119
        %9770 = vmatprep.subr.bf16.mxu0 %v8140
        %9771 = vmatpush1.bf16.msra.mxu0 %v8139
        %9772 = vmatprep.subr.bf16.mxu0 %v8160
        %9773 = vmatpush1.bf16.msra.mxu0 %v8159
        %9774 = vmatprep.subr.bf16.mxu0 %v8180
        %9775 = vmatpush1.bf16.msra.mxu0 %v8179
        %9776 = vmatprep.subr.bf16.mxu0 %v8200
        %9777 = vmatpush1.bf16.msra.mxu0 %v8199
        %9778 = vmatprep.subr.bf16.mxu0 %v8220
        %9779 = vmatpush1.bf16.msra.mxu0 %v8219
        %9780 = vmatprep.subr.bf16.mxu0 %v8240
        %9781 = vmatpush1.bf16.msra.mxu0 %v8239
        %9782 = vmatprep.subr.bf16.mxu0 %v8260
        %9783 = vmatpush1.bf16.msra.mxu0 %v8259
        %9784 = vmatprep.subr.bf16.mxu0 %v8280
        %9785 = vmatpush1.bf16.msra.mxu0 %v8279
        %9786 = vmatprep.subr.bf16.mxu0 %v8300
        %9787 = vmatpush1.bf16.msra.mxu0 %v8299
        %9788 = vmatprep.subr.bf16.mxu0 %v8320
        %9789 = vmatpush1.bf16.msra.mxu0 %v8319
        %9790 = vmatprep.subr.bf16.mxu0 %v8340
        %9791 = vmatpush1.bf16.msra.mxu0 %v8339
        %9792 = vmatprep.mubr.bf16.mxu0 %v5140
        %9793 = vmatmul.mubr.bf16.gmra.mrb[0].mxu0 %v5139
        %v9794 = vpop.f32.mrb[0].mxu0
        %v9795 = vadd.f32 %v9754, %v9794
        %v9796 = vpop.f32.mrb[0].mxu0
        %v9797 = vadd.f32 %v9756, %v9796
        %v9798 = vpop.f32.mrb[0].mxu0
        %v9799 = vpop.f32.mrb[0].mxu0
        %9800 = vdwg.mxu0
        %v9821 = vcombine.low %v9057, %v9059
        %v9822 = vcombine.low %v9139, %v9141
        %v9824 = vunpack.c.l.s4 1983009808
        %v9825 = vunpack.c.0.s8 %v9824
        %v9826 = vlaneseq
        %v9827 = vshrl.u32 %v9826, 7
        %v9828 = vsub.s32 %v9825, %v9827
        %v9829 = vrot.slane %v9821, %v9828
        %v9831 = vunpack.c.l.s4 1983009808
        %v9832 = vunpack.c.0.s8 %v9831
        %v9833 = vlaneseq
        %v9834 = vshrl.u32 %v9833, 7
        %v9835 = vsub.s32 %v9832, %v9834
        %v9836 = vrot.slane %v9822, %v9835
        %v9837 = vcombine.low %v9829, %v9836
        %v9838 = vcombine.low %v9221, %v9223
        %v9839 = vcombine.low %v9303, %v9305
        %v9841 = vunpack.c.l.s4 1983009808
        %v9842 = vunpack.c.0.s8 %v9841
        %v9843 = vlaneseq
        %v9844 = vshrl.u32 %v9843, 7
        %v9845 = vsub.s32 %v9842, %v9844
        %v9846 = vrot.slane %v9838, %v9845
        %v9848 = vunpack.c.l.s4 1983009808
        %v9849 = vunpack.c.0.s8 %v9848
        %v9850 = vlaneseq
        %v9851 = vshrl.u32 %v9850, 7
        %v9852 = vsub.s32 %v9849, %v9851
        %v9853 = vrot.slane %v9839, %v9852
        %v9854 = vcombine.low %v9846, %v9853
        %v9855 = vcombine.low %v9385, %v9387
        %v9856 = vcombine.low %v9467, %v9469
        %v9858 = vunpack.c.l.s4 1983009808
        %v9859 = vunpack.c.0.s8 %v9858
        %v9860 = vlaneseq
        %v9861 = vshrl.u32 %v9860, 7
        %v9862 = vsub.s32 %v9859, %v9861
        %v9863 = vrot.slane %v9855, %v9862
        %v9865 = vunpack.c.l.s4 1983009808
        %v9866 = vunpack.c.0.s8 %v9865
        %v9867 = vlaneseq
        %v9868 = vshrl.u32 %v9867, 7
        %v9869 = vsub.s32 %v9866, %v9868
        %v9870 = vrot.slane %v9856, %v9869
        %v9871 = vcombine.low %v9863, %v9870
        %v9872 = vcombine.low %v9549, %v9551
        %v9873 = vcombine.low %v9631, %v9633
        %v9875 = vunpack.c.l.s4 1983009808
        %v9876 = vunpack.c.0.s8 %v9875
        %v9877 = vlaneseq
        %v9878 = vshrl.u32 %v9877, 7
        %v9879 = vsub.s32 %v9876, %v9878
        %v9880 = vrot.slane %v9872, %v9879
        %v9882 = vunpack.c.l.s4 1983009808
        %v9883 = vunpack.c.0.s8 %v9882
        %v9884 = vlaneseq
        %v9885 = vshrl.u32 %v9884, 7
        %v9886 = vsub.s32 %v9883, %v9885
        %v9887 = vrot.slane %v9873, %v9886
        %v9888 = vcombine.low %v9880, %v9887
        %v9889 = vcombine.low %v9713, %v9715
        %v9890 = vcombine.low %v9795, %v9797
        %v9892 = vunpack.c.l.s4 1983009808
        %v9893 = vunpack.c.0.s8 %v9892
        %v9894 = vlaneseq
        %v9895 = vshrl.u32 %v9894, 7
        %v9896 = vsub.s32 %v9893, %v9895
        %v9897 = vrot.slane %v9889, %v9896
        %v9899 = vunpack.c.l.s4 1983009808
        %v9900 = vunpack.c.0.s8 %v9899
        %v9901 = vlaneseq
        %v9902 = vshrl.u32 %v9901, 7
        %v9903 = vsub.s32 %v9900, %v9902
        %v9904 = vrot.slane %v9890, %v9903
        %v9905 = vcombine.low %v9897, %v9904
        %9911 = vst [vmem:[%s304] sm:$0xff] %v9837
        %9912 = vst [vmem:[%s304 + $0x8] sm:$0xff] %v9854
        %9913 = vst [vmem:[%s304 + $0x10] sm:$0xff] %v9871
        %9914 = vst [vmem:[%s304 + $0x18] sm:$0xff] %v9888
        %9915 = vst [vmem:[%s304 + $0x20] sm:$0xff] %v9905
        %s9916 = sand.u32 %s132, 1
        %s9917 = scalar_lea.sflag [#allocation4], %s9916
        %s9918 = sand.u32 %s132, 1
        %s9919 = smul.addr %s9918, 40
        %s9920 = scalar_lea.vmem [#allocation10], %s9919
        // Predicated region
        $region53: #{tpu_custom_call.1} parent=35 // pred_check
          %p9921 = pneg %p142
        $region54: #{tpu_custom_call.1} parent=35 // pred_check_branch
          %9923 = sbr.rel (%p9921) target = $region56
        $region55: #{tpu_custom_call.1} parent=35 // pred_region
          %s9925 = ssub.s32 640, 640
          %9926 = vsyncadd %s9917, %s9925
          %s9927 = smul.addr %s25, 20
          %s9928 = smul.addr %s9927, 32
          %s9929 = scalar_lea.hbm %s4, %s9928
          %s9931 = sshll.u32 %s9920, 4
          %s9932 = int_to_ptr.vmem [resolvable:$true] %s9931
          %9934 = dma.vmem_to_hbm [thread:$0]  %s9932, 640, %s9929, %s9917
        $region56: #{tpu_custom_call.1} parent=35 // pred_fallthru
          _
      $region36: #{tpu_custom_call.1} parent=5 // pred_fallthru
        _
      %p9935 = scmp.le.s32.totalorder 2, %s20
      // Predicated region
      $region57: #{tpu_custom_call.1} parent=5 // pred_check
        %p9936 = pneg %p9935
      $region58: #{tpu_custom_call.1} parent=5 // pred_check_branch
        %9938 = sbr.rel (%p9936) target = $region60
      $region59: #{tpu_custom_call.1} parent=5 // pred_region
        %s9939 = ssub.s32 %s20, 2
        // Predicated region
        $region61: #{tpu_custom_call.1} parent=59 // pred_check
          %p9940 = pneg %p148
        $region62: #{tpu_custom_call.1} parent=59 // pred_check_branch
          %9942 = sbr.rel (%p9940) target = $region64
        $region63: #{tpu_custom_call.1} parent=59 // pred_region
          %s9943 = sand.u32 %s133, 1
          %s9944 = scalar_lea.sflag [#allocation4], %s9943
          %s9945 = sand.u32 %s133, 1
          %s9946 = smul.addr %s9945, 40
          %s9947 = scalar_lea.vmem [#allocation10], %s9946
          %9948 = dma.done %s9944, 640
        $region64: #{tpu_custom_call.1} parent=59 // pred_fallthru
          _
      $region60: #{tpu_custom_call.1} parent=5 // pred_fallthru
        _
    $region6: #{tpu_custom_call.1} parent=1 // loop_footer
      %s24 = sadd.s32 1, %s20
    $region7: #{tpu_custom_call.1} parent=1 // loop_footer_branch
      %19 = sbr.rel target = $region3
    $region8: #{tpu_custom_call.1} parent=1 // loop_exit
      _
    %9949 = vsyncpa [#allocation3], 1
    %s9950 = scalar_lea.sflag [#allocation3], 1
    %9951 = vsyncpa %s9950, 1
    %9952 = vsyncpa [#allocation6], 1
    %s9953 = scalar_lea.sflag [#allocation6], 1
    %9954 = vsyncpa %s9953, 1
    %9955 = vsyncpa [#allocation9], 1
    %s9956 = scalar_lea.sflag [#allocation9], 1
    %9957 = vsyncpa %s9956, 1
    %9958 = vsyncpa [#allocation4], 1
    %s9959 = scalar_lea.sflag [#allocation4], 1
    %9960 = vsyncpa %s9959, 1

</llo_original>
